<compile_context>
chip_gen: v7x
topology: tpu7x:2x2x1
jax: 0.10.0
libtpu: 0.0.40
codegen_flags: <defaults>
</compile_context>

<pallas_src>
import jax
import jax.numpy as jnp
from jax.experimental import pallas as pl
from jax.experimental.pallas import tpu as pltpu


# ----------------------------- kernel ---------------------------------------

def rcan_block_kernel(xp_ref, w1_ref, b1_ref, w2_ref, b2_ref,
                      wf1_ref, bf1_ref, wf2_ref, bf2_ref,
                      out_ref, pad_ref):
    # xp_ref : (H+2, W+2, C)  zero-padded input for this batch element
    # w1_ref/w2_ref : (9, C, C) conv taps, tap index = ky*3 + kx
    # out_ref: (H, W, C)
    # pad_ref: (H+2, W+2, C) VMEM scratch (padded conv1 activation)
    Hp, Wp, C = xp_ref.shape
    H, W = Hp - 2, Wp - 2
    N = H * W

    # ---- conv1 (3x3, pad=1) as 9 shifted matmuls, + bias + ReLU ------------
    acc = jnp.zeros((N, C), jnp.float32)
    for ky in range(3):
        for kx in range(3):
            win = xp_ref[ky:ky + H, kx:kx + W, :].reshape(N, C)
            acc = acc + jnp.dot(win, w1_ref[ky * 3 + kx],
                                preferred_element_type=jnp.float32)
    h1 = jnp.maximum(acc + b1_ref[...], 0.0)                    # (N, C)

    # ---- keep zero-padded conv1 activation resident in VMEM for conv2 ------
    pad_ref[...] = jnp.zeros_like(pad_ref)
    pad_ref[1:H + 1, 1:W + 1, :] = h1.reshape(H, W, C)

    # ---- conv2 (3x3, pad=1) -------------------------------------------------
    acc2 = jnp.zeros((N, C), jnp.float32)
    for ky in range(3):
        for kx in range(3):
            win = pad_ref[ky:ky + H, kx:kx + W, :].reshape(N, C)
            acc2 = acc2 + jnp.dot(win, w2_ref[ky * 3 + kx],
                                  preferred_element_type=jnp.float32)
    conv2 = acc2 + b2_ref[...]                                  # (N, C)

    # ---- channel attention: GAP -> fc1 -> ReLU -> fc2 -> sigmoid ----------
    pooled = jnp.mean(conv2, axis=0, keepdims=True)             # (1, C)
    z = jnp.maximum(
        jnp.dot(pooled, wf1_ref[...],
                preferred_element_type=jnp.float32) + bf1_ref[...], 0.0)
    scale = jax.nn.sigmoid(
        jnp.dot(z, wf2_ref[...],
                preferred_element_type=jnp.float32) + bf2_ref[...])  # (1, C)

    # ---- channel scale + residual ------------------------------------------
    res = xp_ref[1:H + 1, 1:W + 1, :].reshape(N, C)
    out_ref[...] = (res + conv2 * scale).reshape(H, W, C)


# ----------------------------- wrapper ---------------------------------------

def rcan_forward(x_nchw, p):
    B, C, H, W = x_nchw.shape
    Cmid = p["wf1"].shape[1]

    # channels-last + spatial zero padding done once in the wrapper
    xh = jnp.transpose(x_nchw, (0, 2, 3, 1)).astype(jnp.float32)
    xp = jnp.pad(xh, ((0, 0), (1, 1), (1, 1), (0, 0)))
    w1 = p["w1"].reshape(9, C, C)
    w2 = p["w2"].reshape(9, C, C)

    out_nhwc = pl.pallas_call(
        rcan_block_kernel,
        out_shape=jax.ShapeDtypeStruct((B, H, W, C), jnp.float32),
        grid=(B,),
        in_specs=[
            pl.BlockSpec((None, H + 2, W + 2, C), lambda b: (b, 0, 0, 0)),
            pl.BlockSpec((9, C, C), lambda b: (0, 0, 0)),
            pl.BlockSpec((1, C), lambda b: (0, 0)),
            pl.BlockSpec((9, C, C), lambda b: (0, 0, 0)),
            pl.BlockSpec((1, C), lambda b: (0, 0)),
            pl.BlockSpec((C, Cmid), lambda b: (0, 0)),
            pl.BlockSpec((1, Cmid), lambda b: (0, 0)),
            pl.BlockSpec((Cmid, C), lambda b: (0, 0)),
            pl.BlockSpec((1, C), lambda b: (0, 0)),
        ],
        out_specs=pl.BlockSpec((None, H, W, C), lambda b: (b, 0, 0, 0)),
        scratch_shapes=[pltpu.VMEM((H + 2, W + 2, C), jnp.float32)],
        compiler_params=pltpu.CompilerParams(
            dimension_semantics=("parallel",)),
    )(xp, w1, p["b1"], w2, p["b2"], p["wf1"], p["bf1"], p["wf2"], p["bf2"])

    return jnp.transpose(out_nhwc, (0, 3, 1, 2))


# ----------------------------- params ----------------------------------------

def init_params(key, C, reduction):
    Cmid = max(C // reduction, 1)
    ks = jax.random.split(key, 8)

    def u(k, shape, fan_in):
        s = 1.0 / jnp.sqrt(jnp.float32(fan_in))
        return jax.random.uniform(k, shape, jnp.float32, -s, s)

    return dict(
        w1=u(ks[0], (3, 3, C, C), 9 * C), b1=u(ks[1], (1, C), 9 * C),
        w2=u(ks[2], (3, 3, C, C), 9 * C), b2=u(ks[3], (1, C), 9 * C),
        wf1=u(ks[4], (C, Cmid), C), bf1=u(ks[5], (1, Cmid), C),
        wf2=u(ks[6], (Cmid, C), Cmid), bf2=u(ks[7], (1, C), Cmid),
    )


# ----------------------------- pure-JAX reference -----------------------------

def reference_forward(x_nchw, p):
    xh = jnp.transpose(x_nchw, (0, 2, 3, 1)).astype(jnp.float32)

    def conv(inp, w, b):
        o = jax.lax.conv_general_dilated(
            inp, w, window_strides=(1, 1), padding="SAME",
            dimension_numbers=("NHWC", "HWIO", "NHWC"),
            precision=jax.lax.Precision.HIGHEST)
        return o + b

    h = jax.nn.relu(conv(xh, p["w1"], p["b1"]))
    h2 = conv(h, p["w2"], p["b2"])
    y = jnp.mean(h2, axis=(1, 2))
    z = jax.nn.relu(jnp.dot(y, p["wf1"],
                            precision=jax.lax.Precision.HIGHEST) + p["bf1"])
    s = jax.nn.sigmoid(jnp.dot(z, p["wf2"],
                               precision=jax.lax.Precision.HIGHEST) + p["bf2"])
    out = xh + h2 * s[:, None, None, :]
    return jnp.transpose(out, (0, 3, 1, 2))


# ----------------------------- main -------------------------------------------

if __name__ == "__main__":
    B, C, H, W, reduction = 2, 32, 16, 16, 16
    key = jax.random.PRNGKey(0)
    k_x, k_p = jax.random.split(key)
    x = jax.random.normal(k_x, (B, C, H, W), jnp.float32)
    params = init_params(k_p, C, reduction)

    out = rcan_forward(x, params)
    jax.block_until_ready(out)

    ref = reference_forward(x, params)
    assert out.shape == (B, C, H, W)
    max_err = float(jnp.max(jnp.abs(out - ref)))
    assert jnp.allclose(out, ref, atol=1e-3, rtol=1e-3), f"max abs err {max_err}"

    print("KERNEL_OK")
</pallas_src>

<mosaic_0001>
module attributes {stable_mosaic.version = 11 : i64} {
  func.func @rcan_block_kernel(%arg0: i32, %arg1: memref<1x18x18x32xf32, #tpu.memory_space<vmem>>, %arg2: memref<9x32x32xf32, #tpu.memory_space<vmem>>, %arg3: memref<1x32xf32, #tpu.memory_space<vmem>>, %arg4: memref<9x32x32xf32, #tpu.memory_space<vmem>>, %arg5: memref<1x32xf32, #tpu.memory_space<vmem>>, %arg6: memref<32x2xf32, #tpu.memory_space<vmem>>, %arg7: memref<1x2xf32, #tpu.memory_space<vmem>>, %arg8: memref<2x32xf32, #tpu.memory_space<vmem>>, %arg9: memref<1x32xf32, #tpu.memory_space<vmem>>, %arg10: memref<1x16x16x32xf32, #tpu.memory_space<vmem>>, %arg11: memref<18x18x32xf32, #tpu.memory_space<vmem>>) attributes {dimension_semantics = [#tpu.dimension_semantics<parallel>], iteration_bounds = array<i64: 2>, scalar_prefetch = 0 : i64, scratch_operands = 1 : i64, tpu.core_type = #tpu.core_type<tc>, window_params = [{transform_indices = @transform_0, window_bounds = array<i64: 1, 18, 18, 32>}, {pipeline_mode = #tpu.pipeline_mode<synchronous>, transform_indices = @transform_1, window_bounds = array<i64: 9, 32, 32>}, {pipeline_mode = #tpu.pipeline_mode<synchronous>, transform_indices = @transform_2, window_bounds = array<i64: 1, 32>}, {pipeline_mode = #tpu.pipeline_mode<synchronous>, transform_indices = @transform_3, window_bounds = array<i64: 9, 32, 32>}, {pipeline_mode = #tpu.pipeline_mode<synchronous>, transform_indices = @transform_4, window_bounds = array<i64: 1, 32>}, {pipeline_mode = #tpu.pipeline_mode<synchronous>, transform_indices = @transform_5, window_bounds = array<i64: 32, 2>}, {pipeline_mode = #tpu.pipeline_mode<synchronous>, transform_indices = @transform_6, window_bounds = array<i64: 1, 2>}, {pipeline_mode = #tpu.pipeline_mode<synchronous>, transform_indices = @transform_7, window_bounds = array<i64: 2, 32>}, {pipeline_mode = #tpu.pipeline_mode<synchronous>, transform_indices = @transform_8, window_bounds = array<i64: 1, 32>}, {transform_indices = @transform_9, window_bounds = array<i64: 1, 16, 16, 32>}]} {
    %cst = arith.constant 0.000000e+00 : f32
    %0 = vector.broadcast %cst : f32 to vector<256x32xf32>
    %c0 = arith.constant 0 : index
    %c0_0 = arith.constant 0 : index
    %c0_1 = arith.constant 0 : index
    %c0_2 = arith.constant 0 : index
    %1 = vector.load %arg1[%c0, %c0_0, %c0_1, %c0_2] : memref<1x18x18x32xf32, #tpu.memory_space<vmem>>, vector<1x16x16x32xf32>
    %2 = vector.shape_cast %1 : vector<1x16x16x32xf32> to vector<16x16x32xf32>
    %3 = vector.shape_cast %2 : vector<16x16x32xf32> to vector<256x32xf32>
    %c0_3 = arith.constant 0 : index
    %c0_4 = arith.constant 0 : index
    %c0_5 = arith.constant 0 : index
    %4 = vector.load %arg2[%c0_3, %c0_4, %c0_5] : memref<9x32x32xf32, #tpu.memory_space<vmem>>, vector<1x32x32xf32>
    %5 = vector.shape_cast %4 : vector<1x32x32xf32> to vector<32x32xf32>
    %cst_6 = arith.constant dense<0.000000e+00> : vector<256x32xf32>
    %6 = tpu.matmul %3, %5, %cst_6 {dimension_numbers = #tpu.dot_dimension_numbers<[1], [0], [0], [1], [0, 0, 1, 1], [], []>} : vector<256x32xf32>, vector<32x32xf32>, vector<256x32xf32> -> vector<256x32xf32>
    %7 = arith.addf %0, %6 : vector<256x32xf32>
    %c0_7 = arith.constant 0 : index
    %c0_8 = arith.constant 0 : index
    %c1 = arith.constant 1 : index
    %c0_9 = arith.constant 0 : index
    %8 = vector.load %arg1[%c0_7, %c0_8, %c1, %c0_9] : memref<1x18x18x32xf32, #tpu.memory_space<vmem>>, vector<1x16x16x32xf32>
    %9 = vector.shape_cast %8 : vector<1x16x16x32xf32> to vector<16x16x32xf32>
    %10 = vector.shape_cast %9 : vector<16x16x32xf32> to vector<256x32xf32>
    %c1_10 = arith.constant 1 : index
    %c0_11 = arith.constant 0 : index
    %c0_12 = arith.constant 0 : index
    %11 = vector.load %arg2[%c1_10, %c0_11, %c0_12] : memref<9x32x32xf32, #tpu.memory_space<vmem>>, vector<1x32x32xf32>
    %12 = vector.shape_cast %11 : vector<1x32x32xf32> to vector<32x32xf32>
    %cst_13 = arith.constant dense<0.000000e+00> : vector<256x32xf32>
    %13 = tpu.matmul %10, %12, %cst_13 {dimension_numbers = #tpu.dot_dimension_numbers<[1], [0], [0], [1], [0, 0, 1, 1], [], []>} : vector<256x32xf32>, vector<32x32xf32>, vector<256x32xf32> -> vector<256x32xf32>
    %14 = arith.addf %7, %13 : vector<256x32xf32>
    %c0_14 = arith.constant 0 : index
    %c0_15 = arith.constant 0 : index
    %c2 = arith.constant 2 : index
    %c0_16 = arith.constant 0 : index
    %15 = vector.load %arg1[%c0_14, %c0_15, %c2, %c0_16] : memref<1x18x18x32xf32, #tpu.memory_space<vmem>>, vector<1x16x16x32xf32>
    %16 = vector.shape_cast %15 : vector<1x16x16x32xf32> to vector<16x16x32xf32>
    %17 = vector.shape_cast %16 : vector<16x16x32xf32> to vector<256x32xf32>
    %c2_17 = arith.constant 2 : index
    %c0_18 = arith.constant 0 : index
    %c0_19 = arith.constant 0 : index
    %18 = vector.load %arg2[%c2_17, %c0_18, %c0_19] : memref<9x32x32xf32, #tpu.memory_space<vmem>>, vector<1x32x32xf32>
    %19 = vector.shape_cast %18 : vector<1x32x32xf32> to vector<32x32xf32>
    %cst_20 = arith.constant dense<0.000000e+00> : vector<256x32xf32>
    %20 = tpu.matmul %17, %19, %cst_20 {dimension_numbers = #tpu.dot_dimension_numbers<[1], [0], [0], [1], [0, 0, 1, 1], [], []>} : vector<256x32xf32>, vector<32x32xf32>, vector<256x32xf32> -> vector<256x32xf32>
    %21 = arith.addf %14, %20 : vector<256x32xf32>
    %c0_21 = arith.constant 0 : index
    %c1_22 = arith.constant 1 : index
    %c0_23 = arith.constant 0 : index
    %c0_24 = arith.constant 0 : index
    %22 = vector.load %arg1[%c0_21, %c1_22, %c0_23, %c0_24] : memref<1x18x18x32xf32, #tpu.memory_space<vmem>>, vector<1x16x16x32xf32>
    %23 = vector.shape_cast %22 : vector<1x16x16x32xf32> to vector<16x16x32xf32>
    %24 = vector.shape_cast %23 : vector<16x16x32xf32> to vector<256x32xf32>
    %c3 = arith.constant 3 : index
    %c0_25 = arith.constant 0 : index
    %c0_26 = arith.constant 0 : index
    %25 = vector.load %arg2[%c3, %c0_25, %c0_26] : memref<9x32x32xf32, #tpu.memory_space<vmem>>, vector<1x32x32xf32>
    %26 = vector.shape_cast %25 : vector<1x32x32xf32> to vector<32x32xf32>
    %cst_27 = arith.constant dense<0.000000e+00> : vector<256x32xf32>
    %27 = tpu.matmul %24, %26, %cst_27 {dimension_numbers = #tpu.dot_dimension_numbers<[1], [0], [0], [1], [0, 0, 1, 1], [], []>} : vector<256x32xf32>, vector<32x32xf32>, vector<256x32xf32> -> vector<256x32xf32>
    %28 = arith.addf %21, %27 : vector<256x32xf32>
    %c0_28 = arith.constant 0 : index
    %c1_29 = arith.constant 1 : index
    %c1_30 = arith.constant 1 : index
    %c0_31 = arith.constant 0 : index
    %29 = vector.load %arg1[%c0_28, %c1_29, %c1_30, %c0_31] : memref<1x18x18x32xf32, #tpu.memory_space<vmem>>, vector<1x16x16x32xf32>
    %30 = vector.shape_cast %29 : vector<1x16x16x32xf32> to vector<16x16x32xf32>
    %31 = vector.shape_cast %30 : vector<16x16x32xf32> to vector<256x32xf32>
    %c4 = arith.constant 4 : index
    %c0_32 = arith.constant 0 : index
    %c0_33 = arith.constant 0 : index
    %32 = vector.load %arg2[%c4, %c0_32, %c0_33] : memref<9x32x32xf32, #tpu.memory_space<vmem>>, vector<1x32x32xf32>
    %33 = vector.shape_cast %32 : vector<1x32x32xf32> to vector<32x32xf32>
    %cst_34 = arith.constant dense<0.000000e+00> : vector<256x32xf32>
    %34 = tpu.matmul %31, %33, %cst_34 {dimension_numbers = #tpu.dot_dimension_numbers<[1], [0], [0], [1], [0, 0, 1, 1], [], []>} : vector<256x32xf32>, vector<32x32xf32>, vector<256x32xf32> -> vector<256x32xf32>
    %35 = arith.addf %28, %34 : vector<256x32xf32>
    %c0_35 = arith.constant 0 : index
    %c1_36 = arith.constant 1 : index
    %c2_37 = arith.constant 2 : index
    %c0_38 = arith.constant 0 : index
    %36 = vector.load %arg1[%c0_35, %c1_36, %c2_37, %c0_38] : memref<1x18x18x32xf32, #tpu.memory_space<vmem>>, vector<1x16x16x32xf32>
    %37 = vector.shape_cast %36 : vector<1x16x16x32xf32> to vector<16x16x32xf32>
    %38 = vector.shape_cast %37 : vector<16x16x32xf32> to vector<256x32xf32>
    %c5 = arith.constant 5 : index
    %c0_39 = arith.constant 0 : index
    %c0_40 = arith.constant 0 : index
    %39 = vector.load %arg2[%c5, %c0_39, %c0_40] : memref<9x32x32xf32, #tpu.memory_space<vmem>>, vector<1x32x32xf32>
    %40 = vector.shape_cast %39 : vector<1x32x32xf32> to vector<32x32xf32>
    %cst_41 = arith.constant dense<0.000000e+00> : vector<256x32xf32>
    %41 = tpu.matmul %38, %40, %cst_41 {dimension_numbers = #tpu.dot_dimension_numbers<[1], [0], [0], [1], [0, 0, 1, 1], [], []>} : vector<256x32xf32>, vector<32x32xf32>, vector<256x32xf32> -> vector<256x32xf32>
    %42 = arith.addf %35, %41 : vector<256x32xf32>
    %c0_42 = arith.constant 0 : index
    %c2_43 = arith.constant 2 : index
    %c0_44 = arith.constant 0 : index
    %c0_45 = arith.constant 0 : index
    %43 = vector.load %arg1[%c0_42, %c2_43, %c0_44, %c0_45] : memref<1x18x18x32xf32, #tpu.memory_space<vmem>>, vector<1x16x16x32xf32>
    %44 = vector.shape_cast %43 : vector<1x16x16x32xf32> to vector<16x16x32xf32>
    %45 = vector.shape_cast %44 : vector<16x16x32xf32> to vector<256x32xf32>
    %c6 = arith.constant 6 : index
    %c0_46 = arith.constant 0 : index
    %c0_47 = arith.constant 0 : index
    %46 = vector.load %arg2[%c6, %c0_46, %c0_47] : memref<9x32x32xf32, #tpu.memory_space<vmem>>, vector<1x32x32xf32>
    %47 = vector.shape_cast %46 : vector<1x32x32xf32> to vector<32x32xf32>
    %cst_48 = arith.constant dense<0.000000e+00> : vector<256x32xf32>
    %48 = tpu.matmul %45, %47, %cst_48 {dimension_numbers = #tpu.dot_dimension_numbers<[1], [0], [0], [1], [0, 0, 1, 1], [], []>} : vector<256x32xf32>, vector<32x32xf32>, vector<256x32xf32> -> vector<256x32xf32>
    %49 = arith.addf %42, %48 : vector<256x32xf32>
    %c0_49 = arith.constant 0 : index
    %c2_50 = arith.constant 2 : index
    %c1_51 = arith.constant 1 : index
    %c0_52 = arith.constant 0 : index
    %50 = vector.load %arg1[%c0_49, %c2_50, %c1_51, %c0_52] : memref<1x18x18x32xf32, #tpu.memory_space<vmem>>, vector<1x16x16x32xf32>
    %51 = vector.shape_cast %50 : vector<1x16x16x32xf32> to vector<16x16x32xf32>
    %52 = vector.shape_cast %51 : vector<16x16x32xf32> to vector<256x32xf32>
    %c7 = arith.constant 7 : index
    %c0_53 = arith.constant 0 : index
    %c0_54 = arith.constant 0 : index
    %53 = vector.load %arg2[%c7, %c0_53, %c0_54] : memref<9x32x32xf32, #tpu.memory_space<vmem>>, vector<1x32x32xf32>
    %54 = vector.shape_cast %53 : vector<1x32x32xf32> to vector<32x32xf32>
    %cst_55 = arith.constant dense<0.000000e+00> : vector<256x32xf32>
    %55 = tpu.matmul %52, %54, %cst_55 {dimension_numbers = #tpu.dot_dimension_numbers<[1], [0], [0], [1], [0, 0, 1, 1], [], []>} : vector<256x32xf32>, vector<32x32xf32>, vector<256x32xf32> -> vector<256x32xf32>
    %56 = arith.addf %49, %55 : vector<256x32xf32>
    %c0_56 = arith.constant 0 : index
    %c2_57 = arith.constant 2 : index
    %c2_58 = arith.constant 2 : index
    %c0_59 = arith.constant 0 : index
    %57 = vector.load %arg1[%c0_56, %c2_57, %c2_58, %c0_59] : memref<1x18x18x32xf32, #tpu.memory_space<vmem>>, vector<1x16x16x32xf32>
    %58 = vector.shape_cast %57 : vector<1x16x16x32xf32> to vector<16x16x32xf32>
    %59 = vector.shape_cast %58 : vector<16x16x32xf32> to vector<256x32xf32>
    %c8 = arith.constant 8 : index
    %c0_60 = arith.constant 0 : index
    %c0_61 = arith.constant 0 : index
    %60 = vector.load %arg2[%c8, %c0_60, %c0_61] : memref<9x32x32xf32, #tpu.memory_space<vmem>>, vector<1x32x32xf32>
    %61 = vector.shape_cast %60 : vector<1x32x32xf32> to vector<32x32xf32>
    %cst_62 = arith.constant dense<0.000000e+00> : vector<256x32xf32>
    %62 = tpu.matmul %59, %61, %cst_62 {dimension_numbers = #tpu.dot_dimension_numbers<[1], [0], [0], [1], [0, 0, 1, 1], [], []>} : vector<256x32xf32>, vector<32x32xf32>, vector<256x32xf32> -> vector<256x32xf32>
    %63 = arith.addf %56, %62 : vector<256x32xf32>
    %c0_63 = arith.constant 0 : index
    %c0_64 = arith.constant 0 : index
    %64 = vector.load %arg3[%c0_63, %c0_64] : memref<1x32xf32, #tpu.memory_space<vmem>>, vector<1x32xf32>
    %65 = vector.broadcast %64 : vector<1x32xf32> to vector<256x32xf32>
    %66 = arith.addf %63, %65 : vector<256x32xf32>
    %cst_65 = arith.constant 0.000000e+00 : f32
    %67 = vector.broadcast %cst_65 : f32 to vector<256x32xf32>
    %68 = arith.maximumf %66, %67 : vector<256x32xf32>
    %cst_66 = arith.constant 0.000000e+00 : f32
    %69 = vector.broadcast %cst_66 : f32 to vector<18x18x32xf32>
    %c0_67 = arith.constant 0 : index
    %c0_68 = arith.constant 0 : index
    %c0_69 = arith.constant 0 : index
    %70 = vector.load %arg11[%c0_67, %c0_68, %c0_69] : memref<18x18x32xf32, #tpu.memory_space<vmem>>, vector<18x18x32xf32>
    tpu.vector_store %arg11[%c0_67, %c0_68, %c0_69], %69 {strides = array<i32>} : memref<18x18x32xf32, #tpu.memory_space<vmem>>, vector<18x18x32xf32>,
    %71 = vector.shape_cast %68 : vector<256x32xf32> to vector<16x16x32xf32>
    %c1_70 = arith.constant 1 : index
    %c1_71 = arith.constant 1 : index
    %c0_72 = arith.constant 0 : index
    %72 = vector.load %arg11[%c1_70, %c1_71, %c0_72] : memref<18x18x32xf32, #tpu.memory_space<vmem>>, vector<16x16x32xf32>
    tpu.vector_store %arg11[%c1_70, %c1_71, %c0_72], %71 {strides = array<i32>} : memref<18x18x32xf32, #tpu.memory_space<vmem>>, vector<16x16x32xf32>,
    %cst_73 = arith.constant 0.000000e+00 : f32
    %73 = vector.broadcast %cst_73 : f32 to vector<256x32xf32>
    %c0_74 = arith.constant 0 : index
    %c0_75 = arith.constant 0 : index
    %c0_76 = arith.constant 0 : index
    %74 = vector.load %arg11[%c0_74, %c0_75, %c0_76] : memref<18x18x32xf32, #tpu.memory_space<vmem>>, vector<16x16x32xf32>
    %75 = vector.shape_cast %74 : vector<16x16x32xf32> to vector<256x32xf32>
    %c0_77 = arith.constant 0 : index
    %c0_78 = arith.constant 0 : index
    %c0_79 = arith.constant 0 : index
    %76 = vector.load %arg4[%c0_77, %c0_78, %c0_79] : memref<9x32x32xf32, #tpu.memory_space<vmem>>, vector<1x32x32xf32>
    %77 = vector.shape_cast %76 : vector<1x32x32xf32> to vector<32x32xf32>
    %cst_80 = arith.constant dense<0.000000e+00> : vector<256x32xf32>
    %78 = tpu.matmul %75, %77, %cst_80 {dimension_numbers = #tpu.dot_dimension_numbers<[1], [0], [0], [1], [0, 0, 1, 1], [], []>} : vector<256x32xf32>, vector<32x32xf32>, vector<256x32xf32> -> vector<256x32xf32>
    %79 = arith.addf %73, %78 : vector<256x32xf32>
    %c0_81 = arith.constant 0 : index
    %c1_82 = arith.constant 1 : index
    %c0_83 = arith.constant 0 : index
    %80 = vector.load %arg11[%c0_81, %c1_82, %c0_83] : memref<18x18x32xf32, #tpu.memory_space<vmem>>, vector<16x16x32xf32>
    %81 = vector.shape_cast %80 : vector<16x16x32xf32> to vector<256x32xf32>
    %c1_84 = arith.constant 1 : index
    %c0_85 = arith.constant 0 : index
    %c0_86 = arith.constant 0 : index
    %82 = vector.load %arg4[%c1_84, %c0_85, %c0_86] : memref<9x32x32xf32, #tpu.memory_space<vmem>>, vector<1x32x32xf32>
    %83 = vector.shape_cast %82 : vector<1x32x32xf32> to vector<32x32xf32>
    %cst_87 = arith.constant dense<0.000000e+00> : vector<256x32xf32>
    %84 = tpu.matmul %81, %83, %cst_87 {dimension_numbers = #tpu.dot_dimension_numbers<[1], [0], [0], [1], [0, 0, 1, 1], [], []>} : vector<256x32xf32>, vector<32x32xf32>, vector<256x32xf32> -> vector<256x32xf32>
    %85 = arith.addf %79, %84 : vector<256x32xf32>
    %c0_88 = arith.constant 0 : index
    %c2_89 = arith.constant 2 : index
    %c0_90 = arith.constant 0 : index
    %86 = vector.load %arg11[%c0_88, %c2_89, %c0_90] : memref<18x18x32xf32, #tpu.memory_space<vmem>>, vector<16x16x32xf32>
    %87 = vector.shape_cast %86 : vector<16x16x32xf32> to vector<256x32xf32>
    %c2_91 = arith.constant 2 : index
    %c0_92 = arith.constant 0 : index
    %c0_93 = arith.constant 0 : index
    %88 = vector.load %arg4[%c2_91, %c0_92, %c0_93] : memref<9x32x32xf32, #tpu.memory_space<vmem>>, vector<1x32x32xf32>
    %89 = vector.shape_cast %88 : vector<1x32x32xf32> to vector<32x32xf32>
    %cst_94 = arith.constant dense<0.000000e+00> : vector<256x32xf32>
    %90 = tpu.matmul %87, %89, %cst_94 {dimension_numbers = #tpu.dot_dimension_numbers<[1], [0], [0], [1], [0, 0, 1, 1], [], []>} : vector<256x32xf32>, vector<32x32xf32>, vector<256x32xf32> -> vector<256x32xf32>
    %91 = arith.addf %85, %90 : vector<256x32xf32>
    %c1_95 = arith.constant 1 : index
    %c0_96 = arith.constant 0 : index
    %c0_97 = arith.constant 0 : index
    %92 = vector.load %arg11[%c1_95, %c0_96, %c0_97] : memref<18x18x32xf32, #tpu.memory_space<vmem>>, vector<16x16x32xf32>
    %93 = vector.shape_cast %92 : vector<16x16x32xf32> to vector<256x32xf32>
    %c3_98 = arith.constant 3 : index
    %c0_99 = arith.constant 0 : index
    %c0_100 = arith.constant 0 : index
    %94 = vector.load %arg4[%c3_98, %c0_99, %c0_100] : memref<9x32x32xf32, #tpu.memory_space<vmem>>, vector<1x32x32xf32>
    %95 = vector.shape_cast %94 : vector<1x32x32xf32> to vector<32x32xf32>
    %cst_101 = arith.constant dense<0.000000e+00> : vector<256x32xf32>
    %96 = tpu.matmul %93, %95, %cst_101 {dimension_numbers = #tpu.dot_dimension_numbers<[1], [0], [0], [1], [0, 0, 1, 1], [], []>} : vector<256x32xf32>, vector<32x32xf32>, vector<256x32xf32> -> vector<256x32xf32>
    %97 = arith.addf %91, %96 : vector<256x32xf32>
    %c1_102 = arith.constant 1 : index
    %c1_103 = arith.constant 1 : index
    %c0_104 = arith.constant 0 : index
    %98 = vector.load %arg11[%c1_102, %c1_103, %c0_104] : memref<18x18x32xf32, #tpu.memory_space<vmem>>, vector<16x16x32xf32>
    %99 = vector.shape_cast %98 : vector<16x16x32xf32> to vector<256x32xf32>
    %c4_105 = arith.constant 4 : index
    %c0_106 = arith.constant 0 : index
    %c0_107 = arith.constant 0 : index
    %100 = vector.load %arg4[%c4_105, %c0_106, %c0_107] : memref<9x32x32xf32, #tpu.memory_space<vmem>>, vector<1x32x32xf32>
    %101 = vector.shape_cast %100 : vector<1x32x32xf32> to vector<32x32xf32>
    %cst_108 = arith.constant dense<0.000000e+00> : vector<256x32xf32>
    %102 = tpu.matmul %99, %101, %cst_108 {dimension_numbers = #tpu.dot_dimension_numbers<[1], [0], [0], [1], [0, 0, 1, 1], [], []>} : vector<256x32xf32>, vector<32x32xf32>, vector<256x32xf32> -> vector<256x32xf32>
    %103 = arith.addf %97, %102 : vector<256x32xf32>
    %c1_109 = arith.constant 1 : index
    %c2_110 = arith.constant 2 : index
    %c0_111 = arith.constant 0 : index
    %104 = vector.load %arg11[%c1_109, %c2_110, %c0_111] : memref<18x18x32xf32, #tpu.memory_space<vmem>>, vector<16x16x32xf32>
    %105 = vector.shape_cast %104 : vector<16x16x32xf32> to vector<256x32xf32>
    %c5_112 = arith.constant 5 : index
    %c0_113 = arith.constant 0 : index
    %c0_114 = arith.constant 0 : index
    %106 = vector.load %arg4[%c5_112, %c0_113, %c0_114] : memref<9x32x32xf32, #tpu.memory_space<vmem>>, vector<1x32x32xf32>
    %107 = vector.shape_cast %106 : vector<1x32x32xf32> to vector<32x32xf32>
    %cst_115 = arith.constant dense<0.000000e+00> : vector<256x32xf32>
    %108 = tpu.matmul %105, %107, %cst_115 {dimension_numbers = #tpu.dot_dimension_numbers<[1], [0], [0], [1], [0, 0, 1, 1], [], []>} : vector<256x32xf32>, vector<32x32xf32>, vector<256x32xf32> -> vector<256x32xf32>
    %109 = arith.addf %103, %108 : vector<256x32xf32>
    %c2_116 = arith.constant 2 : index
    %c0_117 = arith.constant 0 : index
    %c0_118 = arith.constant 0 : index
    %110 = vector.load %arg11[%c2_116, %c0_117, %c0_118] : memref<18x18x32xf32, #tpu.memory_space<vmem>>, vector<16x16x32xf32>
    %111 = vector.shape_cast %110 : vector<16x16x32xf32> to vector<256x32xf32>
    %c6_119 = arith.constant 6 : index
    %c0_120 = arith.constant 0 : index
    %c0_121 = arith.constant 0 : index
    %112 = vector.load %arg4[%c6_119, %c0_120, %c0_121] : memref<9x32x32xf32, #tpu.memory_space<vmem>>, vector<1x32x32xf32>
    %113 = vector.shape_cast %112 : vector<1x32x32xf32> to vector<32x32xf32>
    %cst_122 = arith.constant dense<0.000000e+00> : vector<256x32xf32>
    %114 = tpu.matmul %111, %113, %cst_122 {dimension_numbers = #tpu.dot_dimension_numbers<[1], [0], [0], [1], [0, 0, 1, 1], [], []>} : vector<256x32xf32>, vector<32x32xf32>, vector<256x32xf32> -> vector<256x32xf32>
    %115 = arith.addf %109, %114 : vector<256x32xf32>
    %c2_123 = arith.constant 2 : index
    %c1_124 = arith.constant 1 : index
    %c0_125 = arith.constant 0 : index
    %116 = vector.load %arg11[%c2_123, %c1_124, %c0_125] : memref<18x18x32xf32, #tpu.memory_space<vmem>>, vector<16x16x32xf32>
    %117 = vector.shape_cast %116 : vector<16x16x32xf32> to vector<256x32xf32>
    %c7_126 = arith.constant 7 : index
    %c0_127 = arith.constant 0 : index
    %c0_128 = arith.constant 0 : index
    %118 = vector.load %arg4[%c7_126, %c0_127, %c0_128] : memref<9x32x32xf32, #tpu.memory_space<vmem>>, vector<1x32x32xf32>
    %119 = vector.shape_cast %118 : vector<1x32x32xf32> to vector<32x32xf32>
    %cst_129 = arith.constant dense<0.000000e+00> : vector<256x32xf32>
    %120 = tpu.matmul %117, %119, %cst_129 {dimension_numbers = #tpu.dot_dimension_numbers<[1], [0], [0], [1], [0, 0, 1, 1], [], []>} : vector<256x32xf32>, vector<32x32xf32>, vector<256x32xf32> -> vector<256x32xf32>
    %121 = arith.addf %115, %120 : vector<256x32xf32>
    %c2_130 = arith.constant 2 : index
    %c2_131 = arith.constant 2 : index
    %c0_132 = arith.constant 0 : index
    %122 = vector.load %arg11[%c2_130, %c2_131, %c0_132] : memref<18x18x32xf32, #tpu.memory_space<vmem>>, vector<16x16x32xf32>
    %123 = vector.shape_cast %122 : vector<16x16x32xf32> to vector<256x32xf32>
    %c8_133 = arith.constant 8 : index
    %c0_134 = arith.constant 0 : index
    %c0_135 = arith.constant 0 : index
    %124 = vector.load %arg4[%c8_133, %c0_134, %c0_135] : memref<9x32x32xf32, #tpu.memory_space<vmem>>, vector<1x32x32xf32>
    %125 = vector.shape_cast %124 : vector<1x32x32xf32> to vector<32x32xf32>
    %cst_136 = arith.constant dense<0.000000e+00> : vector<256x32xf32>
    %126 = tpu.matmul %123, %125, %cst_136 {dimension_numbers = #tpu.dot_dimension_numbers<[1], [0], [0], [1], [0, 0, 1, 1], [], []>} : vector<256x32xf32>, vector<32x32xf32>, vector<256x32xf32> -> vector<256x32xf32>
    %127 = arith.addf %121, %126 : vector<256x32xf32>
    %c0_137 = arith.constant 0 : index
    %c0_138 = arith.constant 0 : index
    %128 = vector.load %arg5[%c0_137, %c0_138] : memref<1x32xf32, #tpu.memory_space<vmem>>, vector<1x32xf32>
    %129 = vector.broadcast %128 : vector<1x32xf32> to vector<256x32xf32>
    %130 = arith.addf %127, %129 : vector<256x32xf32>
    %cst_139 = arith.constant dense<0.000000e+00> : vector<32xf32>
    %131 = vector.multi_reduction <add>, %130, %cst_139 [0] : vector<256x32xf32> to vector<32xf32>
    %132 = vector.shape_cast %131 : vector<32xf32> to vector<1x32xf32>
    %cst_140 = arith.constant 2.560000e+02 : f32
    %133 = vector.broadcast %cst_140 : f32 to vector<1x32xf32>
    %134 = arith.divf %132, %133 : vector<1x32xf32>
    %c0_141 = arith.constant 0 : index
    %c0_142 = arith.constant 0 : index
    %135 = vector.load %arg6[%c0_141, %c0_142] : memref<32x2xf32, #tpu.memory_space<vmem>>, vector<32x2xf32>
    %cst_143 = arith.constant dense<0.000000e+00> : vector<1x2xf32>
    %136 = tpu.matmul %134, %135, %cst_143 {dimension_numbers = #tpu.dot_dimension_numbers<[1], [0], [0], [1], [0, 0, 1, 1], [], []>} : vector<1x32xf32>, vector<32x2xf32>, vector<1x2xf32> -> vector<1x2xf32>
    %c0_144 = arith.constant 0 : index
    %c0_145 = arith.constant 0 : index
    %137 = vector.load %arg7[%c0_144, %c0_145] : memref<1x2xf32, #tpu.memory_space<vmem>>, vector<1x2xf32>
    %138 = arith.addf %136, %137 : vector<1x2xf32>
    %cst_146 = arith.constant 0.000000e+00 : f32
    %139 = vector.broadcast %cst_146 : f32 to vector<1x2xf32>
    %140 = arith.maximumf %138, %139 : vector<1x2xf32>
    %c0_147 = arith.constant 0 : index
    %c0_148 = arith.constant 0 : index
    %141 = vector.load %arg8[%c0_147, %c0_148] : memref<2x32xf32, #tpu.memory_space<vmem>>, vector<2x32xf32>
    %cst_149 = arith.constant dense<0.000000e+00> : vector<1x32xf32>
    %142 = tpu.matmul %140, %141, %cst_149 {dimension_numbers = #tpu.dot_dimension_numbers<[1], [0], [0], [1], [0, 0, 1, 1], [], []>} : vector<1x2xf32>, vector<2x32xf32>, vector<1x32xf32> -> vector<1x32xf32>
    %c0_150 = arith.constant 0 : index
    %c0_151 = arith.constant 0 : index
    %143 = vector.load %arg9[%c0_150, %c0_151] : memref<1x32xf32, #tpu.memory_space<vmem>>, vector<1x32xf32>
    %144 = arith.addf %142, %143 : vector<1x32xf32>
    %145 = arith.negf %144 : vector<1x32xf32>
    %146 = math.exp %145 : vector<1x32xf32>
    %cst_152 = arith.constant 1.000000e+00 : f32
    %147 = vector.broadcast %cst_152 : f32 to vector<1x32xf32>
    %148 = arith.addf %147, %146 : vector<1x32xf32>
    %149 = arith.divf %147, %148 : vector<1x32xf32>
    %c0_153 = arith.constant 0 : index
    %c1_154 = arith.constant 1 : index
    %c1_155 = arith.constant 1 : index
    %c0_156 = arith.constant 0 : index
    %150 = vector.load %arg1[%c0_153, %c1_154, %c1_155, %c0_156] : memref<1x18x18x32xf32, #tpu.memory_space<vmem>>, vector<1x16x16x32xf32>
    %151 = vector.shape_cast %150 : vector<1x16x16x32xf32> to vector<16x16x32xf32>
    %152 = vector.shape_cast %151 : vector<16x16x32xf32> to vector<256x32xf32>
    %153 = vector.broadcast %149 : vector<1x32xf32> to vector<256x32xf32>
    %154 = arith.mulf %130, %153 : vector<256x32xf32>
    %155 = arith.addf %152, %154 : vector<256x32xf32>
    %156 = vector.shape_cast %155 : vector<256x32xf32> to vector<16x16x32xf32>
    %c0_157 = arith.constant 0 : index
    %c0_158 = arith.constant 0 : index
    %c0_159 = arith.constant 0 : index
    %c0_160 = arith.constant 0 : index
    %157 = vector.load %arg10[%c0_157, %c0_158, %c0_159, %c0_160] : memref<1x16x16x32xf32, #tpu.memory_space<vmem>>, vector<1x16x16x32xf32>
    %158 = vector.shape_cast %157 : vector<1x16x16x32xf32> to vector<16x16x32xf32>
    %159 = vector.shape_cast %156 : vector<16x16x32xf32> to vector<1x16x16x32xf32>
    tpu.vector_store %arg10[%c0_157, %c0_158, %c0_159, %c0_160], %159 {strides = array<i32>} : memref<1x16x16x32xf32, #tpu.memory_space<vmem>>, vector<1x16x16x32xf32>,
    return
  }
  func.func @transform_0(%arg0: i32) -> (i32, i32, i32, i32) {
    %c0_i32 = arith.constant 0 : i32
    %c0_i32_0 = arith.constant 0 : i32
    %c0_i32_1 = arith.constant 0 : i32
    %c0_i32_2 = arith.constant 0 : i32
    return %arg0, %c0_i32, %c0_i32_0, %c0_i32_1 : i32, i32, i32, i32
  }
  func.func @transform_1(%arg0: i32) -> (i32, i32, i32) {
    %c0_i32 = arith.constant 0 : i32
    %c0_i32_0 = arith.constant 0 : i32
    %c0_i32_1 = arith.constant 0 : i32
    %c0_i32_2 = arith.constant 0 : i32
    return %c0_i32, %c0_i32_0, %c0_i32_1 : i32, i32, i32
  }
  func.func @transform_2(%arg0: i32) -> (i32, i32) {
    %c0_i32 = arith.constant 0 : i32
    %c0_i32_0 = arith.constant 0 : i32
    %c0_i32_1 = arith.constant 0 : i32
    return %c0_i32, %c0_i32_0 : i32, i32
  }
  func.func @transform_3(%arg0: i32) -> (i32, i32, i32) {
    %c0_i32 = arith.constant 0 : i32
    %c0_i32_0 = arith.constant 0 : i32
    %c0_i32_1 = arith.constant 0 : i32
    %c0_i32_2 = arith.constant 0 : i32
    return %c0_i32, %c0_i32_0, %c0_i32_1 : i32, i32, i32
  }
  func.func @transform_4(%arg0: i32) -> (i32, i32) {
    %c0_i32 = arith.constant 0 : i32
    %c0_i32_0 = arith.constant 0 : i32
    %c0_i32_1 = arith.constant 0 : i32
    return %c0_i32, %c0_i32_0 : i32, i32
  }
  func.func @transform_5(%arg0: i32) -> (i32, i32) {
    %c0_i32 = arith.constant 0 : i32
    %c0_i32_0 = arith.constant 0 : i32
    %c0_i32_1 = arith.constant 0 : i32
    return %c0_i32, %c0_i32_0 : i32, i32
  }
  func.func @transform_6(%arg0: i32) -> (i32, i32) {
    %c0_i32 = arith.constant 0 : i32
    %c0_i32_0 = arith.constant 0 : i32
    %c0_i32_1 = arith.constant 0 : i32
    return %c0_i32, %c0_i32_0 : i32, i32
  }
  func.func @transform_7(%arg0: i32) -> (i32, i32) {
    %c0_i32 = arith.constant 0 : i32
    %c0_i32_0 = arith.constant 0 : i32
    %c0_i32_1 = arith.constant 0 : i32
    return %c0_i32, %c0_i32_0 : i32, i32
  }
  func.func @transform_8(%arg0: i32) -> (i32, i32) {
    %c0_i32 = arith.constant 0 : i32
    %c0_i32_0 = arith.constant 0 : i32
    %c0_i32_1 = arith.constant 0 : i32
    return %c0_i32, %c0_i32_0 : i32, i32
  }
  func.func @transform_9(%arg0: i32) -> (i32, i32, i32, i32) {
    %c0_i32 = arith.constant 0 : i32
    %c0_i32_0 = arith.constant 0 : i32
    %c0_i32_1 = arith.constant 0 : i32
    %c0_i32_2 = arith.constant 0 : i32
    return %arg0, %c0_i32, %c0_i32_0, %c0_i32_1 : i32, i32, i32, i32
  }
}

</mosaic_0001>

<llo_original>
// kernel: tpu_custom_call.1
$region0: #{tpu_custom_call.1}
  #allocation0 [shape = 'u32[]', space=smem, size = 0x4, offset = 0x4, fixed_abs, tag = 'smem constant byte address 0x4 - core index']
  #allocation1 [shape = 'u32[144,128]{1,0:T(1,128)}', space=vmem, size = 0x12000, scoped, tag = 'internal scratch']
  #allocation2 [shape = 'f32[18,18,32]{2,1,0:T(8,128)}', space=vmem, size = 0x36000, scoped, tag = 'scratch operand']
  %s0 = inlined_call_operand.vmem [shape: f32[2,18,18,32], index: 0, kind: input, shape index: {}]
  %s1 = inlined_call_operand.vmem [shape: f32[9,32,32], index: 1, kind: input, shape index: {}]
  %s2 = inlined_call_operand.vmem [shape: f32[1,32], index: 2, kind: input, shape index: {}]
  %s3 = inlined_call_operand.vmem [shape: f32[9,32,32], index: 3, kind: input, shape index: {}]
  %s4 = inlined_call_operand.vmem [shape: f32[1,32], index: 4, kind: input, shape index: {}]
  %s5 = inlined_call_operand.vmem [shape: f32[32,2], index: 5, kind: input, shape index: {}]
  %s6 = inlined_call_operand.vmem [shape: f32[1,2], index: 6, kind: input, shape index: {}]
  %s7 = inlined_call_operand.vmem [shape: f32[2,32], index: 7, kind: input, shape index: {}]
  %s8 = inlined_call_operand.vmem [shape: f32[1,32], index: 8, kind: input, shape index: {}]
  %s9 = inlined_call_operand.hbm [shape: f32[2,16,16,32], index: 9, kind: output, shape index: {}]
  %s10 = sld [smem:[#allocation0]]
  $region69: #{tpu_custom_call.1} parent=0
    _
  %s12 = ssub.s32 1, %s10
  %s13 = scalar_select 0, %s12, %s10
  $region1: #{tpu_custom_call.1} parent=0
    #allocation3 [shape = 'u8[262144]{0}', space=vmem, size = 0x40000, scoped, tag = 'output window, operand 0']
    #allocation4 [shape = 's32[2]{0}', space=sflag, size = 0x8, scoped, tag = 'scoped memory for tpu_custom_call.1']
    %14 = vsyncpa [#allocation4], 0
    %s15 = scalar_lea.sflag [#allocation4], 1
    %16 = vsyncpa %s15, 0
    loop: start=0, step=1, limit=4
    $region2: #{tpu_custom_call.1} parent=1 // loop_pre_header
      _
    $region3: #{tpu_custom_call.1} parent=1 // loop_header
      %s18 = sphi 0, %s22
      %p19 = scmp.ge.s32.totalorder %s18, 4
      %s28 = sphi 0, %s30
      %s31 = sphi 0, %s28
      %s32 = sphi 0, %s31
      %s48 = sphi 0, %s32
      %s52 = sphi 0, %s52
      %s54 = sphi 0, %s52
      %s55 = sphi 0, %s54
      %s69 = sphi 0, %s55
      %s73 = sphi 0, %s73
      %s75 = sphi 0, %s73
      %s76 = sphi 0, %s75
      %s90 = sphi 0, %s76
      %s94 = sphi 0, %s94
      %s96 = sphi 0, %s94
      %s97 = sphi 0, %s96
      %s111 = sphi 0, %s97
      %s115 = sphi 0, %s115
      %s117 = sphi 0, %s115
      %s118 = sphi 0, %s117
      %s132 = sphi 0, %s118
      %s136 = sphi 0, %s136
      %s138 = sphi 0, %s136
      %s139 = sphi 0, %s138
      %s153 = sphi 0, %s139
      %s157 = sphi 0, %s157
      %s159 = sphi 0, %s157
      %s160 = sphi 0, %s159
      %s174 = sphi 0, %s160
      %s178 = sphi 0, %s178
      %s180 = sphi 0, %s178
      %s181 = sphi 0, %s180
      %s195 = sphi 0, %s181
      %s199 = sphi 0, %s199
      %s201 = sphi 0, %s199
      %s202 = sphi 0, %s201
      %s216 = sphi 0, %s202
      %s222 = sphi 0, %s224
      %s225 = sphi 0, %s222
      %s226 = sphi 0, %s225
      %s242 = sphi 0, %s226
    $region4: #{tpu_custom_call.1} parent=1 // loop_header_branch
      %21 = sbr.rel (%p19) target = $region8
    $region5: #{tpu_custom_call.1} parent=1 // loop_body
      %s23 = ssub.s32 %s18, 1
      %s24 = ssub.s32 %s18, 2
      %s25 = sadd.s32 %s18, 1
      %s26 = ssub.s32 %s18, %s25
      %p27 = scmp.eq.s32.totalorder %s26, 0
      %s29 = sadd.s32 %s28, 1
      %s30 = scalar_select %p27, %s28, %s29
      %p33 = pneg %p27
      %p34 = scmp.eq.s32.totalorder %s18, 1
      %p35 = por %p33, %p34
      %p36 = scmp.ne.s32.totalorder %s28, %s31
      %p37 = scmp.eq.s32.totalorder %s18, 0
      %p38 = por %p36, %p37
      %p39 = scmp.ne.s32.totalorder %s28, %s31
      %p40 = scmp.eq.s32.totalorder %s23, 1
      %p41 = por %p39, %p40
      %p42 = scmp.ne.s32.totalorder %s31, %s32
      %p43 = scmp.eq.s32.totalorder %s23, 0
      %p44 = por %p42, %p43
      %p45 = scmp.ne.s32.totalorder %s31, %s32
      %p46 = scmp.eq.s32.totalorder %s24, 1
      %p47 = por %p45, %p46
      %p49 = scmp.ne.s32.totalorder %s32, %s48
      %p50 = scmp.eq.s32.totalorder %s24, 0
      %p51 = por %p49, %p50
      %s53 = sadd.s32 %s52, 1
      %p56 = scmp.eq.s32.totalorder %s18, 1
      %p57 = scmp.ne.s32.totalorder %s52, %s54
      %p58 = scmp.eq.s32.totalorder %s18, 0
      %p59 = por %p57, %p58
      %p60 = scmp.ne.s32.totalorder %s52, %s54
      %p61 = scmp.eq.s32.totalorder %s23, 1
      %p62 = por %p60, %p61
      %p63 = scmp.ne.s32.totalorder %s54, %s55
      %p64 = scmp.eq.s32.totalorder %s23, 0
      %p65 = por %p63, %p64
      %p66 = scmp.ne.s32.totalorder %s54, %s55
      %p67 = scmp.eq.s32.totalorder %s24, 1
      %p68 = por %p66, %p67
      %p70 = scmp.ne.s32.totalorder %s55, %s69
      %p71 = scmp.eq.s32.totalorder %s24, 0
      %p72 = por %p70, %p71
      %s74 = sadd.s32 %s73, 1
      %p77 = scmp.eq.s32.totalorder %s18, 1
      %p78 = scmp.ne.s32.totalorder %s73, %s75
      %p79 = scmp.eq.s32.totalorder %s18, 0
      %p80 = por %p78, %p79
      %p81 = scmp.ne.s32.totalorder %s73, %s75
      %p82 = scmp.eq.s32.totalorder %s23, 1
      %p83 = por %p81, %p82
      %p84 = scmp.ne.s32.totalorder %s75, %s76
      %p85 = scmp.eq.s32.totalorder %s23, 0
      %p86 = por %p84, %p85
      %p87 = scmp.ne.s32.totalorder %s75, %s76
      %p88 = scmp.eq.s32.totalorder %s24, 1
      %p89 = por %p87, %p88
      %p91 = scmp.ne.s32.totalorder %s76, %s90
      %p92 = scmp.eq.s32.totalorder %s24, 0
      %p93 = por %p91, %p92
      %s95 = sadd.s32 %s94, 1
      %p98 = scmp.eq.s32.totalorder %s18, 1
      %p99 = scmp.ne.s32.totalorder %s94, %s96
      %p100 = scmp.eq.s32.totalorder %s18, 0
      %p101 = por %p99, %p100
      %p102 = scmp.ne.s32.totalorder %s94, %s96
      %p103 = scmp.eq.s32.totalorder %s23, 1
      %p104 = por %p102, %p103
      %p105 = scmp.ne.s32.totalorder %s96, %s97
      %p106 = scmp.eq.s32.totalorder %s23, 0
      %p107 = por %p105, %p106
      %p108 = scmp.ne.s32.totalorder %s96, %s97
      %p109 = scmp.eq.s32.totalorder %s24, 1
      %p110 = por %p108, %p109
      %p112 = scmp.ne.s32.totalorder %s97, %s111
      %p113 = scmp.eq.s32.totalorder %s24, 0
      %p114 = por %p112, %p113
      %s116 = sadd.s32 %s115, 1
      %p119 = scmp.eq.s32.totalorder %s18, 1
      %p120 = scmp.ne.s32.totalorder %s115, %s117
      %p121 = scmp.eq.s32.totalorder %s18, 0
      %p122 = por %p120, %p121
      %p123 = scmp.ne.s32.totalorder %s115, %s117
      %p124 = scmp.eq.s32.totalorder %s23, 1
      %p125 = por %p123, %p124
      %p126 = scmp.ne.s32.totalorder %s117, %s118
      %p127 = scmp.eq.s32.totalorder %s23, 0
      %p128 = por %p126, %p127
      %p129 = scmp.ne.s32.totalorder %s117, %s118
      %p130 = scmp.eq.s32.totalorder %s24, 1
      %p131 = por %p129, %p130
      %p133 = scmp.ne.s32.totalorder %s118, %s132
      %p134 = scmp.eq.s32.totalorder %s24, 0
      %p135 = por %p133, %p134
      %s137 = sadd.s32 %s136, 1
      %p140 = scmp.eq.s32.totalorder %s18, 1
      %p141 = scmp.ne.s32.totalorder %s136, %s138
      %p142 = scmp.eq.s32.totalorder %s18, 0
      %p143 = por %p141, %p142
      %p144 = scmp.ne.s32.totalorder %s136, %s138
      %p145 = scmp.eq.s32.totalorder %s23, 1
      %p146 = por %p144, %p145
      %p147 = scmp.ne.s32.totalorder %s138, %s139
      %p148 = scmp.eq.s32.totalorder %s23, 0
      %p149 = por %p147, %p148
      %p150 = scmp.ne.s32.totalorder %s138, %s139
      %p151 = scmp.eq.s32.totalorder %s24, 1
      %p152 = por %p150, %p151
      %p154 = scmp.ne.s32.totalorder %s139, %s153
      %p155 = scmp.eq.s32.totalorder %s24, 0
      %p156 = por %p154, %p155
      %s158 = sadd.s32 %s157, 1
      %p161 = scmp.eq.s32.totalorder %s18, 1
      %p162 = scmp.ne.s32.totalorder %s157, %s159
      %p163 = scmp.eq.s32.totalorder %s18, 0
      %p164 = por %p162, %p163
      %p165 = scmp.ne.s32.totalorder %s157, %s159
      %p166 = scmp.eq.s32.totalorder %s23, 1
      %p167 = por %p165, %p166
      %p168 = scmp.ne.s32.totalorder %s159, %s160
      %p169 = scmp.eq.s32.totalorder %s23, 0
      %p170 = por %p168, %p169
      %p171 = scmp.ne.s32.totalorder %s159, %s160
      %p172 = scmp.eq.s32.totalorder %s24, 1
      %p173 = por %p171, %p172
      %p175 = scmp.ne.s32.totalorder %s160, %s174
      %p176 = scmp.eq.s32.totalorder %s24, 0
      %p177 = por %p175, %p176
      %s179 = sadd.s32 %s178, 1
      %p182 = scmp.eq.s32.totalorder %s18, 1
      %p183 = scmp.ne.s32.totalorder %s178, %s180
      %p184 = scmp.eq.s32.totalorder %s18, 0
      %p185 = por %p183, %p184
      %p186 = scmp.ne.s32.totalorder %s178, %s180
      %p187 = scmp.eq.s32.totalorder %s23, 1
      %p188 = por %p186, %p187
      %p189 = scmp.ne.s32.totalorder %s180, %s181
      %p190 = scmp.eq.s32.totalorder %s23, 0
      %p191 = por %p189, %p190
      %p192 = scmp.ne.s32.totalorder %s180, %s181
      %p193 = scmp.eq.s32.totalorder %s24, 1
      %p194 = por %p192, %p193
      %p196 = scmp.ne.s32.totalorder %s181, %s195
      %p197 = scmp.eq.s32.totalorder %s24, 0
      %p198 = por %p196, %p197
      %s200 = sadd.s32 %s199, 1
      %p203 = scmp.eq.s32.totalorder %s18, 1
      %p204 = scmp.ne.s32.totalorder %s199, %s201
      %p205 = scmp.eq.s32.totalorder %s18, 0
      %p206 = por %p204, %p205
      %p207 = scmp.ne.s32.totalorder %s199, %s201
      %p208 = scmp.eq.s32.totalorder %s23, 1
      %p209 = por %p207, %p208
      %p210 = scmp.ne.s32.totalorder %s201, %s202
      %p211 = scmp.eq.s32.totalorder %s23, 0
      %p212 = por %p210, %p211
      %p213 = scmp.ne.s32.totalorder %s201, %s202
      %p214 = scmp.eq.s32.totalorder %s24, 1
      %p215 = por %p213, %p214
      %p217 = scmp.ne.s32.totalorder %s202, %s216
      %p218 = scmp.eq.s32.totalorder %s24, 0
      %p219 = por %p217, %p218
      %s220 = ssub.s32 %s18, %s25
      %p221 = scmp.eq.s32.totalorder %s220, 0
      %s223 = sadd.s32 %s222, 1
      %s224 = scalar_select %p221, %s222, %s223
      %p227 = pneg %p221
      %p228 = scmp.eq.s32.totalorder %s18, 1
      %p229 = por %p227, %p228
      %p230 = scmp.ne.s32.totalorder %s222, %s225
      %p231 = scmp.eq.s32.totalorder %s18, 0
      %p232 = por %p230, %p231
      %p233 = scmp.ne.s32.totalorder %s222, %s225
      %p234 = scmp.eq.s32.totalorder %s23, 1
      %p235 = por %p233, %p234
      %p236 = scmp.ne.s32.totalorder %s225, %s226
      %p237 = scmp.eq.s32.totalorder %s23, 0
      %p238 = por %p236, %p237
      %p239 = scmp.ne.s32.totalorder %s225, %s226
      %p240 = scmp.eq.s32.totalorder %s24, 1
      %p241 = por %p239, %p240
      %p243 = scmp.ne.s32.totalorder %s226, %s242
      %p244 = scmp.eq.s32.totalorder %s24, 0
      %p245 = por %p243, %p244
      %p246 = scmp.le.s32.totalorder 1, %s18
      %p247 = scmp.lt.s32.totalorder %s18, 3
      %p248 = pnand %p246, %p247
      %p249 = pneg %p248
      // Predicated region
      $region9: #{tpu_custom_call.1} parent=5 // pred_check
        _
      $region10: #{tpu_custom_call.1} parent=5 // pred_check_branch
        %251 = sbr.rel (%p248) target = $region12
      $region11: #{tpu_custom_call.1} parent=5 // pred_region
        %s252 = ssub.s32 %s18, 1
        // Predicated region
        $region13: #{tpu_custom_call.1} parent=11 // pred_check
          %p253 = pneg %p65
        $region14: #{tpu_custom_call.1} parent=11 // pred_check_branch
          %255 = sbr.rel (%p253) target = $region16
        $region15: #{tpu_custom_call.1} parent=11 // pred_region
          _
        $region16: #{tpu_custom_call.1} parent=11 // pred_fallthru
          _
        // Predicated region
        $region17: #{tpu_custom_call.1} parent=11 // pred_check
          %p256 = pneg %p86
        $region18: #{tpu_custom_call.1} parent=11 // pred_check_branch
          %258 = sbr.rel (%p256) target = $region20
        $region19: #{tpu_custom_call.1} parent=11 // pred_region
          _
        $region20: #{tpu_custom_call.1} parent=11 // pred_fallthru
          _
        // Predicated region
        $region21: #{tpu_custom_call.1} parent=11 // pred_check
          %p259 = pneg %p107
        $region22: #{tpu_custom_call.1} parent=11 // pred_check_branch
          %261 = sbr.rel (%p259) target = $region24
        $region23: #{tpu_custom_call.1} parent=11 // pred_region
          _
        $region24: #{tpu_custom_call.1} parent=11 // pred_fallthru
          _
        // Predicated region
        $region25: #{tpu_custom_call.1} parent=11 // pred_check
          %p262 = pneg %p128
        $region26: #{tpu_custom_call.1} parent=11 // pred_check_branch
          %264 = sbr.rel (%p262) target = $region28
        $region27: #{tpu_custom_call.1} parent=11 // pred_region
          _
        $region28: #{tpu_custom_call.1} parent=11 // pred_fallthru
          _
        // Predicated region
        $region29: #{tpu_custom_call.1} parent=11 // pred_check
          %p265 = pneg %p149
        $region30: #{tpu_custom_call.1} parent=11 // pred_check_branch
          %267 = sbr.rel (%p265) target = $region32
        $region31: #{tpu_custom_call.1} parent=11 // pred_region
          _
        $region32: #{tpu_custom_call.1} parent=11 // pred_fallthru
          _
        // Predicated region
        $region33: #{tpu_custom_call.1} parent=11 // pred_check
          %p268 = pneg %p170
        $region34: #{tpu_custom_call.1} parent=11 // pred_check_branch
          %270 = sbr.rel (%p268) target = $region36
        $region35: #{tpu_custom_call.1} parent=11 // pred_region
          _
        $region36: #{tpu_custom_call.1} parent=11 // pred_fallthru
          _
        // Predicated region
        $region37: #{tpu_custom_call.1} parent=11 // pred_check
          %p271 = pneg %p191
        $region38: #{tpu_custom_call.1} parent=11 // pred_check_branch
          %273 = sbr.rel (%p271) target = $region40
        $region39: #{tpu_custom_call.1} parent=11 // pred_region
          _
        $region40: #{tpu_custom_call.1} parent=11 // pred_fallthru
          _
        // Predicated region
        $region41: #{tpu_custom_call.1} parent=11 // pred_check
          %p274 = pneg %p212
        $region42: #{tpu_custom_call.1} parent=11 // pred_check_branch
          %276 = sbr.rel (%p274) target = $region44
        $region43: #{tpu_custom_call.1} parent=11 // pred_region
          _
        $region44: #{tpu_custom_call.1} parent=11 // pred_fallthru
          _
      $region12: #{tpu_custom_call.1} parent=5 // pred_fallthru
        _
      %p277 = scmp.lt.s32.totalorder %s18, 2
      // Predicated region
      $region45: #{tpu_custom_call.1} parent=5 // pred_check
        %p278 = pneg %p277
      $region46: #{tpu_custom_call.1} parent=5 // pred_check_branch
        %280 = sbr.rel (%p278) target = $region48
      $region47: #{tpu_custom_call.1} parent=5 // pred_region
        // Predicated region
        $region49: #{tpu_custom_call.1} parent=47 // pred_check
          %p281 = pneg %p38
        $region50: #{tpu_custom_call.1} parent=47 // pred_check_branch
          %283 = sbr.rel (%p281) target = $region52
        $region51: #{tpu_custom_call.1} parent=47 // pred_region
          %p284 = scmp.lt.s32.totalorder %s18, 1
          %s285 = scalar_select %p284, %s18, 1
          %s286 = smul.addr %s285, 54
          %s287 = smul.addr %s286, 8
          %s288 = scalar_lea.vmem %s0, %s287
        $region52: #{tpu_custom_call.1} parent=47 // pred_fallthru
          _
      $region48: #{tpu_custom_call.1} parent=5 // pred_fallthru
        _
      %p289 = scmp.le.s32.totalorder 1, %s18
      %p290 = scmp.lt.s32.totalorder %s18, 3
      %p291 = pnand %p289, %p290
      %p292 = pneg %p291
      // Predicated region
      $region53: #{tpu_custom_call.1} parent=5 // pred_check
        _
      $region54: #{tpu_custom_call.1} parent=5 // pred_check_branch
        %294 = sbr.rel (%p291) target = $region56
      $region55: #{tpu_custom_call.1} parent=5 // pred_region
        %s295 = ssub.s32 %s18, 1
        %p296 = scmp.lt.s32.totalorder %s23, 1
        %s297 = scalar_select %p296, %s23, 1
        %s298 = smul.addr %s297, 54
        %s299 = smul.addr %s298, 8
        %s300 = scalar_lea.vmem %s0, %s299
        %p301 = pneg %p44
        %p302 = pneg %p41
        %p303 = pneg %p65
        %p304 = pneg %p62
        %p305 = pneg %p86
        %p306 = pneg %p83
        %p307 = pneg %p107
        %p308 = pneg %p104
        %p309 = pneg %p128
        %p310 = pneg %p125
        %p311 = pneg %p149
        %p312 = pneg %p146
        %p313 = pneg %p170
        %p314 = pneg %p167
        %p315 = pneg %p191
        %p316 = pneg %p188
        %p317 = pneg %p212
        %p318 = pneg %p209
        %p319 = pneg %p238
        %p320 = pneg %p235
        %s321 = sand.u32 %s225, 1
        %s322 = scalar_lea.sflag [#allocation4], %s321
        %s323 = sand.u32 %s225, 1
        %s324 = smul.addr %s323, 256
        %s325 = scalar_lea.vmem [#allocation3], %s324
        %p326 = scmp.lt.s32.totalorder %s23, 1
        %s327 = scalar_select %p326, %s23, 1
        %s328 = smul.addr %s327, 54
        %s329 = smul.addr %s328, 8
        %s330 = scalar_lea.vmem %s0, %s329
        %v331 = vld [vmem:[%s330] sm:$0xff]
        %v332 = vld [vmem:[%s330 + $0x8] sm:$0xff]
        %v333 = vld [vmem:[%s330 + $0x18] sm:$0xff]
        %v334 = vld [vmem:[%s330 + $0x20] sm:$0xff]
        %v335 = vld [vmem:[%s330 + $0x30] sm:$0xff]
        %v336 = vld [vmem:[%s330 + $0x38] sm:$0xff]
        %v337 = vld [vmem:[%s330 + $0x48] sm:$0xff]
        %v338 = vld [vmem:[%s330 + $0x50] sm:$0xff]
        %v339 = vld [vmem:[%s330 + $0x60] sm:$0xff]
        %v340 = vld [vmem:[%s330 + $0x68] sm:$0xff]
        %v341 = vld [vmem:[%s330 + $0x78] sm:$0xff]
        %v342 = vld [vmem:[%s330 + $0x80] sm:$0xff]
        %v343 = vld [vmem:[%s330 + $0x90] sm:$0xff]
        %v344 = vld [vmem:[%s330 + $0x98] sm:$0xff]
        %v345 = vld [vmem:[%s330 + $0xa8] sm:$0xff]
        %v346 = vld [vmem:[%s330 + $0xb0] sm:$0xff]
        %v347 = vld [vmem:[%s330 + $0xc0] sm:$0xff]
        %v348 = vld [vmem:[%s330 + $0xc8] sm:$0xff]
        %v349 = vld [vmem:[%s330 + $0xd8] sm:$0xff]
        %v350 = vld [vmem:[%s330 + $0xe0] sm:$0xff]
        %v351 = vld [vmem:[%s330 + $0xf0] sm:$0xff]
        %v352 = vld [vmem:[%s330 + $0xf8] sm:$0xff]
        %v353 = vld [vmem:[%s330 + $0x108] sm:$0xff]
        %v354 = vld [vmem:[%s330 + $0x110] sm:$0xff]
        %v355 = vld [vmem:[%s330 + $0x120] sm:$0xff]
        %v356 = vld [vmem:[%s330 + $0x128] sm:$0xff]
        %v357 = vld [vmem:[%s330 + $0x138] sm:$0xff]
        %v358 = vld [vmem:[%s330 + $0x140] sm:$0xff]
        %v359 = vld [vmem:[%s330 + $0x150] sm:$0xff]
        %v360 = vld [vmem:[%s330 + $0x158] sm:$0xff]
        %v361 = vld [vmem:[%s330 + $0x168] sm:$0xff]
        %v362 = vld [vmem:[%s330 + $0x170] sm:$0xff]
        %v363 = vld [vmem:[%s1] sm:$0xff]
        %v364 = vld [vmem:[%s1 + $0x8] sm:$0xff]
        %v365 = vld [vmem:[%s1 + $0x10] sm:$0xff]
        %v366 = vld [vmem:[%s1 + $0x18] sm:$0xff]
        %v367 = vld [vmem:[%s330 + $0x1] sm:$0xff]
        %v368 = vld [vmem:[%s330 + $0x9] sm:$0xff]
        %v369 = vld [vmem:[%s330 + $0x19] sm:$0xff]
        %v370 = vld [vmem:[%s330 + $0x21] sm:$0xff]
        %v371 = vld [vmem:[%s330 + $0x31] sm:$0xff]
        %v372 = vld [vmem:[%s330 + $0x39] sm:$0xff]
        %v373 = vld [vmem:[%s330 + $0x49] sm:$0xff]
        %v374 = vld [vmem:[%s330 + $0x51] sm:$0xff]
        %v375 = vld [vmem:[%s330 + $0x61] sm:$0xff]
        %v376 = vld [vmem:[%s330 + $0x69] sm:$0xff]
        %v377 = vld [vmem:[%s330 + $0x79] sm:$0xff]
        %v378 = vld [vmem:[%s330 + $0x81] sm:$0xff]
        %v379 = vld [vmem:[%s330 + $0x91] sm:$0xff]
        %v380 = vld [vmem:[%s330 + $0x99] sm:$0xff]
        %v381 = vld [vmem:[%s330 + $0xa9] sm:$0xff]
        %v382 = vld [vmem:[%s330 + $0xb1] sm:$0xff]
        %v383 = vld [vmem:[%s330 + $0xc1] sm:$0xff]
        %v384 = vld [vmem:[%s330 + $0xc9] sm:$0xff]
        %v385 = vld [vmem:[%s330 + $0xd9] sm:$0xff]
        %v386 = vld [vmem:[%s330 + $0xe1] sm:$0xff]
        %v387 = vld [vmem:[%s330 + $0xf1] sm:$0xff]
        %v388 = vld [vmem:[%s330 + $0xf9] sm:$0xff]
        %v389 = vld [vmem:[%s330 + $0x109] sm:$0xff]
        %v390 = vld [vmem:[%s330 + $0x111] sm:$0xff]
        %v391 = vld [vmem:[%s330 + $0x121] sm:$0xff]
        %v392 = vld [vmem:[%s330 + $0x129] sm:$0xff]
        %v393 = vld [vmem:[%s330 + $0x139] sm:$0xff]
        %v394 = vld [vmem:[%s330 + $0x141] sm:$0xff]
        %v395 = vld [vmem:[%s330 + $0x151] sm:$0xff]
        %v396 = vld [vmem:[%s330 + $0x159] sm:$0xff]
        %v397 = vld [vmem:[%s330 + $0x169] sm:$0xff]
        %v398 = vld [vmem:[%s330 + $0x171] sm:$0xff]
        %s399 = scalar_lea.vmem %s1, 32
        %v400 = vld [vmem:[%s399] sm:$0xff]
        %v401 = vld [vmem:[%s399 + $0x8] sm:$0xff]
        %v402 = vld [vmem:[%s399 + $0x10] sm:$0xff]
        %v403 = vld [vmem:[%s399 + $0x18] sm:$0xff]
        %vm404 = vcmask 261120
        %v406 = vsel %vm404, %v367, 0
        %v409 = vsel %vm404, %v368, 0
        %v412 = vsel %vm404, %v369, 0
        %v415 = vsel %vm404, %v370, 0
        %v418 = vsel %vm404, %v371, 0
        %v421 = vsel %vm404, %v372, 0
        %v424 = vsel %vm404, %v373, 0
        %v427 = vsel %vm404, %v374, 0
        %v430 = vsel %vm404, %v375, 0
        %v433 = vsel %vm404, %v376, 0
        %v436 = vsel %vm404, %v377, 0
        %v439 = vsel %vm404, %v378, 0
        %v442 = vsel %vm404, %v379, 0
        %v445 = vsel %vm404, %v380, 0
        %v448 = vsel %vm404, %v381, 0
        %v451 = vsel %vm404, %v382, 0
        %v454 = vsel %vm404, %v383, 0
        %v457 = vsel %vm404, %v384, 0
        %v460 = vsel %vm404, %v385, 0
        %v463 = vsel %vm404, %v386, 0
        %v466 = vsel %vm404, %v387, 0
        %v469 = vsel %vm404, %v388, 0
        %v472 = vsel %vm404, %v389, 0
        %v475 = vsel %vm404, %v390, 0
        %v478 = vsel %vm404, %v391, 0
        %v481 = vsel %vm404, %v392, 0
        %v484 = vsel %vm404, %v393, 0
        %v487 = vsel %vm404, %v394, 0
        %v490 = vsel %vm404, %v395, 0
        %v493 = vsel %vm404, %v396, 0
        %v496 = vsel %vm404, %v397, 0
        %v499 = vsel %vm404, %v398, 0
        %501 = vmatprep.subr.mxu0 0.0
        %502 = vmatpush1.msra.mxu0 %v400
        %503 = vmatprep.subr.mxu0 0.0
        %504 = vmatpush1.msra.mxu0 %v401
        %505 = vmatprep.subr.mxu0 0.0
        %506 = vmatpush1.msra.mxu0 %v402
        %507 = vmatprep.subr.mxu0 0.0
        %508 = vmatpush1.msra.mxu0 %v403
        %509 = vmatprep.subr.mxu0 0.0
        %510 = vmatpush1.msra.mxu0 0.0
        %511 = vmatprep.subr.mxu0 0.0
        %512 = vmatpush1.msra.mxu0 0.0
        %513 = vmatprep.subr.mxu0 0.0
        %514 = vmatpush1.msra.mxu0 0.0
        %515 = vmatprep.subr.mxu0 0.0
        %516 = vmatpush1.msra.mxu0 0.0
        %517 = vmatprep.subr.mxu0 0.0
        %518 = vmatpush1.msra.mxu0 0.0
        %519 = vmatprep.subr.mxu0 0.0
        %520 = vmatpush1.msra.mxu0 0.0
        %521 = vmatprep.subr.mxu0 0.0
        %522 = vmatpush1.msra.mxu0 0.0
        %523 = vmatprep.subr.mxu0 0.0
        %524 = vmatpush1.msra.mxu0 0.0
        %525 = vmatprep.subr.mxu0 0.0
        %526 = vmatpush1.msra.mxu0 0.0
        %527 = vmatprep.subr.mxu0 0.0
        %528 = vmatpush1.msra.mxu0 0.0
        %529 = vmatprep.subr.mxu0 0.0
        %530 = vmatpush1.msra.mxu0 0.0
        %531 = vmatprep.subr.mxu0 0.0
        %532 = vmatpush1.msra.mxu0 0.0
        %533 = vmatprep.subr.mxu0 0.0
        %534 = vmatpush1.msra.mxu0 0.0
        %535 = vmatprep.subr.mxu0 0.0
        %536 = vmatpush1.msra.mxu0 0.0
        %537 = vmatprep.subr.mxu0 0.0
        %538 = vmatpush1.msra.mxu0 0.0
        %539 = vmatprep.subr.mxu0 0.0
        %540 = vmatpush1.msra.mxu0 0.0
        %541 = vmatprep.subr.mxu0 0.0
        %542 = vmatpush1.msra.mxu0 0.0
        %543 = vmatprep.subr.mxu0 0.0
        %544 = vmatpush1.msra.mxu0 0.0
        %545 = vmatprep.subr.mxu0 0.0
        %546 = vmatpush1.msra.mxu0 0.0
        %547 = vmatprep.subr.mxu0 0.0
        %548 = vmatpush1.msra.mxu0 0.0
        %549 = vmatprep.subr.mxu0 0.0
        %550 = vmatpush1.msra.mxu0 0.0
        %551 = vmatprep.subr.mxu0 0.0
        %552 = vmatpush1.msra.mxu0 0.0
        %553 = vmatprep.subr.mxu0 0.0
        %554 = vmatpush1.msra.mxu0 0.0
        %555 = vmatprep.subr.mxu0 0.0
        %556 = vmatpush1.msra.mxu0 0.0
        %557 = vmatprep.subr.mxu0 0.0
        %558 = vmatpush1.msra.mxu0 0.0
        %559 = vmatprep.subr.mxu0 0.0
        %560 = vmatpush1.msra.mxu0 0.0
        %561 = vmatprep.subr.mxu0 0.0
        %562 = vmatpush1.msra.mxu0 0.0
        %563 = vmatprep.subr.mxu0 0.0
        %564 = vmatpush1.msra.mxu0 0.0
        %565 = vmatprep.mubr.f32.mxu0 0.0
        %566 = vmatmul.mubr.f32.gmra.mrb[0].mxu0 %v406
        %v567 = vpop.f32.mrb[0].mxu0
        %v568 = vadd.f32 0.0, %v567
        %v569 = vpop.f32.mrb[0].mxu0
        %570 = vmatprep.mubr.f32.mxu0 0.0
        %571 = vmatmul.mubr.f32.gmra.mrb[0].mxu0 %v409
        %v572 = vpop.f32.mrb[0].mxu0
        %v573 = vadd.f32 0.0, %v572
        %v574 = vpop.f32.mrb[0].mxu0
        %575 = vmatprep.mubr.f32.mxu0 0.0
        %576 = vmatmul.mubr.f32.gmra.mrb[0].mxu0 %v412
        %v577 = vpop.f32.mrb[0].mxu0
        %v578 = vadd.f32 0.0, %v577
        %v579 = vpop.f32.mrb[0].mxu0
        %580 = vmatprep.mubr.f32.mxu0 0.0
        %581 = vmatmul.mubr.f32.gmra.mrb[0].mxu0 %v415
        %v582 = vpop.f32.mrb[0].mxu0
        %v583 = vadd.f32 0.0, %v582
        %v584 = vpop.f32.mrb[0].mxu0
        %585 = vmatprep.mubr.f32.mxu0 0.0
        %586 = vmatmul.mubr.f32.gmra.mrb[0].mxu0 %v418
        %v587 = vpop.f32.mrb[0].mxu0
        %v588 = vadd.f32 0.0, %v587
        %v589 = vpop.f32.mrb[0].mxu0
        %590 = vmatprep.mubr.f32.mxu0 0.0
        %591 = vmatmul.mubr.f32.gmra.mrb[0].mxu0 %v421
        %v592 = vpop.f32.mrb[0].mxu0
        %v593 = vadd.f32 0.0, %v592
        %v594 = vpop.f32.mrb[0].mxu0
        %595 = vmatprep.mubr.f32.mxu0 0.0
        %596 = vmatmul.mubr.f32.gmra.mrb[0].mxu0 %v424
        %v597 = vpop.f32.mrb[0].mxu0
        %v598 = vadd.f32 0.0, %v597
        %v599 = vpop.f32.mrb[0].mxu0
        %600 = vmatprep.mubr.f32.mxu0 0.0
        %601 = vmatmul.mubr.f32.gmra.mrb[0].mxu0 %v427
        %v602 = vpop.f32.mrb[0].mxu0
        %v603 = vadd.f32 0.0, %v602
        %v604 = vpop.f32.mrb[0].mxu0
        %605 = vmatprep.mubr.f32.mxu0 0.0
        %606 = vmatmul.mubr.f32.gmra.mrb[0].mxu0 %v430
        %v607 = vpop.f32.mrb[0].mxu0
        %v608 = vadd.f32 0.0, %v607
        %v609 = vpop.f32.mrb[0].mxu0
        %610 = vmatprep.mubr.f32.mxu0 0.0
        %611 = vmatmul.mubr.f32.gmra.mrb[0].mxu0 %v433
        %v612 = vpop.f32.mrb[0].mxu0
        %v613 = vadd.f32 0.0, %v612
        %v614 = vpop.f32.mrb[0].mxu0
        %615 = vmatprep.mubr.f32.mxu0 0.0
        %616 = vmatmul.mubr.f32.gmra.mrb[0].mxu0 %v436
        %v617 = vpop.f32.mrb[0].mxu0
        %v618 = vadd.f32 0.0, %v617
        %v619 = vpop.f32.mrb[0].mxu0
        %620 = vmatprep.mubr.f32.mxu0 0.0
        %621 = vmatmul.mubr.f32.gmra.mrb[0].mxu0 %v439
        %v622 = vpop.f32.mrb[0].mxu0
        %v623 = vadd.f32 0.0, %v622
        %v624 = vpop.f32.mrb[0].mxu0
        %625 = vmatprep.mubr.f32.mxu0 0.0
        %626 = vmatmul.mubr.f32.gmra.mrb[0].mxu0 %v442
        %v627 = vpop.f32.mrb[0].mxu0
        %v628 = vadd.f32 0.0, %v627
        %v629 = vpop.f32.mrb[0].mxu0
        %630 = vmatprep.mubr.f32.mxu0 0.0
        %631 = vmatmul.mubr.f32.gmra.mrb[0].mxu0 %v445
        %v632 = vpop.f32.mrb[0].mxu0
        %v633 = vadd.f32 0.0, %v632
        %v634 = vpop.f32.mrb[0].mxu0
        %635 = vmatprep.mubr.f32.mxu0 0.0
        %636 = vmatmul.mubr.f32.gmra.mrb[0].mxu0 %v448
        %v637 = vpop.f32.mrb[0].mxu0
        %v638 = vadd.f32 0.0, %v637
        %v639 = vpop.f32.mrb[0].mxu0
        %640 = vmatprep.mubr.f32.mxu0 0.0
        %641 = vmatmul.mubr.f32.gmra.mrb[0].mxu0 %v451
        %v642 = vpop.f32.mrb[0].mxu0
        %v643 = vadd.f32 0.0, %v642
        %v644 = vpop.f32.mrb[0].mxu0
        %645 = vmatprep.mubr.f32.mxu0 0.0
        %646 = vmatmul.mubr.f32.gmra.mrb[0].mxu0 %v454
        %v647 = vpop.f32.mrb[0].mxu0
        %v648 = vadd.f32 0.0, %v647
        %v649 = vpop.f32.mrb[0].mxu0
        %650 = vmatprep.mubr.f32.mxu0 0.0
        %651 = vmatmul.mubr.f32.gmra.mrb[0].mxu0 %v457
        %v652 = vpop.f32.mrb[0].mxu0
        %v653 = vadd.f32 0.0, %v652
        %v654 = vpop.f32.mrb[0].mxu0
        %655 = vmatprep.mubr.f32.mxu0 0.0
        %656 = vmatmul.mubr.f32.gmra.mrb[0].mxu0 %v460
        %v657 = vpop.f32.mrb[0].mxu0
        %v658 = vadd.f32 0.0, %v657
        %v659 = vpop.f32.mrb[0].mxu0
        %660 = vmatprep.mubr.f32.mxu0 0.0
        %661 = vmatmul.mubr.f32.gmra.mrb[0].mxu0 %v463
        %v662 = vpop.f32.mrb[0].mxu0
        %v663 = vadd.f32 0.0, %v662
        %v664 = vpop.f32.mrb[0].mxu0
        %665 = vmatprep.mubr.f32.mxu0 0.0
        %666 = vmatmul.mubr.f32.gmra.mrb[0].mxu0 %v466
        %v667 = vpop.f32.mrb[0].mxu0
        %v668 = vadd.f32 0.0, %v667
        %v669 = vpop.f32.mrb[0].mxu0
        %670 = vmatprep.mubr.f32.mxu0 0.0
        %671 = vmatmul.mubr.f32.gmra.mrb[0].mxu0 %v469
        %v672 = vpop.f32.mrb[0].mxu0
        %v673 = vadd.f32 0.0, %v672
        %v674 = vpop.f32.mrb[0].mxu0
        %675 = vmatprep.mubr.f32.mxu0 0.0
        %676 = vmatmul.mubr.f32.gmra.mrb[0].mxu0 %v472
        %v677 = vpop.f32.mrb[0].mxu0
        %v678 = vadd.f32 0.0, %v677
        %v679 = vpop.f32.mrb[0].mxu0
        %680 = vmatprep.mubr.f32.mxu0 0.0
        %681 = vmatmul.mubr.f32.gmra.mrb[0].mxu0 %v475
        %v682 = vpop.f32.mrb[0].mxu0
        %v683 = vadd.f32 0.0, %v682
        %v684 = vpop.f32.mrb[0].mxu0
        %685 = vmatprep.mubr.f32.mxu0 0.0
        %686 = vmatmul.mubr.f32.gmra.mrb[0].mxu0 %v478
        %v687 = vpop.f32.mrb[0].mxu0
        %v688 = vadd.f32 0.0, %v687
        %v689 = vpop.f32.mrb[0].mxu0
        %690 = vmatprep.mubr.f32.mxu0 0.0
        %691 = vmatmul.mubr.f32.gmra.mrb[0].mxu0 %v481
        %v692 = vpop.f32.mrb[0].mxu0
        %v693 = vadd.f32 0.0, %v692
        %v694 = vpop.f32.mrb[0].mxu0
        %695 = vmatprep.mubr.f32.mxu0 0.0
        %696 = vmatmul.mubr.f32.gmra.mrb[0].mxu0 %v484
        %v697 = vpop.f32.mrb[0].mxu0
        %v698 = vadd.f32 0.0, %v697
        %v699 = vpop.f32.mrb[0].mxu0
        %700 = vmatprep.mubr.f32.mxu0 0.0
        %701 = vmatmul.mubr.f32.gmra.mrb[0].mxu0 %v487
        %v702 = vpop.f32.mrb[0].mxu0
        %v703 = vadd.f32 0.0, %v702
        %v704 = vpop.f32.mrb[0].mxu0
        %705 = vmatprep.mubr.f32.mxu0 0.0
        %706 = vmatmul.mubr.f32.gmra.mrb[0].mxu0 %v490
        %v707 = vpop.f32.mrb[0].mxu0
        %v708 = vadd.f32 0.0, %v707
        %v709 = vpop.f32.mrb[0].mxu0
        %710 = vmatprep.mubr.f32.mxu0 0.0
        %711 = vmatmul.mubr.f32.gmra.mrb[0].mxu0 %v493
        %v712 = vpop.f32.mrb[0].mxu0
        %v713 = vadd.f32 0.0, %v712
        %v714 = vpop.f32.mrb[0].mxu0
        %715 = vmatprep.mubr.f32.mxu0 0.0
        %716 = vmatmul.mubr.f32.gmra.mrb[0].mxu0 %v496
        %v717 = vpop.f32.mrb[0].mxu0
        %v718 = vadd.f32 0.0, %v717
        %v719 = vpop.f32.mrb[0].mxu0
        %720 = vmatprep.mubr.f32.mxu0 0.0
        %721 = vmatmul.mubr.f32.gmra.mrb[0].mxu0 %v499
        %v722 = vpop.f32.mrb[0].mxu0
        %v723 = vadd.f32 0.0, %v722
        %v724 = vpop.f32.mrb[0].mxu0
        %725 = vdwg.mxu0
        %v727 = vsel %vm404, %v331, 0
        %v730 = vsel %vm404, %v332, 0
        %v733 = vsel %vm404, %v333, 0
        %v736 = vsel %vm404, %v334, 0
        %v739 = vsel %vm404, %v335, 0
        %v742 = vsel %vm404, %v336, 0
        %v745 = vsel %vm404, %v337, 0
        %v748 = vsel %vm404, %v338, 0
        %v751 = vsel %vm404, %v339, 0
        %v754 = vsel %vm404, %v340, 0
        %v757 = vsel %vm404, %v341, 0
        %v760 = vsel %vm404, %v342, 0
        %v763 = vsel %vm404, %v343, 0
        %v766 = vsel %vm404, %v344, 0
        %v769 = vsel %vm404, %v345, 0
        %v772 = vsel %vm404, %v346, 0
        %v775 = vsel %vm404, %v347, 0
        %v778 = vsel %vm404, %v348, 0
        %v781 = vsel %vm404, %v349, 0
        %v784 = vsel %vm404, %v350, 0
        %v787 = vsel %vm404, %v351, 0
        %v790 = vsel %vm404, %v352, 0
        %v793 = vsel %vm404, %v353, 0
        %v796 = vsel %vm404, %v354, 0
        %v799 = vsel %vm404, %v355, 0
        %v802 = vsel %vm404, %v356, 0
        %v805 = vsel %vm404, %v357, 0
        %v808 = vsel %vm404, %v358, 0
        %v811 = vsel %vm404, %v359, 0
        %v814 = vsel %vm404, %v360, 0
        %v817 = vsel %vm404, %v361, 0
        %v820 = vsel %vm404, %v362, 0
        %822 = vmatprep.subr.mxu0 0.0
        %823 = vmatpush1.msra.mxu0 %v363
        %824 = vmatprep.subr.mxu0 0.0
        %825 = vmatpush1.msra.mxu0 %v364
        %826 = vmatprep.subr.mxu0 0.0
        %827 = vmatpush1.msra.mxu0 %v365
        %828 = vmatprep.subr.mxu0 0.0
        %829 = vmatpush1.msra.mxu0 %v366
        %830 = vmatprep.subr.mxu0 0.0
        %831 = vmatpush1.msra.mxu0 0.0
        %832 = vmatprep.subr.mxu0 0.0
        %833 = vmatpush1.msra.mxu0 0.0
        %834 = vmatprep.subr.mxu0 0.0
        %835 = vmatpush1.msra.mxu0 0.0
        %836 = vmatprep.subr.mxu0 0.0
        %837 = vmatpush1.msra.mxu0 0.0
        %838 = vmatprep.subr.mxu0 0.0
        %839 = vmatpush1.msra.mxu0 0.0
        %840 = vmatprep.subr.mxu0 0.0
        %841 = vmatpush1.msra.mxu0 0.0
        %842 = vmatprep.subr.mxu0 0.0
        %843 = vmatpush1.msra.mxu0 0.0
        %844 = vmatprep.subr.mxu0 0.0
        %845 = vmatpush1.msra.mxu0 0.0
        %846 = vmatprep.subr.mxu0 0.0
        %847 = vmatpush1.msra.mxu0 0.0
        %848 = vmatprep.subr.mxu0 0.0
        %849 = vmatpush1.msra.mxu0 0.0
        %850 = vmatprep.subr.mxu0 0.0
        %851 = vmatpush1.msra.mxu0 0.0
        %852 = vmatprep.subr.mxu0 0.0
        %853 = vmatpush1.msra.mxu0 0.0
        %854 = vmatprep.subr.mxu0 0.0
        %855 = vmatpush1.msra.mxu0 0.0
        %856 = vmatprep.subr.mxu0 0.0
        %857 = vmatpush1.msra.mxu0 0.0
        %858 = vmatprep.subr.mxu0 0.0
        %859 = vmatpush1.msra.mxu0 0.0
        %860 = vmatprep.subr.mxu0 0.0
        %861 = vmatpush1.msra.mxu0 0.0
        %862 = vmatprep.subr.mxu0 0.0
        %863 = vmatpush1.msra.mxu0 0.0
        %864 = vmatprep.subr.mxu0 0.0
        %865 = vmatpush1.msra.mxu0 0.0
        %866 = vmatprep.subr.mxu0 0.0
        %867 = vmatpush1.msra.mxu0 0.0
        %868 = vmatprep.subr.mxu0 0.0
        %869 = vmatpush1.msra.mxu0 0.0
        %870 = vmatprep.subr.mxu0 0.0
        %871 = vmatpush1.msra.mxu0 0.0
        %872 = vmatprep.subr.mxu0 0.0
        %873 = vmatpush1.msra.mxu0 0.0
        %874 = vmatprep.subr.mxu0 0.0
        %875 = vmatpush1.msra.mxu0 0.0
        %876 = vmatprep.subr.mxu0 0.0
        %877 = vmatpush1.msra.mxu0 0.0
        %878 = vmatprep.subr.mxu0 0.0
        %879 = vmatpush1.msra.mxu0 0.0
        %880 = vmatprep.subr.mxu0 0.0
        %881 = vmatpush1.msra.mxu0 0.0
        %882 = vmatprep.subr.mxu0 0.0
        %883 = vmatpush1.msra.mxu0 0.0
        %884 = vmatprep.subr.mxu0 0.0
        %885 = vmatpush1.msra.mxu0 0.0
        %886 = vmatprep.mubr.f32.mxu0 0.0
        %887 = vmatmul.mubr.f32.gmra.mrb[0].mxu0 %v727
        %v888 = vpop.f32.mrb[0].mxu0
        %v889 = vadd.f32 %v568, %v888
        %v890 = vpop.f32.mrb[0].mxu0
        %891 = vmatprep.mubr.f32.mxu0 0.0
        %892 = vmatmul.mubr.f32.gmra.mrb[0].mxu0 %v730
        %v893 = vpop.f32.mrb[0].mxu0
        %v894 = vadd.f32 %v573, %v893
        %v895 = vpop.f32.mrb[0].mxu0
        %896 = vmatprep.mubr.f32.mxu0 0.0
        %897 = vmatmul.mubr.f32.gmra.mrb[0].mxu0 %v733
        %v898 = vpop.f32.mrb[0].mxu0
        %v899 = vadd.f32 %v578, %v898
        %v900 = vpop.f32.mrb[0].mxu0
        %901 = vmatprep.mubr.f32.mxu0 0.0
        %902 = vmatmul.mubr.f32.gmra.mrb[0].mxu0 %v736
        %v903 = vpop.f32.mrb[0].mxu0
        %v904 = vadd.f32 %v583, %v903
        %v905 = vpop.f32.mrb[0].mxu0
        %906 = vmatprep.mubr.f32.mxu0 0.0
        %907 = vmatmul.mubr.f32.gmra.mrb[0].mxu0 %v739
        %v908 = vpop.f32.mrb[0].mxu0
        %v909 = vadd.f32 %v588, %v908
        %v910 = vpop.f32.mrb[0].mxu0
        %911 = vmatprep.mubr.f32.mxu0 0.0
        %912 = vmatmul.mubr.f32.gmra.mrb[0].mxu0 %v742
        %v913 = vpop.f32.mrb[0].mxu0
        %v914 = vadd.f32 %v593, %v913
        %v915 = vpop.f32.mrb[0].mxu0
        %916 = vmatprep.mubr.f32.mxu0 0.0
        %917 = vmatmul.mubr.f32.gmra.mrb[0].mxu0 %v745
        %v918 = vpop.f32.mrb[0].mxu0
        %v919 = vadd.f32 %v598, %v918
        %v920 = vpop.f32.mrb[0].mxu0
        %921 = vmatprep.mubr.f32.mxu0 0.0
        %922 = vmatmul.mubr.f32.gmra.mrb[0].mxu0 %v748
        %v923 = vpop.f32.mrb[0].mxu0
        %v924 = vadd.f32 %v603, %v923
        %v925 = vpop.f32.mrb[0].mxu0
        %926 = vmatprep.mubr.f32.mxu0 0.0
        %927 = vmatmul.mubr.f32.gmra.mrb[0].mxu0 %v751
        %v928 = vpop.f32.mrb[0].mxu0
        %v929 = vadd.f32 %v608, %v928
        %v930 = vpop.f32.mrb[0].mxu0
        %931 = vmatprep.mubr.f32.mxu0 0.0
        %932 = vmatmul.mubr.f32.gmra.mrb[0].mxu0 %v754
        %v933 = vpop.f32.mrb[0].mxu0
        %v934 = vadd.f32 %v613, %v933
        %v935 = vpop.f32.mrb[0].mxu0
        %936 = vmatprep.mubr.f32.mxu0 0.0
        %937 = vmatmul.mubr.f32.gmra.mrb[0].mxu0 %v757
        %v938 = vpop.f32.mrb[0].mxu0
        %v939 = vadd.f32 %v618, %v938
        %v940 = vpop.f32.mrb[0].mxu0
        %941 = vmatprep.mubr.f32.mxu0 0.0
        %942 = vmatmul.mubr.f32.gmra.mrb[0].mxu0 %v760
        %v943 = vpop.f32.mrb[0].mxu0
        %v944 = vadd.f32 %v623, %v943
        %v945 = vpop.f32.mrb[0].mxu0
        %946 = vmatprep.mubr.f32.mxu0 0.0
        %947 = vmatmul.mubr.f32.gmra.mrb[0].mxu0 %v763
        %v948 = vpop.f32.mrb[0].mxu0
        %v949 = vadd.f32 %v628, %v948
        %v950 = vpop.f32.mrb[0].mxu0
        %951 = vmatprep.mubr.f32.mxu0 0.0
        %952 = vmatmul.mubr.f32.gmra.mrb[0].mxu0 %v766
        %v953 = vpop.f32.mrb[0].mxu0
        %v954 = vadd.f32 %v633, %v953
        %v955 = vpop.f32.mrb[0].mxu0
        %956 = vmatprep.mubr.f32.mxu0 0.0
        %957 = vmatmul.mubr.f32.gmra.mrb[0].mxu0 %v769
        %v958 = vpop.f32.mrb[0].mxu0
        %v959 = vadd.f32 %v638, %v958
        %v960 = vpop.f32.mrb[0].mxu0
        %961 = vmatprep.mubr.f32.mxu0 0.0
        %962 = vmatmul.mubr.f32.gmra.mrb[0].mxu0 %v772
        %v963 = vpop.f32.mrb[0].mxu0
        %v964 = vadd.f32 %v643, %v963
        %v965 = vpop.f32.mrb[0].mxu0
        %966 = vmatprep.mubr.f32.mxu0 0.0
        %967 = vmatmul.mubr.f32.gmra.mrb[0].mxu0 %v775
        %v968 = vpop.f32.mrb[0].mxu0
        %v969 = vadd.f32 %v648, %v968
        %v970 = vpop.f32.mrb[0].mxu0
        %971 = vmatprep.mubr.f32.mxu0 0.0
        %972 = vmatmul.mubr.f32.gmra.mrb[0].mxu0 %v778
        %v973 = vpop.f32.mrb[0].mxu0
        %v974 = vadd.f32 %v653, %v973
        %v975 = vpop.f32.mrb[0].mxu0
        %976 = vmatprep.mubr.f32.mxu0 0.0
        %977 = vmatmul.mubr.f32.gmra.mrb[0].mxu0 %v781
        %v978 = vpop.f32.mrb[0].mxu0
        %v979 = vadd.f32 %v658, %v978
        %v980 = vpop.f32.mrb[0].mxu0
        %981 = vmatprep.mubr.f32.mxu0 0.0
        %982 = vmatmul.mubr.f32.gmra.mrb[0].mxu0 %v784
        %v983 = vpop.f32.mrb[0].mxu0
        %v984 = vadd.f32 %v663, %v983
        %v985 = vpop.f32.mrb[0].mxu0
        %986 = vmatprep.mubr.f32.mxu0 0.0
        %987 = vmatmul.mubr.f32.gmra.mrb[0].mxu0 %v787
        %v988 = vpop.f32.mrb[0].mxu0
        %v989 = vadd.f32 %v668, %v988
        %v990 = vpop.f32.mrb[0].mxu0
        %991 = vmatprep.mubr.f32.mxu0 0.0
        %992 = vmatmul.mubr.f32.gmra.mrb[0].mxu0 %v790
        %v993 = vpop.f32.mrb[0].mxu0
        %v994 = vadd.f32 %v673, %v993
        %v995 = vpop.f32.mrb[0].mxu0
        %996 = vmatprep.mubr.f32.mxu0 0.0
        %997 = vmatmul.mubr.f32.gmra.mrb[0].mxu0 %v793
        %v998 = vpop.f32.mrb[0].mxu0
        %v999 = vadd.f32 %v678, %v998
        %v1000 = vpop.f32.mrb[0].mxu0
        %1001 = vmatprep.mubr.f32.mxu0 0.0
        %1002 = vmatmul.mubr.f32.gmra.mrb[0].mxu0 %v796
        %v1003 = vpop.f32.mrb[0].mxu0
        %v1004 = vadd.f32 %v683, %v1003
        %v1005 = vpop.f32.mrb[0].mxu0
        %1006 = vmatprep.mubr.f32.mxu0 0.0
        %1007 = vmatmul.mubr.f32.gmra.mrb[0].mxu0 %v799
        %v1008 = vpop.f32.mrb[0].mxu0
        %v1009 = vadd.f32 %v688, %v1008
        %v1010 = vpop.f32.mrb[0].mxu0
        %1011 = vmatprep.mubr.f32.mxu0 0.0
        %1012 = vmatmul.mubr.f32.gmra.mrb[0].mxu0 %v802
        %v1013 = vpop.f32.mrb[0].mxu0
        %v1014 = vadd.f32 %v693, %v1013
        %v1015 = vpop.f32.mrb[0].mxu0
        %1016 = vmatprep.mubr.f32.mxu0 0.0
        %1017 = vmatmul.mubr.f32.gmra.mrb[0].mxu0 %v805
        %v1018 = vpop.f32.mrb[0].mxu0
        %v1019 = vadd.f32 %v698, %v1018
        %v1020 = vpop.f32.mrb[0].mxu0
        %1021 = vmatprep.mubr.f32.mxu0 0.0
        %1022 = vmatmul.mubr.f32.gmra.mrb[0].mxu0 %v808
        %v1023 = vpop.f32.mrb[0].mxu0
        %v1024 = vadd.f32 %v703, %v1023
        %v1025 = vpop.f32.mrb[0].mxu0
        %1026 = vmatprep.mubr.f32.mxu0 0.0
        %1027 = vmatmul.mubr.f32.gmra.mrb[0].mxu0 %v811
        %v1028 = vpop.f32.mrb[0].mxu0
        %v1029 = vadd.f32 %v708, %v1028
        %v1030 = vpop.f32.mrb[0].mxu0
        %1031 = vmatprep.mubr.f32.mxu0 0.0
        %1032 = vmatmul.mubr.f32.gmra.mrb[0].mxu0 %v814
        %v1033 = vpop.f32.mrb[0].mxu0
        %v1034 = vadd.f32 %v713, %v1033
        %v1035 = vpop.f32.mrb[0].mxu0
        %1036 = vmatprep.mubr.f32.mxu0 0.0
        %1037 = vmatmul.mubr.f32.gmra.mrb[0].mxu0 %v817
        %v1038 = vpop.f32.mrb[0].mxu0
        %v1039 = vadd.f32 %v718, %v1038
        %v1040 = vpop.f32.mrb[0].mxu0
        %1041 = vmatprep.mubr.f32.mxu0 0.0
        %1042 = vmatmul.mubr.f32.gmra.mrb[0].mxu0 %v820
        %v1043 = vpop.f32.mrb[0].mxu0
        %v1044 = vadd.f32 %v723, %v1043
        %v1045 = vpop.f32.mrb[0].mxu0
        %1046 = vdwg.mxu0
        %v1047 = vld [vmem:[%s330 + $0x2] sm:$0xff]
        %v1048 = vld [vmem:[%s330 + $0xa] sm:$0xff]
        %v1049 = vld [vmem:[%s330 + $0x1a] sm:$0xff]
        %v1050 = vld [vmem:[%s330 + $0x22] sm:$0xff]
        %v1051 = vld [vmem:[%s330 + $0x32] sm:$0xff]
        %v1052 = vld [vmem:[%s330 + $0x3a] sm:$0xff]
        %v1053 = vld [vmem:[%s330 + $0x4a] sm:$0xff]
        %v1054 = vld [vmem:[%s330 + $0x52] sm:$0xff]
        %v1055 = vld [vmem:[%s330 + $0x62] sm:$0xff]
        %v1056 = vld [vmem:[%s330 + $0x6a] sm:$0xff]
        %v1057 = vld [vmem:[%s330 + $0x7a] sm:$0xff]
        %v1058 = vld [vmem:[%s330 + $0x82] sm:$0xff]
        %v1059 = vld [vmem:[%s330 + $0x92] sm:$0xff]
        %v1060 = vld [vmem:[%s330 + $0x9a] sm:$0xff]
        %v1061 = vld [vmem:[%s330 + $0xaa] sm:$0xff]
        %v1062 = vld [vmem:[%s330 + $0xb2] sm:$0xff]
        %v1063 = vld [vmem:[%s330 + $0xc2] sm:$0xff]
        %v1064 = vld [vmem:[%s330 + $0xca] sm:$0xff]
        %v1065 = vld [vmem:[%s330 + $0xda] sm:$0xff]
        %v1066 = vld [vmem:[%s330 + $0xe2] sm:$0xff]
        %v1067 = vld [vmem:[%s330 + $0xf2] sm:$0xff]
        %v1068 = vld [vmem:[%s330 + $0xfa] sm:$0xff]
        %v1069 = vld [vmem:[%s330 + $0x10a] sm:$0xff]
        %v1070 = vld [vmem:[%s330 + $0x112] sm:$0xff]
        %v1071 = vld [vmem:[%s330 + $0x122] sm:$0xff]
        %v1072 = vld [vmem:[%s330 + $0x12a] sm:$0xff]
        %v1073 = vld [vmem:[%s330 + $0x13a] sm:$0xff]
        %v1074 = vld [vmem:[%s330 + $0x142] sm:$0xff]
        %v1075 = vld [vmem:[%s330 + $0x152] sm:$0xff]
        %v1076 = vld [vmem:[%s330 + $0x15a] sm:$0xff]
        %v1077 = vld [vmem:[%s330 + $0x16a] sm:$0xff]
        %v1078 = vld [vmem:[%s330 + $0x172] sm:$0xff]
        %s1079 = scalar_lea.vmem %s1, 64
        %v1080 = vld [vmem:[%s1079] sm:$0xff]
        %v1081 = vld [vmem:[%s1079 + $0x8] sm:$0xff]
        %v1082 = vld [vmem:[%s1079 + $0x10] sm:$0xff]
        %v1083 = vld [vmem:[%s1079 + $0x18] sm:$0xff]
        %v1085 = vsel %vm404, %v1047, 0
        %v1088 = vsel %vm404, %v1048, 0
        %v1091 = vsel %vm404, %v1049, 0
        %v1094 = vsel %vm404, %v1050, 0
        %v1097 = vsel %vm404, %v1051, 0
        %v1100 = vsel %vm404, %v1052, 0
        %v1103 = vsel %vm404, %v1053, 0
        %v1106 = vsel %vm404, %v1054, 0
        %v1109 = vsel %vm404, %v1055, 0
        %v1112 = vsel %vm404, %v1056, 0
        %v1115 = vsel %vm404, %v1057, 0
        %v1118 = vsel %vm404, %v1058, 0
        %v1121 = vsel %vm404, %v1059, 0
        %v1124 = vsel %vm404, %v1060, 0
        %v1127 = vsel %vm404, %v1061, 0
        %v1130 = vsel %vm404, %v1062, 0
        %v1133 = vsel %vm404, %v1063, 0
        %v1136 = vsel %vm404, %v1064, 0
        %v1139 = vsel %vm404, %v1065, 0
        %v1142 = vsel %vm404, %v1066, 0
        %v1145 = vsel %vm404, %v1067, 0
        %v1148 = vsel %vm404, %v1068, 0
        %v1151 = vsel %vm404, %v1069, 0
        %v1154 = vsel %vm404, %v1070, 0
        %v1157 = vsel %vm404, %v1071, 0
        %v1160 = vsel %vm404, %v1072, 0
        %v1163 = vsel %vm404, %v1073, 0
        %v1166 = vsel %vm404, %v1074, 0
        %v1169 = vsel %vm404, %v1075, 0
        %v1172 = vsel %vm404, %v1076, 0
        %v1175 = vsel %vm404, %v1077, 0
        %v1178 = vsel %vm404, %v1078, 0
        %1180 = vmatprep.subr.mxu0 0.0
        %1181 = vmatpush1.msra.mxu0 %v1080
        %1182 = vmatprep.subr.mxu0 0.0
        %1183 = vmatpush1.msra.mxu0 %v1081
        %1184 = vmatprep.subr.mxu0 0.0
        %1185 = vmatpush1.msra.mxu0 %v1082
        %1186 = vmatprep.subr.mxu0 0.0
        %1187 = vmatpush1.msra.mxu0 %v1083
        %1188 = vmatprep.subr.mxu0 0.0
        %1189 = vmatpush1.msra.mxu0 0.0
        %1190 = vmatprep.subr.mxu0 0.0
        %1191 = vmatpush1.msra.mxu0 0.0
        %1192 = vmatprep.subr.mxu0 0.0
        %1193 = vmatpush1.msra.mxu0 0.0
        %1194 = vmatprep.subr.mxu0 0.0
        %1195 = vmatpush1.msra.mxu0 0.0
        %1196 = vmatprep.subr.mxu0 0.0
        %1197 = vmatpush1.msra.mxu0 0.0
        %1198 = vmatprep.subr.mxu0 0.0
        %1199 = vmatpush1.msra.mxu0 0.0
        %1200 = vmatprep.subr.mxu0 0.0
        %1201 = vmatpush1.msra.mxu0 0.0
        %1202 = vmatprep.subr.mxu0 0.0
        %1203 = vmatpush1.msra.mxu0 0.0
        %1204 = vmatprep.subr.mxu0 0.0
        %1205 = vmatpush1.msra.mxu0 0.0
        %1206 = vmatprep.subr.mxu0 0.0
        %1207 = vmatpush1.msra.mxu0 0.0
        %1208 = vmatprep.subr.mxu0 0.0
        %1209 = vmatpush1.msra.mxu0 0.0
        %1210 = vmatprep.subr.mxu0 0.0
        %1211 = vmatpush1.msra.mxu0 0.0
        %1212 = vmatprep.subr.mxu0 0.0
        %1213 = vmatpush1.msra.mxu0 0.0
        %1214 = vmatprep.subr.mxu0 0.0
        %1215 = vmatpush1.msra.mxu0 0.0
        %1216 = vmatprep.subr.mxu0 0.0
        %1217 = vmatpush1.msra.mxu0 0.0
        %1218 = vmatprep.subr.mxu0 0.0
        %1219 = vmatpush1.msra.mxu0 0.0
        %1220 = vmatprep.subr.mxu0 0.0
        %1221 = vmatpush1.msra.mxu0 0.0
        %1222 = vmatprep.subr.mxu0 0.0
        %1223 = vmatpush1.msra.mxu0 0.0
        %1224 = vmatprep.subr.mxu0 0.0
        %1225 = vmatpush1.msra.mxu0 0.0
        %1226 = vmatprep.subr.mxu0 0.0
        %1227 = vmatpush1.msra.mxu0 0.0
        %1228 = vmatprep.subr.mxu0 0.0
        %1229 = vmatpush1.msra.mxu0 0.0
        %1230 = vmatprep.subr.mxu0 0.0
        %1231 = vmatpush1.msra.mxu0 0.0
        %1232 = vmatprep.subr.mxu0 0.0
        %1233 = vmatpush1.msra.mxu0 0.0
        %1234 = vmatprep.subr.mxu0 0.0
        %1235 = vmatpush1.msra.mxu0 0.0
        %1236 = vmatprep.subr.mxu0 0.0
        %1237 = vmatpush1.msra.mxu0 0.0
        %1238 = vmatprep.subr.mxu0 0.0
        %1239 = vmatpush1.msra.mxu0 0.0
        %1240 = vmatprep.subr.mxu0 0.0
        %1241 = vmatpush1.msra.mxu0 0.0
        %1242 = vmatprep.subr.mxu0 0.0
        %1243 = vmatpush1.msra.mxu0 0.0
        %1244 = vmatprep.mubr.f32.mxu0 0.0
        %1245 = vmatmul.mubr.f32.gmra.mrb[0].mxu0 %v1085
        %v1246 = vpop.f32.mrb[0].mxu0
        %v1247 = vadd.f32 0.0, %v1246
        %v1248 = vpop.f32.mrb[0].mxu0
        %1249 = vmatprep.mubr.f32.mxu0 0.0
        %1250 = vmatmul.mubr.f32.gmra.mrb[0].mxu0 %v1088
        %v1251 = vpop.f32.mrb[0].mxu0
        %v1252 = vadd.f32 0.0, %v1251
        %v1253 = vpop.f32.mrb[0].mxu0
        %1254 = vmatprep.mubr.f32.mxu0 0.0
        %1255 = vmatmul.mubr.f32.gmra.mrb[0].mxu0 %v1091
        %v1256 = vpop.f32.mrb[0].mxu0
        %v1257 = vadd.f32 0.0, %v1256
        %v1258 = vpop.f32.mrb[0].mxu0
        %1259 = vmatprep.mubr.f32.mxu0 0.0
        %1260 = vmatmul.mubr.f32.gmra.mrb[0].mxu0 %v1094
        %v1261 = vpop.f32.mrb[0].mxu0
        %v1262 = vadd.f32 0.0, %v1261
        %v1263 = vpop.f32.mrb[0].mxu0
        %1264 = vmatprep.mubr.f32.mxu0 0.0
        %1265 = vmatmul.mubr.f32.gmra.mrb[0].mxu0 %v1097
        %v1266 = vpop.f32.mrb[0].mxu0
        %v1267 = vadd.f32 0.0, %v1266
        %v1268 = vpop.f32.mrb[0].mxu0
        %1269 = vmatprep.mubr.f32.mxu0 0.0
        %1270 = vmatmul.mubr.f32.gmra.mrb[0].mxu0 %v1100
        %v1271 = vpop.f32.mrb[0].mxu0
        %v1272 = vadd.f32 0.0, %v1271
        %v1273 = vpop.f32.mrb[0].mxu0
        %1274 = vmatprep.mubr.f32.mxu0 0.0
        %1275 = vmatmul.mubr.f32.gmra.mrb[0].mxu0 %v1103
        %v1276 = vpop.f32.mrb[0].mxu0
        %v1277 = vadd.f32 0.0, %v1276
        %v1278 = vpop.f32.mrb[0].mxu0
        %1279 = vmatprep.mubr.f32.mxu0 0.0
        %1280 = vmatmul.mubr.f32.gmra.mrb[0].mxu0 %v1106
        %v1281 = vpop.f32.mrb[0].mxu0
        %v1282 = vadd.f32 0.0, %v1281
        %v1283 = vpop.f32.mrb[0].mxu0
        %1284 = vmatprep.mubr.f32.mxu0 0.0
        %1285 = vmatmul.mubr.f32.gmra.mrb[0].mxu0 %v1109
        %v1286 = vpop.f32.mrb[0].mxu0
        %v1287 = vadd.f32 0.0, %v1286
        %v1288 = vpop.f32.mrb[0].mxu0
        %1289 = vmatprep.mubr.f32.mxu0 0.0
        %1290 = vmatmul.mubr.f32.gmra.mrb[0].mxu0 %v1112
        %v1291 = vpop.f32.mrb[0].mxu0
        %v1292 = vadd.f32 0.0, %v1291
        %v1293 = vpop.f32.mrb[0].mxu0
        %1294 = vmatprep.mubr.f32.mxu0 0.0
        %1295 = vmatmul.mubr.f32.gmra.mrb[0].mxu0 %v1115
        %v1296 = vpop.f32.mrb[0].mxu0
        %v1297 = vadd.f32 0.0, %v1296
        %v1298 = vpop.f32.mrb[0].mxu0
        %1299 = vmatprep.mubr.f32.mxu0 0.0
        %1300 = vmatmul.mubr.f32.gmra.mrb[0].mxu0 %v1118
        %v1301 = vpop.f32.mrb[0].mxu0
        %v1302 = vadd.f32 0.0, %v1301
        %v1303 = vpop.f32.mrb[0].mxu0
        %1304 = vmatprep.mubr.f32.mxu0 0.0
        %1305 = vmatmul.mubr.f32.gmra.mrb[0].mxu0 %v1121
        %v1306 = vpop.f32.mrb[0].mxu0
        %v1307 = vadd.f32 0.0, %v1306
        %v1308 = vpop.f32.mrb[0].mxu0
        %1309 = vmatprep.mubr.f32.mxu0 0.0
        %1310 = vmatmul.mubr.f32.gmra.mrb[0].mxu0 %v1124
        %v1311 = vpop.f32.mrb[0].mxu0
        %v1312 = vadd.f32 0.0, %v1311
        %v1313 = vpop.f32.mrb[0].mxu0
        %1314 = vmatprep.mubr.f32.mxu0 0.0
        %1315 = vmatmul.mubr.f32.gmra.mrb[0].mxu0 %v1127
        %v1316 = vpop.f32.mrb[0].mxu0
        %v1317 = vadd.f32 0.0, %v1316
        %v1318 = vpop.f32.mrb[0].mxu0
        %1319 = vmatprep.mubr.f32.mxu0 0.0
        %1320 = vmatmul.mubr.f32.gmra.mrb[0].mxu0 %v1130
        %v1321 = vpop.f32.mrb[0].mxu0
        %v1322 = vadd.f32 0.0, %v1321
        %v1323 = vpop.f32.mrb[0].mxu0
        %1324 = vmatprep.mubr.f32.mxu0 0.0
        %1325 = vmatmul.mubr.f32.gmra.mrb[0].mxu0 %v1133
        %v1326 = vpop.f32.mrb[0].mxu0
        %v1327 = vadd.f32 0.0, %v1326
        %v1328 = vpop.f32.mrb[0].mxu0
        %1329 = vmatprep.mubr.f32.mxu0 0.0
        %1330 = vmatmul.mubr.f32.gmra.mrb[0].mxu0 %v1136
        %v1331 = vpop.f32.mrb[0].mxu0
        %v1332 = vadd.f32 0.0, %v1331
        %v1333 = vpop.f32.mrb[0].mxu0
        %1334 = vmatprep.mubr.f32.mxu0 0.0
        %1335 = vmatmul.mubr.f32.gmra.mrb[0].mxu0 %v1139
        %v1336 = vpop.f32.mrb[0].mxu0
        %v1337 = vadd.f32 0.0, %v1336
        %v1338 = vpop.f32.mrb[0].mxu0
        %1339 = vmatprep.mubr.f32.mxu0 0.0
        %1340 = vmatmul.mubr.f32.gmra.mrb[0].mxu0 %v1142
        %v1341 = vpop.f32.mrb[0].mxu0
        %v1342 = vadd.f32 0.0, %v1341
        %v1343 = vpop.f32.mrb[0].mxu0
        %1344 = vmatprep.mubr.f32.mxu0 0.0
        %1345 = vmatmul.mubr.f32.gmra.mrb[0].mxu0 %v1145
        %v1346 = vpop.f32.mrb[0].mxu0
        %v1347 = vadd.f32 0.0, %v1346
        %v1348 = vpop.f32.mrb[0].mxu0
        %1349 = vmatprep.mubr.f32.mxu0 0.0
        %1350 = vmatmul.mubr.f32.gmra.mrb[0].mxu0 %v1148
        %v1351 = vpop.f32.mrb[0].mxu0
        %v1352 = vadd.f32 0.0, %v1351
        %v1353 = vpop.f32.mrb[0].mxu0
        %1354 = vmatprep.mubr.f32.mxu0 0.0
        %1355 = vmatmul.mubr.f32.gmra.mrb[0].mxu0 %v1151
        %v1356 = vpop.f32.mrb[0].mxu0
        %v1357 = vadd.f32 0.0, %v1356
        %v1358 = vpop.f32.mrb[0].mxu0
        %1359 = vmatprep.mubr.f32.mxu0 0.0
        %1360 = vmatmul.mubr.f32.gmra.mrb[0].mxu0 %v1154
        %v1361 = vpop.f32.mrb[0].mxu0
        %v1362 = vadd.f32 0.0, %v1361
        %v1363 = vpop.f32.mrb[0].mxu0
        %1364 = vmatprep.mubr.f32.mxu0 0.0
        %1365 = vmatmul.mubr.f32.gmra.mrb[0].mxu0 %v1157
        %v1366 = vpop.f32.mrb[0].mxu0
        %v1367 = vadd.f32 0.0, %v1366
        %v1368 = vpop.f32.mrb[0].mxu0
        %1369 = vmatprep.mubr.f32.mxu0 0.0
        %1370 = vmatmul.mubr.f32.gmra.mrb[0].mxu0 %v1160
        %v1371 = vpop.f32.mrb[0].mxu0
        %v1372 = vadd.f32 0.0, %v1371
        %v1373 = vpop.f32.mrb[0].mxu0
        %1374 = vmatprep.mubr.f32.mxu0 0.0
        %1375 = vmatmul.mubr.f32.gmra.mrb[0].mxu0 %v1163
        %v1376 = vpop.f32.mrb[0].mxu0
        %v1377 = vadd.f32 0.0, %v1376
        %v1378 = vpop.f32.mrb[0].mxu0
        %1379 = vmatprep.mubr.f32.mxu0 0.0
        %1380 = vmatmul.mubr.f32.gmra.mrb[0].mxu0 %v1166
        %v1381 = vpop.f32.mrb[0].mxu0
        %v1382 = vadd.f32 0.0, %v1381
        %v1383 = vpop.f32.mrb[0].mxu0
        %1384 = vmatprep.mubr.f32.mxu0 0.0
        %1385 = vmatmul.mubr.f32.gmra.mrb[0].mxu0 %v1169
        %v1386 = vpop.f32.mrb[0].mxu0
        %v1387 = vadd.f32 0.0, %v1386
        %v1388 = vpop.f32.mrb[0].mxu0
        %1389 = vmatprep.mubr.f32.mxu0 0.0
        %1390 = vmatmul.mubr.f32.gmra.mrb[0].mxu0 %v1172
        %v1391 = vpop.f32.mrb[0].mxu0
        %v1392 = vadd.f32 0.0, %v1391
        %v1393 = vpop.f32.mrb[0].mxu0
        %1394 = vmatprep.mubr.f32.mxu0 0.0
        %1395 = vmatmul.mubr.f32.gmra.mrb[0].mxu0 %v1175
        %v1396 = vpop.f32.mrb[0].mxu0
        %v1397 = vadd.f32 0.0, %v1396
        %v1398 = vpop.f32.mrb[0].mxu0
        %1399 = vmatprep.mubr.f32.mxu0 0.0
        %1400 = vmatmul.mubr.f32.gmra.mrb[0].mxu0 %v1178
        %v1401 = vpop.f32.mrb[0].mxu0
        %v1402 = vadd.f32 0.0, %v1401
        %v1403 = vpop.f32.mrb[0].mxu0
        %1404 = vdwg.mxu0
        %v1405 = vadd.f32 %v889, %v1247
        %v1406 = vadd.f32 %v894, %v1252
        %v1407 = vadd.f32 %v899, %v1257
        %v1408 = vadd.f32 %v904, %v1262
        %v1409 = vadd.f32 %v909, %v1267
        %v1410 = vadd.f32 %v914, %v1272
        %v1411 = vadd.f32 %v919, %v1277
        %v1412 = vadd.f32 %v924, %v1282
        %v1413 = vadd.f32 %v929, %v1287
        %v1414 = vadd.f32 %v934, %v1292
        %v1415 = vadd.f32 %v939, %v1297
        %v1416 = vadd.f32 %v944, %v1302
        %v1417 = vadd.f32 %v949, %v1307
        %v1418 = vadd.f32 %v954, %v1312
        %v1419 = vadd.f32 %v959, %v1317
        %v1420 = vadd.f32 %v964, %v1322
        %v1421 = vadd.f32 %v969, %v1327
        %v1422 = vadd.f32 %v974, %v1332
        %v1423 = vadd.f32 %v979, %v1337
        %v1424 = vadd.f32 %v984, %v1342
        %v1425 = vadd.f32 %v989, %v1347
        %v1426 = vadd.f32 %v994, %v1352
        %v1427 = vadd.f32 %v999, %v1357
        %v1428 = vadd.f32 %v1004, %v1362
        %v1429 = vadd.f32 %v1009, %v1367
        %v1430 = vadd.f32 %v1014, %v1372
        %v1431 = vadd.f32 %v1019, %v1377
        %v1432 = vadd.f32 %v1024, %v1382
        %v1433 = vadd.f32 %v1029, %v1387
        %v1434 = vadd.f32 %v1034, %v1392
        %v1435 = vadd.f32 %v1039, %v1397
        %v1436 = vadd.f32 %v1044, %v1402
        %s1437 = scalar_lea.vmem %s330, 24
        %v1438 = vld [vmem:[%s1437] sm:$0xff]
        %v1439 = vld [vmem:[%s1437 + $0x8] sm:$0xff]
        %v1440 = vld [vmem:[%s1437 + $0x18] sm:$0xff]
        %v1441 = vld [vmem:[%s1437 + $0x20] sm:$0xff]
        %v1442 = vld [vmem:[%s1437 + $0x30] sm:$0xff]
        %v1443 = vld [vmem:[%s1437 + $0x38] sm:$0xff]
        %v1444 = vld [vmem:[%s1437 + $0x48] sm:$0xff]
        %v1445 = vld [vmem:[%s1437 + $0x50] sm:$0xff]
        %v1446 = vld [vmem:[%s1437 + $0x60] sm:$0xff]
        %v1447 = vld [vmem:[%s1437 + $0x68] sm:$0xff]
        %v1448 = vld [vmem:[%s1437 + $0x78] sm:$0xff]
        %v1449 = vld [vmem:[%s1437 + $0x80] sm:$0xff]
        %v1450 = vld [vmem:[%s1437 + $0x90] sm:$0xff]
        %v1451 = vld [vmem:[%s1437 + $0x98] sm:$0xff]
        %v1452 = vld [vmem:[%s1437 + $0xa8] sm:$0xff]
        %v1453 = vld [vmem:[%s1437 + $0xb0] sm:$0xff]
        %v1454 = vld [vmem:[%s1437 + $0xc0] sm:$0xff]
        %v1455 = vld [vmem:[%s1437 + $0xc8] sm:$0xff]
        %v1456 = vld [vmem:[%s1437 + $0xd8] sm:$0xff]
        %v1457 = vld [vmem:[%s1437 + $0xe0] sm:$0xff]
        %v1458 = vld [vmem:[%s1437 + $0xf0] sm:$0xff]
        %v1459 = vld [vmem:[%s1437 + $0xf8] sm:$0xff]
        %v1460 = vld [vmem:[%s1437 + $0x108] sm:$0xff]
        %v1461 = vld [vmem:[%s1437 + $0x110] sm:$0xff]
        %v1462 = vld [vmem:[%s1437 + $0x120] sm:$0xff]
        %v1463 = vld [vmem:[%s1437 + $0x128] sm:$0xff]
        %v1464 = vld [vmem:[%s1437 + $0x138] sm:$0xff]
        %v1465 = vld [vmem:[%s1437 + $0x140] sm:$0xff]
        %v1466 = vld [vmem:[%s1437 + $0x150] sm:$0xff]
        %v1467 = vld [vmem:[%s1437 + $0x158] sm:$0xff]
        %v1468 = vld [vmem:[%s1437 + $0x168] sm:$0xff]
        %v1469 = vld [vmem:[%s1437 + $0x170] sm:$0xff]
        %s1470 = scalar_lea.vmem %s1, 96
        %v1471 = vld [vmem:[%s1470] sm:$0xff]
        %v1472 = vld [vmem:[%s1470 + $0x8] sm:$0xff]
        %v1473 = vld [vmem:[%s1470 + $0x10] sm:$0xff]
        %v1474 = vld [vmem:[%s1470 + $0x18] sm:$0xff]
        %v1476 = vsel %vm404, %v1438, 0
        %v1479 = vsel %vm404, %v1439, 0
        %v1482 = vsel %vm404, %v1440, 0
        %v1485 = vsel %vm404, %v1441, 0
        %v1488 = vsel %vm404, %v1442, 0
        %v1491 = vsel %vm404, %v1443, 0
        %v1494 = vsel %vm404, %v1444, 0
        %v1497 = vsel %vm404, %v1445, 0
        %v1500 = vsel %vm404, %v1446, 0
        %v1503 = vsel %vm404, %v1447, 0
        %v1506 = vsel %vm404, %v1448, 0
        %v1509 = vsel %vm404, %v1449, 0
        %v1512 = vsel %vm404, %v1450, 0
        %v1515 = vsel %vm404, %v1451, 0
        %v1518 = vsel %vm404, %v1452, 0
        %v1521 = vsel %vm404, %v1453, 0
        %v1524 = vsel %vm404, %v1454, 0
        %v1527 = vsel %vm404, %v1455, 0
        %v1530 = vsel %vm404, %v1456, 0
        %v1533 = vsel %vm404, %v1457, 0
        %v1536 = vsel %vm404, %v1458, 0
        %v1539 = vsel %vm404, %v1459, 0
        %v1542 = vsel %vm404, %v1460, 0
        %v1545 = vsel %vm404, %v1461, 0
        %v1548 = vsel %vm404, %v1462, 0
        %v1551 = vsel %vm404, %v1463, 0
        %v1554 = vsel %vm404, %v1464, 0
        %v1557 = vsel %vm404, %v1465, 0
        %v1560 = vsel %vm404, %v1466, 0
        %v1563 = vsel %vm404, %v1467, 0
        %v1566 = vsel %vm404, %v1468, 0
        %v1569 = vsel %vm404, %v1469, 0
        %1571 = vmatprep.subr.mxu0 0.0
        %1572 = vmatpush1.msra.mxu0 %v1471
        %1573 = vmatprep.subr.mxu0 0.0
        %1574 = vmatpush1.msra.mxu0 %v1472
        %1575 = vmatprep.subr.mxu0 0.0
        %1576 = vmatpush1.msra.mxu0 %v1473
        %1577 = vmatprep.subr.mxu0 0.0
        %1578 = vmatpush1.msra.mxu0 %v1474
        %1579 = vmatprep.subr.mxu0 0.0
        %1580 = vmatpush1.msra.mxu0 0.0
        %1581 = vmatprep.subr.mxu0 0.0
        %1582 = vmatpush1.msra.mxu0 0.0
        %1583 = vmatprep.subr.mxu0 0.0
        %1584 = vmatpush1.msra.mxu0 0.0
        %1585 = vmatprep.subr.mxu0 0.0
        %1586 = vmatpush1.msra.mxu0 0.0
        %1587 = vmatprep.subr.mxu0 0.0
        %1588 = vmatpush1.msra.mxu0 0.0
        %1589 = vmatprep.subr.mxu0 0.0
        %1590 = vmatpush1.msra.mxu0 0.0
        %1591 = vmatprep.subr.mxu0 0.0
        %1592 = vmatpush1.msra.mxu0 0.0
        %1593 = vmatprep.subr.mxu0 0.0
        %1594 = vmatpush1.msra.mxu0 0.0
        %1595 = vmatprep.subr.mxu0 0.0
        %1596 = vmatpush1.msra.mxu0 0.0
        %1597 = vmatprep.subr.mxu0 0.0
        %1598 = vmatpush1.msra.mxu0 0.0
        %1599 = vmatprep.subr.mxu0 0.0
        %1600 = vmatpush1.msra.mxu0 0.0
        %1601 = vmatprep.subr.mxu0 0.0
        %1602 = vmatpush1.msra.mxu0 0.0
        %1603 = vmatprep.subr.mxu0 0.0
        %1604 = vmatpush1.msra.mxu0 0.0
        %1605 = vmatprep.subr.mxu0 0.0
        %1606 = vmatpush1.msra.mxu0 0.0
        %1607 = vmatprep.subr.mxu0 0.0
        %1608 = vmatpush1.msra.mxu0 0.0
        %1609 = vmatprep.subr.mxu0 0.0
        %1610 = vmatpush1.msra.mxu0 0.0
        %1611 = vmatprep.subr.mxu0 0.0
        %1612 = vmatpush1.msra.mxu0 0.0
        %1613 = vmatprep.subr.mxu0 0.0
        %1614 = vmatpush1.msra.mxu0 0.0
        %1615 = vmatprep.subr.mxu0 0.0
        %1616 = vmatpush1.msra.mxu0 0.0
        %1617 = vmatprep.subr.mxu0 0.0
        %1618 = vmatpush1.msra.mxu0 0.0
        %1619 = vmatprep.subr.mxu0 0.0
        %1620 = vmatpush1.msra.mxu0 0.0
        %1621 = vmatprep.subr.mxu0 0.0
        %1622 = vmatpush1.msra.mxu0 0.0
        %1623 = vmatprep.subr.mxu0 0.0
        %1624 = vmatpush1.msra.mxu0 0.0
        %1625 = vmatprep.subr.mxu0 0.0
        %1626 = vmatpush1.msra.mxu0 0.0
        %1627 = vmatprep.subr.mxu0 0.0
        %1628 = vmatpush1.msra.mxu0 0.0
        %1629 = vmatprep.subr.mxu0 0.0
        %1630 = vmatpush1.msra.mxu0 0.0
        %1631 = vmatprep.subr.mxu0 0.0
        %1632 = vmatpush1.msra.mxu0 0.0
        %1633 = vmatprep.subr.mxu0 0.0
        %1634 = vmatpush1.msra.mxu0 0.0
        %1635 = vmatprep.mubr.f32.mxu0 0.0
        %1636 = vmatmul.mubr.f32.gmra.mrb[0].mxu0 %v1476
        %v1637 = vpop.f32.mrb[0].mxu0
        %v1638 = vadd.f32 0.0, %v1637
        %v1639 = vpop.f32.mrb[0].mxu0
        %1640 = vmatprep.mubr.f32.mxu0 0.0
        %1641 = vmatmul.mubr.f32.gmra.mrb[0].mxu0 %v1479
        %v1642 = vpop.f32.mrb[0].mxu0
        %v1643 = vadd.f32 0.0, %v1642
        %v1644 = vpop.f32.mrb[0].mxu0
        %1645 = vmatprep.mubr.f32.mxu0 0.0
        %1646 = vmatmul.mubr.f32.gmra.mrb[0].mxu0 %v1482
        %v1647 = vpop.f32.mrb[0].mxu0
        %v1648 = vadd.f32 0.0, %v1647
        %v1649 = vpop.f32.mrb[0].mxu0
        %1650 = vmatprep.mubr.f32.mxu0 0.0
        %1651 = vmatmul.mubr.f32.gmra.mrb[0].mxu0 %v1485
        %v1652 = vpop.f32.mrb[0].mxu0
        %v1653 = vadd.f32 0.0, %v1652
        %v1654 = vpop.f32.mrb[0].mxu0
        %1655 = vmatprep.mubr.f32.mxu0 0.0
        %1656 = vmatmul.mubr.f32.gmra.mrb[0].mxu0 %v1488
        %v1657 = vpop.f32.mrb[0].mxu0
        %v1658 = vadd.f32 0.0, %v1657
        %v1659 = vpop.f32.mrb[0].mxu0
        %1660 = vmatprep.mubr.f32.mxu0 0.0
        %1661 = vmatmul.mubr.f32.gmra.mrb[0].mxu0 %v1491
        %v1662 = vpop.f32.mrb[0].mxu0
        %v1663 = vadd.f32 0.0, %v1662
        %v1664 = vpop.f32.mrb[0].mxu0
        %1665 = vmatprep.mubr.f32.mxu0 0.0
        %1666 = vmatmul.mubr.f32.gmra.mrb[0].mxu0 %v1494
        %v1667 = vpop.f32.mrb[0].mxu0
        %v1668 = vadd.f32 0.0, %v1667
        %v1669 = vpop.f32.mrb[0].mxu0
        %1670 = vmatprep.mubr.f32.mxu0 0.0
        %1671 = vmatmul.mubr.f32.gmra.mrb[0].mxu0 %v1497
        %v1672 = vpop.f32.mrb[0].mxu0
        %v1673 = vadd.f32 0.0, %v1672
        %v1674 = vpop.f32.mrb[0].mxu0
        %1675 = vmatprep.mubr.f32.mxu0 0.0
        %1676 = vmatmul.mubr.f32.gmra.mrb[0].mxu0 %v1500
        %v1677 = vpop.f32.mrb[0].mxu0
        %v1678 = vadd.f32 0.0, %v1677
        %v1679 = vpop.f32.mrb[0].mxu0
        %1680 = vmatprep.mubr.f32.mxu0 0.0
        %1681 = vmatmul.mubr.f32.gmra.mrb[0].mxu0 %v1503
        %v1682 = vpop.f32.mrb[0].mxu0
        %v1683 = vadd.f32 0.0, %v1682
        %v1684 = vpop.f32.mrb[0].mxu0
        %1685 = vmatprep.mubr.f32.mxu0 0.0
        %1686 = vmatmul.mubr.f32.gmra.mrb[0].mxu0 %v1506
        %v1687 = vpop.f32.mrb[0].mxu0
        %v1688 = vadd.f32 0.0, %v1687
        %v1689 = vpop.f32.mrb[0].mxu0
        %1690 = vmatprep.mubr.f32.mxu0 0.0
        %1691 = vmatmul.mubr.f32.gmra.mrb[0].mxu0 %v1509
        %v1692 = vpop.f32.mrb[0].mxu0
        %v1693 = vadd.f32 0.0, %v1692
        %v1694 = vpop.f32.mrb[0].mxu0
        %1695 = vmatprep.mubr.f32.mxu0 0.0
        %1696 = vmatmul.mubr.f32.gmra.mrb[0].mxu0 %v1512
        %v1697 = vpop.f32.mrb[0].mxu0
        %v1698 = vadd.f32 0.0, %v1697
        %v1699 = vpop.f32.mrb[0].mxu0
        %1700 = vmatprep.mubr.f32.mxu0 0.0
        %1701 = vmatmul.mubr.f32.gmra.mrb[0].mxu0 %v1515
        %v1702 = vpop.f32.mrb[0].mxu0
        %v1703 = vadd.f32 0.0, %v1702
        %v1704 = vpop.f32.mrb[0].mxu0
        %1705 = vmatprep.mubr.f32.mxu0 0.0
        %1706 = vmatmul.mubr.f32.gmra.mrb[0].mxu0 %v1518
        %v1707 = vpop.f32.mrb[0].mxu0
        %v1708 = vadd.f32 0.0, %v1707
        %v1709 = vpop.f32.mrb[0].mxu0
        %1710 = vmatprep.mubr.f32.mxu0 0.0
        %1711 = vmatmul.mubr.f32.gmra.mrb[0].mxu0 %v1521
        %v1712 = vpop.f32.mrb[0].mxu0
        %v1713 = vadd.f32 0.0, %v1712
        %v1714 = vpop.f32.mrb[0].mxu0
        %1715 = vmatprep.mubr.f32.mxu0 0.0
        %1716 = vmatmul.mubr.f32.gmra.mrb[0].mxu0 %v1524
        %v1717 = vpop.f32.mrb[0].mxu0
        %v1718 = vadd.f32 0.0, %v1717
        %v1719 = vpop.f32.mrb[0].mxu0
        %1720 = vmatprep.mubr.f32.mxu0 0.0
        %1721 = vmatmul.mubr.f32.gmra.mrb[0].mxu0 %v1527
        %v1722 = vpop.f32.mrb[0].mxu0
        %v1723 = vadd.f32 0.0, %v1722
        %v1724 = vpop.f32.mrb[0].mxu0
        %1725 = vmatprep.mubr.f32.mxu0 0.0
        %1726 = vmatmul.mubr.f32.gmra.mrb[0].mxu0 %v1530
        %v1727 = vpop.f32.mrb[0].mxu0
        %v1728 = vadd.f32 0.0, %v1727
        %v1729 = vpop.f32.mrb[0].mxu0
        %1730 = vmatprep.mubr.f32.mxu0 0.0
        %1731 = vmatmul.mubr.f32.gmra.mrb[0].mxu0 %v1533
        %v1732 = vpop.f32.mrb[0].mxu0
        %v1733 = vadd.f32 0.0, %v1732
        %v1734 = vpop.f32.mrb[0].mxu0
        %1735 = vmatprep.mubr.f32.mxu0 0.0
        %1736 = vmatmul.mubr.f32.gmra.mrb[0].mxu0 %v1536
        %v1737 = vpop.f32.mrb[0].mxu0
        %v1738 = vadd.f32 0.0, %v1737
        %v1739 = vpop.f32.mrb[0].mxu0
        %1740 = vmatprep.mubr.f32.mxu0 0.0
        %1741 = vmatmul.mubr.f32.gmra.mrb[0].mxu0 %v1539
        %v1742 = vpop.f32.mrb[0].mxu0
        %v1743 = vadd.f32 0.0, %v1742
        %v1744 = vpop.f32.mrb[0].mxu0
        %1745 = vmatprep.mubr.f32.mxu0 0.0
        %1746 = vmatmul.mubr.f32.gmra.mrb[0].mxu0 %v1542
        %v1747 = vpop.f32.mrb[0].mxu0
        %v1748 = vadd.f32 0.0, %v1747
        %v1749 = vpop.f32.mrb[0].mxu0
        %1750 = vmatprep.mubr.f32.mxu0 0.0
        %1751 = vmatmul.mubr.f32.gmra.mrb[0].mxu0 %v1545
        %v1752 = vpop.f32.mrb[0].mxu0
        %v1753 = vadd.f32 0.0, %v1752
        %v1754 = vpop.f32.mrb[0].mxu0
        %1755 = vmatprep.mubr.f32.mxu0 0.0
        %1756 = vmatmul.mubr.f32.gmra.mrb[0].mxu0 %v1548
        %v1757 = vpop.f32.mrb[0].mxu0
        %v1758 = vadd.f32 0.0, %v1757
        %v1759 = vpop.f32.mrb[0].mxu0
        %1760 = vmatprep.mubr.f32.mxu0 0.0
        %1761 = vmatmul.mubr.f32.gmra.mrb[0].mxu0 %v1551
        %v1762 = vpop.f32.mrb[0].mxu0
        %v1763 = vadd.f32 0.0, %v1762
        %v1764 = vpop.f32.mrb[0].mxu0
        %1765 = vmatprep.mubr.f32.mxu0 0.0
        %1766 = vmatmul.mubr.f32.gmra.mrb[0].mxu0 %v1554
        %v1767 = vpop.f32.mrb[0].mxu0
        %v1768 = vadd.f32 0.0, %v1767
        %v1769 = vpop.f32.mrb[0].mxu0
        %1770 = vmatprep.mubr.f32.mxu0 0.0
        %1771 = vmatmul.mubr.f32.gmra.mrb[0].mxu0 %v1557
        %v1772 = vpop.f32.mrb[0].mxu0
        %v1773 = vadd.f32 0.0, %v1772
        %v1774 = vpop.f32.mrb[0].mxu0
        %1775 = vmatprep.mubr.f32.mxu0 0.0
        %1776 = vmatmul.mubr.f32.gmra.mrb[0].mxu0 %v1560
        %v1777 = vpop.f32.mrb[0].mxu0
        %v1778 = vadd.f32 0.0, %v1777
        %v1779 = vpop.f32.mrb[0].mxu0
        %1780 = vmatprep.mubr.f32.mxu0 0.0
        %1781 = vmatmul.mubr.f32.gmra.mrb[0].mxu0 %v1563
        %v1782 = vpop.f32.mrb[0].mxu0
        %v1783 = vadd.f32 0.0, %v1782
        %v1784 = vpop.f32.mrb[0].mxu0
        %1785 = vmatprep.mubr.f32.mxu0 0.0
        %1786 = vmatmul.mubr.f32.gmra.mrb[0].mxu0 %v1566
        %v1787 = vpop.f32.mrb[0].mxu0
        %v1788 = vadd.f32 0.0, %v1787
        %v1789 = vpop.f32.mrb[0].mxu0
        %1790 = vmatprep.mubr.f32.mxu0 0.0
        %1791 = vmatmul.mubr.f32.gmra.mrb[0].mxu0 %v1569
        %v1792 = vpop.f32.mrb[0].mxu0
        %v1793 = vadd.f32 0.0, %v1792
        %v1794 = vpop.f32.mrb[0].mxu0
        %1795 = vdwg.mxu0
        %v1796 = vadd.f32 %v1405, %v1638
        %v1797 = vadd.f32 %v1406, %v1643
        %v1798 = vadd.f32 %v1407, %v1648
        %v1799 = vadd.f32 %v1408, %v1653
        %v1800 = vadd.f32 %v1409, %v1658
        %v1801 = vadd.f32 %v1410, %v1663
        %v1802 = vadd.f32 %v1411, %v1668
        %v1803 = vadd.f32 %v1412, %v1673
        %v1804 = vadd.f32 %v1413, %v1678
        %v1805 = vadd.f32 %v1414, %v1683
        %v1806 = vadd.f32 %v1415, %v1688
        %v1807 = vadd.f32 %v1416, %v1693
        %v1808 = vadd.f32 %v1417, %v1698
        %v1809 = vadd.f32 %v1418, %v1703
        %v1810 = vadd.f32 %v1419, %v1708
        %v1811 = vadd.f32 %v1420, %v1713
        %v1812 = vadd.f32 %v1421, %v1718
        %v1813 = vadd.f32 %v1422, %v1723
        %v1814 = vadd.f32 %v1423, %v1728
        %v1815 = vadd.f32 %v1424, %v1733
        %v1816 = vadd.f32 %v1425, %v1738
        %v1817 = vadd.f32 %v1426, %v1743
        %v1818 = vadd.f32 %v1427, %v1748
        %v1819 = vadd.f32 %v1428, %v1753
        %v1820 = vadd.f32 %v1429, %v1758
        %v1821 = vadd.f32 %v1430, %v1763
        %v1822 = vadd.f32 %v1431, %v1768
        %v1823 = vadd.f32 %v1432, %v1773
        %v1824 = vadd.f32 %v1433, %v1778
        %v1825 = vadd.f32 %v1434, %v1783
        %v1826 = vadd.f32 %v1435, %v1788
        %v1827 = vadd.f32 %v1436, %v1793
        %v1828 = vld [vmem:[%s1437 + $0x1] sm:$0xff]
        %v1829 = vld [vmem:[%s1437 + $0x9] sm:$0xff]
        %v1830 = vld [vmem:[%s1437 + $0x19] sm:$0xff]
        %v1831 = vld [vmem:[%s1437 + $0x21] sm:$0xff]
        %v1832 = vld [vmem:[%s1437 + $0x31] sm:$0xff]
        %v1833 = vld [vmem:[%s1437 + $0x39] sm:$0xff]
        %v1834 = vld [vmem:[%s1437 + $0x49] sm:$0xff]
        %v1835 = vld [vmem:[%s1437 + $0x51] sm:$0xff]
        %v1836 = vld [vmem:[%s1437 + $0x61] sm:$0xff]
        %v1837 = vld [vmem:[%s1437 + $0x69] sm:$0xff]
        %v1838 = vld [vmem:[%s1437 + $0x79] sm:$0xff]
        %v1839 = vld [vmem:[%s1437 + $0x81] sm:$0xff]
        %v1840 = vld [vmem:[%s1437 + $0x91] sm:$0xff]
        %v1841 = vld [vmem:[%s1437 + $0x99] sm:$0xff]
        %v1842 = vld [vmem:[%s1437 + $0xa9] sm:$0xff]
        %v1843 = vld [vmem:[%s1437 + $0xb1] sm:$0xff]
        %v1844 = vld [vmem:[%s1437 + $0xc1] sm:$0xff]
        %v1845 = vld [vmem:[%s1437 + $0xc9] sm:$0xff]
        %v1846 = vld [vmem:[%s1437 + $0xd9] sm:$0xff]
        %v1847 = vld [vmem:[%s1437 + $0xe1] sm:$0xff]
        %v1848 = vld [vmem:[%s1437 + $0xf1] sm:$0xff]
        %v1849 = vld [vmem:[%s1437 + $0xf9] sm:$0xff]
        %v1850 = vld [vmem:[%s1437 + $0x109] sm:$0xff]
        %v1851 = vld [vmem:[%s1437 + $0x111] sm:$0xff]
        %v1852 = vld [vmem:[%s1437 + $0x121] sm:$0xff]
        %v1853 = vld [vmem:[%s1437 + $0x129] sm:$0xff]
        %v1854 = vld [vmem:[%s1437 + $0x139] sm:$0xff]
        %v1855 = vld [vmem:[%s1437 + $0x141] sm:$0xff]
        %v1856 = vld [vmem:[%s1437 + $0x151] sm:$0xff]
        %v1857 = vld [vmem:[%s1437 + $0x159] sm:$0xff]
        %v1858 = vld [vmem:[%s1437 + $0x169] sm:$0xff]
        %v1859 = vld [vmem:[%s1437 + $0x171] sm:$0xff]
        %s1860 = scalar_lea.vmem %s1, 128
        %v1861 = vld [vmem:[%s1860] sm:$0xff]
        %v1862 = vld [vmem:[%s1860 + $0x8] sm:$0xff]
        %v1863 = vld [vmem:[%s1860 + $0x10] sm:$0xff]
        %v1864 = vld [vmem:[%s1860 + $0x18] sm:$0xff]
        %v1866 = vsel %vm404, %v1828, 0
        %v1869 = vsel %vm404, %v1829, 0
        %v1872 = vsel %vm404, %v1830, 0
        %v1875 = vsel %vm404, %v1831, 0
        %v1878 = vsel %vm404, %v1832, 0
        %v1881 = vsel %vm404, %v1833, 0
        %v1884 = vsel %vm404, %v1834, 0
        %v1887 = vsel %vm404, %v1835, 0
        %v1890 = vsel %vm404, %v1836, 0
        %v1893 = vsel %vm404, %v1837, 0
        %v1896 = vsel %vm404, %v1838, 0
        %v1899 = vsel %vm404, %v1839, 0
        %v1902 = vsel %vm404, %v1840, 0
        %v1905 = vsel %vm404, %v1841, 0
        %v1908 = vsel %vm404, %v1842, 0
        %v1911 = vsel %vm404, %v1843, 0
        %v1914 = vsel %vm404, %v1844, 0
        %v1917 = vsel %vm404, %v1845, 0
        %v1920 = vsel %vm404, %v1846, 0
        %v1923 = vsel %vm404, %v1847, 0
        %v1926 = vsel %vm404, %v1848, 0
        %v1929 = vsel %vm404, %v1849, 0
        %v1932 = vsel %vm404, %v1850, 0
        %v1935 = vsel %vm404, %v1851, 0
        %v1938 = vsel %vm404, %v1852, 0
        %v1941 = vsel %vm404, %v1853, 0
        %v1944 = vsel %vm404, %v1854, 0
        %v1947 = vsel %vm404, %v1855, 0
        %v1950 = vsel %vm404, %v1856, 0
        %v1953 = vsel %vm404, %v1857, 0
        %v1956 = vsel %vm404, %v1858, 0
        %v1959 = vsel %vm404, %v1859, 0
        %1961 = vmatprep.subr.mxu0 0.0
        %1962 = vmatpush1.msra.mxu0 %v1861
        %1963 = vmatprep.subr.mxu0 0.0
        %1964 = vmatpush1.msra.mxu0 %v1862
        %1965 = vmatprep.subr.mxu0 0.0
        %1966 = vmatpush1.msra.mxu0 %v1863
        %1967 = vmatprep.subr.mxu0 0.0
        %1968 = vmatpush1.msra.mxu0 %v1864
        %1969 = vmatprep.subr.mxu0 0.0
        %1970 = vmatpush1.msra.mxu0 0.0
        %1971 = vmatprep.subr.mxu0 0.0
        %1972 = vmatpush1.msra.mxu0 0.0
        %1973 = vmatprep.subr.mxu0 0.0
        %1974 = vmatpush1.msra.mxu0 0.0
        %1975 = vmatprep.subr.mxu0 0.0
        %1976 = vmatpush1.msra.mxu0 0.0
        %1977 = vmatprep.subr.mxu0 0.0
        %1978 = vmatpush1.msra.mxu0 0.0
        %1979 = vmatprep.subr.mxu0 0.0
        %1980 = vmatpush1.msra.mxu0 0.0
        %1981 = vmatprep.subr.mxu0 0.0
        %1982 = vmatpush1.msra.mxu0 0.0
        %1983 = vmatprep.subr.mxu0 0.0
        %1984 = vmatpush1.msra.mxu0 0.0
        %1985 = vmatprep.subr.mxu0 0.0
        %1986 = vmatpush1.msra.mxu0 0.0
        %1987 = vmatprep.subr.mxu0 0.0
        %1988 = vmatpush1.msra.mxu0 0.0
        %1989 = vmatprep.subr.mxu0 0.0
        %1990 = vmatpush1.msra.mxu0 0.0
        %1991 = vmatprep.subr.mxu0 0.0
        %1992 = vmatpush1.msra.mxu0 0.0
        %1993 = vmatprep.subr.mxu0 0.0
        %1994 = vmatpush1.msra.mxu0 0.0
        %1995 = vmatprep.subr.mxu0 0.0
        %1996 = vmatpush1.msra.mxu0 0.0
        %1997 = vmatprep.subr.mxu0 0.0
        %1998 = vmatpush1.msra.mxu0 0.0
        %1999 = vmatprep.subr.mxu0 0.0
        %2000 = vmatpush1.msra.mxu0 0.0
        %2001 = vmatprep.subr.mxu0 0.0
        %2002 = vmatpush1.msra.mxu0 0.0
        %2003 = vmatprep.subr.mxu0 0.0
        %2004 = vmatpush1.msra.mxu0 0.0
        %2005 = vmatprep.subr.mxu0 0.0
        %2006 = vmatpush1.msra.mxu0 0.0
        %2007 = vmatprep.subr.mxu0 0.0
        %2008 = vmatpush1.msra.mxu0 0.0
        %2009 = vmatprep.subr.mxu0 0.0
        %2010 = vmatpush1.msra.mxu0 0.0
        %2011 = vmatprep.subr.mxu0 0.0
        %2012 = vmatpush1.msra.mxu0 0.0
        %2013 = vmatprep.subr.mxu0 0.0
        %2014 = vmatpush1.msra.mxu0 0.0
        %2015 = vmatprep.subr.mxu0 0.0
        %2016 = vmatpush1.msra.mxu0 0.0
        %2017 = vmatprep.subr.mxu0 0.0
        %2018 = vmatpush1.msra.mxu0 0.0
        %2019 = vmatprep.subr.mxu0 0.0
        %2020 = vmatpush1.msra.mxu0 0.0
        %2021 = vmatprep.subr.mxu0 0.0
        %2022 = vmatpush1.msra.mxu0 0.0
        %2023 = vmatprep.subr.mxu0 0.0
        %2024 = vmatpush1.msra.mxu0 0.0
        %2025 = vmatprep.mubr.f32.mxu0 0.0
        %2026 = vmatmul.mubr.f32.gmra.mrb[0].mxu0 %v1866
        %v2027 = vpop.f32.mrb[0].mxu0
        %v2028 = vadd.f32 0.0, %v2027
        %v2029 = vpop.f32.mrb[0].mxu0
        %2030 = vmatprep.mubr.f32.mxu0 0.0
        %2031 = vmatmul.mubr.f32.gmra.mrb[0].mxu0 %v1869
        %v2032 = vpop.f32.mrb[0].mxu0
        %v2033 = vadd.f32 0.0, %v2032
        %v2034 = vpop.f32.mrb[0].mxu0
        %2035 = vmatprep.mubr.f32.mxu0 0.0
        %2036 = vmatmul.mubr.f32.gmra.mrb[0].mxu0 %v1872
        %v2037 = vpop.f32.mrb[0].mxu0
        %v2038 = vadd.f32 0.0, %v2037
        %v2039 = vpop.f32.mrb[0].mxu0
        %2040 = vmatprep.mubr.f32.mxu0 0.0
        %2041 = vmatmul.mubr.f32.gmra.mrb[0].mxu0 %v1875
        %v2042 = vpop.f32.mrb[0].mxu0
        %v2043 = vadd.f32 0.0, %v2042
        %v2044 = vpop.f32.mrb[0].mxu0
        %2045 = vmatprep.mubr.f32.mxu0 0.0
        %2046 = vmatmul.mubr.f32.gmra.mrb[0].mxu0 %v1878
        %v2047 = vpop.f32.mrb[0].mxu0
        %v2048 = vadd.f32 0.0, %v2047
        %v2049 = vpop.f32.mrb[0].mxu0
        %2050 = vmatprep.mubr.f32.mxu0 0.0
        %2051 = vmatmul.mubr.f32.gmra.mrb[0].mxu0 %v1881
        %v2052 = vpop.f32.mrb[0].mxu0
        %v2053 = vadd.f32 0.0, %v2052
        %v2054 = vpop.f32.mrb[0].mxu0
        %2055 = vmatprep.mubr.f32.mxu0 0.0
        %2056 = vmatmul.mubr.f32.gmra.mrb[0].mxu0 %v1884
        %v2057 = vpop.f32.mrb[0].mxu0
        %v2058 = vadd.f32 0.0, %v2057
        %v2059 = vpop.f32.mrb[0].mxu0
        %2060 = vmatprep.mubr.f32.mxu0 0.0
        %2061 = vmatmul.mubr.f32.gmra.mrb[0].mxu0 %v1887
        %v2062 = vpop.f32.mrb[0].mxu0
        %v2063 = vadd.f32 0.0, %v2062
        %v2064 = vpop.f32.mrb[0].mxu0
        %2065 = vmatprep.mubr.f32.mxu0 0.0
        %2066 = vmatmul.mubr.f32.gmra.mrb[0].mxu0 %v1890
        %v2067 = vpop.f32.mrb[0].mxu0
        %v2068 = vadd.f32 0.0, %v2067
        %v2069 = vpop.f32.mrb[0].mxu0
        %2070 = vmatprep.mubr.f32.mxu0 0.0
        %2071 = vmatmul.mubr.f32.gmra.mrb[0].mxu0 %v1893
        %v2072 = vpop.f32.mrb[0].mxu0
        %v2073 = vadd.f32 0.0, %v2072
        %v2074 = vpop.f32.mrb[0].mxu0
        %2075 = vmatprep.mubr.f32.mxu0 0.0
        %2076 = vmatmul.mubr.f32.gmra.mrb[0].mxu0 %v1896
        %v2077 = vpop.f32.mrb[0].mxu0
        %v2078 = vadd.f32 0.0, %v2077
        %v2079 = vpop.f32.mrb[0].mxu0
        %2080 = vmatprep.mubr.f32.mxu0 0.0
        %2081 = vmatmul.mubr.f32.gmra.mrb[0].mxu0 %v1899
        %v2082 = vpop.f32.mrb[0].mxu0
        %v2083 = vadd.f32 0.0, %v2082
        %v2084 = vpop.f32.mrb[0].mxu0
        %2085 = vmatprep.mubr.f32.mxu0 0.0
        %2086 = vmatmul.mubr.f32.gmra.mrb[0].mxu0 %v1902
        %v2087 = vpop.f32.mrb[0].mxu0
        %v2088 = vadd.f32 0.0, %v2087
        %v2089 = vpop.f32.mrb[0].mxu0
        %2090 = vmatprep.mubr.f32.mxu0 0.0
        %2091 = vmatmul.mubr.f32.gmra.mrb[0].mxu0 %v1905
        %v2092 = vpop.f32.mrb[0].mxu0
        %v2093 = vadd.f32 0.0, %v2092
        %v2094 = vpop.f32.mrb[0].mxu0
        %2095 = vmatprep.mubr.f32.mxu0 0.0
        %2096 = vmatmul.mubr.f32.gmra.mrb[0].mxu0 %v1908
        %v2097 = vpop.f32.mrb[0].mxu0
        %v2098 = vadd.f32 0.0, %v2097
        %v2099 = vpop.f32.mrb[0].mxu0
        %2100 = vmatprep.mubr.f32.mxu0 0.0
        %2101 = vmatmul.mubr.f32.gmra.mrb[0].mxu0 %v1911
        %v2102 = vpop.f32.mrb[0].mxu0
        %v2103 = vadd.f32 0.0, %v2102
        %v2104 = vpop.f32.mrb[0].mxu0
        %2105 = vmatprep.mubr.f32.mxu0 0.0
        %2106 = vmatmul.mubr.f32.gmra.mrb[0].mxu0 %v1914
        %v2107 = vpop.f32.mrb[0].mxu0
        %v2108 = vadd.f32 0.0, %v2107
        %v2109 = vpop.f32.mrb[0].mxu0
        %2110 = vmatprep.mubr.f32.mxu0 0.0
        %2111 = vmatmul.mubr.f32.gmra.mrb[0].mxu0 %v1917
        %v2112 = vpop.f32.mrb[0].mxu0
        %v2113 = vadd.f32 0.0, %v2112
        %v2114 = vpop.f32.mrb[0].mxu0
        %2115 = vmatprep.mubr.f32.mxu0 0.0
        %2116 = vmatmul.mubr.f32.gmra.mrb[0].mxu0 %v1920
        %v2117 = vpop.f32.mrb[0].mxu0
        %v2118 = vadd.f32 0.0, %v2117
        %v2119 = vpop.f32.mrb[0].mxu0
        %2120 = vmatprep.mubr.f32.mxu0 0.0
        %2121 = vmatmul.mubr.f32.gmra.mrb[0].mxu0 %v1923
        %v2122 = vpop.f32.mrb[0].mxu0
        %v2123 = vadd.f32 0.0, %v2122
        %v2124 = vpop.f32.mrb[0].mxu0
        %2125 = vmatprep.mubr.f32.mxu0 0.0
        %2126 = vmatmul.mubr.f32.gmra.mrb[0].mxu0 %v1926
        %v2127 = vpop.f32.mrb[0].mxu0
        %v2128 = vadd.f32 0.0, %v2127
        %v2129 = vpop.f32.mrb[0].mxu0
        %2130 = vmatprep.mubr.f32.mxu0 0.0
        %2131 = vmatmul.mubr.f32.gmra.mrb[0].mxu0 %v1929
        %v2132 = vpop.f32.mrb[0].mxu0
        %v2133 = vadd.f32 0.0, %v2132
        %v2134 = vpop.f32.mrb[0].mxu0
        %2135 = vmatprep.mubr.f32.mxu0 0.0
        %2136 = vmatmul.mubr.f32.gmra.mrb[0].mxu0 %v1932
        %v2137 = vpop.f32.mrb[0].mxu0
        %v2138 = vadd.f32 0.0, %v2137
        %v2139 = vpop.f32.mrb[0].mxu0
        %2140 = vmatprep.mubr.f32.mxu0 0.0
        %2141 = vmatmul.mubr.f32.gmra.mrb[0].mxu0 %v1935
        %v2142 = vpop.f32.mrb[0].mxu0
        %v2143 = vadd.f32 0.0, %v2142
        %v2144 = vpop.f32.mrb[0].mxu0
        %2145 = vmatprep.mubr.f32.mxu0 0.0
        %2146 = vmatmul.mubr.f32.gmra.mrb[0].mxu0 %v1938
        %v2147 = vpop.f32.mrb[0].mxu0
        %v2148 = vadd.f32 0.0, %v2147
        %v2149 = vpop.f32.mrb[0].mxu0
        %2150 = vmatprep.mubr.f32.mxu0 0.0
        %2151 = vmatmul.mubr.f32.gmra.mrb[0].mxu0 %v1941
        %v2152 = vpop.f32.mrb[0].mxu0
        %v2153 = vadd.f32 0.0, %v2152
        %v2154 = vpop.f32.mrb[0].mxu0
        %2155 = vmatprep.mubr.f32.mxu0 0.0
        %2156 = vmatmul.mubr.f32.gmra.mrb[0].mxu0 %v1944
        %v2157 = vpop.f32.mrb[0].mxu0
        %v2158 = vadd.f32 0.0, %v2157
        %v2159 = vpop.f32.mrb[0].mxu0
        %2160 = vmatprep.mubr.f32.mxu0 0.0
        %2161 = vmatmul.mubr.f32.gmra.mrb[0].mxu0 %v1947
        %v2162 = vpop.f32.mrb[0].mxu0
        %v2163 = vadd.f32 0.0, %v2162
        %v2164 = vpop.f32.mrb[0].mxu0
        %2165 = vmatprep.mubr.f32.mxu0 0.0
        %2166 = vmatmul.mubr.f32.gmra.mrb[0].mxu0 %v1950
        %v2167 = vpop.f32.mrb[0].mxu0
        %v2168 = vadd.f32 0.0, %v2167
        %v2169 = vpop.f32.mrb[0].mxu0
        %2170 = vmatprep.mubr.f32.mxu0 0.0
        %2171 = vmatmul.mubr.f32.gmra.mrb[0].mxu0 %v1953
        %v2172 = vpop.f32.mrb[0].mxu0
        %v2173 = vadd.f32 0.0, %v2172
        %v2174 = vpop.f32.mrb[0].mxu0
        %2175 = vmatprep.mubr.f32.mxu0 0.0
        %2176 = vmatmul.mubr.f32.gmra.mrb[0].mxu0 %v1956
        %v2177 = vpop.f32.mrb[0].mxu0
        %v2178 = vadd.f32 0.0, %v2177
        %v2179 = vpop.f32.mrb[0].mxu0
        %2180 = vmatprep.mubr.f32.mxu0 0.0
        %2181 = vmatmul.mubr.f32.gmra.mrb[0].mxu0 %v1959
        %v2182 = vpop.f32.mrb[0].mxu0
        %v2183 = vadd.f32 0.0, %v2182
        %v2184 = vpop.f32.mrb[0].mxu0
        %2185 = vdwg.mxu0
        %v2186 = vadd.f32 %v1796, %v2028
        %v2187 = vadd.f32 %v1797, %v2033
        %v2188 = vadd.f32 %v1798, %v2038
        %v2189 = vadd.f32 %v1799, %v2043
        %v2190 = vadd.f32 %v1800, %v2048
        %v2191 = vadd.f32 %v1801, %v2053
        %v2192 = vadd.f32 %v1802, %v2058
        %v2193 = vadd.f32 %v1803, %v2063
        %v2194 = vadd.f32 %v1804, %v2068
        %v2195 = vadd.f32 %v1805, %v2073
        %v2196 = vadd.f32 %v1806, %v2078
        %v2197 = vadd.f32 %v1807, %v2083
        %v2198 = vadd.f32 %v1808, %v2088
        %v2199 = vadd.f32 %v1809, %v2093
        %v2200 = vadd.f32 %v1810, %v2098
        %v2201 = vadd.f32 %v1811, %v2103
        %v2202 = vadd.f32 %v1812, %v2108
        %v2203 = vadd.f32 %v1813, %v2113
        %v2204 = vadd.f32 %v1814, %v2118
        %v2205 = vadd.f32 %v1815, %v2123
        %v2206 = vadd.f32 %v1816, %v2128
        %v2207 = vadd.f32 %v1817, %v2133
        %v2208 = vadd.f32 %v1818, %v2138
        %v2209 = vadd.f32 %v1819, %v2143
        %v2210 = vadd.f32 %v1820, %v2148
        %v2211 = vadd.f32 %v1821, %v2153
        %v2212 = vadd.f32 %v1822, %v2158
        %v2213 = vadd.f32 %v1823, %v2163
        %v2214 = vadd.f32 %v1824, %v2168
        %v2215 = vadd.f32 %v1825, %v2173
        %v2216 = vadd.f32 %v1826, %v2178
        %v2217 = vadd.f32 %v1827, %v2183
        %v2218 = vld [vmem:[%s1437 + $0x2] sm:$0xff]
        %v2219 = vld [vmem:[%s1437 + $0xa] sm:$0xff]
        %v2220 = vld [vmem:[%s1437 + $0x1a] sm:$0xff]
        %v2221 = vld [vmem:[%s1437 + $0x22] sm:$0xff]
        %v2222 = vld [vmem:[%s1437 + $0x32] sm:$0xff]
        %v2223 = vld [vmem:[%s1437 + $0x3a] sm:$0xff]
        %v2224 = vld [vmem:[%s1437 + $0x4a] sm:$0xff]
        %v2225 = vld [vmem:[%s1437 + $0x52] sm:$0xff]
        %v2226 = vld [vmem:[%s1437 + $0x62] sm:$0xff]
        %v2227 = vld [vmem:[%s1437 + $0x6a] sm:$0xff]
        %v2228 = vld [vmem:[%s1437 + $0x7a] sm:$0xff]
        %v2229 = vld [vmem:[%s1437 + $0x82] sm:$0xff]
        %v2230 = vld [vmem:[%s1437 + $0x92] sm:$0xff]
        %v2231 = vld [vmem:[%s1437 + $0x9a] sm:$0xff]
        %v2232 = vld [vmem:[%s1437 + $0xaa] sm:$0xff]
        %v2233 = vld [vmem:[%s1437 + $0xb2] sm:$0xff]
        %v2234 = vld [vmem:[%s1437 + $0xc2] sm:$0xff]
        %v2235 = vld [vmem:[%s1437 + $0xca] sm:$0xff]
        %v2236 = vld [vmem:[%s1437 + $0xda] sm:$0xff]
        %v2237 = vld [vmem:[%s1437 + $0xe2] sm:$0xff]
        %v2238 = vld [vmem:[%s1437 + $0xf2] sm:$0xff]
        %v2239 = vld [vmem:[%s1437 + $0xfa] sm:$0xff]
        %v2240 = vld [vmem:[%s1437 + $0x10a] sm:$0xff]
        %v2241 = vld [vmem:[%s1437 + $0x112] sm:$0xff]
        %v2242 = vld [vmem:[%s1437 + $0x122] sm:$0xff]
        %v2243 = vld [vmem:[%s1437 + $0x12a] sm:$0xff]
        %v2244 = vld [vmem:[%s1437 + $0x13a] sm:$0xff]
        %v2245 = vld [vmem:[%s1437 + $0x142] sm:$0xff]
        %v2246 = vld [vmem:[%s1437 + $0x152] sm:$0xff]
        %v2247 = vld [vmem:[%s1437 + $0x15a] sm:$0xff]
        %v2248 = vld [vmem:[%s1437 + $0x16a] sm:$0xff]
        %v2249 = vld [vmem:[%s1437 + $0x172] sm:$0xff]
        %s2250 = scalar_lea.vmem %s1, 160
        %v2251 = vld [vmem:[%s2250] sm:$0xff]
        %v2252 = vld [vmem:[%s2250 + $0x8] sm:$0xff]
        %v2253 = vld [vmem:[%s2250 + $0x10] sm:$0xff]
        %v2254 = vld [vmem:[%s2250 + $0x18] sm:$0xff]
        %v2256 = vsel %vm404, %v2218, 0
        %v2259 = vsel %vm404, %v2219, 0
        %v2262 = vsel %vm404, %v2220, 0
        %v2265 = vsel %vm404, %v2221, 0
        %v2268 = vsel %vm404, %v2222, 0
        %v2271 = vsel %vm404, %v2223, 0
        %v2274 = vsel %vm404, %v2224, 0
        %v2277 = vsel %vm404, %v2225, 0
        %v2280 = vsel %vm404, %v2226, 0
        %v2283 = vsel %vm404, %v2227, 0
        %v2286 = vsel %vm404, %v2228, 0
        %v2289 = vsel %vm404, %v2229, 0
        %v2292 = vsel %vm404, %v2230, 0
        %v2295 = vsel %vm404, %v2231, 0
        %v2298 = vsel %vm404, %v2232, 0
        %v2301 = vsel %vm404, %v2233, 0
        %v2304 = vsel %vm404, %v2234, 0
        %v2307 = vsel %vm404, %v2235, 0
        %v2310 = vsel %vm404, %v2236, 0
        %v2313 = vsel %vm404, %v2237, 0
        %v2316 = vsel %vm404, %v2238, 0
        %v2319 = vsel %vm404, %v2239, 0
        %v2322 = vsel %vm404, %v2240, 0
        %v2325 = vsel %vm404, %v2241, 0
        %v2328 = vsel %vm404, %v2242, 0
        %v2331 = vsel %vm404, %v2243, 0
        %v2334 = vsel %vm404, %v2244, 0
        %v2337 = vsel %vm404, %v2245, 0
        %v2340 = vsel %vm404, %v2246, 0
        %v2343 = vsel %vm404, %v2247, 0
        %v2346 = vsel %vm404, %v2248, 0
        %v2349 = vsel %vm404, %v2249, 0
        %2351 = vmatprep.subr.mxu0 0.0
        %2352 = vmatpush1.msra.mxu0 %v2251
        %2353 = vmatprep.subr.mxu0 0.0
        %2354 = vmatpush1.msra.mxu0 %v2252
        %2355 = vmatprep.subr.mxu0 0.0
        %2356 = vmatpush1.msra.mxu0 %v2253
        %2357 = vmatprep.subr.mxu0 0.0
        %2358 = vmatpush1.msra.mxu0 %v2254
        %2359 = vmatprep.subr.mxu0 0.0
        %2360 = vmatpush1.msra.mxu0 0.0
        %2361 = vmatprep.subr.mxu0 0.0
        %2362 = vmatpush1.msra.mxu0 0.0
        %2363 = vmatprep.subr.mxu0 0.0
        %2364 = vmatpush1.msra.mxu0 0.0
        %2365 = vmatprep.subr.mxu0 0.0
        %2366 = vmatpush1.msra.mxu0 0.0
        %2367 = vmatprep.subr.mxu0 0.0
        %2368 = vmatpush1.msra.mxu0 0.0
        %2369 = vmatprep.subr.mxu0 0.0
        %2370 = vmatpush1.msra.mxu0 0.0
        %2371 = vmatprep.subr.mxu0 0.0
        %2372 = vmatpush1.msra.mxu0 0.0
        %2373 = vmatprep.subr.mxu0 0.0
        %2374 = vmatpush1.msra.mxu0 0.0
        %2375 = vmatprep.subr.mxu0 0.0
        %2376 = vmatpush1.msra.mxu0 0.0
        %2377 = vmatprep.subr.mxu0 0.0
        %2378 = vmatpush1.msra.mxu0 0.0
        %2379 = vmatprep.subr.mxu0 0.0
        %2380 = vmatpush1.msra.mxu0 0.0
        %2381 = vmatprep.subr.mxu0 0.0
        %2382 = vmatpush1.msra.mxu0 0.0
        %2383 = vmatprep.subr.mxu0 0.0
        %2384 = vmatpush1.msra.mxu0 0.0
        %2385 = vmatprep.subr.mxu0 0.0
        %2386 = vmatpush1.msra.mxu0 0.0
        %2387 = vmatprep.subr.mxu0 0.0
        %2388 = vmatpush1.msra.mxu0 0.0
        %2389 = vmatprep.subr.mxu0 0.0
        %2390 = vmatpush1.msra.mxu0 0.0
        %2391 = vmatprep.subr.mxu0 0.0
        %2392 = vmatpush1.msra.mxu0 0.0
        %2393 = vmatprep.subr.mxu0 0.0
        %2394 = vmatpush1.msra.mxu0 0.0
        %2395 = vmatprep.subr.mxu0 0.0
        %2396 = vmatpush1.msra.mxu0 0.0
        %2397 = vmatprep.subr.mxu0 0.0
        %2398 = vmatpush1.msra.mxu0 0.0
        %2399 = vmatprep.subr.mxu0 0.0
        %2400 = vmatpush1.msra.mxu0 0.0
        %2401 = vmatprep.subr.mxu0 0.0
        %2402 = vmatpush1.msra.mxu0 0.0
        %2403 = vmatprep.subr.mxu0 0.0
        %2404 = vmatpush1.msra.mxu0 0.0
        %2405 = vmatprep.subr.mxu0 0.0
        %2406 = vmatpush1.msra.mxu0 0.0
        %2407 = vmatprep.subr.mxu0 0.0
        %2408 = vmatpush1.msra.mxu0 0.0
        %2409 = vmatprep.subr.mxu0 0.0
        %2410 = vmatpush1.msra.mxu0 0.0
        %2411 = vmatprep.subr.mxu0 0.0
        %2412 = vmatpush1.msra.mxu0 0.0
        %2413 = vmatprep.subr.mxu0 0.0
        %2414 = vmatpush1.msra.mxu0 0.0
        %2415 = vmatprep.mubr.f32.mxu0 0.0
        %2416 = vmatmul.mubr.f32.gmra.mrb[0].mxu0 %v2256
        %v2417 = vpop.f32.mrb[0].mxu0
        %v2418 = vadd.f32 0.0, %v2417
        %v2419 = vpop.f32.mrb[0].mxu0
        %2420 = vmatprep.mubr.f32.mxu0 0.0
        %2421 = vmatmul.mubr.f32.gmra.mrb[0].mxu0 %v2259
        %v2422 = vpop.f32.mrb[0].mxu0
        %v2423 = vadd.f32 0.0, %v2422
        %v2424 = vpop.f32.mrb[0].mxu0
        %2425 = vmatprep.mubr.f32.mxu0 0.0
        %2426 = vmatmul.mubr.f32.gmra.mrb[0].mxu0 %v2262
        %v2427 = vpop.f32.mrb[0].mxu0
        %v2428 = vadd.f32 0.0, %v2427
        %v2429 = vpop.f32.mrb[0].mxu0
        %2430 = vmatprep.mubr.f32.mxu0 0.0
        %2431 = vmatmul.mubr.f32.gmra.mrb[0].mxu0 %v2265
        %v2432 = vpop.f32.mrb[0].mxu0
        %v2433 = vadd.f32 0.0, %v2432
        %v2434 = vpop.f32.mrb[0].mxu0
        %2435 = vmatprep.mubr.f32.mxu0 0.0
        %2436 = vmatmul.mubr.f32.gmra.mrb[0].mxu0 %v2268
        %v2437 = vpop.f32.mrb[0].mxu0
        %v2438 = vadd.f32 0.0, %v2437
        %v2439 = vpop.f32.mrb[0].mxu0
        %2440 = vmatprep.mubr.f32.mxu0 0.0
        %2441 = vmatmul.mubr.f32.gmra.mrb[0].mxu0 %v2271
        %v2442 = vpop.f32.mrb[0].mxu0
        %v2443 = vadd.f32 0.0, %v2442
        %v2444 = vpop.f32.mrb[0].mxu0
        %2445 = vmatprep.mubr.f32.mxu0 0.0
        %2446 = vmatmul.mubr.f32.gmra.mrb[0].mxu0 %v2274
        %v2447 = vpop.f32.mrb[0].mxu0
        %v2448 = vadd.f32 0.0, %v2447
        %v2449 = vpop.f32.mrb[0].mxu0
        %2450 = vmatprep.mubr.f32.mxu0 0.0
        %2451 = vmatmul.mubr.f32.gmra.mrb[0].mxu0 %v2277
        %v2452 = vpop.f32.mrb[0].mxu0
        %v2453 = vadd.f32 0.0, %v2452
        %v2454 = vpop.f32.mrb[0].mxu0
        %2455 = vmatprep.mubr.f32.mxu0 0.0
        %2456 = vmatmul.mubr.f32.gmra.mrb[0].mxu0 %v2280
        %v2457 = vpop.f32.mrb[0].mxu0
        %v2458 = vadd.f32 0.0, %v2457
        %v2459 = vpop.f32.mrb[0].mxu0
        %2460 = vmatprep.mubr.f32.mxu0 0.0
        %2461 = vmatmul.mubr.f32.gmra.mrb[0].mxu0 %v2283
        %v2462 = vpop.f32.mrb[0].mxu0
        %v2463 = vadd.f32 0.0, %v2462
        %v2464 = vpop.f32.mrb[0].mxu0
        %2465 = vmatprep.mubr.f32.mxu0 0.0
        %2466 = vmatmul.mubr.f32.gmra.mrb[0].mxu0 %v2286
        %v2467 = vpop.f32.mrb[0].mxu0
        %v2468 = vadd.f32 0.0, %v2467
        %v2469 = vpop.f32.mrb[0].mxu0
        %2470 = vmatprep.mubr.f32.mxu0 0.0
        %2471 = vmatmul.mubr.f32.gmra.mrb[0].mxu0 %v2289
        %v2472 = vpop.f32.mrb[0].mxu0
        %v2473 = vadd.f32 0.0, %v2472
        %v2474 = vpop.f32.mrb[0].mxu0
        %2475 = vmatprep.mubr.f32.mxu0 0.0
        %2476 = vmatmul.mubr.f32.gmra.mrb[0].mxu0 %v2292
        %v2477 = vpop.f32.mrb[0].mxu0
        %v2478 = vadd.f32 0.0, %v2477
        %v2479 = vpop.f32.mrb[0].mxu0
        %2480 = vmatprep.mubr.f32.mxu0 0.0
        %2481 = vmatmul.mubr.f32.gmra.mrb[0].mxu0 %v2295
        %v2482 = vpop.f32.mrb[0].mxu0
        %v2483 = vadd.f32 0.0, %v2482
        %v2484 = vpop.f32.mrb[0].mxu0
        %2485 = vmatprep.mubr.f32.mxu0 0.0
        %2486 = vmatmul.mubr.f32.gmra.mrb[0].mxu0 %v2298
        %v2487 = vpop.f32.mrb[0].mxu0
        %v2488 = vadd.f32 0.0, %v2487
        %v2489 = vpop.f32.mrb[0].mxu0
        %2490 = vmatprep.mubr.f32.mxu0 0.0
        %2491 = vmatmul.mubr.f32.gmra.mrb[0].mxu0 %v2301
        %v2492 = vpop.f32.mrb[0].mxu0
        %v2493 = vadd.f32 0.0, %v2492
        %v2494 = vpop.f32.mrb[0].mxu0
        %2495 = vmatprep.mubr.f32.mxu0 0.0
        %2496 = vmatmul.mubr.f32.gmra.mrb[0].mxu0 %v2304
        %v2497 = vpop.f32.mrb[0].mxu0
        %v2498 = vadd.f32 0.0, %v2497
        %v2499 = vpop.f32.mrb[0].mxu0
        %2500 = vmatprep.mubr.f32.mxu0 0.0
        %2501 = vmatmul.mubr.f32.gmra.mrb[0].mxu0 %v2307
        %v2502 = vpop.f32.mrb[0].mxu0
        %v2503 = vadd.f32 0.0, %v2502
        %v2504 = vpop.f32.mrb[0].mxu0
        %2505 = vmatprep.mubr.f32.mxu0 0.0
        %2506 = vmatmul.mubr.f32.gmra.mrb[0].mxu0 %v2310
        %v2507 = vpop.f32.mrb[0].mxu0
        %v2508 = vadd.f32 0.0, %v2507
        %v2509 = vpop.f32.mrb[0].mxu0
        %2510 = vmatprep.mubr.f32.mxu0 0.0
        %2511 = vmatmul.mubr.f32.gmra.mrb[0].mxu0 %v2313
        %v2512 = vpop.f32.mrb[0].mxu0
        %v2513 = vadd.f32 0.0, %v2512
        %v2514 = vpop.f32.mrb[0].mxu0
        %2515 = vmatprep.mubr.f32.mxu0 0.0
        %2516 = vmatmul.mubr.f32.gmra.mrb[0].mxu0 %v2316
        %v2517 = vpop.f32.mrb[0].mxu0
        %v2518 = vadd.f32 0.0, %v2517
        %v2519 = vpop.f32.mrb[0].mxu0
        %2520 = vmatprep.mubr.f32.mxu0 0.0
        %2521 = vmatmul.mubr.f32.gmra.mrb[0].mxu0 %v2319
        %v2522 = vpop.f32.mrb[0].mxu0
        %v2523 = vadd.f32 0.0, %v2522
        %v2524 = vpop.f32.mrb[0].mxu0
        %2525 = vmatprep.mubr.f32.mxu0 0.0
        %2526 = vmatmul.mubr.f32.gmra.mrb[0].mxu0 %v2322
        %v2527 = vpop.f32.mrb[0].mxu0
        %v2528 = vadd.f32 0.0, %v2527
        %v2529 = vpop.f32.mrb[0].mxu0
        %2530 = vmatprep.mubr.f32.mxu0 0.0
        %2531 = vmatmul.mubr.f32.gmra.mrb[0].mxu0 %v2325
        %v2532 = vpop.f32.mrb[0].mxu0
        %v2533 = vadd.f32 0.0, %v2532
        %v2534 = vpop.f32.mrb[0].mxu0
        %2535 = vmatprep.mubr.f32.mxu0 0.0
        %2536 = vmatmul.mubr.f32.gmra.mrb[0].mxu0 %v2328
        %v2537 = vpop.f32.mrb[0].mxu0
        %v2538 = vadd.f32 0.0, %v2537
        %v2539 = vpop.f32.mrb[0].mxu0
        %2540 = vmatprep.mubr.f32.mxu0 0.0
        %2541 = vmatmul.mubr.f32.gmra.mrb[0].mxu0 %v2331
        %v2542 = vpop.f32.mrb[0].mxu0
        %v2543 = vadd.f32 0.0, %v2542
        %v2544 = vpop.f32.mrb[0].mxu0
        %2545 = vmatprep.mubr.f32.mxu0 0.0
        %2546 = vmatmul.mubr.f32.gmra.mrb[0].mxu0 %v2334
        %v2547 = vpop.f32.mrb[0].mxu0
        %v2548 = vadd.f32 0.0, %v2547
        %v2549 = vpop.f32.mrb[0].mxu0
        %2550 = vmatprep.mubr.f32.mxu0 0.0
        %2551 = vmatmul.mubr.f32.gmra.mrb[0].mxu0 %v2337
        %v2552 = vpop.f32.mrb[0].mxu0
        %v2553 = vadd.f32 0.0, %v2552
        %v2554 = vpop.f32.mrb[0].mxu0
        %2555 = vmatprep.mubr.f32.mxu0 0.0
        %2556 = vmatmul.mubr.f32.gmra.mrb[0].mxu0 %v2340
        %v2557 = vpop.f32.mrb[0].mxu0
        %v2558 = vadd.f32 0.0, %v2557
        %v2559 = vpop.f32.mrb[0].mxu0
        %2560 = vmatprep.mubr.f32.mxu0 0.0
        %2561 = vmatmul.mubr.f32.gmra.mrb[0].mxu0 %v2343
        %v2562 = vpop.f32.mrb[0].mxu0
        %v2563 = vadd.f32 0.0, %v2562
        %v2564 = vpop.f32.mrb[0].mxu0
        %2565 = vmatprep.mubr.f32.mxu0 0.0
        %2566 = vmatmul.mubr.f32.gmra.mrb[0].mxu0 %v2346
        %v2567 = vpop.f32.mrb[0].mxu0
        %v2568 = vadd.f32 0.0, %v2567
        %v2569 = vpop.f32.mrb[0].mxu0
        %2570 = vmatprep.mubr.f32.mxu0 0.0
        %2571 = vmatmul.mubr.f32.gmra.mrb[0].mxu0 %v2349
        %v2572 = vpop.f32.mrb[0].mxu0
        %v2573 = vadd.f32 0.0, %v2572
        %v2574 = vpop.f32.mrb[0].mxu0
        %2575 = vdwg.mxu0
        %v2576 = vadd.f32 %v2186, %v2418
        %v2577 = vadd.f32 %v2187, %v2423
        %v2578 = vadd.f32 %v2188, %v2428
        %v2579 = vadd.f32 %v2189, %v2433
        %v2580 = vadd.f32 %v2190, %v2438
        %v2581 = vadd.f32 %v2191, %v2443
        %v2582 = vadd.f32 %v2192, %v2448
        %v2583 = vadd.f32 %v2193, %v2453
        %v2584 = vadd.f32 %v2194, %v2458
        %v2585 = vadd.f32 %v2195, %v2463
        %v2586 = vadd.f32 %v2196, %v2468
        %v2587 = vadd.f32 %v2197, %v2473
        %v2588 = vadd.f32 %v2198, %v2478
        %v2589 = vadd.f32 %v2199, %v2483
        %v2590 = vadd.f32 %v2200, %v2488
        %v2591 = vadd.f32 %v2201, %v2493
        %v2592 = vadd.f32 %v2202, %v2498
        %v2593 = vadd.f32 %v2203, %v2503
        %v2594 = vadd.f32 %v2204, %v2508
        %v2595 = vadd.f32 %v2205, %v2513
        %v2596 = vadd.f32 %v2206, %v2518
        %v2597 = vadd.f32 %v2207, %v2523
        %v2598 = vadd.f32 %v2208, %v2528
        %v2599 = vadd.f32 %v2209, %v2533
        %v2600 = vadd.f32 %v2210, %v2538
        %v2601 = vadd.f32 %v2211, %v2543
        %v2602 = vadd.f32 %v2212, %v2548
        %v2603 = vadd.f32 %v2213, %v2553
        %v2604 = vadd.f32 %v2214, %v2558
        %v2605 = vadd.f32 %v2215, %v2563
        %v2606 = vadd.f32 %v2216, %v2568
        %v2607 = vadd.f32 %v2217, %v2573
        %s2608 = scalar_lea.vmem %s330, 48
        %v2609 = vld [vmem:[%s2608] sm:$0xff]
        %v2610 = vld [vmem:[%s2608 + $0x8] sm:$0xff]
        %v2611 = vld [vmem:[%s2608 + $0x18] sm:$0xff]
        %v2612 = vld [vmem:[%s2608 + $0x20] sm:$0xff]
        %v2613 = vld [vmem:[%s2608 + $0x30] sm:$0xff]
        %v2614 = vld [vmem:[%s2608 + $0x38] sm:$0xff]
        %v2615 = vld [vmem:[%s2608 + $0x48] sm:$0xff]
        %v2616 = vld [vmem:[%s2608 + $0x50] sm:$0xff]
        %v2617 = vld [vmem:[%s2608 + $0x60] sm:$0xff]
        %v2618 = vld [vmem:[%s2608 + $0x68] sm:$0xff]
        %v2619 = vld [vmem:[%s2608 + $0x78] sm:$0xff]
        %v2620 = vld [vmem:[%s2608 + $0x80] sm:$0xff]
        %v2621 = vld [vmem:[%s2608 + $0x90] sm:$0xff]
        %v2622 = vld [vmem:[%s2608 + $0x98] sm:$0xff]
        %v2623 = vld [vmem:[%s2608 + $0xa8] sm:$0xff]
        %v2624 = vld [vmem:[%s2608 + $0xb0] sm:$0xff]
        %v2625 = vld [vmem:[%s2608 + $0xc0] sm:$0xff]
        %v2626 = vld [vmem:[%s2608 + $0xc8] sm:$0xff]
        %v2627 = vld [vmem:[%s2608 + $0xd8] sm:$0xff]
        %v2628 = vld [vmem:[%s2608 + $0xe0] sm:$0xff]
        %v2629 = vld [vmem:[%s2608 + $0xf0] sm:$0xff]
        %v2630 = vld [vmem:[%s2608 + $0xf8] sm:$0xff]
        %v2631 = vld [vmem:[%s2608 + $0x108] sm:$0xff]
        %v2632 = vld [vmem:[%s2608 + $0x110] sm:$0xff]
        %v2633 = vld [vmem:[%s2608 + $0x120] sm:$0xff]
        %v2634 = vld [vmem:[%s2608 + $0x128] sm:$0xff]
        %v2635 = vld [vmem:[%s2608 + $0x138] sm:$0xff]
        %v2636 = vld [vmem:[%s2608 + $0x140] sm:$0xff]
        %v2637 = vld [vmem:[%s2608 + $0x150] sm:$0xff]
        %v2638 = vld [vmem:[%s2608 + $0x158] sm:$0xff]
        %v2639 = vld [vmem:[%s2608 + $0x168] sm:$0xff]
        %v2640 = vld [vmem:[%s2608 + $0x170] sm:$0xff]
        %s2641 = scalar_lea.vmem %s1, 192
        %v2642 = vld [vmem:[%s2641] sm:$0xff]
        %v2643 = vld [vmem:[%s2641 + $0x8] sm:$0xff]
        %v2644 = vld [vmem:[%s2641 + $0x10] sm:$0xff]
        %v2645 = vld [vmem:[%s2641 + $0x18] sm:$0xff]
        %v2647 = vsel %vm404, %v2609, 0
        %v2650 = vsel %vm404, %v2610, 0
        %v2653 = vsel %vm404, %v2611, 0
        %v2656 = vsel %vm404, %v2612, 0
        %v2659 = vsel %vm404, %v2613, 0
        %v2662 = vsel %vm404, %v2614, 0
        %v2665 = vsel %vm404, %v2615, 0
        %v2668 = vsel %vm404, %v2616, 0
        %v2671 = vsel %vm404, %v2617, 0
        %v2674 = vsel %vm404, %v2618, 0
        %v2677 = vsel %vm404, %v2619, 0
        %v2680 = vsel %vm404, %v2620, 0
        %v2683 = vsel %vm404, %v2621, 0
        %v2686 = vsel %vm404, %v2622, 0
        %v2689 = vsel %vm404, %v2623, 0
        %v2692 = vsel %vm404, %v2624, 0
        %v2695 = vsel %vm404, %v2625, 0
        %v2698 = vsel %vm404, %v2626, 0
        %v2701 = vsel %vm404, %v2627, 0
        %v2704 = vsel %vm404, %v2628, 0
        %v2707 = vsel %vm404, %v2629, 0
        %v2710 = vsel %vm404, %v2630, 0
        %v2713 = vsel %vm404, %v2631, 0
        %v2716 = vsel %vm404, %v2632, 0
        %v2719 = vsel %vm404, %v2633, 0
        %v2722 = vsel %vm404, %v2634, 0
        %v2725 = vsel %vm404, %v2635, 0
        %v2728 = vsel %vm404, %v2636, 0
        %v2731 = vsel %vm404, %v2637, 0
        %v2734 = vsel %vm404, %v2638, 0
        %v2737 = vsel %vm404, %v2639, 0
        %v2740 = vsel %vm404, %v2640, 0
        %2742 = vmatprep.subr.mxu0 0.0
        %2743 = vmatpush1.msra.mxu0 %v2642
        %2744 = vmatprep.subr.mxu0 0.0
        %2745 = vmatpush1.msra.mxu0 %v2643
        %2746 = vmatprep.subr.mxu0 0.0
        %2747 = vmatpush1.msra.mxu0 %v2644
        %2748 = vmatprep.subr.mxu0 0.0
        %2749 = vmatpush1.msra.mxu0 %v2645
        %2750 = vmatprep.subr.mxu0 0.0
        %2751 = vmatpush1.msra.mxu0 0.0
        %2752 = vmatprep.subr.mxu0 0.0
        %2753 = vmatpush1.msra.mxu0 0.0
        %2754 = vmatprep.subr.mxu0 0.0
        %2755 = vmatpush1.msra.mxu0 0.0
        %2756 = vmatprep.subr.mxu0 0.0
        %2757 = vmatpush1.msra.mxu0 0.0
        %2758 = vmatprep.subr.mxu0 0.0
        %2759 = vmatpush1.msra.mxu0 0.0
        %2760 = vmatprep.subr.mxu0 0.0
        %2761 = vmatpush1.msra.mxu0 0.0
        %2762 = vmatprep.subr.mxu0 0.0
        %2763 = vmatpush1.msra.mxu0 0.0
        %2764 = vmatprep.subr.mxu0 0.0
        %2765 = vmatpush1.msra.mxu0 0.0
        %2766 = vmatprep.subr.mxu0 0.0
        %2767 = vmatpush1.msra.mxu0 0.0
        %2768 = vmatprep.subr.mxu0 0.0
        %2769 = vmatpush1.msra.mxu0 0.0
        %2770 = vmatprep.subr.mxu0 0.0
        %2771 = vmatpush1.msra.mxu0 0.0
        %2772 = vmatprep.subr.mxu0 0.0
        %2773 = vmatpush1.msra.mxu0 0.0
        %2774 = vmatprep.subr.mxu0 0.0
        %2775 = vmatpush1.msra.mxu0 0.0
        %2776 = vmatprep.subr.mxu0 0.0
        %2777 = vmatpush1.msra.mxu0 0.0
        %2778 = vmatprep.subr.mxu0 0.0
        %2779 = vmatpush1.msra.mxu0 0.0
        %2780 = vmatprep.subr.mxu0 0.0
        %2781 = vmatpush1.msra.mxu0 0.0
        %2782 = vmatprep.subr.mxu0 0.0
        %2783 = vmatpush1.msra.mxu0 0.0
        %2784 = vmatprep.subr.mxu0 0.0
        %2785 = vmatpush1.msra.mxu0 0.0
        %2786 = vmatprep.subr.mxu0 0.0
        %2787 = vmatpush1.msra.mxu0 0.0
        %2788 = vmatprep.subr.mxu0 0.0
        %2789 = vmatpush1.msra.mxu0 0.0
        %2790 = vmatprep.subr.mxu0 0.0
        %2791 = vmatpush1.msra.mxu0 0.0
        %2792 = vmatprep.subr.mxu0 0.0
        %2793 = vmatpush1.msra.mxu0 0.0
        %2794 = vmatprep.subr.mxu0 0.0
        %2795 = vmatpush1.msra.mxu0 0.0
        %2796 = vmatprep.subr.mxu0 0.0
        %2797 = vmatpush1.msra.mxu0 0.0
        %2798 = vmatprep.subr.mxu0 0.0
        %2799 = vmatpush1.msra.mxu0 0.0
        %2800 = vmatprep.subr.mxu0 0.0
        %2801 = vmatpush1.msra.mxu0 0.0
        %2802 = vmatprep.subr.mxu0 0.0
        %2803 = vmatpush1.msra.mxu0 0.0
        %2804 = vmatprep.subr.mxu0 0.0
        %2805 = vmatpush1.msra.mxu0 0.0
        %2806 = vmatprep.mubr.f32.mxu0 0.0
        %2807 = vmatmul.mubr.f32.gmra.mrb[0].mxu0 %v2647
        %v2808 = vpop.f32.mrb[0].mxu0
        %v2809 = vadd.f32 0.0, %v2808
        %v2810 = vpop.f32.mrb[0].mxu0
        %2811 = vmatprep.mubr.f32.mxu0 0.0
        %2812 = vmatmul.mubr.f32.gmra.mrb[0].mxu0 %v2650
        %v2813 = vpop.f32.mrb[0].mxu0
        %v2814 = vadd.f32 0.0, %v2813
        %v2815 = vpop.f32.mrb[0].mxu0
        %2816 = vmatprep.mubr.f32.mxu0 0.0
        %2817 = vmatmul.mubr.f32.gmra.mrb[0].mxu0 %v2653
        %v2818 = vpop.f32.mrb[0].mxu0
        %v2819 = vadd.f32 0.0, %v2818
        %v2820 = vpop.f32.mrb[0].mxu0
        %2821 = vmatprep.mubr.f32.mxu0 0.0
        %2822 = vmatmul.mubr.f32.gmra.mrb[0].mxu0 %v2656
        %v2823 = vpop.f32.mrb[0].mxu0
        %v2824 = vadd.f32 0.0, %v2823
        %v2825 = vpop.f32.mrb[0].mxu0
        %2826 = vmatprep.mubr.f32.mxu0 0.0
        %2827 = vmatmul.mubr.f32.gmra.mrb[0].mxu0 %v2659
        %v2828 = vpop.f32.mrb[0].mxu0
        %v2829 = vadd.f32 0.0, %v2828
        %v2830 = vpop.f32.mrb[0].mxu0
        %2831 = vmatprep.mubr.f32.mxu0 0.0
        %2832 = vmatmul.mubr.f32.gmra.mrb[0].mxu0 %v2662
        %v2833 = vpop.f32.mrb[0].mxu0
        %v2834 = vadd.f32 0.0, %v2833
        %v2835 = vpop.f32.mrb[0].mxu0
        %2836 = vmatprep.mubr.f32.mxu0 0.0
        %2837 = vmatmul.mubr.f32.gmra.mrb[0].mxu0 %v2665
        %v2838 = vpop.f32.mrb[0].mxu0
        %v2839 = vadd.f32 0.0, %v2838
        %v2840 = vpop.f32.mrb[0].mxu0
        %2841 = vmatprep.mubr.f32.mxu0 0.0
        %2842 = vmatmul.mubr.f32.gmra.mrb[0].mxu0 %v2668
        %v2843 = vpop.f32.mrb[0].mxu0
        %v2844 = vadd.f32 0.0, %v2843
        %v2845 = vpop.f32.mrb[0].mxu0
        %2846 = vmatprep.mubr.f32.mxu0 0.0
        %2847 = vmatmul.mubr.f32.gmra.mrb[0].mxu0 %v2671
        %v2848 = vpop.f32.mrb[0].mxu0
        %v2849 = vadd.f32 0.0, %v2848
        %v2850 = vpop.f32.mrb[0].mxu0
        %2851 = vmatprep.mubr.f32.mxu0 0.0
        %2852 = vmatmul.mubr.f32.gmra.mrb[0].mxu0 %v2674
        %v2853 = vpop.f32.mrb[0].mxu0
        %v2854 = vadd.f32 0.0, %v2853
        %v2855 = vpop.f32.mrb[0].mxu0
        %2856 = vmatprep.mubr.f32.mxu0 0.0
        %2857 = vmatmul.mubr.f32.gmra.mrb[0].mxu0 %v2677
        %v2858 = vpop.f32.mrb[0].mxu0
        %v2859 = vadd.f32 0.0, %v2858
        %v2860 = vpop.f32.mrb[0].mxu0
        %2861 = vmatprep.mubr.f32.mxu0 0.0
        %2862 = vmatmul.mubr.f32.gmra.mrb[0].mxu0 %v2680
        %v2863 = vpop.f32.mrb[0].mxu0
        %v2864 = vadd.f32 0.0, %v2863
        %v2865 = vpop.f32.mrb[0].mxu0
        %2866 = vmatprep.mubr.f32.mxu0 0.0
        %2867 = vmatmul.mubr.f32.gmra.mrb[0].mxu0 %v2683
        %v2868 = vpop.f32.mrb[0].mxu0
        %v2869 = vadd.f32 0.0, %v2868
        %v2870 = vpop.f32.mrb[0].mxu0
        %2871 = vmatprep.mubr.f32.mxu0 0.0
        %2872 = vmatmul.mubr.f32.gmra.mrb[0].mxu0 %v2686
        %v2873 = vpop.f32.mrb[0].mxu0
        %v2874 = vadd.f32 0.0, %v2873
        %v2875 = vpop.f32.mrb[0].mxu0
        %2876 = vmatprep.mubr.f32.mxu0 0.0
        %2877 = vmatmul.mubr.f32.gmra.mrb[0].mxu0 %v2689
        %v2878 = vpop.f32.mrb[0].mxu0
        %v2879 = vadd.f32 0.0, %v2878
        %v2880 = vpop.f32.mrb[0].mxu0
        %2881 = vmatprep.mubr.f32.mxu0 0.0
        %2882 = vmatmul.mubr.f32.gmra.mrb[0].mxu0 %v2692
        %v2883 = vpop.f32.mrb[0].mxu0
        %v2884 = vadd.f32 0.0, %v2883
        %v2885 = vpop.f32.mrb[0].mxu0
        %2886 = vmatprep.mubr.f32.mxu0 0.0
        %2887 = vmatmul.mubr.f32.gmra.mrb[0].mxu0 %v2695
        %v2888 = vpop.f32.mrb[0].mxu0
        %v2889 = vadd.f32 0.0, %v2888
        %v2890 = vpop.f32.mrb[0].mxu0
        %2891 = vmatprep.mubr.f32.mxu0 0.0
        %2892 = vmatmul.mubr.f32.gmra.mrb[0].mxu0 %v2698
        %v2893 = vpop.f32.mrb[0].mxu0
        %v2894 = vadd.f32 0.0, %v2893
        %v2895 = vpop.f32.mrb[0].mxu0
        %2896 = vmatprep.mubr.f32.mxu0 0.0
        %2897 = vmatmul.mubr.f32.gmra.mrb[0].mxu0 %v2701
        %v2898 = vpop.f32.mrb[0].mxu0
        %v2899 = vadd.f32 0.0, %v2898
        %v2900 = vpop.f32.mrb[0].mxu0
        %2901 = vmatprep.mubr.f32.mxu0 0.0
        %2902 = vmatmul.mubr.f32.gmra.mrb[0].mxu0 %v2704
        %v2903 = vpop.f32.mrb[0].mxu0
        %v2904 = vadd.f32 0.0, %v2903
        %v2905 = vpop.f32.mrb[0].mxu0
        %2906 = vmatprep.mubr.f32.mxu0 0.0
        %2907 = vmatmul.mubr.f32.gmra.mrb[0].mxu0 %v2707
        %v2908 = vpop.f32.mrb[0].mxu0
        %v2909 = vadd.f32 0.0, %v2908
        %v2910 = vpop.f32.mrb[0].mxu0
        %2911 = vmatprep.mubr.f32.mxu0 0.0
        %2912 = vmatmul.mubr.f32.gmra.mrb[0].mxu0 %v2710
        %v2913 = vpop.f32.mrb[0].mxu0
        %v2914 = vadd.f32 0.0, %v2913
        %v2915 = vpop.f32.mrb[0].mxu0
        %2916 = vmatprep.mubr.f32.mxu0 0.0
        %2917 = vmatmul.mubr.f32.gmra.mrb[0].mxu0 %v2713
        %v2918 = vpop.f32.mrb[0].mxu0
        %v2919 = vadd.f32 0.0, %v2918
        %v2920 = vpop.f32.mrb[0].mxu0
        %2921 = vmatprep.mubr.f32.mxu0 0.0
        %2922 = vmatmul.mubr.f32.gmra.mrb[0].mxu0 %v2716
        %v2923 = vpop.f32.mrb[0].mxu0
        %v2924 = vadd.f32 0.0, %v2923
        %v2925 = vpop.f32.mrb[0].mxu0
        %2926 = vmatprep.mubr.f32.mxu0 0.0
        %2927 = vmatmul.mubr.f32.gmra.mrb[0].mxu0 %v2719
        %v2928 = vpop.f32.mrb[0].mxu0
        %v2929 = vadd.f32 0.0, %v2928
        %v2930 = vpop.f32.mrb[0].mxu0
        %2931 = vmatprep.mubr.f32.mxu0 0.0
        %2932 = vmatmul.mubr.f32.gmra.mrb[0].mxu0 %v2722
        %v2933 = vpop.f32.mrb[0].mxu0
        %v2934 = vadd.f32 0.0, %v2933
        %v2935 = vpop.f32.mrb[0].mxu0
        %2936 = vmatprep.mubr.f32.mxu0 0.0
        %2937 = vmatmul.mubr.f32.gmra.mrb[0].mxu0 %v2725
        %v2938 = vpop.f32.mrb[0].mxu0
        %v2939 = vadd.f32 0.0, %v2938
        %v2940 = vpop.f32.mrb[0].mxu0
        %2941 = vmatprep.mubr.f32.mxu0 0.0
        %2942 = vmatmul.mubr.f32.gmra.mrb[0].mxu0 %v2728
        %v2943 = vpop.f32.mrb[0].mxu0
        %v2944 = vadd.f32 0.0, %v2943
        %v2945 = vpop.f32.mrb[0].mxu0
        %2946 = vmatprep.mubr.f32.mxu0 0.0
        %2947 = vmatmul.mubr.f32.gmra.mrb[0].mxu0 %v2731
        %v2948 = vpop.f32.mrb[0].mxu0
        %v2949 = vadd.f32 0.0, %v2948
        %v2950 = vpop.f32.mrb[0].mxu0
        %2951 = vmatprep.mubr.f32.mxu0 0.0
        %2952 = vmatmul.mubr.f32.gmra.mrb[0].mxu0 %v2734
        %v2953 = vpop.f32.mrb[0].mxu0
        %v2954 = vadd.f32 0.0, %v2953
        %v2955 = vpop.f32.mrb[0].mxu0
        %2956 = vmatprep.mubr.f32.mxu0 0.0
        %2957 = vmatmul.mubr.f32.gmra.mrb[0].mxu0 %v2737
        %v2958 = vpop.f32.mrb[0].mxu0
        %v2959 = vadd.f32 0.0, %v2958
        %v2960 = vpop.f32.mrb[0].mxu0
        %2961 = vmatprep.mubr.f32.mxu0 0.0
        %2962 = vmatmul.mubr.f32.gmra.mrb[0].mxu0 %v2740
        %v2963 = vpop.f32.mrb[0].mxu0
        %v2964 = vadd.f32 0.0, %v2963
        %v2965 = vpop.f32.mrb[0].mxu0
        %2966 = vdwg.mxu0
        %v2967 = vadd.f32 %v2576, %v2809
        %v2968 = vadd.f32 %v2577, %v2814
        %v2969 = vadd.f32 %v2578, %v2819
        %v2970 = vadd.f32 %v2579, %v2824
        %v2971 = vadd.f32 %v2580, %v2829
        %v2972 = vadd.f32 %v2581, %v2834
        %v2973 = vadd.f32 %v2582, %v2839
        %v2974 = vadd.f32 %v2583, %v2844
        %v2975 = vadd.f32 %v2584, %v2849
        %v2976 = vadd.f32 %v2585, %v2854
        %v2977 = vadd.f32 %v2586, %v2859
        %v2978 = vadd.f32 %v2587, %v2864
        %v2979 = vadd.f32 %v2588, %v2869
        %v2980 = vadd.f32 %v2589, %v2874
        %v2981 = vadd.f32 %v2590, %v2879
        %v2982 = vadd.f32 %v2591, %v2884
        %v2983 = vadd.f32 %v2592, %v2889
        %v2984 = vadd.f32 %v2593, %v2894
        %v2985 = vadd.f32 %v2594, %v2899
        %v2986 = vadd.f32 %v2595, %v2904
        %v2987 = vadd.f32 %v2596, %v2909
        %v2988 = vadd.f32 %v2597, %v2914
        %v2989 = vadd.f32 %v2598, %v2919
        %v2990 = vadd.f32 %v2599, %v2924
        %v2991 = vadd.f32 %v2600, %v2929
        %v2992 = vadd.f32 %v2601, %v2934
        %v2993 = vadd.f32 %v2602, %v2939
        %v2994 = vadd.f32 %v2603, %v2944
        %v2995 = vadd.f32 %v2604, %v2949
        %v2996 = vadd.f32 %v2605, %v2954
        %v2997 = vadd.f32 %v2606, %v2959
        %v2998 = vadd.f32 %v2607, %v2964
        %v2999 = vld [vmem:[%s2608 + $0x1] sm:$0xff]
        %v3000 = vld [vmem:[%s2608 + $0x9] sm:$0xff]
        %v3001 = vld [vmem:[%s2608 + $0x19] sm:$0xff]
        %v3002 = vld [vmem:[%s2608 + $0x21] sm:$0xff]
        %v3003 = vld [vmem:[%s2608 + $0x31] sm:$0xff]
        %v3004 = vld [vmem:[%s2608 + $0x39] sm:$0xff]
        %v3005 = vld [vmem:[%s2608 + $0x49] sm:$0xff]
        %v3006 = vld [vmem:[%s2608 + $0x51] sm:$0xff]
        %v3007 = vld [vmem:[%s2608 + $0x61] sm:$0xff]
        %v3008 = vld [vmem:[%s2608 + $0x69] sm:$0xff]
        %v3009 = vld [vmem:[%s2608 + $0x79] sm:$0xff]
        %v3010 = vld [vmem:[%s2608 + $0x81] sm:$0xff]
        %v3011 = vld [vmem:[%s2608 + $0x91] sm:$0xff]
        %v3012 = vld [vmem:[%s2608 + $0x99] sm:$0xff]
        %v3013 = vld [vmem:[%s2608 + $0xa9] sm:$0xff]
        %v3014 = vld [vmem:[%s2608 + $0xb1] sm:$0xff]
        %v3015 = vld [vmem:[%s2608 + $0xc1] sm:$0xff]
        %v3016 = vld [vmem:[%s2608 + $0xc9] sm:$0xff]
        %v3017 = vld [vmem:[%s2608 + $0xd9] sm:$0xff]
        %v3018 = vld [vmem:[%s2608 + $0xe1] sm:$0xff]
        %v3019 = vld [vmem:[%s2608 + $0xf1] sm:$0xff]
        %v3020 = vld [vmem:[%s2608 + $0xf9] sm:$0xff]
        %v3021 = vld [vmem:[%s2608 + $0x109] sm:$0xff]
        %v3022 = vld [vmem:[%s2608 + $0x111] sm:$0xff]
        %v3023 = vld [vmem:[%s2608 + $0x121] sm:$0xff]
        %v3024 = vld [vmem:[%s2608 + $0x129] sm:$0xff]
        %v3025 = vld [vmem:[%s2608 + $0x139] sm:$0xff]
        %v3026 = vld [vmem:[%s2608 + $0x141] sm:$0xff]
        %v3027 = vld [vmem:[%s2608 + $0x151] sm:$0xff]
        %v3028 = vld [vmem:[%s2608 + $0x159] sm:$0xff]
        %v3029 = vld [vmem:[%s2608 + $0x169] sm:$0xff]
        %v3030 = vld [vmem:[%s2608 + $0x171] sm:$0xff]
        %s3031 = scalar_lea.vmem %s1, 224
        %v3032 = vld [vmem:[%s3031] sm:$0xff]
        %v3033 = vld [vmem:[%s3031 + $0x8] sm:$0xff]
        %v3034 = vld [vmem:[%s3031 + $0x10] sm:$0xff]
        %v3035 = vld [vmem:[%s3031 + $0x18] sm:$0xff]
        %v3037 = vsel %vm404, %v2999, 0
        %v3040 = vsel %vm404, %v3000, 0
        %v3043 = vsel %vm404, %v3001, 0
        %v3046 = vsel %vm404, %v3002, 0
        %v3049 = vsel %vm404, %v3003, 0
        %v3052 = vsel %vm404, %v3004, 0
        %v3055 = vsel %vm404, %v3005, 0
        %v3058 = vsel %vm404, %v3006, 0
        %v3061 = vsel %vm404, %v3007, 0
        %v3064 = vsel %vm404, %v3008, 0
        %v3067 = vsel %vm404, %v3009, 0
        %v3070 = vsel %vm404, %v3010, 0
        %v3073 = vsel %vm404, %v3011, 0
        %v3076 = vsel %vm404, %v3012, 0
        %v3079 = vsel %vm404, %v3013, 0
        %v3082 = vsel %vm404, %v3014, 0
        %v3085 = vsel %vm404, %v3015, 0
        %v3088 = vsel %vm404, %v3016, 0
        %v3091 = vsel %vm404, %v3017, 0
        %v3094 = vsel %vm404, %v3018, 0
        %v3097 = vsel %vm404, %v3019, 0
        %v3100 = vsel %vm404, %v3020, 0
        %v3103 = vsel %vm404, %v3021, 0
        %v3106 = vsel %vm404, %v3022, 0
        %v3109 = vsel %vm404, %v3023, 0
        %v3112 = vsel %vm404, %v3024, 0
        %v3115 = vsel %vm404, %v3025, 0
        %v3118 = vsel %vm404, %v3026, 0
        %v3121 = vsel %vm404, %v3027, 0
        %v3124 = vsel %vm404, %v3028, 0
        %v3127 = vsel %vm404, %v3029, 0
        %v3130 = vsel %vm404, %v3030, 0
        %3132 = vmatprep.subr.mxu0 0.0
        %3133 = vmatpush1.msra.mxu0 %v3032
        %3134 = vmatprep.subr.mxu0 0.0
        %3135 = vmatpush1.msra.mxu0 %v3033
        %3136 = vmatprep.subr.mxu0 0.0
        %3137 = vmatpush1.msra.mxu0 %v3034
        %3138 = vmatprep.subr.mxu0 0.0
        %3139 = vmatpush1.msra.mxu0 %v3035
        %3140 = vmatprep.subr.mxu0 0.0
        %3141 = vmatpush1.msra.mxu0 0.0
        %3142 = vmatprep.subr.mxu0 0.0
        %3143 = vmatpush1.msra.mxu0 0.0
        %3144 = vmatprep.subr.mxu0 0.0
        %3145 = vmatpush1.msra.mxu0 0.0
        %3146 = vmatprep.subr.mxu0 0.0
        %3147 = vmatpush1.msra.mxu0 0.0
        %3148 = vmatprep.subr.mxu0 0.0
        %3149 = vmatpush1.msra.mxu0 0.0
        %3150 = vmatprep.subr.mxu0 0.0
        %3151 = vmatpush1.msra.mxu0 0.0
        %3152 = vmatprep.subr.mxu0 0.0
        %3153 = vmatpush1.msra.mxu0 0.0
        %3154 = vmatprep.subr.mxu0 0.0
        %3155 = vmatpush1.msra.mxu0 0.0
        %3156 = vmatprep.subr.mxu0 0.0
        %3157 = vmatpush1.msra.mxu0 0.0
        %3158 = vmatprep.subr.mxu0 0.0
        %3159 = vmatpush1.msra.mxu0 0.0
        %3160 = vmatprep.subr.mxu0 0.0
        %3161 = vmatpush1.msra.mxu0 0.0
        %3162 = vmatprep.subr.mxu0 0.0
        %3163 = vmatpush1.msra.mxu0 0.0
        %3164 = vmatprep.subr.mxu0 0.0
        %3165 = vmatpush1.msra.mxu0 0.0
        %3166 = vmatprep.subr.mxu0 0.0
        %3167 = vmatpush1.msra.mxu0 0.0
        %3168 = vmatprep.subr.mxu0 0.0
        %3169 = vmatpush1.msra.mxu0 0.0
        %3170 = vmatprep.subr.mxu0 0.0
        %3171 = vmatpush1.msra.mxu0 0.0
        %3172 = vmatprep.subr.mxu0 0.0
        %3173 = vmatpush1.msra.mxu0 0.0
        %3174 = vmatprep.subr.mxu0 0.0
        %3175 = vmatpush1.msra.mxu0 0.0
        %3176 = vmatprep.subr.mxu0 0.0
        %3177 = vmatpush1.msra.mxu0 0.0
        %3178 = vmatprep.subr.mxu0 0.0
        %3179 = vmatpush1.msra.mxu0 0.0
        %3180 = vmatprep.subr.mxu0 0.0
        %3181 = vmatpush1.msra.mxu0 0.0
        %3182 = vmatprep.subr.mxu0 0.0
        %3183 = vmatpush1.msra.mxu0 0.0
        %3184 = vmatprep.subr.mxu0 0.0
        %3185 = vmatpush1.msra.mxu0 0.0
        %3186 = vmatprep.subr.mxu0 0.0
        %3187 = vmatpush1.msra.mxu0 0.0
        %3188 = vmatprep.subr.mxu0 0.0
        %3189 = vmatpush1.msra.mxu0 0.0
        %3190 = vmatprep.subr.mxu0 0.0
        %3191 = vmatpush1.msra.mxu0 0.0
        %3192 = vmatprep.subr.mxu0 0.0
        %3193 = vmatpush1.msra.mxu0 0.0
        %3194 = vmatprep.subr.mxu0 0.0
        %3195 = vmatpush1.msra.mxu0 0.0
        %3196 = vmatprep.mubr.f32.mxu0 0.0
        %3197 = vmatmul.mubr.f32.gmra.mrb[0].mxu0 %v3037
        %v3198 = vpop.f32.mrb[0].mxu0
        %v3199 = vadd.f32 0.0, %v3198
        %v3200 = vpop.f32.mrb[0].mxu0
        %3201 = vmatprep.mubr.f32.mxu0 0.0
        %3202 = vmatmul.mubr.f32.gmra.mrb[0].mxu0 %v3040
        %v3203 = vpop.f32.mrb[0].mxu0
        %v3204 = vadd.f32 0.0, %v3203
        %v3205 = vpop.f32.mrb[0].mxu0
        %3206 = vmatprep.mubr.f32.mxu0 0.0
        %3207 = vmatmul.mubr.f32.gmra.mrb[0].mxu0 %v3043
        %v3208 = vpop.f32.mrb[0].mxu0
        %v3209 = vadd.f32 0.0, %v3208
        %v3210 = vpop.f32.mrb[0].mxu0
        %3211 = vmatprep.mubr.f32.mxu0 0.0
        %3212 = vmatmul.mubr.f32.gmra.mrb[0].mxu0 %v3046
        %v3213 = vpop.f32.mrb[0].mxu0
        %v3214 = vadd.f32 0.0, %v3213
        %v3215 = vpop.f32.mrb[0].mxu0
        %3216 = vmatprep.mubr.f32.mxu0 0.0
        %3217 = vmatmul.mubr.f32.gmra.mrb[0].mxu0 %v3049
        %v3218 = vpop.f32.mrb[0].mxu0
        %v3219 = vadd.f32 0.0, %v3218
        %v3220 = vpop.f32.mrb[0].mxu0
        %3221 = vmatprep.mubr.f32.mxu0 0.0
        %3222 = vmatmul.mubr.f32.gmra.mrb[0].mxu0 %v3052
        %v3223 = vpop.f32.mrb[0].mxu0
        %v3224 = vadd.f32 0.0, %v3223
        %v3225 = vpop.f32.mrb[0].mxu0
        %3226 = vmatprep.mubr.f32.mxu0 0.0
        %3227 = vmatmul.mubr.f32.gmra.mrb[0].mxu0 %v3055
        %v3228 = vpop.f32.mrb[0].mxu0
        %v3229 = vadd.f32 0.0, %v3228
        %v3230 = vpop.f32.mrb[0].mxu0
        %3231 = vmatprep.mubr.f32.mxu0 0.0
        %3232 = vmatmul.mubr.f32.gmra.mrb[0].mxu0 %v3058
        %v3233 = vpop.f32.mrb[0].mxu0
        %v3234 = vadd.f32 0.0, %v3233
        %v3235 = vpop.f32.mrb[0].mxu0
        %3236 = vmatprep.mubr.f32.mxu0 0.0
        %3237 = vmatmul.mubr.f32.gmra.mrb[0].mxu0 %v3061
        %v3238 = vpop.f32.mrb[0].mxu0
        %v3239 = vadd.f32 0.0, %v3238
        %v3240 = vpop.f32.mrb[0].mxu0
        %3241 = vmatprep.mubr.f32.mxu0 0.0
        %3242 = vmatmul.mubr.f32.gmra.mrb[0].mxu0 %v3064
        %v3243 = vpop.f32.mrb[0].mxu0
        %v3244 = vadd.f32 0.0, %v3243
        %v3245 = vpop.f32.mrb[0].mxu0
        %3246 = vmatprep.mubr.f32.mxu0 0.0
        %3247 = vmatmul.mubr.f32.gmra.mrb[0].mxu0 %v3067
        %v3248 = vpop.f32.mrb[0].mxu0
        %v3249 = vadd.f32 0.0, %v3248
        %v3250 = vpop.f32.mrb[0].mxu0
        %3251 = vmatprep.mubr.f32.mxu0 0.0
        %3252 = vmatmul.mubr.f32.gmra.mrb[0].mxu0 %v3070
        %v3253 = vpop.f32.mrb[0].mxu0
        %v3254 = vadd.f32 0.0, %v3253
        %v3255 = vpop.f32.mrb[0].mxu0
        %3256 = vmatprep.mubr.f32.mxu0 0.0
        %3257 = vmatmul.mubr.f32.gmra.mrb[0].mxu0 %v3073
        %v3258 = vpop.f32.mrb[0].mxu0
        %v3259 = vadd.f32 0.0, %v3258
        %v3260 = vpop.f32.mrb[0].mxu0
        %3261 = vmatprep.mubr.f32.mxu0 0.0
        %3262 = vmatmul.mubr.f32.gmra.mrb[0].mxu0 %v3076
        %v3263 = vpop.f32.mrb[0].mxu0
        %v3264 = vadd.f32 0.0, %v3263
        %v3265 = vpop.f32.mrb[0].mxu0
        %3266 = vmatprep.mubr.f32.mxu0 0.0
        %3267 = vmatmul.mubr.f32.gmra.mrb[0].mxu0 %v3079
        %v3268 = vpop.f32.mrb[0].mxu0
        %v3269 = vadd.f32 0.0, %v3268
        %v3270 = vpop.f32.mrb[0].mxu0
        %3271 = vmatprep.mubr.f32.mxu0 0.0
        %3272 = vmatmul.mubr.f32.gmra.mrb[0].mxu0 %v3082
        %v3273 = vpop.f32.mrb[0].mxu0
        %v3274 = vadd.f32 0.0, %v3273
        %v3275 = vpop.f32.mrb[0].mxu0
        %3276 = vmatprep.mubr.f32.mxu0 0.0
        %3277 = vmatmul.mubr.f32.gmra.mrb[0].mxu0 %v3085
        %v3278 = vpop.f32.mrb[0].mxu0
        %v3279 = vadd.f32 0.0, %v3278
        %v3280 = vpop.f32.mrb[0].mxu0
        %3281 = vmatprep.mubr.f32.mxu0 0.0
        %3282 = vmatmul.mubr.f32.gmra.mrb[0].mxu0 %v3088
        %v3283 = vpop.f32.mrb[0].mxu0
        %v3284 = vadd.f32 0.0, %v3283
        %v3285 = vpop.f32.mrb[0].mxu0
        %3286 = vmatprep.mubr.f32.mxu0 0.0
        %3287 = vmatmul.mubr.f32.gmra.mrb[0].mxu0 %v3091
        %v3288 = vpop.f32.mrb[0].mxu0
        %v3289 = vadd.f32 0.0, %v3288
        %v3290 = vpop.f32.mrb[0].mxu0
        %3291 = vmatprep.mubr.f32.mxu0 0.0
        %3292 = vmatmul.mubr.f32.gmra.mrb[0].mxu0 %v3094
        %v3293 = vpop.f32.mrb[0].mxu0
        %v3294 = vadd.f32 0.0, %v3293
        %v3295 = vpop.f32.mrb[0].mxu0
        %3296 = vmatprep.mubr.f32.mxu0 0.0
        %3297 = vmatmul.mubr.f32.gmra.mrb[0].mxu0 %v3097
        %v3298 = vpop.f32.mrb[0].mxu0
        %v3299 = vadd.f32 0.0, %v3298
        %v3300 = vpop.f32.mrb[0].mxu0
        %3301 = vmatprep.mubr.f32.mxu0 0.0
        %3302 = vmatmul.mubr.f32.gmra.mrb[0].mxu0 %v3100
        %v3303 = vpop.f32.mrb[0].mxu0
        %v3304 = vadd.f32 0.0, %v3303
        %v3305 = vpop.f32.mrb[0].mxu0
        %3306 = vmatprep.mubr.f32.mxu0 0.0
        %3307 = vmatmul.mubr.f32.gmra.mrb[0].mxu0 %v3103
        %v3308 = vpop.f32.mrb[0].mxu0
        %v3309 = vadd.f32 0.0, %v3308
        %v3310 = vpop.f32.mrb[0].mxu0
        %3311 = vmatprep.mubr.f32.mxu0 0.0
        %3312 = vmatmul.mubr.f32.gmra.mrb[0].mxu0 %v3106
        %v3313 = vpop.f32.mrb[0].mxu0
        %v3314 = vadd.f32 0.0, %v3313
        %v3315 = vpop.f32.mrb[0].mxu0
        %3316 = vmatprep.mubr.f32.mxu0 0.0
        %3317 = vmatmul.mubr.f32.gmra.mrb[0].mxu0 %v3109
        %v3318 = vpop.f32.mrb[0].mxu0
        %v3319 = vadd.f32 0.0, %v3318
        %v3320 = vpop.f32.mrb[0].mxu0
        %3321 = vmatprep.mubr.f32.mxu0 0.0
        %3322 = vmatmul.mubr.f32.gmra.mrb[0].mxu0 %v3112
        %v3323 = vpop.f32.mrb[0].mxu0
        %v3324 = vadd.f32 0.0, %v3323
        %v3325 = vpop.f32.mrb[0].mxu0
        %3326 = vmatprep.mubr.f32.mxu0 0.0
        %3327 = vmatmul.mubr.f32.gmra.mrb[0].mxu0 %v3115
        %v3328 = vpop.f32.mrb[0].mxu0
        %v3329 = vadd.f32 0.0, %v3328
        %v3330 = vpop.f32.mrb[0].mxu0
        %3331 = vmatprep.mubr.f32.mxu0 0.0
        %3332 = vmatmul.mubr.f32.gmra.mrb[0].mxu0 %v3118
        %v3333 = vpop.f32.mrb[0].mxu0
        %v3334 = vadd.f32 0.0, %v3333
        %v3335 = vpop.f32.mrb[0].mxu0
        %3336 = vmatprep.mubr.f32.mxu0 0.0
        %3337 = vmatmul.mubr.f32.gmra.mrb[0].mxu0 %v3121
        %v3338 = vpop.f32.mrb[0].mxu0
        %v3339 = vadd.f32 0.0, %v3338
        %v3340 = vpop.f32.mrb[0].mxu0
        %3341 = vmatprep.mubr.f32.mxu0 0.0
        %3342 = vmatmul.mubr.f32.gmra.mrb[0].mxu0 %v3124
        %v3343 = vpop.f32.mrb[0].mxu0
        %v3344 = vadd.f32 0.0, %v3343
        %v3345 = vpop.f32.mrb[0].mxu0
        %3346 = vmatprep.mubr.f32.mxu0 0.0
        %3347 = vmatmul.mubr.f32.gmra.mrb[0].mxu0 %v3127
        %v3348 = vpop.f32.mrb[0].mxu0
        %v3349 = vadd.f32 0.0, %v3348
        %v3350 = vpop.f32.mrb[0].mxu0
        %3351 = vmatprep.mubr.f32.mxu0 0.0
        %3352 = vmatmul.mubr.f32.gmra.mrb[0].mxu0 %v3130
        %v3353 = vpop.f32.mrb[0].mxu0
        %v3354 = vadd.f32 0.0, %v3353
        %v3355 = vpop.f32.mrb[0].mxu0
        %3356 = vdwg.mxu0
        %v3357 = vadd.f32 %v2967, %v3199
        %v3358 = vadd.f32 %v2968, %v3204
        %v3359 = vadd.f32 %v2969, %v3209
        %v3360 = vadd.f32 %v2970, %v3214
        %v3361 = vadd.f32 %v2971, %v3219
        %v3362 = vadd.f32 %v2972, %v3224
        %v3363 = vadd.f32 %v2973, %v3229
        %v3364 = vadd.f32 %v2974, %v3234
        %v3365 = vadd.f32 %v2975, %v3239
        %v3366 = vadd.f32 %v2976, %v3244
        %v3367 = vadd.f32 %v2977, %v3249
        %v3368 = vadd.f32 %v2978, %v3254
        %v3369 = vadd.f32 %v2979, %v3259
        %v3370 = vadd.f32 %v2980, %v3264
        %v3371 = vadd.f32 %v2981, %v3269
        %v3372 = vadd.f32 %v2982, %v3274
        %v3373 = vadd.f32 %v2983, %v3279
        %v3374 = vadd.f32 %v2984, %v3284
        %v3375 = vadd.f32 %v2985, %v3289
        %v3376 = vadd.f32 %v2986, %v3294
        %v3377 = vadd.f32 %v2987, %v3299
        %v3378 = vadd.f32 %v2988, %v3304
        %v3379 = vadd.f32 %v2989, %v3309
        %v3380 = vadd.f32 %v2990, %v3314
        %v3381 = vadd.f32 %v2991, %v3319
        %v3382 = vadd.f32 %v2992, %v3324
        %v3383 = vadd.f32 %v2993, %v3329
        %v3384 = vadd.f32 %v2994, %v3334
        %v3385 = vadd.f32 %v2995, %v3339
        %v3386 = vadd.f32 %v2996, %v3344
        %v3387 = vadd.f32 %v2997, %v3349
        %v3388 = vadd.f32 %v2998, %v3354
        %v3389 = vld [vmem:[%s2608 + $0x2] sm:$0xff]
        %v3390 = vld [vmem:[%s2608 + $0xa] sm:$0xff]
        %v3391 = vld [vmem:[%s2608 + $0x1a] sm:$0xff]
        %v3392 = vld [vmem:[%s2608 + $0x22] sm:$0xff]
        %v3393 = vld [vmem:[%s2608 + $0x32] sm:$0xff]
        %v3394 = vld [vmem:[%s2608 + $0x3a] sm:$0xff]
        %v3395 = vld [vmem:[%s2608 + $0x4a] sm:$0xff]
        %v3396 = vld [vmem:[%s2608 + $0x52] sm:$0xff]
        %v3397 = vld [vmem:[%s2608 + $0x62] sm:$0xff]
        %v3398 = vld [vmem:[%s2608 + $0x6a] sm:$0xff]
        %v3399 = vld [vmem:[%s2608 + $0x7a] sm:$0xff]
        %v3400 = vld [vmem:[%s2608 + $0x82] sm:$0xff]
        %v3401 = vld [vmem:[%s2608 + $0x92] sm:$0xff]
        %v3402 = vld [vmem:[%s2608 + $0x9a] sm:$0xff]
        %v3403 = vld [vmem:[%s2608 + $0xaa] sm:$0xff]
        %v3404 = vld [vmem:[%s2608 + $0xb2] sm:$0xff]
        %v3405 = vld [vmem:[%s2608 + $0xc2] sm:$0xff]
        %v3406 = vld [vmem:[%s2608 + $0xca] sm:$0xff]
        %v3407 = vld [vmem:[%s2608 + $0xda] sm:$0xff]
        %v3408 = vld [vmem:[%s2608 + $0xe2] sm:$0xff]
        %v3409 = vld [vmem:[%s2608 + $0xf2] sm:$0xff]
        %v3410 = vld [vmem:[%s2608 + $0xfa] sm:$0xff]
        %v3411 = vld [vmem:[%s2608 + $0x10a] sm:$0xff]
        %v3412 = vld [vmem:[%s2608 + $0x112] sm:$0xff]
        %v3413 = vld [vmem:[%s2608 + $0x122] sm:$0xff]
        %v3414 = vld [vmem:[%s2608 + $0x12a] sm:$0xff]
        %v3415 = vld [vmem:[%s2608 + $0x13a] sm:$0xff]
        %v3416 = vld [vmem:[%s2608 + $0x142] sm:$0xff]
        %v3417 = vld [vmem:[%s2608 + $0x152] sm:$0xff]
        %v3418 = vld [vmem:[%s2608 + $0x15a] sm:$0xff]
        %v3419 = vld [vmem:[%s2608 + $0x16a] sm:$0xff]
        %v3420 = vld [vmem:[%s2608 + $0x172] sm:$0xff]
        %s3421 = scalar_lea.vmem %s1, 256
        %v3422 = vld [vmem:[%s3421] sm:$0xff]
        %v3423 = vld [vmem:[%s3421 + $0x8] sm:$0xff]
        %v3424 = vld [vmem:[%s3421 + $0x10] sm:$0xff]
        %v3425 = vld [vmem:[%s3421 + $0x18] sm:$0xff]
        %v3427 = vsel %vm404, %v3389, 0
        %v3430 = vsel %vm404, %v3390, 0
        %v3433 = vsel %vm404, %v3391, 0
        %v3436 = vsel %vm404, %v3392, 0
        %v3439 = vsel %vm404, %v3393, 0
        %v3442 = vsel %vm404, %v3394, 0
        %v3445 = vsel %vm404, %v3395, 0
        %v3448 = vsel %vm404, %v3396, 0
        %v3451 = vsel %vm404, %v3397, 0
        %v3454 = vsel %vm404, %v3398, 0
        %v3457 = vsel %vm404, %v3399, 0
        %v3460 = vsel %vm404, %v3400, 0
        %v3463 = vsel %vm404, %v3401, 0
        %v3466 = vsel %vm404, %v3402, 0
        %v3469 = vsel %vm404, %v3403, 0
        %v3472 = vsel %vm404, %v3404, 0
        %v3475 = vsel %vm404, %v3405, 0
        %v3478 = vsel %vm404, %v3406, 0
        %v3481 = vsel %vm404, %v3407, 0
        %v3484 = vsel %vm404, %v3408, 0
        %v3487 = vsel %vm404, %v3409, 0
        %v3490 = vsel %vm404, %v3410, 0
        %v3493 = vsel %vm404, %v3411, 0
        %v3496 = vsel %vm404, %v3412, 0
        %v3499 = vsel %vm404, %v3413, 0
        %v3502 = vsel %vm404, %v3414, 0
        %v3505 = vsel %vm404, %v3415, 0
        %v3508 = vsel %vm404, %v3416, 0
        %v3511 = vsel %vm404, %v3417, 0
        %v3514 = vsel %vm404, %v3418, 0
        %v3517 = vsel %vm404, %v3419, 0
        %v3520 = vsel %vm404, %v3420, 0
        %3522 = vmatprep.subr.mxu0 0.0
        %3523 = vmatpush1.msra.mxu0 %v3422
        %3524 = vmatprep.subr.mxu0 0.0
        %3525 = vmatpush1.msra.mxu0 %v3423
        %3526 = vmatprep.subr.mxu0 0.0
        %3527 = vmatpush1.msra.mxu0 %v3424
        %3528 = vmatprep.subr.mxu0 0.0
        %3529 = vmatpush1.msra.mxu0 %v3425
        %3530 = vmatprep.subr.mxu0 0.0
        %3531 = vmatpush1.msra.mxu0 0.0
        %3532 = vmatprep.subr.mxu0 0.0
        %3533 = vmatpush1.msra.mxu0 0.0
        %3534 = vmatprep.subr.mxu0 0.0
        %3535 = vmatpush1.msra.mxu0 0.0
        %3536 = vmatprep.subr.mxu0 0.0
        %3537 = vmatpush1.msra.mxu0 0.0
        %3538 = vmatprep.subr.mxu0 0.0
        %3539 = vmatpush1.msra.mxu0 0.0
        %3540 = vmatprep.subr.mxu0 0.0
        %3541 = vmatpush1.msra.mxu0 0.0
        %3542 = vmatprep.subr.mxu0 0.0
        %3543 = vmatpush1.msra.mxu0 0.0
        %3544 = vmatprep.subr.mxu0 0.0
        %3545 = vmatpush1.msra.mxu0 0.0
        %3546 = vmatprep.subr.mxu0 0.0
        %3547 = vmatpush1.msra.mxu0 0.0
        %3548 = vmatprep.subr.mxu0 0.0
        %3549 = vmatpush1.msra.mxu0 0.0
        %3550 = vmatprep.subr.mxu0 0.0
        %3551 = vmatpush1.msra.mxu0 0.0
        %3552 = vmatprep.subr.mxu0 0.0
        %3553 = vmatpush1.msra.mxu0 0.0
        %3554 = vmatprep.subr.mxu0 0.0
        %3555 = vmatpush1.msra.mxu0 0.0
        %3556 = vmatprep.subr.mxu0 0.0
        %3557 = vmatpush1.msra.mxu0 0.0
        %3558 = vmatprep.subr.mxu0 0.0
        %3559 = vmatpush1.msra.mxu0 0.0
        %3560 = vmatprep.subr.mxu0 0.0
        %3561 = vmatpush1.msra.mxu0 0.0
        %3562 = vmatprep.subr.mxu0 0.0
        %3563 = vmatpush1.msra.mxu0 0.0
        %3564 = vmatprep.subr.mxu0 0.0
        %3565 = vmatpush1.msra.mxu0 0.0
        %3566 = vmatprep.subr.mxu0 0.0
        %3567 = vmatpush1.msra.mxu0 0.0
        %3568 = vmatprep.subr.mxu0 0.0
        %3569 = vmatpush1.msra.mxu0 0.0
        %3570 = vmatprep.subr.mxu0 0.0
        %3571 = vmatpush1.msra.mxu0 0.0
        %3572 = vmatprep.subr.mxu0 0.0
        %3573 = vmatpush1.msra.mxu0 0.0
        %3574 = vmatprep.subr.mxu0 0.0
        %3575 = vmatpush1.msra.mxu0 0.0
        %3576 = vmatprep.subr.mxu0 0.0
        %3577 = vmatpush1.msra.mxu0 0.0
        %3578 = vmatprep.subr.mxu0 0.0
        %3579 = vmatpush1.msra.mxu0 0.0
        %3580 = vmatprep.subr.mxu0 0.0
        %3581 = vmatpush1.msra.mxu0 0.0
        %3582 = vmatprep.subr.mxu0 0.0
        %3583 = vmatpush1.msra.mxu0 0.0
        %3584 = vmatprep.subr.mxu0 0.0
        %3585 = vmatpush1.msra.mxu0 0.0
        %3586 = vmatprep.mubr.f32.mxu0 0.0
        %3587 = vmatmul.mubr.f32.gmra.mrb[0].mxu0 %v3427
        %v3588 = vpop.f32.mrb[0].mxu0
        %v3589 = vadd.f32 0.0, %v3588
        %v3590 = vpop.f32.mrb[0].mxu0
        %3591 = vmatprep.mubr.f32.mxu0 0.0
        %3592 = vmatmul.mubr.f32.gmra.mrb[0].mxu0 %v3430
        %v3593 = vpop.f32.mrb[0].mxu0
        %v3594 = vadd.f32 0.0, %v3593
        %v3595 = vpop.f32.mrb[0].mxu0
        %3596 = vmatprep.mubr.f32.mxu0 0.0
        %3597 = vmatmul.mubr.f32.gmra.mrb[0].mxu0 %v3433
        %v3598 = vpop.f32.mrb[0].mxu0
        %v3599 = vadd.f32 0.0, %v3598
        %v3600 = vpop.f32.mrb[0].mxu0
        %3601 = vmatprep.mubr.f32.mxu0 0.0
        %3602 = vmatmul.mubr.f32.gmra.mrb[0].mxu0 %v3436
        %v3603 = vpop.f32.mrb[0].mxu0
        %v3604 = vadd.f32 0.0, %v3603
        %v3605 = vpop.f32.mrb[0].mxu0
        %3606 = vmatprep.mubr.f32.mxu0 0.0
        %3607 = vmatmul.mubr.f32.gmra.mrb[0].mxu0 %v3439
        %v3608 = vpop.f32.mrb[0].mxu0
        %v3609 = vadd.f32 0.0, %v3608
        %v3610 = vpop.f32.mrb[0].mxu0
        %3611 = vmatprep.mubr.f32.mxu0 0.0
        %3612 = vmatmul.mubr.f32.gmra.mrb[0].mxu0 %v3442
        %v3613 = vpop.f32.mrb[0].mxu0
        %v3614 = vadd.f32 0.0, %v3613
        %v3615 = vpop.f32.mrb[0].mxu0
        %3616 = vmatprep.mubr.f32.mxu0 0.0
        %3617 = vmatmul.mubr.f32.gmra.mrb[0].mxu0 %v3445
        %v3618 = vpop.f32.mrb[0].mxu0
        %v3619 = vadd.f32 0.0, %v3618
        %v3620 = vpop.f32.mrb[0].mxu0
        %3621 = vmatprep.mubr.f32.mxu0 0.0
        %3622 = vmatmul.mubr.f32.gmra.mrb[0].mxu0 %v3448
        %v3623 = vpop.f32.mrb[0].mxu0
        %v3624 = vadd.f32 0.0, %v3623
        %v3625 = vpop.f32.mrb[0].mxu0
        %3626 = vmatprep.mubr.f32.mxu0 0.0
        %3627 = vmatmul.mubr.f32.gmra.mrb[0].mxu0 %v3451
        %v3628 = vpop.f32.mrb[0].mxu0
        %v3629 = vadd.f32 0.0, %v3628
        %v3630 = vpop.f32.mrb[0].mxu0
        %3631 = vmatprep.mubr.f32.mxu0 0.0
        %3632 = vmatmul.mubr.f32.gmra.mrb[0].mxu0 %v3454
        %v3633 = vpop.f32.mrb[0].mxu0
        %v3634 = vadd.f32 0.0, %v3633
        %v3635 = vpop.f32.mrb[0].mxu0
        %3636 = vmatprep.mubr.f32.mxu0 0.0
        %3637 = vmatmul.mubr.f32.gmra.mrb[0].mxu0 %v3457
        %v3638 = vpop.f32.mrb[0].mxu0
        %v3639 = vadd.f32 0.0, %v3638
        %v3640 = vpop.f32.mrb[0].mxu0
        %3641 = vmatprep.mubr.f32.mxu0 0.0
        %3642 = vmatmul.mubr.f32.gmra.mrb[0].mxu0 %v3460
        %v3643 = vpop.f32.mrb[0].mxu0
        %v3644 = vadd.f32 0.0, %v3643
        %v3645 = vpop.f32.mrb[0].mxu0
        %3646 = vmatprep.mubr.f32.mxu0 0.0
        %3647 = vmatmul.mubr.f32.gmra.mrb[0].mxu0 %v3463
        %v3648 = vpop.f32.mrb[0].mxu0
        %v3649 = vadd.f32 0.0, %v3648
        %v3650 = vpop.f32.mrb[0].mxu0
        %3651 = vmatprep.mubr.f32.mxu0 0.0
        %3652 = vmatmul.mubr.f32.gmra.mrb[0].mxu0 %v3466
        %v3653 = vpop.f32.mrb[0].mxu0
        %v3654 = vadd.f32 0.0, %v3653
        %v3655 = vpop.f32.mrb[0].mxu0
        %3656 = vmatprep.mubr.f32.mxu0 0.0
        %3657 = vmatmul.mubr.f32.gmra.mrb[0].mxu0 %v3469
        %v3658 = vpop.f32.mrb[0].mxu0
        %v3659 = vadd.f32 0.0, %v3658
        %v3660 = vpop.f32.mrb[0].mxu0
        %3661 = vmatprep.mubr.f32.mxu0 0.0
        %3662 = vmatmul.mubr.f32.gmra.mrb[0].mxu0 %v3472
        %v3663 = vpop.f32.mrb[0].mxu0
        %v3664 = vadd.f32 0.0, %v3663
        %v3665 = vpop.f32.mrb[0].mxu0
        %3666 = vmatprep.mubr.f32.mxu0 0.0
        %3667 = vmatmul.mubr.f32.gmra.mrb[0].mxu0 %v3475
        %v3668 = vpop.f32.mrb[0].mxu0
        %v3669 = vadd.f32 0.0, %v3668
        %v3670 = vpop.f32.mrb[0].mxu0
        %3671 = vmatprep.mubr.f32.mxu0 0.0
        %3672 = vmatmul.mubr.f32.gmra.mrb[0].mxu0 %v3478
        %v3673 = vpop.f32.mrb[0].mxu0
        %v3674 = vadd.f32 0.0, %v3673
        %v3675 = vpop.f32.mrb[0].mxu0
        %3676 = vmatprep.mubr.f32.mxu0 0.0
        %3677 = vmatmul.mubr.f32.gmra.mrb[0].mxu0 %v3481
        %v3678 = vpop.f32.mrb[0].mxu0
        %v3679 = vadd.f32 0.0, %v3678
        %v3680 = vpop.f32.mrb[0].mxu0
        %3681 = vmatprep.mubr.f32.mxu0 0.0
        %3682 = vmatmul.mubr.f32.gmra.mrb[0].mxu0 %v3484
        %v3683 = vpop.f32.mrb[0].mxu0
        %v3684 = vadd.f32 0.0, %v3683
        %v3685 = vpop.f32.mrb[0].mxu0
        %3686 = vmatprep.mubr.f32.mxu0 0.0
        %3687 = vmatmul.mubr.f32.gmra.mrb[0].mxu0 %v3487
        %v3688 = vpop.f32.mrb[0].mxu0
        %v3689 = vadd.f32 0.0, %v3688
        %v3690 = vpop.f32.mrb[0].mxu0
        %3691 = vmatprep.mubr.f32.mxu0 0.0
        %3692 = vmatmul.mubr.f32.gmra.mrb[0].mxu0 %v3490
        %v3693 = vpop.f32.mrb[0].mxu0
        %v3694 = vadd.f32 0.0, %v3693
        %v3695 = vpop.f32.mrb[0].mxu0
        %3696 = vmatprep.mubr.f32.mxu0 0.0
        %3697 = vmatmul.mubr.f32.gmra.mrb[0].mxu0 %v3493
        %v3698 = vpop.f32.mrb[0].mxu0
        %v3699 = vadd.f32 0.0, %v3698
        %v3700 = vpop.f32.mrb[0].mxu0
        %3701 = vmatprep.mubr.f32.mxu0 0.0
        %3702 = vmatmul.mubr.f32.gmra.mrb[0].mxu0 %v3496
        %v3703 = vpop.f32.mrb[0].mxu0
        %v3704 = vadd.f32 0.0, %v3703
        %v3705 = vpop.f32.mrb[0].mxu0
        %3706 = vmatprep.mubr.f32.mxu0 0.0
        %3707 = vmatmul.mubr.f32.gmra.mrb[0].mxu0 %v3499
        %v3708 = vpop.f32.mrb[0].mxu0
        %v3709 = vadd.f32 0.0, %v3708
        %v3710 = vpop.f32.mrb[0].mxu0
        %3711 = vmatprep.mubr.f32.mxu0 0.0
        %3712 = vmatmul.mubr.f32.gmra.mrb[0].mxu0 %v3502
        %v3713 = vpop.f32.mrb[0].mxu0
        %v3714 = vadd.f32 0.0, %v3713
        %v3715 = vpop.f32.mrb[0].mxu0
        %3716 = vmatprep.mubr.f32.mxu0 0.0
        %3717 = vmatmul.mubr.f32.gmra.mrb[0].mxu0 %v3505
        %v3718 = vpop.f32.mrb[0].mxu0
        %v3719 = vadd.f32 0.0, %v3718
        %v3720 = vpop.f32.mrb[0].mxu0
        %3721 = vmatprep.mubr.f32.mxu0 0.0
        %3722 = vmatmul.mubr.f32.gmra.mrb[0].mxu0 %v3508
        %v3723 = vpop.f32.mrb[0].mxu0
        %v3724 = vadd.f32 0.0, %v3723
        %v3725 = vpop.f32.mrb[0].mxu0
        %3726 = vmatprep.mubr.f32.mxu0 0.0
        %3727 = vmatmul.mubr.f32.gmra.mrb[0].mxu0 %v3511
        %v3728 = vpop.f32.mrb[0].mxu0
        %v3729 = vadd.f32 0.0, %v3728
        %v3730 = vpop.f32.mrb[0].mxu0
        %3731 = vmatprep.mubr.f32.mxu0 0.0
        %3732 = vmatmul.mubr.f32.gmra.mrb[0].mxu0 %v3514
        %v3733 = vpop.f32.mrb[0].mxu0
        %v3734 = vadd.f32 0.0, %v3733
        %v3735 = vpop.f32.mrb[0].mxu0
        %3736 = vmatprep.mubr.f32.mxu0 0.0
        %3737 = vmatmul.mubr.f32.gmra.mrb[0].mxu0 %v3517
        %v3738 = vpop.f32.mrb[0].mxu0
        %v3739 = vadd.f32 0.0, %v3738
        %v3740 = vpop.f32.mrb[0].mxu0
        %3741 = vmatprep.mubr.f32.mxu0 0.0
        %3742 = vmatmul.mubr.f32.gmra.mrb[0].mxu0 %v3520
        %v3743 = vpop.f32.mrb[0].mxu0
        %v3744 = vadd.f32 0.0, %v3743
        %v3745 = vpop.f32.mrb[0].mxu0
        %3746 = vdwg.mxu0
        %v3747 = vadd.f32 %v3357, %v3589
        %v3748 = vadd.f32 %v3358, %v3594
        %v3749 = vadd.f32 %v3359, %v3599
        %v3750 = vadd.f32 %v3360, %v3604
        %v3751 = vadd.f32 %v3361, %v3609
        %v3752 = vadd.f32 %v3362, %v3614
        %v3753 = vadd.f32 %v3363, %v3619
        %v3754 = vadd.f32 %v3364, %v3624
        %v3755 = vadd.f32 %v3365, %v3629
        %v3756 = vadd.f32 %v3366, %v3634
        %v3757 = vadd.f32 %v3367, %v3639
        %v3758 = vadd.f32 %v3368, %v3644
        %v3759 = vadd.f32 %v3369, %v3649
        %v3760 = vadd.f32 %v3370, %v3654
        %v3761 = vadd.f32 %v3371, %v3659
        %v3762 = vadd.f32 %v3372, %v3664
        %v3763 = vadd.f32 %v3373, %v3669
        %v3764 = vadd.f32 %v3374, %v3674
        %v3765 = vadd.f32 %v3375, %v3679
        %v3766 = vadd.f32 %v3376, %v3684
        %v3767 = vadd.f32 %v3377, %v3689
        %v3768 = vadd.f32 %v3378, %v3694
        %v3769 = vadd.f32 %v3379, %v3699
        %v3770 = vadd.f32 %v3380, %v3704
        %v3771 = vadd.f32 %v3381, %v3709
        %v3772 = vadd.f32 %v3382, %v3714
        %v3773 = vadd.f32 %v3383, %v3719
        %v3774 = vadd.f32 %v3384, %v3724
        %v3775 = vadd.f32 %v3385, %v3729
        %v3776 = vadd.f32 %v3386, %v3734
        %v3777 = vadd.f32 %v3387, %v3739
        %v3778 = vadd.f32 %v3388, %v3744
        %v3779 = vld [vmem:[%s2] sm:$0x1]
        %v3781 = vlaneseq
        %v3782 = vshrl.u32 %v3781, 7
        %v3783 = vsub.s32 0, %v3782
        %v3784 = vrot.slane %v3779, %v3783
        %v3786 = vadd.f32 %v3747, %v3784
        %v3787 = vadd.f32 %v3748, %v3784
        %v3788 = vadd.f32 %v3749, %v3784
        %v3789 = vadd.f32 %v3750, %v3784
        %v3790 = vadd.f32 %v3751, %v3784
        %v3791 = vadd.f32 %v3752, %v3784
        %v3792 = vadd.f32 %v3753, %v3784
        %v3793 = vadd.f32 %v3754, %v3784
        %v3794 = vadd.f32 %v3755, %v3784
        %v3795 = vadd.f32 %v3756, %v3784
        %v3796 = vadd.f32 %v3757, %v3784
        %v3797 = vadd.f32 %v3758, %v3784
        %v3798 = vadd.f32 %v3759, %v3784
        %v3799 = vadd.f32 %v3760, %v3784
        %v3800 = vadd.f32 %v3761, %v3784
        %v3801 = vadd.f32 %v3762, %v3784
        %v3802 = vadd.f32 %v3763, %v3784
        %v3803 = vadd.f32 %v3764, %v3784
        %v3804 = vadd.f32 %v3765, %v3784
        %v3805 = vadd.f32 %v3766, %v3784
        %v3806 = vadd.f32 %v3767, %v3784
        %v3807 = vadd.f32 %v3768, %v3784
        %v3808 = vadd.f32 %v3769, %v3784
        %v3809 = vadd.f32 %v3770, %v3784
        %v3810 = vadd.f32 %v3771, %v3784
        %v3811 = vadd.f32 %v3772, %v3784
        %v3812 = vadd.f32 %v3773, %v3784
        %v3813 = vadd.f32 %v3774, %v3784
        %v3814 = vadd.f32 %v3775, %v3784
        %v3815 = vadd.f32 %v3776, %v3784
        %v3816 = vadd.f32 %v3777, %v3784
        %v3817 = vadd.f32 %v3778, %v3784
        %v3818 = vmax.f32 %v3786, 0.0
        %v3819 = vmax.f32 %v3787, 0.0
        %v3820 = vmax.f32 %v3788, 0.0
        %v3821 = vmax.f32 %v3789, 0.0
        %v3822 = vmax.f32 %v3790, 0.0
        %v3823 = vmax.f32 %v3791, 0.0
        %v3824 = vmax.f32 %v3792, 0.0
        %v3825 = vmax.f32 %v3793, 0.0
        %v3826 = vmax.f32 %v3794, 0.0
        %v3827 = vmax.f32 %v3795, 0.0
        %v3828 = vmax.f32 %v3796, 0.0
        %v3829 = vmax.f32 %v3797, 0.0
        %v3830 = vmax.f32 %v3798, 0.0
        %v3831 = vmax.f32 %v3799, 0.0
        %v3832 = vmax.f32 %v3800, 0.0
        %v3833 = vmax.f32 %v3801, 0.0
        %v3834 = vmax.f32 %v3802, 0.0
        %v3835 = vmax.f32 %v3803, 0.0
        %v3836 = vmax.f32 %v3804, 0.0
        %v3837 = vmax.f32 %v3805, 0.0
        %v3838 = vmax.f32 %v3806, 0.0
        %v3839 = vmax.f32 %v3807, 0.0
        %v3840 = vmax.f32 %v3808, 0.0
        %v3841 = vmax.f32 %v3809, 0.0
        %v3842 = vmax.f32 %v3810, 0.0
        %v3843 = vmax.f32 %v3811, 0.0
        %v3844 = vmax.f32 %v3812, 0.0
        %v3845 = vmax.f32 %v3813, 0.0
        %v3846 = vmax.f32 %v3814, 0.0
        %v3847 = vmax.f32 %v3815, 0.0
        %v3848 = vmax.f32 %v3816, 0.0
        %v3849 = vmax.f32 %v3817, 0.0
        %3850 = vst.msk [vmem:[#allocation2] sm:$0xff] %vm404, 0.0
        %3851 = vst.msk [vmem:[#allocation2 + $0x8] sm:$0xff] %vm404, 0.0
        %vm3852 = vcmask 254976
        %3853 = vst.msk [vmem:[#allocation2 + $0x10] sm:$0x3] %vm3852, 0.0
        %3854 = vst.msk [vmem:[#allocation2 + $0x18] sm:$0xff] %vm404, 0.0
        %3855 = vst.msk [vmem:[#allocation2 + $0x20] sm:$0xff] %vm404, 0.0
        %3856 = vst.msk [vmem:[#allocation2 + $0x28] sm:$0x3] %vm3852, 0.0
        %3857 = vst.msk [vmem:[#allocation2 + $0x30] sm:$0xff] %vm404, 0.0
        %3858 = vst.msk [vmem:[#allocation2 + $0x38] sm:$0xff] %vm404, 0.0
        %3859 = vst.msk [vmem:[#allocation2 + $0x40] sm:$0x3] %vm3852, 0.0
        %3860 = vst.msk [vmem:[#allocation2 + $0x48] sm:$0xff] %vm404, 0.0
        %3861 = vst.msk [vmem:[#allocation2 + $0x50] sm:$0xff] %vm404, 0.0
        %3862 = vst.msk [vmem:[#allocation2 + $0x58] sm:$0x3] %vm3852, 0.0
        %3863 = vst.msk [vmem:[#allocation2 + $0x60] sm:$0xff] %vm404, 0.0
        %3864 = vst.msk [vmem:[#allocation2 + $0x68] sm:$0xff] %vm404, 0.0
        %3865 = vst.msk [vmem:[#allocation2 + $0x70] sm:$0x3] %vm3852, 0.0
        %3866 = vst.msk [vmem:[#allocation2 + $0x78] sm:$0xff] %vm404, 0.0
        %3867 = vst.msk [vmem:[#allocation2 + $0x80] sm:$0xff] %vm404, 0.0
        %3868 = vst.msk [vmem:[#allocation2 + $0x88] sm:$0x3] %vm3852, 0.0
        %3869 = vst.msk [vmem:[#allocation2 + $0x90] sm:$0xff] %vm404, 0.0
        %3870 = vst.msk [vmem:[#allocation2 + $0x98] sm:$0xff] %vm404, 0.0
        %3871 = vst.msk [vmem:[#allocation2 + $0xa0] sm:$0x3] %vm3852, 0.0
        %3872 = vst.msk [vmem:[#allocation2 + $0xa8] sm:$0xff] %vm404, 0.0
        %3873 = vst.msk [vmem:[#allocation2 + $0xb0] sm:$0xff] %vm404, 0.0
        %3874 = vst.msk [vmem:[#allocation2 + $0xb8] sm:$0x3] %vm3852, 0.0
        %3875 = vst.msk [vmem:[#allocation2 + $0xc0] sm:$0xff] %vm404, 0.0
        %3876 = vst.msk [vmem:[#allocation2 + $0xc8] sm:$0xff] %vm404, 0.0
        %3877 = vst.msk [vmem:[#allocation2 + $0xd0] sm:$0x3] %vm3852, 0.0
        %3878 = vst.msk [vmem:[#allocation2 + $0xd8] sm:$0xff] %vm404, 0.0
        %3879 = vst.msk [vmem:[#allocation2 + $0xe0] sm:$0xff] %vm404, 0.0
        %3880 = vst.msk [vmem:[#allocation2 + $0xe8] sm:$0x3] %vm3852, 0.0
        %3881 = vst.msk [vmem:[#allocation2 + $0xf0] sm:$0xff] %vm404, 0.0
        %3882 = vst.msk [vmem:[#allocation2 + $0xf8] sm:$0xff] %vm404, 0.0
        %3883 = vst.msk [vmem:[#allocation2 + $0x100] sm:$0x3] %vm3852, 0.0
        %3884 = vst.msk [vmem:[#allocation2 + $0x108] sm:$0xff] %vm404, 0.0
        %3885 = vst.msk [vmem:[#allocation2 + $0x110] sm:$0xff] %vm404, 0.0
        %3886 = vst.msk [vmem:[#allocation2 + $0x118] sm:$0x3] %vm3852, 0.0
        %3887 = vst.msk [vmem:[#allocation2 + $0x120] sm:$0xff] %vm404, 0.0
        %3888 = vst.msk [vmem:[#allocation2 + $0x128] sm:$0xff] %vm404, 0.0
        %3889 = vst.msk [vmem:[#allocation2 + $0x130] sm:$0x3] %vm3852, 0.0
        %3890 = vst.msk [vmem:[#allocation2 + $0x138] sm:$0xff] %vm404, 0.0
        %3891 = vst.msk [vmem:[#allocation2 + $0x140] sm:$0xff] %vm404, 0.0
        %3892 = vst.msk [vmem:[#allocation2 + $0x148] sm:$0x3] %vm3852, 0.0
        %3893 = vst.msk [vmem:[#allocation2 + $0x150] sm:$0xff] %vm404, 0.0
        %3894 = vst.msk [vmem:[#allocation2 + $0x158] sm:$0xff] %vm404, 0.0
        %3895 = vst.msk [vmem:[#allocation2 + $0x160] sm:$0x3] %vm3852, 0.0
        %3896 = vst.msk [vmem:[#allocation2 + $0x168] sm:$0xff] %vm404, 0.0
        %3897 = vst.msk [vmem:[#allocation2 + $0x170] sm:$0xff] %vm404, 0.0
        %3898 = vst.msk [vmem:[#allocation2 + $0x178] sm:$0x3] %vm3852, 0.0
        %3899 = vst.msk [vmem:[#allocation2 + $0x180] sm:$0xff] %vm404, 0.0
        %3900 = vst.msk [vmem:[#allocation2 + $0x188] sm:$0xff] %vm404, 0.0
        %3901 = vst.msk [vmem:[#allocation2 + $0x190] sm:$0x3] %vm3852, 0.0
        %3902 = vst.msk [vmem:[#allocation2 + $0x198] sm:$0xff] %vm404, 0.0
        %3903 = vst.msk [vmem:[#allocation2 + $0x1a0] sm:$0xff] %vm404, 0.0
        %3904 = vst.msk [vmem:[#allocation2 + $0x1a8] sm:$0x3] %vm3852, 0.0
        %s3905 = scalar_lea.vmem [#allocation2], 24
        %3906 = vst.msk [vmem:[%s3905 + $0x1] sm:$0xff] %vm404, %v3818
        %3907 = vst.msk [vmem:[%s3905 + $0x9] sm:$0xff] %vm404, %v3819
        %3908 = vst.msk [vmem:[%s3905 + $0x19] sm:$0xff] %vm404, %v3820
        %3909 = vst.msk [vmem:[%s3905 + $0x21] sm:$0xff] %vm404, %v3821
        %3910 = vst.msk [vmem:[%s3905 + $0x31] sm:$0xff] %vm404, %v3822
        %3911 = vst.msk [vmem:[%s3905 + $0x39] sm:$0xff] %vm404, %v3823
        %3912 = vst.msk [vmem:[%s3905 + $0x49] sm:$0xff] %vm404, %v3824
        %3913 = vst.msk [vmem:[%s3905 + $0x51] sm:$0xff] %vm404, %v3825
        %3914 = vst.msk [vmem:[%s3905 + $0x61] sm:$0xff] %vm404, %v3826
        %3915 = vst.msk [vmem:[%s3905 + $0x69] sm:$0xff] %vm404, %v3827
        %3916 = vst.msk [vmem:[%s3905 + $0x79] sm:$0xff] %vm404, %v3828
        %3917 = vst.msk [vmem:[%s3905 + $0x81] sm:$0xff] %vm404, %v3829
        %3918 = vst.msk [vmem:[%s3905 + $0x91] sm:$0xff] %vm404, %v3830
        %3919 = vst.msk [vmem:[%s3905 + $0x99] sm:$0xff] %vm404, %v3831
        %3920 = vst.msk [vmem:[%s3905 + $0xa9] sm:$0xff] %vm404, %v3832
        %3921 = vst.msk [vmem:[%s3905 + $0xb1] sm:$0xff] %vm404, %v3833
        %3922 = vst.msk [vmem:[%s3905 + $0xc1] sm:$0xff] %vm404, %v3834
        %3923 = vst.msk [vmem:[%s3905 + $0xc9] sm:$0xff] %vm404, %v3835
        %3924 = vst.msk [vmem:[%s3905 + $0xd9] sm:$0xff] %vm404, %v3836
        %3925 = vst.msk [vmem:[%s3905 + $0xe1] sm:$0xff] %vm404, %v3837
        %3926 = vst.msk [vmem:[%s3905 + $0xf1] sm:$0xff] %vm404, %v3838
        %3927 = vst.msk [vmem:[%s3905 + $0xf9] sm:$0xff] %vm404, %v3839
        %3928 = vst.msk [vmem:[%s3905 + $0x109] sm:$0xff] %vm404, %v3840
        %3929 = vst.msk [vmem:[%s3905 + $0x111] sm:$0xff] %vm404, %v3841
        %3930 = vst.msk [vmem:[%s3905 + $0x121] sm:$0xff] %vm404, %v3842
        %3931 = vst.msk [vmem:[%s3905 + $0x129] sm:$0xff] %vm404, %v3843
        %3932 = vst.msk [vmem:[%s3905 + $0x139] sm:$0xff] %vm404, %v3844
        %3933 = vst.msk [vmem:[%s3905 + $0x141] sm:$0xff] %vm404, %v3845
        %3934 = vst.msk [vmem:[%s3905 + $0x151] sm:$0xff] %vm404, %v3846
        %3935 = vst.msk [vmem:[%s3905 + $0x159] sm:$0xff] %vm404, %v3847
        %3936 = vst.msk [vmem:[%s3905 + $0x169] sm:$0xff] %vm404, %v3848
        %3937 = vst.msk [vmem:[%s3905 + $0x171] sm:$0xff] %vm404, %v3849
        %v3938 = vld [vmem:[#allocation2] sm:$0xff]
        %v3939 = vld [vmem:[#allocation2 + $0x8] sm:$0xff]
        %v3940 = vld [vmem:[#allocation2 + $0x18] sm:$0xff]
        %v3941 = vld [vmem:[#allocation2 + $0x20] sm:$0xff]
        %v3942 = vld [vmem:[#allocation2 + $0x30] sm:$0xff]
        %v3943 = vld [vmem:[#allocation2 + $0x38] sm:$0xff]
        %v3944 = vld [vmem:[#allocation2 + $0x48] sm:$0xff]
        %v3945 = vld [vmem:[#allocation2 + $0x50] sm:$0xff]
        %v3946 = vld [vmem:[#allocation2 + $0x60] sm:$0xff]
        %v3947 = vld [vmem:[#allocation2 + $0x68] sm:$0xff]
        %v3948 = vld [vmem:[#allocation2 + $0x78] sm:$0xff]
        %v3949 = vld [vmem:[#allocation2 + $0x80] sm:$0xff]
        %v3950 = vld [vmem:[#allocation2 + $0x90] sm:$0xff]
        %v3951 = vld [vmem:[#allocation2 + $0x98] sm:$0xff]
        %v3952 = vld [vmem:[#allocation2 + $0xa8] sm:$0xff]
        %v3953 = vld [vmem:[#allocation2 + $0xb0] sm:$0xff]
        %v3954 = vld [vmem:[#allocation2 + $0xc0] sm:$0xff]
        %v3955 = vld [vmem:[#allocation2 + $0xc8] sm:$0xff]
        %v3956 = vld [vmem:[#allocation2 + $0xd8] sm:$0xff]
        %v3957 = vld [vmem:[#allocation2 + $0xe0] sm:$0xff]
        %v3958 = vld [vmem:[#allocation2 + $0xf0] sm:$0xff]
        %v3959 = vld [vmem:[#allocation2 + $0xf8] sm:$0xff]
        %v3960 = vld [vmem:[#allocation2 + $0x108] sm:$0xff]
        %v3961 = vld [vmem:[#allocation2 + $0x110] sm:$0xff]
        %v3962 = vld [vmem:[#allocation2 + $0x120] sm:$0xff]
        %v3963 = vld [vmem:[#allocation2 + $0x128] sm:$0xff]
        %v3964 = vld [vmem:[#allocation2 + $0x138] sm:$0xff]
        %v3965 = vld [vmem:[#allocation2 + $0x140] sm:$0xff]
        %v3966 = vld [vmem:[#allocation2 + $0x150] sm:$0xff]
        %v3967 = vld [vmem:[#allocation2 + $0x158] sm:$0xff]
        %v3968 = vld [vmem:[#allocation2 + $0x168] sm:$0xff]
        %v3969 = vld [vmem:[#allocation2 + $0x170] sm:$0xff]
        %v3970 = vld [vmem:[%s3] sm:$0xff]
        %v3971 = vld [vmem:[%s3 + $0x8] sm:$0xff]
        %v3972 = vld [vmem:[%s3 + $0x10] sm:$0xff]
        %v3973 = vld [vmem:[%s3 + $0x18] sm:$0xff]
        %v3974 = vld [vmem:[#allocation2 + $0x1] sm:$0xff]
        %v3975 = vld [vmem:[#allocation2 + $0x9] sm:$0xff]
        %v3976 = vld [vmem:[#allocation2 + $0x19] sm:$0xff]
        %v3977 = vld [vmem:[#allocation2 + $0x21] sm:$0xff]
        %v3978 = vld [vmem:[#allocation2 + $0x31] sm:$0xff]
        %v3979 = vld [vmem:[#allocation2 + $0x39] sm:$0xff]
        %v3980 = vld [vmem:[#allocation2 + $0x49] sm:$0xff]
        %v3981 = vld [vmem:[#allocation2 + $0x51] sm:$0xff]
        %v3982 = vld [vmem:[#allocation2 + $0x61] sm:$0xff]
        %v3983 = vld [vmem:[#allocation2 + $0x69] sm:$0xff]
        %v3984 = vld [vmem:[#allocation2 + $0x79] sm:$0xff]
        %v3985 = vld [vmem:[#allocation2 + $0x81] sm:$0xff]
        %v3986 = vld [vmem:[#allocation2 + $0x91] sm:$0xff]
        %v3987 = vld [vmem:[#allocation2 + $0x99] sm:$0xff]
        %v3988 = vld [vmem:[#allocation2 + $0xa9] sm:$0xff]
        %v3989 = vld [vmem:[#allocation2 + $0xb1] sm:$0xff]
        %v3990 = vld [vmem:[#allocation2 + $0xc1] sm:$0xff]
        %v3991 = vld [vmem:[#allocation2 + $0xc9] sm:$0xff]
        %v3992 = vld [vmem:[#allocation2 + $0xd9] sm:$0xff]
        %v3993 = vld [vmem:[#allocation2 + $0xe1] sm:$0xff]
        %v3994 = vld [vmem:[#allocation2 + $0xf1] sm:$0xff]
        %v3995 = vld [vmem:[#allocation2 + $0xf9] sm:$0xff]
        %v3996 = vld [vmem:[#allocation2 + $0x109] sm:$0xff]
        %v3997 = vld [vmem:[#allocation2 + $0x111] sm:$0xff]
        %v3998 = vld [vmem:[#allocation2 + $0x121] sm:$0xff]
        %v3999 = vld [vmem:[#allocation2 + $0x129] sm:$0xff]
        %v4000 = vld [vmem:[#allocation2 + $0x139] sm:$0xff]
        %v4001 = vld [vmem:[#allocation2 + $0x141] sm:$0xff]
        %v4002 = vld [vmem:[#allocation2 + $0x151] sm:$0xff]
        %v4003 = vld [vmem:[#allocation2 + $0x159] sm:$0xff]
        %v4004 = vld [vmem:[#allocation2 + $0x169] sm:$0xff]
        %v4005 = vld [vmem:[#allocation2 + $0x171] sm:$0xff]
        %s4006 = scalar_lea.vmem %s3, 32
        %v4007 = vld [vmem:[%s4006] sm:$0xff]
        %v4008 = vld [vmem:[%s4006 + $0x8] sm:$0xff]
        %v4009 = vld [vmem:[%s4006 + $0x10] sm:$0xff]
        %v4010 = vld [vmem:[%s4006 + $0x18] sm:$0xff]
        %v4012 = vsel %vm404, %v3974, 0
        %v4015 = vsel %vm404, %v3975, 0
        %v4018 = vsel %vm404, %v3976, 0
        %v4021 = vsel %vm404, %v3977, 0
        %v4024 = vsel %vm404, %v3978, 0
        %v4027 = vsel %vm404, %v3979, 0
        %v4030 = vsel %vm404, %v3980, 0
        %v4033 = vsel %vm404, %v3981, 0
        %v4036 = vsel %vm404, %v3982, 0
        %v4039 = vsel %vm404, %v3983, 0
        %v4042 = vsel %vm404, %v3984, 0
        %v4045 = vsel %vm404, %v3985, 0
        %v4048 = vsel %vm404, %v3986, 0
        %v4051 = vsel %vm404, %v3987, 0
        %v4054 = vsel %vm404, %v3988, 0
        %v4057 = vsel %vm404, %v3989, 0
        %v4060 = vsel %vm404, %v3990, 0
        %v4063 = vsel %vm404, %v3991, 0
        %v4066 = vsel %vm404, %v3992, 0
        %v4069 = vsel %vm404, %v3993, 0
        %v4072 = vsel %vm404, %v3994, 0
        %v4075 = vsel %vm404, %v3995, 0
        %v4078 = vsel %vm404, %v3996, 0
        %v4081 = vsel %vm404, %v3997, 0
        %v4084 = vsel %vm404, %v3998, 0
        %v4087 = vsel %vm404, %v3999, 0
        %v4090 = vsel %vm404, %v4000, 0
        %v4093 = vsel %vm404, %v4001, 0
        %v4096 = vsel %vm404, %v4002, 0
        %v4099 = vsel %vm404, %v4003, 0
        %v4102 = vsel %vm404, %v4004, 0
        %v4105 = vsel %vm404, %v4005, 0
        %4107 = vmatprep.subr.mxu0 0.0
        %4108 = vmatpush1.msra.mxu0 %v4007
        %4109 = vmatprep.subr.mxu0 0.0
        %4110 = vmatpush1.msra.mxu0 %v4008
        %4111 = vmatprep.subr.mxu0 0.0
        %4112 = vmatpush1.msra.mxu0 %v4009
        %4113 = vmatprep.subr.mxu0 0.0
        %4114 = vmatpush1.msra.mxu0 %v4010
        %4115 = vmatprep.subr.mxu0 0.0
        %4116 = vmatpush1.msra.mxu0 0.0
        %4117 = vmatprep.subr.mxu0 0.0
        %4118 = vmatpush1.msra.mxu0 0.0
        %4119 = vmatprep.subr.mxu0 0.0
        %4120 = vmatpush1.msra.mxu0 0.0
        %4121 = vmatprep.subr.mxu0 0.0
        %4122 = vmatpush1.msra.mxu0 0.0
        %4123 = vmatprep.subr.mxu0 0.0
        %4124 = vmatpush1.msra.mxu0 0.0
        %4125 = vmatprep.subr.mxu0 0.0
        %4126 = vmatpush1.msra.mxu0 0.0
        %4127 = vmatprep.subr.mxu0 0.0
        %4128 = vmatpush1.msra.mxu0 0.0
        %4129 = vmatprep.subr.mxu0 0.0
        %4130 = vmatpush1.msra.mxu0 0.0
        %4131 = vmatprep.subr.mxu0 0.0
        %4132 = vmatpush1.msra.mxu0 0.0
        %4133 = vmatprep.subr.mxu0 0.0
        %4134 = vmatpush1.msra.mxu0 0.0
        %4135 = vmatprep.subr.mxu0 0.0
        %4136 = vmatpush1.msra.mxu0 0.0
        %4137 = vmatprep.subr.mxu0 0.0
        %4138 = vmatpush1.msra.mxu0 0.0
        %4139 = vmatprep.subr.mxu0 0.0
        %4140 = vmatpush1.msra.mxu0 0.0
        %4141 = vmatprep.subr.mxu0 0.0
        %4142 = vmatpush1.msra.mxu0 0.0
        %4143 = vmatprep.subr.mxu0 0.0
        %4144 = vmatpush1.msra.mxu0 0.0
        %4145 = vmatprep.subr.mxu0 0.0
        %4146 = vmatpush1.msra.mxu0 0.0
        %4147 = vmatprep.subr.mxu0 0.0
        %4148 = vmatpush1.msra.mxu0 0.0
        %4149 = vmatprep.subr.mxu0 0.0
        %4150 = vmatpush1.msra.mxu0 0.0
        %4151 = vmatprep.subr.mxu0 0.0
        %4152 = vmatpush1.msra.mxu0 0.0
        %4153 = vmatprep.subr.mxu0 0.0
        %4154 = vmatpush1.msra.mxu0 0.0
        %4155 = vmatprep.subr.mxu0 0.0
        %4156 = vmatpush1.msra.mxu0 0.0
        %4157 = vmatprep.subr.mxu0 0.0
        %4158 = vmatpush1.msra.mxu0 0.0
        %4159 = vmatprep.subr.mxu0 0.0
        %4160 = vmatpush1.msra.mxu0 0.0
        %4161 = vmatprep.subr.mxu0 0.0
        %4162 = vmatpush1.msra.mxu0 0.0
        %4163 = vmatprep.subr.mxu0 0.0
        %4164 = vmatpush1.msra.mxu0 0.0
        %4165 = vmatprep.subr.mxu0 0.0
        %4166 = vmatpush1.msra.mxu0 0.0
        %4167 = vmatprep.subr.mxu0 0.0
        %4168 = vmatpush1.msra.mxu0 0.0
        %4169 = vmatprep.subr.mxu0 0.0
        %4170 = vmatpush1.msra.mxu0 0.0
        %4171 = vmatprep.mubr.f32.mxu0 0.0
        %4172 = vmatmul.mubr.f32.gmra.mrb[0].mxu0 %v4012
        %v4173 = vpop.f32.mrb[0].mxu0
        %v4174 = vadd.f32 0.0, %v4173
        %v4175 = vpop.f32.mrb[0].mxu0
        %4176 = vmatprep.mubr.f32.mxu0 0.0
        %4177 = vmatmul.mubr.f32.gmra.mrb[0].mxu0 %v4015
        %v4178 = vpop.f32.mrb[0].mxu0
        %v4179 = vadd.f32 0.0, %v4178
        %v4180 = vpop.f32.mrb[0].mxu0
        %4181 = vmatprep.mubr.f32.mxu0 0.0
        %4182 = vmatmul.mubr.f32.gmra.mrb[0].mxu0 %v4018
        %v4183 = vpop.f32.mrb[0].mxu0
        %v4184 = vadd.f32 0.0, %v4183
        %v4185 = vpop.f32.mrb[0].mxu0
        %4186 = vmatprep.mubr.f32.mxu0 0.0
        %4187 = vmatmul.mubr.f32.gmra.mrb[0].mxu0 %v4021
        %v4188 = vpop.f32.mrb[0].mxu0
        %v4189 = vadd.f32 0.0, %v4188
        %v4190 = vpop.f32.mrb[0].mxu0
        %4191 = vmatprep.mubr.f32.mxu0 0.0
        %4192 = vmatmul.mubr.f32.gmra.mrb[0].mxu0 %v4024
        %v4193 = vpop.f32.mrb[0].mxu0
        %v4194 = vadd.f32 0.0, %v4193
        %v4195 = vpop.f32.mrb[0].mxu0
        %4196 = vmatprep.mubr.f32.mxu0 0.0
        %4197 = vmatmul.mubr.f32.gmra.mrb[0].mxu0 %v4027
        %v4198 = vpop.f32.mrb[0].mxu0
        %v4199 = vadd.f32 0.0, %v4198
        %v4200 = vpop.f32.mrb[0].mxu0
        %4201 = vmatprep.mubr.f32.mxu0 0.0
        %4202 = vmatmul.mubr.f32.gmra.mrb[0].mxu0 %v4030
        %v4203 = vpop.f32.mrb[0].mxu0
        %v4204 = vadd.f32 0.0, %v4203
        %v4205 = vpop.f32.mrb[0].mxu0
        %4206 = vmatprep.mubr.f32.mxu0 0.0
        %4207 = vmatmul.mubr.f32.gmra.mrb[0].mxu0 %v4033
        %v4208 = vpop.f32.mrb[0].mxu0
        %v4209 = vadd.f32 0.0, %v4208
        %v4210 = vpop.f32.mrb[0].mxu0
        %4211 = vmatprep.mubr.f32.mxu0 0.0
        %4212 = vmatmul.mubr.f32.gmra.mrb[0].mxu0 %v4036
        %v4213 = vpop.f32.mrb[0].mxu0
        %v4214 = vadd.f32 0.0, %v4213
        %v4215 = vpop.f32.mrb[0].mxu0
        %4216 = vmatprep.mubr.f32.mxu0 0.0
        %4217 = vmatmul.mubr.f32.gmra.mrb[0].mxu0 %v4039
        %v4218 = vpop.f32.mrb[0].mxu0
        %v4219 = vadd.f32 0.0, %v4218
        %v4220 = vpop.f32.mrb[0].mxu0
        %4221 = vmatprep.mubr.f32.mxu0 0.0
        %4222 = vmatmul.mubr.f32.gmra.mrb[0].mxu0 %v4042
        %v4223 = vpop.f32.mrb[0].mxu0
        %v4224 = vadd.f32 0.0, %v4223
        %v4225 = vpop.f32.mrb[0].mxu0
        %4226 = vmatprep.mubr.f32.mxu0 0.0
        %4227 = vmatmul.mubr.f32.gmra.mrb[0].mxu0 %v4045
        %v4228 = vpop.f32.mrb[0].mxu0
        %v4229 = vadd.f32 0.0, %v4228
        %v4230 = vpop.f32.mrb[0].mxu0
        %4231 = vmatprep.mubr.f32.mxu0 0.0
        %4232 = vmatmul.mubr.f32.gmra.mrb[0].mxu0 %v4048
        %v4233 = vpop.f32.mrb[0].mxu0
        %v4234 = vadd.f32 0.0, %v4233
        %v4235 = vpop.f32.mrb[0].mxu0
        %4236 = vmatprep.mubr.f32.mxu0 0.0
        %4237 = vmatmul.mubr.f32.gmra.mrb[0].mxu0 %v4051
        %v4238 = vpop.f32.mrb[0].mxu0
        %v4239 = vadd.f32 0.0, %v4238
        %v4240 = vpop.f32.mrb[0].mxu0
        %4241 = vmatprep.mubr.f32.mxu0 0.0
        %4242 = vmatmul.mubr.f32.gmra.mrb[0].mxu0 %v4054
        %v4243 = vpop.f32.mrb[0].mxu0
        %v4244 = vadd.f32 0.0, %v4243
        %v4245 = vpop.f32.mrb[0].mxu0
        %4246 = vmatprep.mubr.f32.mxu0 0.0
        %4247 = vmatmul.mubr.f32.gmra.mrb[0].mxu0 %v4057
        %v4248 = vpop.f32.mrb[0].mxu0
        %v4249 = vadd.f32 0.0, %v4248
        %v4250 = vpop.f32.mrb[0].mxu0
        %4251 = vmatprep.mubr.f32.mxu0 0.0
        %4252 = vmatmul.mubr.f32.gmra.mrb[0].mxu0 %v4060
        %v4253 = vpop.f32.mrb[0].mxu0
        %v4254 = vadd.f32 0.0, %v4253
        %v4255 = vpop.f32.mrb[0].mxu0
        %4256 = vmatprep.mubr.f32.mxu0 0.0
        %4257 = vmatmul.mubr.f32.gmra.mrb[0].mxu0 %v4063
        %v4258 = vpop.f32.mrb[0].mxu0
        %v4259 = vadd.f32 0.0, %v4258
        %v4260 = vpop.f32.mrb[0].mxu0
        %4261 = vmatprep.mubr.f32.mxu0 0.0
        %4262 = vmatmul.mubr.f32.gmra.mrb[0].mxu0 %v4066
        %v4263 = vpop.f32.mrb[0].mxu0
        %v4264 = vadd.f32 0.0, %v4263
        %v4265 = vpop.f32.mrb[0].mxu0
        %4266 = vmatprep.mubr.f32.mxu0 0.0
        %4267 = vmatmul.mubr.f32.gmra.mrb[0].mxu0 %v4069
        %v4268 = vpop.f32.mrb[0].mxu0
        %v4269 = vadd.f32 0.0, %v4268
        %v4270 = vpop.f32.mrb[0].mxu0
        %4271 = vmatprep.mubr.f32.mxu0 0.0
        %4272 = vmatmul.mubr.f32.gmra.mrb[0].mxu0 %v4072
        %v4273 = vpop.f32.mrb[0].mxu0
        %v4274 = vadd.f32 0.0, %v4273
        %v4275 = vpop.f32.mrb[0].mxu0
        %4276 = vmatprep.mubr.f32.mxu0 0.0
        %4277 = vmatmul.mubr.f32.gmra.mrb[0].mxu0 %v4075
        %v4278 = vpop.f32.mrb[0].mxu0
        %v4279 = vadd.f32 0.0, %v4278
        %v4280 = vpop.f32.mrb[0].mxu0
        %4281 = vmatprep.mubr.f32.mxu0 0.0
        %4282 = vmatmul.mubr.f32.gmra.mrb[0].mxu0 %v4078
        %v4283 = vpop.f32.mrb[0].mxu0
        %v4284 = vadd.f32 0.0, %v4283
        %v4285 = vpop.f32.mrb[0].mxu0
        %4286 = vmatprep.mubr.f32.mxu0 0.0
        %4287 = vmatmul.mubr.f32.gmra.mrb[0].mxu0 %v4081
        %v4288 = vpop.f32.mrb[0].mxu0
        %v4289 = vadd.f32 0.0, %v4288
        %v4290 = vpop.f32.mrb[0].mxu0
        %4291 = vmatprep.mubr.f32.mxu0 0.0
        %4292 = vmatmul.mubr.f32.gmra.mrb[0].mxu0 %v4084
        %v4293 = vpop.f32.mrb[0].mxu0
        %v4294 = vadd.f32 0.0, %v4293
        %v4295 = vpop.f32.mrb[0].mxu0
        %4296 = vmatprep.mubr.f32.mxu0 0.0
        %4297 = vmatmul.mubr.f32.gmra.mrb[0].mxu0 %v4087
        %v4298 = vpop.f32.mrb[0].mxu0
        %v4299 = vadd.f32 0.0, %v4298
        %v4300 = vpop.f32.mrb[0].mxu0
        %4301 = vmatprep.mubr.f32.mxu0 0.0
        %4302 = vmatmul.mubr.f32.gmra.mrb[0].mxu0 %v4090
        %v4303 = vpop.f32.mrb[0].mxu0
        %v4304 = vadd.f32 0.0, %v4303
        %v4305 = vpop.f32.mrb[0].mxu0
        %4306 = vmatprep.mubr.f32.mxu0 0.0
        %4307 = vmatmul.mubr.f32.gmra.mrb[0].mxu0 %v4093
        %v4308 = vpop.f32.mrb[0].mxu0
        %v4309 = vadd.f32 0.0, %v4308
        %v4310 = vpop.f32.mrb[0].mxu0
        %4311 = vmatprep.mubr.f32.mxu0 0.0
        %4312 = vmatmul.mubr.f32.gmra.mrb[0].mxu0 %v4096
        %v4313 = vpop.f32.mrb[0].mxu0
        %v4314 = vadd.f32 0.0, %v4313
        %v4315 = vpop.f32.mrb[0].mxu0
        %4316 = vmatprep.mubr.f32.mxu0 0.0
        %4317 = vmatmul.mubr.f32.gmra.mrb[0].mxu0 %v4099
        %v4318 = vpop.f32.mrb[0].mxu0
        %v4319 = vadd.f32 0.0, %v4318
        %v4320 = vpop.f32.mrb[0].mxu0
        %4321 = vmatprep.mubr.f32.mxu0 0.0
        %4322 = vmatmul.mubr.f32.gmra.mrb[0].mxu0 %v4102
        %v4323 = vpop.f32.mrb[0].mxu0
        %v4324 = vadd.f32 0.0, %v4323
        %v4325 = vpop.f32.mrb[0].mxu0
        %4326 = vmatprep.mubr.f32.mxu0 0.0
        %4327 = vmatmul.mubr.f32.gmra.mrb[0].mxu0 %v4105
        %v4328 = vpop.f32.mrb[0].mxu0
        %v4329 = vadd.f32 0.0, %v4328
        %v4330 = vpop.f32.mrb[0].mxu0
        %4331 = vdwg.mxu0
        %v4333 = vsel %vm404, %v3938, 0
        %v4336 = vsel %vm404, %v3939, 0
        %v4339 = vsel %vm404, %v3940, 0
        %v4342 = vsel %vm404, %v3941, 0
        %v4345 = vsel %vm404, %v3942, 0
        %v4348 = vsel %vm404, %v3943, 0
        %v4351 = vsel %vm404, %v3944, 0
        %v4354 = vsel %vm404, %v3945, 0
        %v4357 = vsel %vm404, %v3946, 0
        %v4360 = vsel %vm404, %v3947, 0
        %v4363 = vsel %vm404, %v3948, 0
        %v4366 = vsel %vm404, %v3949, 0
        %v4369 = vsel %vm404, %v3950, 0
        %v4372 = vsel %vm404, %v3951, 0
        %v4375 = vsel %vm404, %v3952, 0
        %v4378 = vsel %vm404, %v3953, 0
        %v4381 = vsel %vm404, %v3954, 0
        %v4384 = vsel %vm404, %v3955, 0
        %v4387 = vsel %vm404, %v3956, 0
        %v4390 = vsel %vm404, %v3957, 0
        %v4393 = vsel %vm404, %v3958, 0
        %v4396 = vsel %vm404, %v3959, 0
        %v4399 = vsel %vm404, %v3960, 0
        %v4402 = vsel %vm404, %v3961, 0
        %v4405 = vsel %vm404, %v3962, 0
        %v4408 = vsel %vm404, %v3963, 0
        %v4411 = vsel %vm404, %v3964, 0
        %v4414 = vsel %vm404, %v3965, 0
        %v4417 = vsel %vm404, %v3966, 0
        %v4420 = vsel %vm404, %v3967, 0
        %v4423 = vsel %vm404, %v3968, 0
        %v4426 = vsel %vm404, %v3969, 0
        %4428 = vmatprep.subr.mxu0 0.0
        %4429 = vmatpush1.msra.mxu0 %v3970
        %4430 = vmatprep.subr.mxu0 0.0
        %4431 = vmatpush1.msra.mxu0 %v3971
        %4432 = vmatprep.subr.mxu0 0.0
        %4433 = vmatpush1.msra.mxu0 %v3972
        %4434 = vmatprep.subr.mxu0 0.0
        %4435 = vmatpush1.msra.mxu0 %v3973
        %4436 = vmatprep.subr.mxu0 0.0
        %4437 = vmatpush1.msra.mxu0 0.0
        %4438 = vmatprep.subr.mxu0 0.0
        %4439 = vmatpush1.msra.mxu0 0.0
        %4440 = vmatprep.subr.mxu0 0.0
        %4441 = vmatpush1.msra.mxu0 0.0
        %4442 = vmatprep.subr.mxu0 0.0
        %4443 = vmatpush1.msra.mxu0 0.0
        %4444 = vmatprep.subr.mxu0 0.0
        %4445 = vmatpush1.msra.mxu0 0.0
        %4446 = vmatprep.subr.mxu0 0.0
        %4447 = vmatpush1.msra.mxu0 0.0
        %4448 = vmatprep.subr.mxu0 0.0
        %4449 = vmatpush1.msra.mxu0 0.0
        %4450 = vmatprep.subr.mxu0 0.0
        %4451 = vmatpush1.msra.mxu0 0.0
        %4452 = vmatprep.subr.mxu0 0.0
        %4453 = vmatpush1.msra.mxu0 0.0
        %4454 = vmatprep.subr.mxu0 0.0
        %4455 = vmatpush1.msra.mxu0 0.0
        %4456 = vmatprep.subr.mxu0 0.0
        %4457 = vmatpush1.msra.mxu0 0.0
        %4458 = vmatprep.subr.mxu0 0.0
        %4459 = vmatpush1.msra.mxu0 0.0
        %4460 = vmatprep.subr.mxu0 0.0
        %4461 = vmatpush1.msra.mxu0 0.0
        %4462 = vmatprep.subr.mxu0 0.0
        %4463 = vmatpush1.msra.mxu0 0.0
        %4464 = vmatprep.subr.mxu0 0.0
        %4465 = vmatpush1.msra.mxu0 0.0
        %4466 = vmatprep.subr.mxu0 0.0
        %4467 = vmatpush1.msra.mxu0 0.0
        %4468 = vmatprep.subr.mxu0 0.0
        %4469 = vmatpush1.msra.mxu0 0.0
        %4470 = vmatprep.subr.mxu0 0.0
        %4471 = vmatpush1.msra.mxu0 0.0
        %4472 = vmatprep.subr.mxu0 0.0
        %4473 = vmatpush1.msra.mxu0 0.0
        %4474 = vmatprep.subr.mxu0 0.0
        %4475 = vmatpush1.msra.mxu0 0.0
        %4476 = vmatprep.subr.mxu0 0.0
        %4477 = vmatpush1.msra.mxu0 0.0
        %4478 = vmatprep.subr.mxu0 0.0
        %4479 = vmatpush1.msra.mxu0 0.0
        %4480 = vmatprep.subr.mxu0 0.0
        %4481 = vmatpush1.msra.mxu0 0.0
        %4482 = vmatprep.subr.mxu0 0.0
        %4483 = vmatpush1.msra.mxu0 0.0
        %4484 = vmatprep.subr.mxu0 0.0
        %4485 = vmatpush1.msra.mxu0 0.0
        %4486 = vmatprep.subr.mxu0 0.0
        %4487 = vmatpush1.msra.mxu0 0.0
        %4488 = vmatprep.subr.mxu0 0.0
        %4489 = vmatpush1.msra.mxu0 0.0
        %4490 = vmatprep.subr.mxu0 0.0
        %4491 = vmatpush1.msra.mxu0 0.0
        %4492 = vmatprep.mubr.f32.mxu0 0.0
        %4493 = vmatmul.mubr.f32.gmra.mrb[0].mxu0 %v4333
        %v4494 = vpop.f32.mrb[0].mxu0
        %v4495 = vadd.f32 %v4174, %v4494
        %v4496 = vpop.f32.mrb[0].mxu0
        %4497 = vmatprep.mubr.f32.mxu0 0.0
        %4498 = vmatmul.mubr.f32.gmra.mrb[0].mxu0 %v4336
        %v4499 = vpop.f32.mrb[0].mxu0
        %v4500 = vadd.f32 %v4179, %v4499
        %v4501 = vpop.f32.mrb[0].mxu0
        %4502 = vmatprep.mubr.f32.mxu0 0.0
        %4503 = vmatmul.mubr.f32.gmra.mrb[0].mxu0 %v4339
        %v4504 = vpop.f32.mrb[0].mxu0
        %v4505 = vadd.f32 %v4184, %v4504
        %v4506 = vpop.f32.mrb[0].mxu0
        %4507 = vmatprep.mubr.f32.mxu0 0.0
        %4508 = vmatmul.mubr.f32.gmra.mrb[0].mxu0 %v4342
        %v4509 = vpop.f32.mrb[0].mxu0
        %v4510 = vadd.f32 %v4189, %v4509
        %v4511 = vpop.f32.mrb[0].mxu0
        %4512 = vmatprep.mubr.f32.mxu0 0.0
        %4513 = vmatmul.mubr.f32.gmra.mrb[0].mxu0 %v4345
        %v4514 = vpop.f32.mrb[0].mxu0
        %v4515 = vadd.f32 %v4194, %v4514
        %v4516 = vpop.f32.mrb[0].mxu0
        %4517 = vmatprep.mubr.f32.mxu0 0.0
        %4518 = vmatmul.mubr.f32.gmra.mrb[0].mxu0 %v4348
        %v4519 = vpop.f32.mrb[0].mxu0
        %v4520 = vadd.f32 %v4199, %v4519
        %v4521 = vpop.f32.mrb[0].mxu0
        %4522 = vmatprep.mubr.f32.mxu0 0.0
        %4523 = vmatmul.mubr.f32.gmra.mrb[0].mxu0 %v4351
        %v4524 = vpop.f32.mrb[0].mxu0
        %v4525 = vadd.f32 %v4204, %v4524
        %v4526 = vpop.f32.mrb[0].mxu0
        %4527 = vmatprep.mubr.f32.mxu0 0.0
        %4528 = vmatmul.mubr.f32.gmra.mrb[0].mxu0 %v4354
        %v4529 = vpop.f32.mrb[0].mxu0
        %v4530 = vadd.f32 %v4209, %v4529
        %v4531 = vpop.f32.mrb[0].mxu0
        %4532 = vmatprep.mubr.f32.mxu0 0.0
        %4533 = vmatmul.mubr.f32.gmra.mrb[0].mxu0 %v4357
        %v4534 = vpop.f32.mrb[0].mxu0
        %v4535 = vadd.f32 %v4214, %v4534
        %v4536 = vpop.f32.mrb[0].mxu0
        %4537 = vmatprep.mubr.f32.mxu0 0.0
        %4538 = vmatmul.mubr.f32.gmra.mrb[0].mxu0 %v4360
        %v4539 = vpop.f32.mrb[0].mxu0
        %v4540 = vadd.f32 %v4219, %v4539
        %v4541 = vpop.f32.mrb[0].mxu0
        %4542 = vmatprep.mubr.f32.mxu0 0.0
        %4543 = vmatmul.mubr.f32.gmra.mrb[0].mxu0 %v4363
        %v4544 = vpop.f32.mrb[0].mxu0
        %v4545 = vadd.f32 %v4224, %v4544
        %v4546 = vpop.f32.mrb[0].mxu0
        %4547 = vmatprep.mubr.f32.mxu0 0.0
        %4548 = vmatmul.mubr.f32.gmra.mrb[0].mxu0 %v4366
        %v4549 = vpop.f32.mrb[0].mxu0
        %v4550 = vadd.f32 %v4229, %v4549
        %v4551 = vpop.f32.mrb[0].mxu0
        %4552 = vmatprep.mubr.f32.mxu0 0.0
        %4553 = vmatmul.mubr.f32.gmra.mrb[0].mxu0 %v4369
        %v4554 = vpop.f32.mrb[0].mxu0
        %v4555 = vadd.f32 %v4234, %v4554
        %v4556 = vpop.f32.mrb[0].mxu0
        %4557 = vmatprep.mubr.f32.mxu0 0.0
        %4558 = vmatmul.mubr.f32.gmra.mrb[0].mxu0 %v4372
        %v4559 = vpop.f32.mrb[0].mxu0
        %v4560 = vadd.f32 %v4239, %v4559
        %v4561 = vpop.f32.mrb[0].mxu0
        %4562 = vmatprep.mubr.f32.mxu0 0.0
        %4563 = vmatmul.mubr.f32.gmra.mrb[0].mxu0 %v4375
        %v4564 = vpop.f32.mrb[0].mxu0
        %v4565 = vadd.f32 %v4244, %v4564
        %v4566 = vpop.f32.mrb[0].mxu0
        %4567 = vmatprep.mubr.f32.mxu0 0.0
        %4568 = vmatmul.mubr.f32.gmra.mrb[0].mxu0 %v4378
        %v4569 = vpop.f32.mrb[0].mxu0
        %v4570 = vadd.f32 %v4249, %v4569
        %v4571 = vpop.f32.mrb[0].mxu0
        %4572 = vmatprep.mubr.f32.mxu0 0.0
        %4573 = vmatmul.mubr.f32.gmra.mrb[0].mxu0 %v4381
        %v4574 = vpop.f32.mrb[0].mxu0
        %v4575 = vadd.f32 %v4254, %v4574
        %v4576 = vpop.f32.mrb[0].mxu0
        %4577 = vmatprep.mubr.f32.mxu0 0.0
        %4578 = vmatmul.mubr.f32.gmra.mrb[0].mxu0 %v4384
        %v4579 = vpop.f32.mrb[0].mxu0
        %v4580 = vadd.f32 %v4259, %v4579
        %v4581 = vpop.f32.mrb[0].mxu0
        %4582 = vmatprep.mubr.f32.mxu0 0.0
        %4583 = vmatmul.mubr.f32.gmra.mrb[0].mxu0 %v4387
        %v4584 = vpop.f32.mrb[0].mxu0
        %v4585 = vadd.f32 %v4264, %v4584
        %v4586 = vpop.f32.mrb[0].mxu0
        %4587 = vmatprep.mubr.f32.mxu0 0.0
        %4588 = vmatmul.mubr.f32.gmra.mrb[0].mxu0 %v4390
        %v4589 = vpop.f32.mrb[0].mxu0
        %v4590 = vadd.f32 %v4269, %v4589
        %v4591 = vpop.f32.mrb[0].mxu0
        %4592 = vmatprep.mubr.f32.mxu0 0.0
        %4593 = vmatmul.mubr.f32.gmra.mrb[0].mxu0 %v4393
        %v4594 = vpop.f32.mrb[0].mxu0
        %v4595 = vadd.f32 %v4274, %v4594
        %v4596 = vpop.f32.mrb[0].mxu0
        %4597 = vmatprep.mubr.f32.mxu0 0.0
        %4598 = vmatmul.mubr.f32.gmra.mrb[0].mxu0 %v4396
        %v4599 = vpop.f32.mrb[0].mxu0
        %v4600 = vadd.f32 %v4279, %v4599
        %v4601 = vpop.f32.mrb[0].mxu0
        %4602 = vmatprep.mubr.f32.mxu0 0.0
        %4603 = vmatmul.mubr.f32.gmra.mrb[0].mxu0 %v4399
        %v4604 = vpop.f32.mrb[0].mxu0
        %v4605 = vadd.f32 %v4284, %v4604
        %v4606 = vpop.f32.mrb[0].mxu0
        %4607 = vmatprep.mubr.f32.mxu0 0.0
        %4608 = vmatmul.mubr.f32.gmra.mrb[0].mxu0 %v4402
        %v4609 = vpop.f32.mrb[0].mxu0
        %v4610 = vadd.f32 %v4289, %v4609
        %v4611 = vpop.f32.mrb[0].mxu0
        %4612 = vmatprep.mubr.f32.mxu0 0.0
        %4613 = vmatmul.mubr.f32.gmra.mrb[0].mxu0 %v4405
        %v4614 = vpop.f32.mrb[0].mxu0
        %v4615 = vadd.f32 %v4294, %v4614
        %v4616 = vpop.f32.mrb[0].mxu0
        %4617 = vmatprep.mubr.f32.mxu0 0.0
        %4618 = vmatmul.mubr.f32.gmra.mrb[0].mxu0 %v4408
        %v4619 = vpop.f32.mrb[0].mxu0
        %v4620 = vadd.f32 %v4299, %v4619
        %v4621 = vpop.f32.mrb[0].mxu0
        %4622 = vmatprep.mubr.f32.mxu0 0.0
        %4623 = vmatmul.mubr.f32.gmra.mrb[0].mxu0 %v4411
        %v4624 = vpop.f32.mrb[0].mxu0
        %v4625 = vadd.f32 %v4304, %v4624
        %v4626 = vpop.f32.mrb[0].mxu0
        %4627 = vmatprep.mubr.f32.mxu0 0.0
        %4628 = vmatmul.mubr.f32.gmra.mrb[0].mxu0 %v4414
        %v4629 = vpop.f32.mrb[0].mxu0
        %v4630 = vadd.f32 %v4309, %v4629
        %v4631 = vpop.f32.mrb[0].mxu0
        %4632 = vmatprep.mubr.f32.mxu0 0.0
        %4633 = vmatmul.mubr.f32.gmra.mrb[0].mxu0 %v4417
        %v4634 = vpop.f32.mrb[0].mxu0
        %v4635 = vadd.f32 %v4314, %v4634
        %v4636 = vpop.f32.mrb[0].mxu0
        %4637 = vmatprep.mubr.f32.mxu0 0.0
        %4638 = vmatmul.mubr.f32.gmra.mrb[0].mxu0 %v4420
        %v4639 = vpop.f32.mrb[0].mxu0
        %v4640 = vadd.f32 %v4319, %v4639
        %v4641 = vpop.f32.mrb[0].mxu0
        %4642 = vmatprep.mubr.f32.mxu0 0.0
        %4643 = vmatmul.mubr.f32.gmra.mrb[0].mxu0 %v4423
        %v4644 = vpop.f32.mrb[0].mxu0
        %v4645 = vadd.f32 %v4324, %v4644
        %v4646 = vpop.f32.mrb[0].mxu0
        %4647 = vmatprep.mubr.f32.mxu0 0.0
        %4648 = vmatmul.mubr.f32.gmra.mrb[0].mxu0 %v4426
        %v4649 = vpop.f32.mrb[0].mxu0
        %v4650 = vadd.f32 %v4329, %v4649
        %v4651 = vpop.f32.mrb[0].mxu0
        %4652 = vdwg.mxu0
        %v4653 = vld [vmem:[#allocation2 + $0x2] sm:$0xff]
        %v4654 = vld [vmem:[#allocation2 + $0xa] sm:$0xff]
        %v4655 = vld [vmem:[#allocation2 + $0x1a] sm:$0xff]
        %v4656 = vld [vmem:[#allocation2 + $0x22] sm:$0xff]
        %v4657 = vld [vmem:[#allocation2 + $0x32] sm:$0xff]
        %v4658 = vld [vmem:[#allocation2 + $0x3a] sm:$0xff]
        %v4659 = vld [vmem:[#allocation2 + $0x4a] sm:$0xff]
        %v4660 = vld [vmem:[#allocation2 + $0x52] sm:$0xff]
        %v4661 = vld [vmem:[#allocation2 + $0x62] sm:$0xff]
        %v4662 = vld [vmem:[#allocation2 + $0x6a] sm:$0xff]
        %v4663 = vld [vmem:[#allocation2 + $0x7a] sm:$0xff]
        %v4664 = vld [vmem:[#allocation2 + $0x82] sm:$0xff]
        %v4665 = vld [vmem:[#allocation2 + $0x92] sm:$0xff]
        %v4666 = vld [vmem:[#allocation2 + $0x9a] sm:$0xff]
        %v4667 = vld [vmem:[#allocation2 + $0xaa] sm:$0xff]
        %v4668 = vld [vmem:[#allocation2 + $0xb2] sm:$0xff]
        %v4669 = vld [vmem:[#allocation2 + $0xc2] sm:$0xff]
        %v4670 = vld [vmem:[#allocation2 + $0xca] sm:$0xff]
        %v4671 = vld [vmem:[#allocation2 + $0xda] sm:$0xff]
        %v4672 = vld [vmem:[#allocation2 + $0xe2] sm:$0xff]
        %v4673 = vld [vmem:[#allocation2 + $0xf2] sm:$0xff]
        %v4674 = vld [vmem:[#allocation2 + $0xfa] sm:$0xff]
        %v4675 = vld [vmem:[#allocation2 + $0x10a] sm:$0xff]
        %v4676 = vld [vmem:[#allocation2 + $0x112] sm:$0xff]
        %v4677 = vld [vmem:[#allocation2 + $0x122] sm:$0xff]
        %v4678 = vld [vmem:[#allocation2 + $0x12a] sm:$0xff]
        %v4679 = vld [vmem:[#allocation2 + $0x13a] sm:$0xff]
        %v4680 = vld [vmem:[#allocation2 + $0x142] sm:$0xff]
        %v4681 = vld [vmem:[#allocation2 + $0x152] sm:$0xff]
        %v4682 = vld [vmem:[#allocation2 + $0x15a] sm:$0xff]
        %v4683 = vld [vmem:[#allocation2 + $0x16a] sm:$0xff]
        %v4684 = vld [vmem:[#allocation2 + $0x172] sm:$0xff]
        %s4685 = scalar_lea.vmem %s3, 64
        %v4686 = vld [vmem:[%s4685] sm:$0xff]
        %v4687 = vld [vmem:[%s4685 + $0x8] sm:$0xff]
        %v4688 = vld [vmem:[%s4685 + $0x10] sm:$0xff]
        %v4689 = vld [vmem:[%s4685 + $0x18] sm:$0xff]
        %v4691 = vsel %vm404, %v4653, 0
        %v4694 = vsel %vm404, %v4654, 0
        %v4697 = vsel %vm404, %v4655, 0
        %v4700 = vsel %vm404, %v4656, 0
        %v4703 = vsel %vm404, %v4657, 0
        %v4706 = vsel %vm404, %v4658, 0
        %v4709 = vsel %vm404, %v4659, 0
        %v4712 = vsel %vm404, %v4660, 0
        %v4715 = vsel %vm404, %v4661, 0
        %v4718 = vsel %vm404, %v4662, 0
        %v4721 = vsel %vm404, %v4663, 0
        %v4724 = vsel %vm404, %v4664, 0
        %v4727 = vsel %vm404, %v4665, 0
        %v4730 = vsel %vm404, %v4666, 0
        %v4733 = vsel %vm404, %v4667, 0
        %v4736 = vsel %vm404, %v4668, 0
        %v4739 = vsel %vm404, %v4669, 0
        %v4742 = vsel %vm404, %v4670, 0
        %v4745 = vsel %vm404, %v4671, 0
        %v4748 = vsel %vm404, %v4672, 0
        %v4751 = vsel %vm404, %v4673, 0
        %v4754 = vsel %vm404, %v4674, 0
        %v4757 = vsel %vm404, %v4675, 0
        %v4760 = vsel %vm404, %v4676, 0
        %v4763 = vsel %vm404, %v4677, 0
        %v4766 = vsel %vm404, %v4678, 0
        %v4769 = vsel %vm404, %v4679, 0
        %v4772 = vsel %vm404, %v4680, 0
        %v4775 = vsel %vm404, %v4681, 0
        %v4778 = vsel %vm404, %v4682, 0
        %v4781 = vsel %vm404, %v4683, 0
        %v4784 = vsel %vm404, %v4684, 0
        %4786 = vmatprep.subr.mxu0 0.0
        %4787 = vmatpush1.msra.mxu0 %v4686
        %4788 = vmatprep.subr.mxu0 0.0
        %4789 = vmatpush1.msra.mxu0 %v4687
        %4790 = vmatprep.subr.mxu0 0.0
        %4791 = vmatpush1.msra.mxu0 %v4688
        %4792 = vmatprep.subr.mxu0 0.0
        %4793 = vmatpush1.msra.mxu0 %v4689
        %4794 = vmatprep.subr.mxu0 0.0
        %4795 = vmatpush1.msra.mxu0 0.0
        %4796 = vmatprep.subr.mxu0 0.0
        %4797 = vmatpush1.msra.mxu0 0.0
        %4798 = vmatprep.subr.mxu0 0.0
        %4799 = vmatpush1.msra.mxu0 0.0
        %4800 = vmatprep.subr.mxu0 0.0
        %4801 = vmatpush1.msra.mxu0 0.0
        %4802 = vmatprep.subr.mxu0 0.0
        %4803 = vmatpush1.msra.mxu0 0.0
        %4804 = vmatprep.subr.mxu0 0.0
        %4805 = vmatpush1.msra.mxu0 0.0
        %4806 = vmatprep.subr.mxu0 0.0
        %4807 = vmatpush1.msra.mxu0 0.0
        %4808 = vmatprep.subr.mxu0 0.0
        %4809 = vmatpush1.msra.mxu0 0.0
        %4810 = vmatprep.subr.mxu0 0.0
        %4811 = vmatpush1.msra.mxu0 0.0
        %4812 = vmatprep.subr.mxu0 0.0
        %4813 = vmatpush1.msra.mxu0 0.0
        %4814 = vmatprep.subr.mxu0 0.0
        %4815 = vmatpush1.msra.mxu0 0.0
        %4816 = vmatprep.subr.mxu0 0.0
        %4817 = vmatpush1.msra.mxu0 0.0
        %4818 = vmatprep.subr.mxu0 0.0
        %4819 = vmatpush1.msra.mxu0 0.0
        %4820 = vmatprep.subr.mxu0 0.0
        %4821 = vmatpush1.msra.mxu0 0.0
        %4822 = vmatprep.subr.mxu0 0.0
        %4823 = vmatpush1.msra.mxu0 0.0
        %4824 = vmatprep.subr.mxu0 0.0
        %4825 = vmatpush1.msra.mxu0 0.0
        %4826 = vmatprep.subr.mxu0 0.0
        %4827 = vmatpush1.msra.mxu0 0.0
        %4828 = vmatprep.subr.mxu0 0.0
        %4829 = vmatpush1.msra.mxu0 0.0
        %4830 = vmatprep.subr.mxu0 0.0
        %4831 = vmatpush1.msra.mxu0 0.0
        %4832 = vmatprep.subr.mxu0 0.0
        %4833 = vmatpush1.msra.mxu0 0.0
        %4834 = vmatprep.subr.mxu0 0.0
        %4835 = vmatpush1.msra.mxu0 0.0
        %4836 = vmatprep.subr.mxu0 0.0
        %4837 = vmatpush1.msra.mxu0 0.0
        %4838 = vmatprep.subr.mxu0 0.0
        %4839 = vmatpush1.msra.mxu0 0.0
        %4840 = vmatprep.subr.mxu0 0.0
        %4841 = vmatpush1.msra.mxu0 0.0
        %4842 = vmatprep.subr.mxu0 0.0
        %4843 = vmatpush1.msra.mxu0 0.0
        %4844 = vmatprep.subr.mxu0 0.0
        %4845 = vmatpush1.msra.mxu0 0.0
        %4846 = vmatprep.subr.mxu0 0.0
        %4847 = vmatpush1.msra.mxu0 0.0
        %4848 = vmatprep.subr.mxu0 0.0
        %4849 = vmatpush1.msra.mxu0 0.0
        %4850 = vmatprep.mubr.f32.mxu0 0.0
        %4851 = vmatmul.mubr.f32.gmra.mrb[0].mxu0 %v4691
        %v4852 = vpop.f32.mrb[0].mxu0
        %v4853 = vadd.f32 0.0, %v4852
        %v4854 = vpop.f32.mrb[0].mxu0
        %4855 = vmatprep.mubr.f32.mxu0 0.0
        %4856 = vmatmul.mubr.f32.gmra.mrb[0].mxu0 %v4694
        %v4857 = vpop.f32.mrb[0].mxu0
        %v4858 = vadd.f32 0.0, %v4857
        %v4859 = vpop.f32.mrb[0].mxu0
        %4860 = vmatprep.mubr.f32.mxu0 0.0
        %4861 = vmatmul.mubr.f32.gmra.mrb[0].mxu0 %v4697
        %v4862 = vpop.f32.mrb[0].mxu0
        %v4863 = vadd.f32 0.0, %v4862
        %v4864 = vpop.f32.mrb[0].mxu0
        %4865 = vmatprep.mubr.f32.mxu0 0.0
        %4866 = vmatmul.mubr.f32.gmra.mrb[0].mxu0 %v4700
        %v4867 = vpop.f32.mrb[0].mxu0
        %v4868 = vadd.f32 0.0, %v4867
        %v4869 = vpop.f32.mrb[0].mxu0
        %4870 = vmatprep.mubr.f32.mxu0 0.0
        %4871 = vmatmul.mubr.f32.gmra.mrb[0].mxu0 %v4703
        %v4872 = vpop.f32.mrb[0].mxu0
        %v4873 = vadd.f32 0.0, %v4872
        %v4874 = vpop.f32.mrb[0].mxu0
        %4875 = vmatprep.mubr.f32.mxu0 0.0
        %4876 = vmatmul.mubr.f32.gmra.mrb[0].mxu0 %v4706
        %v4877 = vpop.f32.mrb[0].mxu0
        %v4878 = vadd.f32 0.0, %v4877
        %v4879 = vpop.f32.mrb[0].mxu0
        %4880 = vmatprep.mubr.f32.mxu0 0.0
        %4881 = vmatmul.mubr.f32.gmra.mrb[0].mxu0 %v4709
        %v4882 = vpop.f32.mrb[0].mxu0
        %v4883 = vadd.f32 0.0, %v4882
        %v4884 = vpop.f32.mrb[0].mxu0
        %4885 = vmatprep.mubr.f32.mxu0 0.0
        %4886 = vmatmul.mubr.f32.gmra.mrb[0].mxu0 %v4712
        %v4887 = vpop.f32.mrb[0].mxu0
        %v4888 = vadd.f32 0.0, %v4887
        %v4889 = vpop.f32.mrb[0].mxu0
        %4890 = vmatprep.mubr.f32.mxu0 0.0
        %4891 = vmatmul.mubr.f32.gmra.mrb[0].mxu0 %v4715
        %v4892 = vpop.f32.mrb[0].mxu0
        %v4893 = vadd.f32 0.0, %v4892
        %v4894 = vpop.f32.mrb[0].mxu0
        %4895 = vmatprep.mubr.f32.mxu0 0.0
        %4896 = vmatmul.mubr.f32.gmra.mrb[0].mxu0 %v4718
        %v4897 = vpop.f32.mrb[0].mxu0
        %v4898 = vadd.f32 0.0, %v4897
        %v4899 = vpop.f32.mrb[0].mxu0
        %4900 = vmatprep.mubr.f32.mxu0 0.0
        %4901 = vmatmul.mubr.f32.gmra.mrb[0].mxu0 %v4721
        %v4902 = vpop.f32.mrb[0].mxu0
        %v4903 = vadd.f32 0.0, %v4902
        %v4904 = vpop.f32.mrb[0].mxu0
        %4905 = vmatprep.mubr.f32.mxu0 0.0
        %4906 = vmatmul.mubr.f32.gmra.mrb[0].mxu0 %v4724
        %v4907 = vpop.f32.mrb[0].mxu0
        %v4908 = vadd.f32 0.0, %v4907
        %v4909 = vpop.f32.mrb[0].mxu0
        %4910 = vmatprep.mubr.f32.mxu0 0.0
        %4911 = vmatmul.mubr.f32.gmra.mrb[0].mxu0 %v4727
        %v4912 = vpop.f32.mrb[0].mxu0
        %v4913 = vadd.f32 0.0, %v4912
        %v4914 = vpop.f32.mrb[0].mxu0
        %4915 = vmatprep.mubr.f32.mxu0 0.0
        %4916 = vmatmul.mubr.f32.gmra.mrb[0].mxu0 %v4730
        %v4917 = vpop.f32.mrb[0].mxu0
        %v4918 = vadd.f32 0.0, %v4917
        %v4919 = vpop.f32.mrb[0].mxu0
        %4920 = vmatprep.mubr.f32.mxu0 0.0
        %4921 = vmatmul.mubr.f32.gmra.mrb[0].mxu0 %v4733
        %v4922 = vpop.f32.mrb[0].mxu0
        %v4923 = vadd.f32 0.0, %v4922
        %v4924 = vpop.f32.mrb[0].mxu0
        %4925 = vmatprep.mubr.f32.mxu0 0.0
        %4926 = vmatmul.mubr.f32.gmra.mrb[0].mxu0 %v4736
        %v4927 = vpop.f32.mrb[0].mxu0
        %v4928 = vadd.f32 0.0, %v4927
        %v4929 = vpop.f32.mrb[0].mxu0
        %4930 = vmatprep.mubr.f32.mxu0 0.0
        %4931 = vmatmul.mubr.f32.gmra.mrb[0].mxu0 %v4739
        %v4932 = vpop.f32.mrb[0].mxu0
        %v4933 = vadd.f32 0.0, %v4932
        %v4934 = vpop.f32.mrb[0].mxu0
        %4935 = vmatprep.mubr.f32.mxu0 0.0
        %4936 = vmatmul.mubr.f32.gmra.mrb[0].mxu0 %v4742
        %v4937 = vpop.f32.mrb[0].mxu0
        %v4938 = vadd.f32 0.0, %v4937
        %v4939 = vpop.f32.mrb[0].mxu0
        %4940 = vmatprep.mubr.f32.mxu0 0.0
        %4941 = vmatmul.mubr.f32.gmra.mrb[0].mxu0 %v4745
        %v4942 = vpop.f32.mrb[0].mxu0
        %v4943 = vadd.f32 0.0, %v4942
        %v4944 = vpop.f32.mrb[0].mxu0
        %4945 = vmatprep.mubr.f32.mxu0 0.0
        %4946 = vmatmul.mubr.f32.gmra.mrb[0].mxu0 %v4748
        %v4947 = vpop.f32.mrb[0].mxu0
        %v4948 = vadd.f32 0.0, %v4947
        %v4949 = vpop.f32.mrb[0].mxu0
        %4950 = vmatprep.mubr.f32.mxu0 0.0
        %4951 = vmatmul.mubr.f32.gmra.mrb[0].mxu0 %v4751
        %v4952 = vpop.f32.mrb[0].mxu0
        %v4953 = vadd.f32 0.0, %v4952
        %v4954 = vpop.f32.mrb[0].mxu0
        %4955 = vmatprep.mubr.f32.mxu0 0.0
        %4956 = vmatmul.mubr.f32.gmra.mrb[0].mxu0 %v4754
        %v4957 = vpop.f32.mrb[0].mxu0
        %v4958 = vadd.f32 0.0, %v4957
        %v4959 = vpop.f32.mrb[0].mxu0
        %4960 = vmatprep.mubr.f32.mxu0 0.0
        %4961 = vmatmul.mubr.f32.gmra.mrb[0].mxu0 %v4757
        %v4962 = vpop.f32.mrb[0].mxu0
        %v4963 = vadd.f32 0.0, %v4962
        %v4964 = vpop.f32.mrb[0].mxu0
        %4965 = vmatprep.mubr.f32.mxu0 0.0
        %4966 = vmatmul.mubr.f32.gmra.mrb[0].mxu0 %v4760
        %v4967 = vpop.f32.mrb[0].mxu0
        %v4968 = vadd.f32 0.0, %v4967
        %v4969 = vpop.f32.mrb[0].mxu0
        %4970 = vmatprep.mubr.f32.mxu0 0.0
        %4971 = vmatmul.mubr.f32.gmra.mrb[0].mxu0 %v4763
        %v4972 = vpop.f32.mrb[0].mxu0
        %v4973 = vadd.f32 0.0, %v4972
        %v4974 = vpop.f32.mrb[0].mxu0
        %4975 = vmatprep.mubr.f32.mxu0 0.0
        %4976 = vmatmul.mubr.f32.gmra.mrb[0].mxu0 %v4766
        %v4977 = vpop.f32.mrb[0].mxu0
        %v4978 = vadd.f32 0.0, %v4977
        %v4979 = vpop.f32.mrb[0].mxu0
        %4980 = vmatprep.mubr.f32.mxu0 0.0
        %4981 = vmatmul.mubr.f32.gmra.mrb[0].mxu0 %v4769
        %v4982 = vpop.f32.mrb[0].mxu0
        %v4983 = vadd.f32 0.0, %v4982
        %v4984 = vpop.f32.mrb[0].mxu0
        %4985 = vmatprep.mubr.f32.mxu0 0.0
        %4986 = vmatmul.mubr.f32.gmra.mrb[0].mxu0 %v4772
        %v4987 = vpop.f32.mrb[0].mxu0
        %v4988 = vadd.f32 0.0, %v4987
        %v4989 = vpop.f32.mrb[0].mxu0
        %4990 = vmatprep.mubr.f32.mxu0 0.0
        %4991 = vmatmul.mubr.f32.gmra.mrb[0].mxu0 %v4775
        %v4992 = vpop.f32.mrb[0].mxu0
        %v4993 = vadd.f32 0.0, %v4992
        %v4994 = vpop.f32.mrb[0].mxu0
        %4995 = vmatprep.mubr.f32.mxu0 0.0
        %4996 = vmatmul.mubr.f32.gmra.mrb[0].mxu0 %v4778
        %v4997 = vpop.f32.mrb[0].mxu0
        %v4998 = vadd.f32 0.0, %v4997
        %v4999 = vpop.f32.mrb[0].mxu0
        %5000 = vmatprep.mubr.f32.mxu0 0.0
        %5001 = vmatmul.mubr.f32.gmra.mrb[0].mxu0 %v4781
        %v5002 = vpop.f32.mrb[0].mxu0
        %v5003 = vadd.f32 0.0, %v5002
        %v5004 = vpop.f32.mrb[0].mxu0
        %5005 = vmatprep.mubr.f32.mxu0 0.0
        %5006 = vmatmul.mubr.f32.gmra.mrb[0].mxu0 %v4784
        %v5007 = vpop.f32.mrb[0].mxu0
        %v5008 = vadd.f32 0.0, %v5007
        %v5009 = vpop.f32.mrb[0].mxu0
        %5010 = vdwg.mxu0
        %v5011 = vadd.f32 %v4495, %v4853
        %v5012 = vadd.f32 %v4500, %v4858
        %v5013 = vadd.f32 %v4505, %v4863
        %v5014 = vadd.f32 %v4510, %v4868
        %v5015 = vadd.f32 %v4515, %v4873
        %v5016 = vadd.f32 %v4520, %v4878
        %v5017 = vadd.f32 %v4525, %v4883
        %v5018 = vadd.f32 %v4530, %v4888
        %v5019 = vadd.f32 %v4535, %v4893
        %v5020 = vadd.f32 %v4540, %v4898
        %v5021 = vadd.f32 %v4545, %v4903
        %v5022 = vadd.f32 %v4550, %v4908
        %v5023 = vadd.f32 %v4555, %v4913
        %v5024 = vadd.f32 %v4560, %v4918
        %v5025 = vadd.f32 %v4565, %v4923
        %v5026 = vadd.f32 %v4570, %v4928
        %v5027 = vadd.f32 %v4575, %v4933
        %v5028 = vadd.f32 %v4580, %v4938
        %v5029 = vadd.f32 %v4585, %v4943
        %v5030 = vadd.f32 %v4590, %v4948
        %v5031 = vadd.f32 %v4595, %v4953
        %v5032 = vadd.f32 %v4600, %v4958
        %v5033 = vadd.f32 %v4605, %v4963
        %v5034 = vadd.f32 %v4610, %v4968
        %v5035 = vadd.f32 %v4615, %v4973
        %v5036 = vadd.f32 %v4620, %v4978
        %v5037 = vadd.f32 %v4625, %v4983
        %v5038 = vadd.f32 %v4630, %v4988
        %v5039 = vadd.f32 %v4635, %v4993
        %v5040 = vadd.f32 %v4640, %v4998
        %v5041 = vadd.f32 %v4645, %v5003
        %v5042 = vadd.f32 %v4650, %v5008
        %v5043 = vld [vmem:[%s3905] sm:$0xff]
        %v5044 = vld [vmem:[%s3905 + $0x8] sm:$0xff]
        %v5045 = vld [vmem:[%s3905 + $0x18] sm:$0xff]
        %v5046 = vld [vmem:[%s3905 + $0x20] sm:$0xff]
        %v5047 = vld [vmem:[%s3905 + $0x30] sm:$0xff]
        %v5048 = vld [vmem:[%s3905 + $0x38] sm:$0xff]
        %v5049 = vld [vmem:[%s3905 + $0x48] sm:$0xff]
        %v5050 = vld [vmem:[%s3905 + $0x50] sm:$0xff]
        %v5051 = vld [vmem:[%s3905 + $0x60] sm:$0xff]
        %v5052 = vld [vmem:[%s3905 + $0x68] sm:$0xff]
        %v5053 = vld [vmem:[%s3905 + $0x78] sm:$0xff]
        %v5054 = vld [vmem:[%s3905 + $0x80] sm:$0xff]
        %v5055 = vld [vmem:[%s3905 + $0x90] sm:$0xff]
        %v5056 = vld [vmem:[%s3905 + $0x98] sm:$0xff]
        %v5057 = vld [vmem:[%s3905 + $0xa8] sm:$0xff]
        %v5058 = vld [vmem:[%s3905 + $0xb0] sm:$0xff]
        %v5059 = vld [vmem:[%s3905 + $0xc0] sm:$0xff]
        %v5060 = vld [vmem:[%s3905 + $0xc8] sm:$0xff]
        %v5061 = vld [vmem:[%s3905 + $0xd8] sm:$0xff]
        %v5062 = vld [vmem:[%s3905 + $0xe0] sm:$0xff]
        %v5063 = vld [vmem:[%s3905 + $0xf0] sm:$0xff]
        %v5064 = vld [vmem:[%s3905 + $0xf8] sm:$0xff]
        %v5065 = vld [vmem:[%s3905 + $0x108] sm:$0xff]
        %v5066 = vld [vmem:[%s3905 + $0x110] sm:$0xff]
        %v5067 = vld [vmem:[%s3905 + $0x120] sm:$0xff]
        %v5068 = vld [vmem:[%s3905 + $0x128] sm:$0xff]
        %v5069 = vld [vmem:[%s3905 + $0x138] sm:$0xff]
        %v5070 = vld [vmem:[%s3905 + $0x140] sm:$0xff]
        %v5071 = vld [vmem:[%s3905 + $0x150] sm:$0xff]
        %v5072 = vld [vmem:[%s3905 + $0x158] sm:$0xff]
        %v5073 = vld [vmem:[%s3905 + $0x168] sm:$0xff]
        %v5074 = vld [vmem:[%s3905 + $0x170] sm:$0xff]
        %s5075 = scalar_lea.vmem %s3, 96
        %v5076 = vld [vmem:[%s5075] sm:$0xff]
        %v5077 = vld [vmem:[%s5075 + $0x8] sm:$0xff]
        %v5078 = vld [vmem:[%s5075 + $0x10] sm:$0xff]
        %v5079 = vld [vmem:[%s5075 + $0x18] sm:$0xff]
        %v5081 = vsel %vm404, %v5043, 0
        %v5084 = vsel %vm404, %v5044, 0
        %v5087 = vsel %vm404, %v5045, 0
        %v5090 = vsel %vm404, %v5046, 0
        %v5093 = vsel %vm404, %v5047, 0
        %v5096 = vsel %vm404, %v5048, 0
        %v5099 = vsel %vm404, %v5049, 0
        %v5102 = vsel %vm404, %v5050, 0
        %v5105 = vsel %vm404, %v5051, 0
        %v5108 = vsel %vm404, %v5052, 0
        %v5111 = vsel %vm404, %v5053, 0
        %v5114 = vsel %vm404, %v5054, 0
        %v5117 = vsel %vm404, %v5055, 0
        %v5120 = vsel %vm404, %v5056, 0
        %v5123 = vsel %vm404, %v5057, 0
        %v5126 = vsel %vm404, %v5058, 0
        %v5129 = vsel %vm404, %v5059, 0
        %v5132 = vsel %vm404, %v5060, 0
        %v5135 = vsel %vm404, %v5061, 0
        %v5138 = vsel %vm404, %v5062, 0
        %v5141 = vsel %vm404, %v5063, 0
        %v5144 = vsel %vm404, %v5064, 0
        %v5147 = vsel %vm404, %v5065, 0
        %v5150 = vsel %vm404, %v5066, 0
        %v5153 = vsel %vm404, %v5067, 0
        %v5156 = vsel %vm404, %v5068, 0
        %v5159 = vsel %vm404, %v5069, 0
        %v5162 = vsel %vm404, %v5070, 0
        %v5165 = vsel %vm404, %v5071, 0
        %v5168 = vsel %vm404, %v5072, 0
        %v5171 = vsel %vm404, %v5073, 0
        %v5174 = vsel %vm404, %v5074, 0
        %5176 = vmatprep.subr.mxu0 0.0
        %5177 = vmatpush1.msra.mxu0 %v5076
        %5178 = vmatprep.subr.mxu0 0.0
        %5179 = vmatpush1.msra.mxu0 %v5077
        %5180 = vmatprep.subr.mxu0 0.0
        %5181 = vmatpush1.msra.mxu0 %v5078
        %5182 = vmatprep.subr.mxu0 0.0
        %5183 = vmatpush1.msra.mxu0 %v5079
        %5184 = vmatprep.subr.mxu0 0.0
        %5185 = vmatpush1.msra.mxu0 0.0
        %5186 = vmatprep.subr.mxu0 0.0
        %5187 = vmatpush1.msra.mxu0 0.0
        %5188 = vmatprep.subr.mxu0 0.0
        %5189 = vmatpush1.msra.mxu0 0.0
        %5190 = vmatprep.subr.mxu0 0.0
        %5191 = vmatpush1.msra.mxu0 0.0
        %5192 = vmatprep.subr.mxu0 0.0
        %5193 = vmatpush1.msra.mxu0 0.0
        %5194 = vmatprep.subr.mxu0 0.0
        %5195 = vmatpush1.msra.mxu0 0.0
        %5196 = vmatprep.subr.mxu0 0.0
        %5197 = vmatpush1.msra.mxu0 0.0
        %5198 = vmatprep.subr.mxu0 0.0
        %5199 = vmatpush1.msra.mxu0 0.0
        %5200 = vmatprep.subr.mxu0 0.0
        %5201 = vmatpush1.msra.mxu0 0.0
        %5202 = vmatprep.subr.mxu0 0.0
        %5203 = vmatpush1.msra.mxu0 0.0
        %5204 = vmatprep.subr.mxu0 0.0
        %5205 = vmatpush1.msra.mxu0 0.0
        %5206 = vmatprep.subr.mxu0 0.0
        %5207 = vmatpush1.msra.mxu0 0.0
        %5208 = vmatprep.subr.mxu0 0.0
        %5209 = vmatpush1.msra.mxu0 0.0
        %5210 = vmatprep.subr.mxu0 0.0
        %5211 = vmatpush1.msra.mxu0 0.0
        %5212 = vmatprep.subr.mxu0 0.0
        %5213 = vmatpush1.msra.mxu0 0.0
        %5214 = vmatprep.subr.mxu0 0.0
        %5215 = vmatpush1.msra.mxu0 0.0
        %5216 = vmatprep.subr.mxu0 0.0
        %5217 = vmatpush1.msra.mxu0 0.0
        %5218 = vmatprep.subr.mxu0 0.0
        %5219 = vmatpush1.msra.mxu0 0.0
        %5220 = vmatprep.subr.mxu0 0.0
        %5221 = vmatpush1.msra.mxu0 0.0
        %5222 = vmatprep.subr.mxu0 0.0
        %5223 = vmatpush1.msra.mxu0 0.0
        %5224 = vmatprep.subr.mxu0 0.0
        %5225 = vmatpush1.msra.mxu0 0.0
        %5226 = vmatprep.subr.mxu0 0.0
        %5227 = vmatpush1.msra.mxu0 0.0
        %5228 = vmatprep.subr.mxu0 0.0
        %5229 = vmatpush1.msra.mxu0 0.0
        %5230 = vmatprep.subr.mxu0 0.0
        %5231 = vmatpush1.msra.mxu0 0.0
        %5232 = vmatprep.subr.mxu0 0.0
        %5233 = vmatpush1.msra.mxu0 0.0
        %5234 = vmatprep.subr.mxu0 0.0
        %5235 = vmatpush1.msra.mxu0 0.0
        %5236 = vmatprep.subr.mxu0 0.0
        %5237 = vmatpush1.msra.mxu0 0.0
        %5238 = vmatprep.subr.mxu0 0.0
        %5239 = vmatpush1.msra.mxu0 0.0
        %5240 = vmatprep.mubr.f32.mxu0 0.0
        %5241 = vmatmul.mubr.f32.gmra.mrb[0].mxu0 %v5081
        %v5242 = vpop.f32.mrb[0].mxu0
        %v5243 = vadd.f32 0.0, %v5242
        %v5244 = vpop.f32.mrb[0].mxu0
        %5245 = vmatprep.mubr.f32.mxu0 0.0
        %5246 = vmatmul.mubr.f32.gmra.mrb[0].mxu0 %v5084
        %v5247 = vpop.f32.mrb[0].mxu0
        %v5248 = vadd.f32 0.0, %v5247
        %v5249 = vpop.f32.mrb[0].mxu0
        %5250 = vmatprep.mubr.f32.mxu0 0.0
        %5251 = vmatmul.mubr.f32.gmra.mrb[0].mxu0 %v5087
        %v5252 = vpop.f32.mrb[0].mxu0
        %v5253 = vadd.f32 0.0, %v5252
        %v5254 = vpop.f32.mrb[0].mxu0
        %5255 = vmatprep.mubr.f32.mxu0 0.0
        %5256 = vmatmul.mubr.f32.gmra.mrb[0].mxu0 %v5090
        %v5257 = vpop.f32.mrb[0].mxu0
        %v5258 = vadd.f32 0.0, %v5257
        %v5259 = vpop.f32.mrb[0].mxu0
        %5260 = vmatprep.mubr.f32.mxu0 0.0
        %5261 = vmatmul.mubr.f32.gmra.mrb[0].mxu0 %v5093
        %v5262 = vpop.f32.mrb[0].mxu0
        %v5263 = vadd.f32 0.0, %v5262
        %v5264 = vpop.f32.mrb[0].mxu0
        %5265 = vmatprep.mubr.f32.mxu0 0.0
        %5266 = vmatmul.mubr.f32.gmra.mrb[0].mxu0 %v5096
        %v5267 = vpop.f32.mrb[0].mxu0
        %v5268 = vadd.f32 0.0, %v5267
        %v5269 = vpop.f32.mrb[0].mxu0
        %5270 = vmatprep.mubr.f32.mxu0 0.0
        %5271 = vmatmul.mubr.f32.gmra.mrb[0].mxu0 %v5099
        %v5272 = vpop.f32.mrb[0].mxu0
        %v5273 = vadd.f32 0.0, %v5272
        %v5274 = vpop.f32.mrb[0].mxu0
        %5275 = vmatprep.mubr.f32.mxu0 0.0
        %5276 = vmatmul.mubr.f32.gmra.mrb[0].mxu0 %v5102
        %v5277 = vpop.f32.mrb[0].mxu0
        %v5278 = vadd.f32 0.0, %v5277
        %v5279 = vpop.f32.mrb[0].mxu0
        %5280 = vmatprep.mubr.f32.mxu0 0.0
        %5281 = vmatmul.mubr.f32.gmra.mrb[0].mxu0 %v5105
        %v5282 = vpop.f32.mrb[0].mxu0
        %v5283 = vadd.f32 0.0, %v5282
        %v5284 = vpop.f32.mrb[0].mxu0
        %5285 = vmatprep.mubr.f32.mxu0 0.0
        %5286 = vmatmul.mubr.f32.gmra.mrb[0].mxu0 %v5108
        %v5287 = vpop.f32.mrb[0].mxu0
        %v5288 = vadd.f32 0.0, %v5287
        %v5289 = vpop.f32.mrb[0].mxu0
        %5290 = vmatprep.mubr.f32.mxu0 0.0
        %5291 = vmatmul.mubr.f32.gmra.mrb[0].mxu0 %v5111
        %v5292 = vpop.f32.mrb[0].mxu0
        %v5293 = vadd.f32 0.0, %v5292
        %v5294 = vpop.f32.mrb[0].mxu0
        %5295 = vmatprep.mubr.f32.mxu0 0.0
        %5296 = vmatmul.mubr.f32.gmra.mrb[0].mxu0 %v5114
        %v5297 = vpop.f32.mrb[0].mxu0
        %v5298 = vadd.f32 0.0, %v5297
        %v5299 = vpop.f32.mrb[0].mxu0
        %5300 = vmatprep.mubr.f32.mxu0 0.0
        %5301 = vmatmul.mubr.f32.gmra.mrb[0].mxu0 %v5117
        %v5302 = vpop.f32.mrb[0].mxu0
        %v5303 = vadd.f32 0.0, %v5302
        %v5304 = vpop.f32.mrb[0].mxu0
        %5305 = vmatprep.mubr.f32.mxu0 0.0
        %5306 = vmatmul.mubr.f32.gmra.mrb[0].mxu0 %v5120
        %v5307 = vpop.f32.mrb[0].mxu0
        %v5308 = vadd.f32 0.0, %v5307
        %v5309 = vpop.f32.mrb[0].mxu0
        %5310 = vmatprep.mubr.f32.mxu0 0.0
        %5311 = vmatmul.mubr.f32.gmra.mrb[0].mxu0 %v5123
        %v5312 = vpop.f32.mrb[0].mxu0
        %v5313 = vadd.f32 0.0, %v5312
        %v5314 = vpop.f32.mrb[0].mxu0
        %5315 = vmatprep.mubr.f32.mxu0 0.0
        %5316 = vmatmul.mubr.f32.gmra.mrb[0].mxu0 %v5126
        %v5317 = vpop.f32.mrb[0].mxu0
        %v5318 = vadd.f32 0.0, %v5317
        %v5319 = vpop.f32.mrb[0].mxu0
        %5320 = vmatprep.mubr.f32.mxu0 0.0
        %5321 = vmatmul.mubr.f32.gmra.mrb[0].mxu0 %v5129
        %v5322 = vpop.f32.mrb[0].mxu0
        %v5323 = vadd.f32 0.0, %v5322
        %v5324 = vpop.f32.mrb[0].mxu0
        %5325 = vmatprep.mubr.f32.mxu0 0.0
        %5326 = vmatmul.mubr.f32.gmra.mrb[0].mxu0 %v5132
        %v5327 = vpop.f32.mrb[0].mxu0
        %v5328 = vadd.f32 0.0, %v5327
        %v5329 = vpop.f32.mrb[0].mxu0
        %5330 = vmatprep.mubr.f32.mxu0 0.0
        %5331 = vmatmul.mubr.f32.gmra.mrb[0].mxu0 %v5135
        %v5332 = vpop.f32.mrb[0].mxu0
        %v5333 = vadd.f32 0.0, %v5332
        %v5334 = vpop.f32.mrb[0].mxu0
        %5335 = vmatprep.mubr.f32.mxu0 0.0
        %5336 = vmatmul.mubr.f32.gmra.mrb[0].mxu0 %v5138
        %v5337 = vpop.f32.mrb[0].mxu0
        %v5338 = vadd.f32 0.0, %v5337
        %v5339 = vpop.f32.mrb[0].mxu0
        %5340 = vmatprep.mubr.f32.mxu0 0.0
        %5341 = vmatmul.mubr.f32.gmra.mrb[0].mxu0 %v5141
        %v5342 = vpop.f32.mrb[0].mxu0
        %v5343 = vadd.f32 0.0, %v5342
        %v5344 = vpop.f32.mrb[0].mxu0
        %5345 = vmatprep.mubr.f32.mxu0 0.0
        %5346 = vmatmul.mubr.f32.gmra.mrb[0].mxu0 %v5144
        %v5347 = vpop.f32.mrb[0].mxu0
        %v5348 = vadd.f32 0.0, %v5347
        %v5349 = vpop.f32.mrb[0].mxu0
        %5350 = vmatprep.mubr.f32.mxu0 0.0
        %5351 = vmatmul.mubr.f32.gmra.mrb[0].mxu0 %v5147
        %v5352 = vpop.f32.mrb[0].mxu0
        %v5353 = vadd.f32 0.0, %v5352
        %v5354 = vpop.f32.mrb[0].mxu0
        %5355 = vmatprep.mubr.f32.mxu0 0.0
        %5356 = vmatmul.mubr.f32.gmra.mrb[0].mxu0 %v5150
        %v5357 = vpop.f32.mrb[0].mxu0
        %v5358 = vadd.f32 0.0, %v5357
        %v5359 = vpop.f32.mrb[0].mxu0
        %5360 = vmatprep.mubr.f32.mxu0 0.0
        %5361 = vmatmul.mubr.f32.gmra.mrb[0].mxu0 %v5153
        %v5362 = vpop.f32.mrb[0].mxu0
        %v5363 = vadd.f32 0.0, %v5362
        %v5364 = vpop.f32.mrb[0].mxu0
        %5365 = vmatprep.mubr.f32.mxu0 0.0
        %5366 = vmatmul.mubr.f32.gmra.mrb[0].mxu0 %v5156
        %v5367 = vpop.f32.mrb[0].mxu0
        %v5368 = vadd.f32 0.0, %v5367
        %v5369 = vpop.f32.mrb[0].mxu0
        %5370 = vmatprep.mubr.f32.mxu0 0.0
        %5371 = vmatmul.mubr.f32.gmra.mrb[0].mxu0 %v5159
        %v5372 = vpop.f32.mrb[0].mxu0
        %v5373 = vadd.f32 0.0, %v5372
        %v5374 = vpop.f32.mrb[0].mxu0
        %5375 = vmatprep.mubr.f32.mxu0 0.0
        %5376 = vmatmul.mubr.f32.gmra.mrb[0].mxu0 %v5162
        %v5377 = vpop.f32.mrb[0].mxu0
        %v5378 = vadd.f32 0.0, %v5377
        %v5379 = vpop.f32.mrb[0].mxu0
        %5380 = vmatprep.mubr.f32.mxu0 0.0
        %5381 = vmatmul.mubr.f32.gmra.mrb[0].mxu0 %v5165
        %v5382 = vpop.f32.mrb[0].mxu0
        %v5383 = vadd.f32 0.0, %v5382
        %v5384 = vpop.f32.mrb[0].mxu0
        %5385 = vmatprep.mubr.f32.mxu0 0.0
        %5386 = vmatmul.mubr.f32.gmra.mrb[0].mxu0 %v5168
        %v5387 = vpop.f32.mrb[0].mxu0
        %v5388 = vadd.f32 0.0, %v5387
        %v5389 = vpop.f32.mrb[0].mxu0
        %5390 = vmatprep.mubr.f32.mxu0 0.0
        %5391 = vmatmul.mubr.f32.gmra.mrb[0].mxu0 %v5171
        %v5392 = vpop.f32.mrb[0].mxu0
        %v5393 = vadd.f32 0.0, %v5392
        %v5394 = vpop.f32.mrb[0].mxu0
        %5395 = vmatprep.mubr.f32.mxu0 0.0
        %5396 = vmatmul.mubr.f32.gmra.mrb[0].mxu0 %v5174
        %v5397 = vpop.f32.mrb[0].mxu0
        %v5398 = vadd.f32 0.0, %v5397
        %v5399 = vpop.f32.mrb[0].mxu0
        %5400 = vdwg.mxu0
        %v5401 = vadd.f32 %v5011, %v5243
        %v5402 = vadd.f32 %v5012, %v5248
        %v5403 = vadd.f32 %v5013, %v5253
        %v5404 = vadd.f32 %v5014, %v5258
        %v5405 = vadd.f32 %v5015, %v5263
        %v5406 = vadd.f32 %v5016, %v5268
        %v5407 = vadd.f32 %v5017, %v5273
        %v5408 = vadd.f32 %v5018, %v5278
        %v5409 = vadd.f32 %v5019, %v5283
        %v5410 = vadd.f32 %v5020, %v5288
        %v5411 = vadd.f32 %v5021, %v5293
        %v5412 = vadd.f32 %v5022, %v5298
        %v5413 = vadd.f32 %v5023, %v5303
        %v5414 = vadd.f32 %v5024, %v5308
        %v5415 = vadd.f32 %v5025, %v5313
        %v5416 = vadd.f32 %v5026, %v5318
        %v5417 = vadd.f32 %v5027, %v5323
        %v5418 = vadd.f32 %v5028, %v5328
        %v5419 = vadd.f32 %v5029, %v5333
        %v5420 = vadd.f32 %v5030, %v5338
        %v5421 = vadd.f32 %v5031, %v5343
        %v5422 = vadd.f32 %v5032, %v5348
        %v5423 = vadd.f32 %v5033, %v5353
        %v5424 = vadd.f32 %v5034, %v5358
        %v5425 = vadd.f32 %v5035, %v5363
        %v5426 = vadd.f32 %v5036, %v5368
        %v5427 = vadd.f32 %v5037, %v5373
        %v5428 = vadd.f32 %v5038, %v5378
        %v5429 = vadd.f32 %v5039, %v5383
        %v5430 = vadd.f32 %v5040, %v5388
        %v5431 = vadd.f32 %v5041, %v5393
        %v5432 = vadd.f32 %v5042, %v5398
        %v5433 = vld [vmem:[%s3905 + $0x1] sm:$0xff]
        %v5434 = vld [vmem:[%s3905 + $0x9] sm:$0xff]
        %v5435 = vld [vmem:[%s3905 + $0x19] sm:$0xff]
        %v5436 = vld [vmem:[%s3905 + $0x21] sm:$0xff]
        %v5437 = vld [vmem:[%s3905 + $0x31] sm:$0xff]
        %v5438 = vld [vmem:[%s3905 + $0x39] sm:$0xff]
        %v5439 = vld [vmem:[%s3905 + $0x49] sm:$0xff]
        %v5440 = vld [vmem:[%s3905 + $0x51] sm:$0xff]
        %v5441 = vld [vmem:[%s3905 + $0x61] sm:$0xff]
        %v5442 = vld [vmem:[%s3905 + $0x69] sm:$0xff]
        %v5443 = vld [vmem:[%s3905 + $0x79] sm:$0xff]
        %v5444 = vld [vmem:[%s3905 + $0x81] sm:$0xff]
        %v5445 = vld [vmem:[%s3905 + $0x91] sm:$0xff]
        %v5446 = vld [vmem:[%s3905 + $0x99] sm:$0xff]
        %v5447 = vld [vmem:[%s3905 + $0xa9] sm:$0xff]
        %v5448 = vld [vmem:[%s3905 + $0xb1] sm:$0xff]
        %v5449 = vld [vmem:[%s3905 + $0xc1] sm:$0xff]
        %v5450 = vld [vmem:[%s3905 + $0xc9] sm:$0xff]
        %v5451 = vld [vmem:[%s3905 + $0xd9] sm:$0xff]
        %v5452 = vld [vmem:[%s3905 + $0xe1] sm:$0xff]
        %v5453 = vld [vmem:[%s3905 + $0xf1] sm:$0xff]
        %v5454 = vld [vmem:[%s3905 + $0xf9] sm:$0xff]
        %v5455 = vld [vmem:[%s3905 + $0x109] sm:$0xff]
        %v5456 = vld [vmem:[%s3905 + $0x111] sm:$0xff]
        %v5457 = vld [vmem:[%s3905 + $0x121] sm:$0xff]
        %v5458 = vld [vmem:[%s3905 + $0x129] sm:$0xff]
        %v5459 = vld [vmem:[%s3905 + $0x139] sm:$0xff]
        %v5460 = vld [vmem:[%s3905 + $0x141] sm:$0xff]
        %v5461 = vld [vmem:[%s3905 + $0x151] sm:$0xff]
        %v5462 = vld [vmem:[%s3905 + $0x159] sm:$0xff]
        %v5463 = vld [vmem:[%s3905 + $0x169] sm:$0xff]
        %v5464 = vld [vmem:[%s3905 + $0x171] sm:$0xff]
        %s5465 = scalar_lea.vmem %s3, 128
        %v5466 = vld [vmem:[%s5465] sm:$0xff]
        %v5467 = vld [vmem:[%s5465 + $0x8] sm:$0xff]
        %v5468 = vld [vmem:[%s5465 + $0x10] sm:$0xff]
        %v5469 = vld [vmem:[%s5465 + $0x18] sm:$0xff]
        %v5471 = vsel %vm404, %v5433, 0
        %v5474 = vsel %vm404, %v5434, 0
        %v5477 = vsel %vm404, %v5435, 0
        %v5480 = vsel %vm404, %v5436, 0
        %v5483 = vsel %vm404, %v5437, 0
        %v5486 = vsel %vm404, %v5438, 0
        %v5489 = vsel %vm404, %v5439, 0
        %v5492 = vsel %vm404, %v5440, 0
        %v5495 = vsel %vm404, %v5441, 0
        %v5498 = vsel %vm404, %v5442, 0
        %v5501 = vsel %vm404, %v5443, 0
        %v5504 = vsel %vm404, %v5444, 0
        %v5507 = vsel %vm404, %v5445, 0
        %v5510 = vsel %vm404, %v5446, 0
        %v5513 = vsel %vm404, %v5447, 0
        %v5516 = vsel %vm404, %v5448, 0
        %v5519 = vsel %vm404, %v5449, 0
        %v5522 = vsel %vm404, %v5450, 0
        %v5525 = vsel %vm404, %v5451, 0
        %v5528 = vsel %vm404, %v5452, 0
        %v5531 = vsel %vm404, %v5453, 0
        %v5534 = vsel %vm404, %v5454, 0
        %v5537 = vsel %vm404, %v5455, 0
        %v5540 = vsel %vm404, %v5456, 0
        %v5543 = vsel %vm404, %v5457, 0
        %v5546 = vsel %vm404, %v5458, 0
        %v5549 = vsel %vm404, %v5459, 0
        %v5552 = vsel %vm404, %v5460, 0
        %v5555 = vsel %vm404, %v5461, 0
        %v5558 = vsel %vm404, %v5462, 0
        %v5561 = vsel %vm404, %v5463, 0
        %v5564 = vsel %vm404, %v5464, 0
        %5566 = vmatprep.subr.mxu0 0.0
        %5567 = vmatpush1.msra.mxu0 %v5466
        %5568 = vmatprep.subr.mxu0 0.0
        %5569 = vmatpush1.msra.mxu0 %v5467
        %5570 = vmatprep.subr.mxu0 0.0
        %5571 = vmatpush1.msra.mxu0 %v5468
        %5572 = vmatprep.subr.mxu0 0.0
        %5573 = vmatpush1.msra.mxu0 %v5469
        %5574 = vmatprep.subr.mxu0 0.0
        %5575 = vmatpush1.msra.mxu0 0.0
        %5576 = vmatprep.subr.mxu0 0.0
        %5577 = vmatpush1.msra.mxu0 0.0
        %5578 = vmatprep.subr.mxu0 0.0
        %5579 = vmatpush1.msra.mxu0 0.0
        %5580 = vmatprep.subr.mxu0 0.0
        %5581 = vmatpush1.msra.mxu0 0.0
        %5582 = vmatprep.subr.mxu0 0.0
        %5583 = vmatpush1.msra.mxu0 0.0
        %5584 = vmatprep.subr.mxu0 0.0
        %5585 = vmatpush1.msra.mxu0 0.0
        %5586 = vmatprep.subr.mxu0 0.0
        %5587 = vmatpush1.msra.mxu0 0.0
        %5588 = vmatprep.subr.mxu0 0.0
        %5589 = vmatpush1.msra.mxu0 0.0
        %5590 = vmatprep.subr.mxu0 0.0
        %5591 = vmatpush1.msra.mxu0 0.0
        %5592 = vmatprep.subr.mxu0 0.0
        %5593 = vmatpush1.msra.mxu0 0.0
        %5594 = vmatprep.subr.mxu0 0.0
        %5595 = vmatpush1.msra.mxu0 0.0
        %5596 = vmatprep.subr.mxu0 0.0
        %5597 = vmatpush1.msra.mxu0 0.0
        %5598 = vmatprep.subr.mxu0 0.0
        %5599 = vmatpush1.msra.mxu0 0.0
        %5600 = vmatprep.subr.mxu0 0.0
        %5601 = vmatpush1.msra.mxu0 0.0
        %5602 = vmatprep.subr.mxu0 0.0
        %5603 = vmatpush1.msra.mxu0 0.0
        %5604 = vmatprep.subr.mxu0 0.0
        %5605 = vmatpush1.msra.mxu0 0.0
        %5606 = vmatprep.subr.mxu0 0.0
        %5607 = vmatpush1.msra.mxu0 0.0
        %5608 = vmatprep.subr.mxu0 0.0
        %5609 = vmatpush1.msra.mxu0 0.0
        %5610 = vmatprep.subr.mxu0 0.0
        %5611 = vmatpush1.msra.mxu0 0.0
        %5612 = vmatprep.subr.mxu0 0.0
        %5613 = vmatpush1.msra.mxu0 0.0
        %5614 = vmatprep.subr.mxu0 0.0
        %5615 = vmatpush1.msra.mxu0 0.0
        %5616 = vmatprep.subr.mxu0 0.0
        %5617 = vmatpush1.msra.mxu0 0.0
        %5618 = vmatprep.subr.mxu0 0.0
        %5619 = vmatpush1.msra.mxu0 0.0
        %5620 = vmatprep.subr.mxu0 0.0
        %5621 = vmatpush1.msra.mxu0 0.0
        %5622 = vmatprep.subr.mxu0 0.0
        %5623 = vmatpush1.msra.mxu0 0.0
        %5624 = vmatprep.subr.mxu0 0.0
        %5625 = vmatpush1.msra.mxu0 0.0
        %5626 = vmatprep.subr.mxu0 0.0
        %5627 = vmatpush1.msra.mxu0 0.0
        %5628 = vmatprep.subr.mxu0 0.0
        %5629 = vmatpush1.msra.mxu0 0.0
        %5630 = vmatprep.mubr.f32.mxu0 0.0
        %5631 = vmatmul.mubr.f32.gmra.mrb[0].mxu0 %v5471
        %v5632 = vpop.f32.mrb[0].mxu0
        %v5633 = vadd.f32 0.0, %v5632
        %v5634 = vpop.f32.mrb[0].mxu0
        %5635 = vmatprep.mubr.f32.mxu0 0.0
        %5636 = vmatmul.mubr.f32.gmra.mrb[0].mxu0 %v5474
        %v5637 = vpop.f32.mrb[0].mxu0
        %v5638 = vadd.f32 0.0, %v5637
        %v5639 = vpop.f32.mrb[0].mxu0
        %5640 = vmatprep.mubr.f32.mxu0 0.0
        %5641 = vmatmul.mubr.f32.gmra.mrb[0].mxu0 %v5477
        %v5642 = vpop.f32.mrb[0].mxu0
        %v5643 = vadd.f32 0.0, %v5642
        %v5644 = vpop.f32.mrb[0].mxu0
        %5645 = vmatprep.mubr.f32.mxu0 0.0
        %5646 = vmatmul.mubr.f32.gmra.mrb[0].mxu0 %v5480
        %v5647 = vpop.f32.mrb[0].mxu0
        %v5648 = vadd.f32 0.0, %v5647
        %v5649 = vpop.f32.mrb[0].mxu0
        %5650 = vmatprep.mubr.f32.mxu0 0.0
        %5651 = vmatmul.mubr.f32.gmra.mrb[0].mxu0 %v5483
        %v5652 = vpop.f32.mrb[0].mxu0
        %v5653 = vadd.f32 0.0, %v5652
        %v5654 = vpop.f32.mrb[0].mxu0
        %5655 = vmatprep.mubr.f32.mxu0 0.0
        %5656 = vmatmul.mubr.f32.gmra.mrb[0].mxu0 %v5486
        %v5657 = vpop.f32.mrb[0].mxu0
        %v5658 = vadd.f32 0.0, %v5657
        %v5659 = vpop.f32.mrb[0].mxu0
        %5660 = vmatprep.mubr.f32.mxu0 0.0
        %5661 = vmatmul.mubr.f32.gmra.mrb[0].mxu0 %v5489
        %v5662 = vpop.f32.mrb[0].mxu0
        %v5663 = vadd.f32 0.0, %v5662
        %v5664 = vpop.f32.mrb[0].mxu0
        %5665 = vmatprep.mubr.f32.mxu0 0.0
        %5666 = vmatmul.mubr.f32.gmra.mrb[0].mxu0 %v5492
        %v5667 = vpop.f32.mrb[0].mxu0
        %v5668 = vadd.f32 0.0, %v5667
        %v5669 = vpop.f32.mrb[0].mxu0
        %5670 = vmatprep.mubr.f32.mxu0 0.0
        %5671 = vmatmul.mubr.f32.gmra.mrb[0].mxu0 %v5495
        %v5672 = vpop.f32.mrb[0].mxu0
        %v5673 = vadd.f32 0.0, %v5672
        %v5674 = vpop.f32.mrb[0].mxu0
        %5675 = vmatprep.mubr.f32.mxu0 0.0
        %5676 = vmatmul.mubr.f32.gmra.mrb[0].mxu0 %v5498
        %v5677 = vpop.f32.mrb[0].mxu0
        %v5678 = vadd.f32 0.0, %v5677
        %v5679 = vpop.f32.mrb[0].mxu0
        %5680 = vmatprep.mubr.f32.mxu0 0.0
        %5681 = vmatmul.mubr.f32.gmra.mrb[0].mxu0 %v5501
        %v5682 = vpop.f32.mrb[0].mxu0
        %v5683 = vadd.f32 0.0, %v5682
        %v5684 = vpop.f32.mrb[0].mxu0
        %5685 = vmatprep.mubr.f32.mxu0 0.0
        %5686 = vmatmul.mubr.f32.gmra.mrb[0].mxu0 %v5504
        %v5687 = vpop.f32.mrb[0].mxu0
        %v5688 = vadd.f32 0.0, %v5687
        %v5689 = vpop.f32.mrb[0].mxu0
        %5690 = vmatprep.mubr.f32.mxu0 0.0
        %5691 = vmatmul.mubr.f32.gmra.mrb[0].mxu0 %v5507
        %v5692 = vpop.f32.mrb[0].mxu0
        %v5693 = vadd.f32 0.0, %v5692
        %v5694 = vpop.f32.mrb[0].mxu0
        %5695 = vmatprep.mubr.f32.mxu0 0.0
        %5696 = vmatmul.mubr.f32.gmra.mrb[0].mxu0 %v5510
        %v5697 = vpop.f32.mrb[0].mxu0
        %v5698 = vadd.f32 0.0, %v5697
        %v5699 = vpop.f32.mrb[0].mxu0
        %5700 = vmatprep.mubr.f32.mxu0 0.0
        %5701 = vmatmul.mubr.f32.gmra.mrb[0].mxu0 %v5513
        %v5702 = vpop.f32.mrb[0].mxu0
        %v5703 = vadd.f32 0.0, %v5702
        %v5704 = vpop.f32.mrb[0].mxu0
        %5705 = vmatprep.mubr.f32.mxu0 0.0
        %5706 = vmatmul.mubr.f32.gmra.mrb[0].mxu0 %v5516
        %v5707 = vpop.f32.mrb[0].mxu0
        %v5708 = vadd.f32 0.0, %v5707
        %v5709 = vpop.f32.mrb[0].mxu0
        %5710 = vmatprep.mubr.f32.mxu0 0.0
        %5711 = vmatmul.mubr.f32.gmra.mrb[0].mxu0 %v5519
        %v5712 = vpop.f32.mrb[0].mxu0
        %v5713 = vadd.f32 0.0, %v5712
        %v5714 = vpop.f32.mrb[0].mxu0
        %5715 = vmatprep.mubr.f32.mxu0 0.0
        %5716 = vmatmul.mubr.f32.gmra.mrb[0].mxu0 %v5522
        %v5717 = vpop.f32.mrb[0].mxu0
        %v5718 = vadd.f32 0.0, %v5717
        %v5719 = vpop.f32.mrb[0].mxu0
        %5720 = vmatprep.mubr.f32.mxu0 0.0
        %5721 = vmatmul.mubr.f32.gmra.mrb[0].mxu0 %v5525
        %v5722 = vpop.f32.mrb[0].mxu0
        %v5723 = vadd.f32 0.0, %v5722
        %v5724 = vpop.f32.mrb[0].mxu0
        %5725 = vmatprep.mubr.f32.mxu0 0.0
        %5726 = vmatmul.mubr.f32.gmra.mrb[0].mxu0 %v5528
        %v5727 = vpop.f32.mrb[0].mxu0
        %v5728 = vadd.f32 0.0, %v5727
        %v5729 = vpop.f32.mrb[0].mxu0
        %5730 = vmatprep.mubr.f32.mxu0 0.0
        %5731 = vmatmul.mubr.f32.gmra.mrb[0].mxu0 %v5531
        %v5732 = vpop.f32.mrb[0].mxu0
        %v5733 = vadd.f32 0.0, %v5732
        %v5734 = vpop.f32.mrb[0].mxu0
        %5735 = vmatprep.mubr.f32.mxu0 0.0
        %5736 = vmatmul.mubr.f32.gmra.mrb[0].mxu0 %v5534
        %v5737 = vpop.f32.mrb[0].mxu0
        %v5738 = vadd.f32 0.0, %v5737
        %v5739 = vpop.f32.mrb[0].mxu0
        %5740 = vmatprep.mubr.f32.mxu0 0.0
        %5741 = vmatmul.mubr.f32.gmra.mrb[0].mxu0 %v5537
        %v5742 = vpop.f32.mrb[0].mxu0
        %v5743 = vadd.f32 0.0, %v5742
        %v5744 = vpop.f32.mrb[0].mxu0
        %5745 = vmatprep.mubr.f32.mxu0 0.0
        %5746 = vmatmul.mubr.f32.gmra.mrb[0].mxu0 %v5540
        %v5747 = vpop.f32.mrb[0].mxu0
        %v5748 = vadd.f32 0.0, %v5747
        %v5749 = vpop.f32.mrb[0].mxu0
        %5750 = vmatprep.mubr.f32.mxu0 0.0
        %5751 = vmatmul.mubr.f32.gmra.mrb[0].mxu0 %v5543
        %v5752 = vpop.f32.mrb[0].mxu0
        %v5753 = vadd.f32 0.0, %v5752
        %v5754 = vpop.f32.mrb[0].mxu0
        %5755 = vmatprep.mubr.f32.mxu0 0.0
        %5756 = vmatmul.mubr.f32.gmra.mrb[0].mxu0 %v5546
        %v5757 = vpop.f32.mrb[0].mxu0
        %v5758 = vadd.f32 0.0, %v5757
        %v5759 = vpop.f32.mrb[0].mxu0
        %5760 = vmatprep.mubr.f32.mxu0 0.0
        %5761 = vmatmul.mubr.f32.gmra.mrb[0].mxu0 %v5549
        %v5762 = vpop.f32.mrb[0].mxu0
        %v5763 = vadd.f32 0.0, %v5762
        %v5764 = vpop.f32.mrb[0].mxu0
        %5765 = vmatprep.mubr.f32.mxu0 0.0
        %5766 = vmatmul.mubr.f32.gmra.mrb[0].mxu0 %v5552
        %v5767 = vpop.f32.mrb[0].mxu0
        %v5768 = vadd.f32 0.0, %v5767
        %v5769 = vpop.f32.mrb[0].mxu0
        %5770 = vmatprep.mubr.f32.mxu0 0.0
        %5771 = vmatmul.mubr.f32.gmra.mrb[0].mxu0 %v5555
        %v5772 = vpop.f32.mrb[0].mxu0
        %v5773 = vadd.f32 0.0, %v5772
        %v5774 = vpop.f32.mrb[0].mxu0
        %5775 = vmatprep.mubr.f32.mxu0 0.0
        %5776 = vmatmul.mubr.f32.gmra.mrb[0].mxu0 %v5558
        %v5777 = vpop.f32.mrb[0].mxu0
        %v5778 = vadd.f32 0.0, %v5777
        %v5779 = vpop.f32.mrb[0].mxu0
        %5780 = vmatprep.mubr.f32.mxu0 0.0
        %5781 = vmatmul.mubr.f32.gmra.mrb[0].mxu0 %v5561
        %v5782 = vpop.f32.mrb[0].mxu0
        %v5783 = vadd.f32 0.0, %v5782
        %v5784 = vpop.f32.mrb[0].mxu0
        %5785 = vmatprep.mubr.f32.mxu0 0.0
        %5786 = vmatmul.mubr.f32.gmra.mrb[0].mxu0 %v5564
        %v5787 = vpop.f32.mrb[0].mxu0
        %v5788 = vadd.f32 0.0, %v5787
        %v5789 = vpop.f32.mrb[0].mxu0
        %5790 = vdwg.mxu0
        %v5791 = vadd.f32 %v5401, %v5633
        %v5792 = vadd.f32 %v5402, %v5638
        %v5793 = vadd.f32 %v5403, %v5643
        %v5794 = vadd.f32 %v5404, %v5648
        %v5795 = vadd.f32 %v5405, %v5653
        %v5796 = vadd.f32 %v5406, %v5658
        %v5797 = vadd.f32 %v5407, %v5663
        %v5798 = vadd.f32 %v5408, %v5668
        %v5799 = vadd.f32 %v5409, %v5673
        %v5800 = vadd.f32 %v5410, %v5678
        %v5801 = vadd.f32 %v5411, %v5683
        %v5802 = vadd.f32 %v5412, %v5688
        %v5803 = vadd.f32 %v5413, %v5693
        %v5804 = vadd.f32 %v5414, %v5698
        %v5805 = vadd.f32 %v5415, %v5703
        %v5806 = vadd.f32 %v5416, %v5708
        %v5807 = vadd.f32 %v5417, %v5713
        %v5808 = vadd.f32 %v5418, %v5718
        %v5809 = vadd.f32 %v5419, %v5723
        %v5810 = vadd.f32 %v5420, %v5728
        %v5811 = vadd.f32 %v5421, %v5733
        %v5812 = vadd.f32 %v5422, %v5738
        %v5813 = vadd.f32 %v5423, %v5743
        %v5814 = vadd.f32 %v5424, %v5748
        %v5815 = vadd.f32 %v5425, %v5753
        %v5816 = vadd.f32 %v5426, %v5758
        %v5817 = vadd.f32 %v5427, %v5763
        %v5818 = vadd.f32 %v5428, %v5768
        %v5819 = vadd.f32 %v5429, %v5773
        %v5820 = vadd.f32 %v5430, %v5778
        %v5821 = vadd.f32 %v5431, %v5783
        %v5822 = vadd.f32 %v5432, %v5788
        %v5823 = vld [vmem:[%s3905 + $0x2] sm:$0xff]
        %v5824 = vld [vmem:[%s3905 + $0xa] sm:$0xff]
        %v5825 = vld [vmem:[%s3905 + $0x1a] sm:$0xff]
        %v5826 = vld [vmem:[%s3905 + $0x22] sm:$0xff]
        %v5827 = vld [vmem:[%s3905 + $0x32] sm:$0xff]
        %v5828 = vld [vmem:[%s3905 + $0x3a] sm:$0xff]
        %v5829 = vld [vmem:[%s3905 + $0x4a] sm:$0xff]
        %v5830 = vld [vmem:[%s3905 + $0x52] sm:$0xff]
        %v5831 = vld [vmem:[%s3905 + $0x62] sm:$0xff]
        %v5832 = vld [vmem:[%s3905 + $0x6a] sm:$0xff]
        %v5833 = vld [vmem:[%s3905 + $0x7a] sm:$0xff]
        %v5834 = vld [vmem:[%s3905 + $0x82] sm:$0xff]
        %v5835 = vld [vmem:[%s3905 + $0x92] sm:$0xff]
        %v5836 = vld [vmem:[%s3905 + $0x9a] sm:$0xff]
        %v5837 = vld [vmem:[%s3905 + $0xaa] sm:$0xff]
        %v5838 = vld [vmem:[%s3905 + $0xb2] sm:$0xff]
        %v5839 = vld [vmem:[%s3905 + $0xc2] sm:$0xff]
        %v5840 = vld [vmem:[%s3905 + $0xca] sm:$0xff]
        %v5841 = vld [vmem:[%s3905 + $0xda] sm:$0xff]
        %v5842 = vld [vmem:[%s3905 + $0xe2] sm:$0xff]
        %v5843 = vld [vmem:[%s3905 + $0xf2] sm:$0xff]
        %v5844 = vld [vmem:[%s3905 + $0xfa] sm:$0xff]
        %v5845 = vld [vmem:[%s3905 + $0x10a] sm:$0xff]
        %v5846 = vld [vmem:[%s3905 + $0x112] sm:$0xff]
        %v5847 = vld [vmem:[%s3905 + $0x122] sm:$0xff]
        %v5848 = vld [vmem:[%s3905 + $0x12a] sm:$0xff]
        %v5849 = vld [vmem:[%s3905 + $0x13a] sm:$0xff]
        %v5850 = vld [vmem:[%s3905 + $0x142] sm:$0xff]
        %v5851 = vld [vmem:[%s3905 + $0x152] sm:$0xff]
        %v5852 = vld [vmem:[%s3905 + $0x15a] sm:$0xff]
        %v5853 = vld [vmem:[%s3905 + $0x16a] sm:$0xff]
        %v5854 = vld [vmem:[%s3905 + $0x172] sm:$0xff]
        %s5855 = scalar_lea.vmem %s3, 160
        %v5856 = vld [vmem:[%s5855] sm:$0xff]
        %v5857 = vld [vmem:[%s5855 + $0x8] sm:$0xff]
        %v5858 = vld [vmem:[%s5855 + $0x10] sm:$0xff]
        %v5859 = vld [vmem:[%s5855 + $0x18] sm:$0xff]
        %v5861 = vsel %vm404, %v5823, 0
        %v5864 = vsel %vm404, %v5824, 0
        %v5867 = vsel %vm404, %v5825, 0
        %v5870 = vsel %vm404, %v5826, 0
        %v5873 = vsel %vm404, %v5827, 0
        %v5876 = vsel %vm404, %v5828, 0
        %v5879 = vsel %vm404, %v5829, 0
        %v5882 = vsel %vm404, %v5830, 0
        %v5885 = vsel %vm404, %v5831, 0
        %v5888 = vsel %vm404, %v5832, 0
        %v5891 = vsel %vm404, %v5833, 0
        %v5894 = vsel %vm404, %v5834, 0
        %v5897 = vsel %vm404, %v5835, 0
        %v5900 = vsel %vm404, %v5836, 0
        %v5903 = vsel %vm404, %v5837, 0
        %v5906 = vsel %vm404, %v5838, 0
        %v5909 = vsel %vm404, %v5839, 0
        %v5912 = vsel %vm404, %v5840, 0
        %v5915 = vsel %vm404, %v5841, 0
        %v5918 = vsel %vm404, %v5842, 0
        %v5921 = vsel %vm404, %v5843, 0
        %v5924 = vsel %vm404, %v5844, 0
        %v5927 = vsel %vm404, %v5845, 0
        %v5930 = vsel %vm404, %v5846, 0
        %v5933 = vsel %vm404, %v5847, 0
        %v5936 = vsel %vm404, %v5848, 0
        %v5939 = vsel %vm404, %v5849, 0
        %v5942 = vsel %vm404, %v5850, 0
        %v5945 = vsel %vm404, %v5851, 0
        %v5948 = vsel %vm404, %v5852, 0
        %v5951 = vsel %vm404, %v5853, 0
        %v5954 = vsel %vm404, %v5854, 0
        %5956 = vmatprep.subr.mxu0 0.0
        %5957 = vmatpush1.msra.mxu0 %v5856
        %5958 = vmatprep.subr.mxu0 0.0
        %5959 = vmatpush1.msra.mxu0 %v5857
        %5960 = vmatprep.subr.mxu0 0.0
        %5961 = vmatpush1.msra.mxu0 %v5858
        %5962 = vmatprep.subr.mxu0 0.0
        %5963 = vmatpush1.msra.mxu0 %v5859
        %5964 = vmatprep.subr.mxu0 0.0
        %5965 = vmatpush1.msra.mxu0 0.0
        %5966 = vmatprep.subr.mxu0 0.0
        %5967 = vmatpush1.msra.mxu0 0.0
        %5968 = vmatprep.subr.mxu0 0.0
        %5969 = vmatpush1.msra.mxu0 0.0
        %5970 = vmatprep.subr.mxu0 0.0
        %5971 = vmatpush1.msra.mxu0 0.0
        %5972 = vmatprep.subr.mxu0 0.0
        %5973 = vmatpush1.msra.mxu0 0.0
        %5974 = vmatprep.subr.mxu0 0.0
        %5975 = vmatpush1.msra.mxu0 0.0
        %5976 = vmatprep.subr.mxu0 0.0
        %5977 = vmatpush1.msra.mxu0 0.0
        %5978 = vmatprep.subr.mxu0 0.0
        %5979 = vmatpush1.msra.mxu0 0.0
        %5980 = vmatprep.subr.mxu0 0.0
        %5981 = vmatpush1.msra.mxu0 0.0
        %5982 = vmatprep.subr.mxu0 0.0
        %5983 = vmatpush1.msra.mxu0 0.0
        %5984 = vmatprep.subr.mxu0 0.0
        %5985 = vmatpush1.msra.mxu0 0.0
        %5986 = vmatprep.subr.mxu0 0.0
        %5987 = vmatpush1.msra.mxu0 0.0
        %5988 = vmatprep.subr.mxu0 0.0
        %5989 = vmatpush1.msra.mxu0 0.0
        %5990 = vmatprep.subr.mxu0 0.0
        %5991 = vmatpush1.msra.mxu0 0.0
        %5992 = vmatprep.subr.mxu0 0.0
        %5993 = vmatpush1.msra.mxu0 0.0
        %5994 = vmatprep.subr.mxu0 0.0
        %5995 = vmatpush1.msra.mxu0 0.0
        %5996 = vmatprep.subr.mxu0 0.0
        %5997 = vmatpush1.msra.mxu0 0.0
        %5998 = vmatprep.subr.mxu0 0.0
        %5999 = vmatpush1.msra.mxu0 0.0
        %6000 = vmatprep.subr.mxu0 0.0
        %6001 = vmatpush1.msra.mxu0 0.0
        %6002 = vmatprep.subr.mxu0 0.0
        %6003 = vmatpush1.msra.mxu0 0.0
        %6004 = vmatprep.subr.mxu0 0.0
        %6005 = vmatpush1.msra.mxu0 0.0
        %6006 = vmatprep.subr.mxu0 0.0
        %6007 = vmatpush1.msra.mxu0 0.0
        %6008 = vmatprep.subr.mxu0 0.0
        %6009 = vmatpush1.msra.mxu0 0.0
        %6010 = vmatprep.subr.mxu0 0.0
        %6011 = vmatpush1.msra.mxu0 0.0
        %6012 = vmatprep.subr.mxu0 0.0
        %6013 = vmatpush1.msra.mxu0 0.0
        %6014 = vmatprep.subr.mxu0 0.0
        %6015 = vmatpush1.msra.mxu0 0.0
        %6016 = vmatprep.subr.mxu0 0.0
        %6017 = vmatpush1.msra.mxu0 0.0
        %6018 = vmatprep.subr.mxu0 0.0
        %6019 = vmatpush1.msra.mxu0 0.0
        %6020 = vmatprep.mubr.f32.mxu0 0.0
        %6021 = vmatmul.mubr.f32.gmra.mrb[0].mxu0 %v5861
        %v6022 = vpop.f32.mrb[0].mxu0
        %v6023 = vadd.f32 0.0, %v6022
        %v6024 = vpop.f32.mrb[0].mxu0
        %6025 = vmatprep.mubr.f32.mxu0 0.0
        %6026 = vmatmul.mubr.f32.gmra.mrb[0].mxu0 %v5864
        %v6027 = vpop.f32.mrb[0].mxu0
        %v6028 = vadd.f32 0.0, %v6027
        %v6029 = vpop.f32.mrb[0].mxu0
        %6030 = vmatprep.mubr.f32.mxu0 0.0
        %6031 = vmatmul.mubr.f32.gmra.mrb[0].mxu0 %v5867
        %v6032 = vpop.f32.mrb[0].mxu0
        %v6033 = vadd.f32 0.0, %v6032
        %v6034 = vpop.f32.mrb[0].mxu0
        %6035 = vmatprep.mubr.f32.mxu0 0.0
        %6036 = vmatmul.mubr.f32.gmra.mrb[0].mxu0 %v5870
        %v6037 = vpop.f32.mrb[0].mxu0
        %v6038 = vadd.f32 0.0, %v6037
        %v6039 = vpop.f32.mrb[0].mxu0
        %6040 = vmatprep.mubr.f32.mxu0 0.0
        %6041 = vmatmul.mubr.f32.gmra.mrb[0].mxu0 %v5873
        %v6042 = vpop.f32.mrb[0].mxu0
        %v6043 = vadd.f32 0.0, %v6042
        %v6044 = vpop.f32.mrb[0].mxu0
        %6045 = vmatprep.mubr.f32.mxu0 0.0
        %6046 = vmatmul.mubr.f32.gmra.mrb[0].mxu0 %v5876
        %v6047 = vpop.f32.mrb[0].mxu0
        %v6048 = vadd.f32 0.0, %v6047
        %v6049 = vpop.f32.mrb[0].mxu0
        %6050 = vmatprep.mubr.f32.mxu0 0.0
        %6051 = vmatmul.mubr.f32.gmra.mrb[0].mxu0 %v5879
        %v6052 = vpop.f32.mrb[0].mxu0
        %v6053 = vadd.f32 0.0, %v6052
        %v6054 = vpop.f32.mrb[0].mxu0
        %6055 = vmatprep.mubr.f32.mxu0 0.0
        %6056 = vmatmul.mubr.f32.gmra.mrb[0].mxu0 %v5882
        %v6057 = vpop.f32.mrb[0].mxu0
        %v6058 = vadd.f32 0.0, %v6057
        %v6059 = vpop.f32.mrb[0].mxu0
        %6060 = vmatprep.mubr.f32.mxu0 0.0
        %6061 = vmatmul.mubr.f32.gmra.mrb[0].mxu0 %v5885
        %v6062 = vpop.f32.mrb[0].mxu0
        %v6063 = vadd.f32 0.0, %v6062
        %v6064 = vpop.f32.mrb[0].mxu0
        %6065 = vmatprep.mubr.f32.mxu0 0.0
        %6066 = vmatmul.mubr.f32.gmra.mrb[0].mxu0 %v5888
        %v6067 = vpop.f32.mrb[0].mxu0
        %v6068 = vadd.f32 0.0, %v6067
        %v6069 = vpop.f32.mrb[0].mxu0
        %6070 = vmatprep.mubr.f32.mxu0 0.0
        %6071 = vmatmul.mubr.f32.gmra.mrb[0].mxu0 %v5891
        %v6072 = vpop.f32.mrb[0].mxu0
        %v6073 = vadd.f32 0.0, %v6072
        %v6074 = vpop.f32.mrb[0].mxu0
        %6075 = vmatprep.mubr.f32.mxu0 0.0
        %6076 = vmatmul.mubr.f32.gmra.mrb[0].mxu0 %v5894
        %v6077 = vpop.f32.mrb[0].mxu0
        %v6078 = vadd.f32 0.0, %v6077
        %v6079 = vpop.f32.mrb[0].mxu0
        %6080 = vmatprep.mubr.f32.mxu0 0.0
        %6081 = vmatmul.mubr.f32.gmra.mrb[0].mxu0 %v5897
        %v6082 = vpop.f32.mrb[0].mxu0
        %v6083 = vadd.f32 0.0, %v6082
        %v6084 = vpop.f32.mrb[0].mxu0
        %6085 = vmatprep.mubr.f32.mxu0 0.0
        %6086 = vmatmul.mubr.f32.gmra.mrb[0].mxu0 %v5900
        %v6087 = vpop.f32.mrb[0].mxu0
        %v6088 = vadd.f32 0.0, %v6087
        %v6089 = vpop.f32.mrb[0].mxu0
        %6090 = vmatprep.mubr.f32.mxu0 0.0
        %6091 = vmatmul.mubr.f32.gmra.mrb[0].mxu0 %v5903
        %v6092 = vpop.f32.mrb[0].mxu0
        %v6093 = vadd.f32 0.0, %v6092
        %v6094 = vpop.f32.mrb[0].mxu0
        %6095 = vmatprep.mubr.f32.mxu0 0.0
        %6096 = vmatmul.mubr.f32.gmra.mrb[0].mxu0 %v5906
        %v6097 = vpop.f32.mrb[0].mxu0
        %v6098 = vadd.f32 0.0, %v6097
        %v6099 = vpop.f32.mrb[0].mxu0
        %6100 = vmatprep.mubr.f32.mxu0 0.0
        %6101 = vmatmul.mubr.f32.gmra.mrb[0].mxu0 %v5909
        %v6102 = vpop.f32.mrb[0].mxu0
        %v6103 = vadd.f32 0.0, %v6102
        %v6104 = vpop.f32.mrb[0].mxu0
        %6105 = vmatprep.mubr.f32.mxu0 0.0
        %6106 = vmatmul.mubr.f32.gmra.mrb[0].mxu0 %v5912
        %v6107 = vpop.f32.mrb[0].mxu0
        %v6108 = vadd.f32 0.0, %v6107
        %v6109 = vpop.f32.mrb[0].mxu0
        %6110 = vmatprep.mubr.f32.mxu0 0.0
        %6111 = vmatmul.mubr.f32.gmra.mrb[0].mxu0 %v5915
        %v6112 = vpop.f32.mrb[0].mxu0
        %v6113 = vadd.f32 0.0, %v6112
        %v6114 = vpop.f32.mrb[0].mxu0
        %6115 = vmatprep.mubr.f32.mxu0 0.0
        %6116 = vmatmul.mubr.f32.gmra.mrb[0].mxu0 %v5918
        %v6117 = vpop.f32.mrb[0].mxu0
        %v6118 = vadd.f32 0.0, %v6117
        %v6119 = vpop.f32.mrb[0].mxu0
        %6120 = vmatprep.mubr.f32.mxu0 0.0
        %6121 = vmatmul.mubr.f32.gmra.mrb[0].mxu0 %v5921
        %v6122 = vpop.f32.mrb[0].mxu0
        %v6123 = vadd.f32 0.0, %v6122
        %v6124 = vpop.f32.mrb[0].mxu0
        %6125 = vmatprep.mubr.f32.mxu0 0.0
        %6126 = vmatmul.mubr.f32.gmra.mrb[0].mxu0 %v5924
        %v6127 = vpop.f32.mrb[0].mxu0
        %v6128 = vadd.f32 0.0, %v6127
        %v6129 = vpop.f32.mrb[0].mxu0
        %6130 = vmatprep.mubr.f32.mxu0 0.0
        %6131 = vmatmul.mubr.f32.gmra.mrb[0].mxu0 %v5927
        %v6132 = vpop.f32.mrb[0].mxu0
        %v6133 = vadd.f32 0.0, %v6132
        %v6134 = vpop.f32.mrb[0].mxu0
        %6135 = vmatprep.mubr.f32.mxu0 0.0
        %6136 = vmatmul.mubr.f32.gmra.mrb[0].mxu0 %v5930
        %v6137 = vpop.f32.mrb[0].mxu0
        %v6138 = vadd.f32 0.0, %v6137
        %v6139 = vpop.f32.mrb[0].mxu0
        %6140 = vmatprep.mubr.f32.mxu0 0.0
        %6141 = vmatmul.mubr.f32.gmra.mrb[0].mxu0 %v5933
        %v6142 = vpop.f32.mrb[0].mxu0
        %v6143 = vadd.f32 0.0, %v6142
        %v6144 = vpop.f32.mrb[0].mxu0
        %6145 = vmatprep.mubr.f32.mxu0 0.0
        %6146 = vmatmul.mubr.f32.gmra.mrb[0].mxu0 %v5936
        %v6147 = vpop.f32.mrb[0].mxu0
        %v6148 = vadd.f32 0.0, %v6147
        %v6149 = vpop.f32.mrb[0].mxu0
        %6150 = vmatprep.mubr.f32.mxu0 0.0
        %6151 = vmatmul.mubr.f32.gmra.mrb[0].mxu0 %v5939
        %v6152 = vpop.f32.mrb[0].mxu0
        %v6153 = vadd.f32 0.0, %v6152
        %v6154 = vpop.f32.mrb[0].mxu0
        %6155 = vmatprep.mubr.f32.mxu0 0.0
        %6156 = vmatmul.mubr.f32.gmra.mrb[0].mxu0 %v5942
        %v6157 = vpop.f32.mrb[0].mxu0
        %v6158 = vadd.f32 0.0, %v6157
        %v6159 = vpop.f32.mrb[0].mxu0
        %6160 = vmatprep.mubr.f32.mxu0 0.0
        %6161 = vmatmul.mubr.f32.gmra.mrb[0].mxu0 %v5945
        %v6162 = vpop.f32.mrb[0].mxu0
        %v6163 = vadd.f32 0.0, %v6162
        %v6164 = vpop.f32.mrb[0].mxu0
        %6165 = vmatprep.mubr.f32.mxu0 0.0
        %6166 = vmatmul.mubr.f32.gmra.mrb[0].mxu0 %v5948
        %v6167 = vpop.f32.mrb[0].mxu0
        %v6168 = vadd.f32 0.0, %v6167
        %v6169 = vpop.f32.mrb[0].mxu0
        %6170 = vmatprep.mubr.f32.mxu0 0.0
        %6171 = vmatmul.mubr.f32.gmra.mrb[0].mxu0 %v5951
        %v6172 = vpop.f32.mrb[0].mxu0
        %v6173 = vadd.f32 0.0, %v6172
        %v6174 = vpop.f32.mrb[0].mxu0
        %6175 = vmatprep.mubr.f32.mxu0 0.0
        %6176 = vmatmul.mubr.f32.gmra.mrb[0].mxu0 %v5954
        %v6177 = vpop.f32.mrb[0].mxu0
        %v6178 = vadd.f32 0.0, %v6177
        %v6179 = vpop.f32.mrb[0].mxu0
        %6180 = vdwg.mxu0
        %v6181 = vadd.f32 %v5791, %v6023
        %v6182 = vadd.f32 %v5792, %v6028
        %v6183 = vadd.f32 %v5793, %v6033
        %v6184 = vadd.f32 %v5794, %v6038
        %v6185 = vadd.f32 %v5795, %v6043
        %v6186 = vadd.f32 %v5796, %v6048
        %v6187 = vadd.f32 %v5797, %v6053
        %v6188 = vadd.f32 %v5798, %v6058
        %v6189 = vadd.f32 %v5799, %v6063
        %v6190 = vadd.f32 %v5800, %v6068
        %v6191 = vadd.f32 %v5801, %v6073
        %v6192 = vadd.f32 %v5802, %v6078
        %v6193 = vadd.f32 %v5803, %v6083
        %v6194 = vadd.f32 %v5804, %v6088
        %v6195 = vadd.f32 %v5805, %v6093
        %v6196 = vadd.f32 %v5806, %v6098
        %v6197 = vadd.f32 %v5807, %v6103
        %v6198 = vadd.f32 %v5808, %v6108
        %v6199 = vadd.f32 %v5809, %v6113
        %v6200 = vadd.f32 %v5810, %v6118
        %v6201 = vadd.f32 %v5811, %v6123
        %v6202 = vadd.f32 %v5812, %v6128
        %v6203 = vadd.f32 %v5813, %v6133
        %v6204 = vadd.f32 %v5814, %v6138
        %v6205 = vadd.f32 %v5815, %v6143
        %v6206 = vadd.f32 %v5816, %v6148
        %v6207 = vadd.f32 %v5817, %v6153
        %v6208 = vadd.f32 %v5818, %v6158
        %v6209 = vadd.f32 %v5819, %v6163
        %v6210 = vadd.f32 %v5820, %v6168
        %v6211 = vadd.f32 %v5821, %v6173
        %v6212 = vadd.f32 %v5822, %v6178
        %s6213 = scalar_lea.vmem [#allocation2], 48
        %v6214 = vld [vmem:[%s6213] sm:$0xff]
        %v6215 = vld [vmem:[%s6213 + $0x8] sm:$0xff]
        %v6216 = vld [vmem:[%s6213 + $0x18] sm:$0xff]
        %v6217 = vld [vmem:[%s6213 + $0x20] sm:$0xff]
        %v6218 = vld [vmem:[%s6213 + $0x30] sm:$0xff]
        %v6219 = vld [vmem:[%s6213 + $0x38] sm:$0xff]
        %v6220 = vld [vmem:[%s6213 + $0x48] sm:$0xff]
        %v6221 = vld [vmem:[%s6213 + $0x50] sm:$0xff]
        %v6222 = vld [vmem:[%s6213 + $0x60] sm:$0xff]
        %v6223 = vld [vmem:[%s6213 + $0x68] sm:$0xff]
        %v6224 = vld [vmem:[%s6213 + $0x78] sm:$0xff]
        %v6225 = vld [vmem:[%s6213 + $0x80] sm:$0xff]
        %v6226 = vld [vmem:[%s6213 + $0x90] sm:$0xff]
        %v6227 = vld [vmem:[%s6213 + $0x98] sm:$0xff]
        %v6228 = vld [vmem:[%s6213 + $0xa8] sm:$0xff]
        %v6229 = vld [vmem:[%s6213 + $0xb0] sm:$0xff]
        %v6230 = vld [vmem:[%s6213 + $0xc0] sm:$0xff]
        %v6231 = vld [vmem:[%s6213 + $0xc8] sm:$0xff]
        %v6232 = vld [vmem:[%s6213 + $0xd8] sm:$0xff]
        %v6233 = vld [vmem:[%s6213 + $0xe0] sm:$0xff]
        %v6234 = vld [vmem:[%s6213 + $0xf0] sm:$0xff]
        %v6235 = vld [vmem:[%s6213 + $0xf8] sm:$0xff]
        %v6236 = vld [vmem:[%s6213 + $0x108] sm:$0xff]
        %v6237 = vld [vmem:[%s6213 + $0x110] sm:$0xff]
        %v6238 = vld [vmem:[%s6213 + $0x120] sm:$0xff]
        %v6239 = vld [vmem:[%s6213 + $0x128] sm:$0xff]
        %v6240 = vld [vmem:[%s6213 + $0x138] sm:$0xff]
        %v6241 = vld [vmem:[%s6213 + $0x140] sm:$0xff]
        %v6242 = vld [vmem:[%s6213 + $0x150] sm:$0xff]
        %v6243 = vld [vmem:[%s6213 + $0x158] sm:$0xff]
        %v6244 = vld [vmem:[%s6213 + $0x168] sm:$0xff]
        %v6245 = vld [vmem:[%s6213 + $0x170] sm:$0xff]
        %s6246 = scalar_lea.vmem %s3, 192
        %v6247 = vld [vmem:[%s6246] sm:$0xff]
        %v6248 = vld [vmem:[%s6246 + $0x8] sm:$0xff]
        %v6249 = vld [vmem:[%s6246 + $0x10] sm:$0xff]
        %v6250 = vld [vmem:[%s6246 + $0x18] sm:$0xff]
        %v6252 = vsel %vm404, %v6214, 0
        %v6255 = vsel %vm404, %v6215, 0
        %v6258 = vsel %vm404, %v6216, 0
        %v6261 = vsel %vm404, %v6217, 0
        %v6264 = vsel %vm404, %v6218, 0
        %v6267 = vsel %vm404, %v6219, 0
        %v6270 = vsel %vm404, %v6220, 0
        %v6273 = vsel %vm404, %v6221, 0
        %v6276 = vsel %vm404, %v6222, 0
        %v6279 = vsel %vm404, %v6223, 0
        %v6282 = vsel %vm404, %v6224, 0
        %v6285 = vsel %vm404, %v6225, 0
        %v6288 = vsel %vm404, %v6226, 0
        %v6291 = vsel %vm404, %v6227, 0
        %v6294 = vsel %vm404, %v6228, 0
        %v6297 = vsel %vm404, %v6229, 0
        %v6300 = vsel %vm404, %v6230, 0
        %v6303 = vsel %vm404, %v6231, 0
        %v6306 = vsel %vm404, %v6232, 0
        %v6309 = vsel %vm404, %v6233, 0
        %v6312 = vsel %vm404, %v6234, 0
        %v6315 = vsel %vm404, %v6235, 0
        %v6318 = vsel %vm404, %v6236, 0
        %v6321 = vsel %vm404, %v6237, 0
        %v6324 = vsel %vm404, %v6238, 0
        %v6327 = vsel %vm404, %v6239, 0
        %v6330 = vsel %vm404, %v6240, 0
        %v6333 = vsel %vm404, %v6241, 0
        %v6336 = vsel %vm404, %v6242, 0
        %v6339 = vsel %vm404, %v6243, 0
        %v6342 = vsel %vm404, %v6244, 0
        %v6345 = vsel %vm404, %v6245, 0
        %6347 = vmatprep.subr.mxu0 0.0
        %6348 = vmatpush1.msra.mxu0 %v6247
        %6349 = vmatprep.subr.mxu0 0.0
        %6350 = vmatpush1.msra.mxu0 %v6248
        %6351 = vmatprep.subr.mxu0 0.0
        %6352 = vmatpush1.msra.mxu0 %v6249
        %6353 = vmatprep.subr.mxu0 0.0
        %6354 = vmatpush1.msra.mxu0 %v6250
        %6355 = vmatprep.subr.mxu0 0.0
        %6356 = vmatpush1.msra.mxu0 0.0
        %6357 = vmatprep.subr.mxu0 0.0
        %6358 = vmatpush1.msra.mxu0 0.0
        %6359 = vmatprep.subr.mxu0 0.0
        %6360 = vmatpush1.msra.mxu0 0.0
        %6361 = vmatprep.subr.mxu0 0.0
        %6362 = vmatpush1.msra.mxu0 0.0
        %6363 = vmatprep.subr.mxu0 0.0
        %6364 = vmatpush1.msra.mxu0 0.0
        %6365 = vmatprep.subr.mxu0 0.0
        %6366 = vmatpush1.msra.mxu0 0.0
        %6367 = vmatprep.subr.mxu0 0.0
        %6368 = vmatpush1.msra.mxu0 0.0
        %6369 = vmatprep.subr.mxu0 0.0
        %6370 = vmatpush1.msra.mxu0 0.0
        %6371 = vmatprep.subr.mxu0 0.0
        %6372 = vmatpush1.msra.mxu0 0.0
        %6373 = vmatprep.subr.mxu0 0.0
        %6374 = vmatpush1.msra.mxu0 0.0
        %6375 = vmatprep.subr.mxu0 0.0
        %6376 = vmatpush1.msra.mxu0 0.0
        %6377 = vmatprep.subr.mxu0 0.0
        %6378 = vmatpush1.msra.mxu0 0.0
        %6379 = vmatprep.subr.mxu0 0.0
        %6380 = vmatpush1.msra.mxu0 0.0
        %6381 = vmatprep.subr.mxu0 0.0
        %6382 = vmatpush1.msra.mxu0 0.0
        %6383 = vmatprep.subr.mxu0 0.0
        %6384 = vmatpush1.msra.mxu0 0.0
        %6385 = vmatprep.subr.mxu0 0.0
        %6386 = vmatpush1.msra.mxu0 0.0
        %6387 = vmatprep.subr.mxu0 0.0
        %6388 = vmatpush1.msra.mxu0 0.0
        %6389 = vmatprep.subr.mxu0 0.0
        %6390 = vmatpush1.msra.mxu0 0.0
        %6391 = vmatprep.subr.mxu0 0.0
        %6392 = vmatpush1.msra.mxu0 0.0
        %6393 = vmatprep.subr.mxu0 0.0
        %6394 = vmatpush1.msra.mxu0 0.0
        %6395 = vmatprep.subr.mxu0 0.0
        %6396 = vmatpush1.msra.mxu0 0.0
        %6397 = vmatprep.subr.mxu0 0.0
        %6398 = vmatpush1.msra.mxu0 0.0
        %6399 = vmatprep.subr.mxu0 0.0
        %6400 = vmatpush1.msra.mxu0 0.0
        %6401 = vmatprep.subr.mxu0 0.0
        %6402 = vmatpush1.msra.mxu0 0.0
        %6403 = vmatprep.subr.mxu0 0.0
        %6404 = vmatpush1.msra.mxu0 0.0
        %6405 = vmatprep.subr.mxu0 0.0
        %6406 = vmatpush1.msra.mxu0 0.0
        %6407 = vmatprep.subr.mxu0 0.0
        %6408 = vmatpush1.msra.mxu0 0.0
        %6409 = vmatprep.subr.mxu0 0.0
        %6410 = vmatpush1.msra.mxu0 0.0
        %6411 = vmatprep.mubr.f32.mxu0 0.0
        %6412 = vmatmul.mubr.f32.gmra.mrb[0].mxu0 %v6252
        %v6413 = vpop.f32.mrb[0].mxu0
        %v6414 = vadd.f32 0.0, %v6413
        %v6415 = vpop.f32.mrb[0].mxu0
        %6416 = vmatprep.mubr.f32.mxu0 0.0
        %6417 = vmatmul.mubr.f32.gmra.mrb[0].mxu0 %v6255
        %v6418 = vpop.f32.mrb[0].mxu0
        %v6419 = vadd.f32 0.0, %v6418
        %v6420 = vpop.f32.mrb[0].mxu0
        %6421 = vmatprep.mubr.f32.mxu0 0.0
        %6422 = vmatmul.mubr.f32.gmra.mrb[0].mxu0 %v6258
        %v6423 = vpop.f32.mrb[0].mxu0
        %v6424 = vadd.f32 0.0, %v6423
        %v6425 = vpop.f32.mrb[0].mxu0
        %6426 = vmatprep.mubr.f32.mxu0 0.0
        %6427 = vmatmul.mubr.f32.gmra.mrb[0].mxu0 %v6261
        %v6428 = vpop.f32.mrb[0].mxu0
        %v6429 = vadd.f32 0.0, %v6428
        %v6430 = vpop.f32.mrb[0].mxu0
        %6431 = vmatprep.mubr.f32.mxu0 0.0
        %6432 = vmatmul.mubr.f32.gmra.mrb[0].mxu0 %v6264
        %v6433 = vpop.f32.mrb[0].mxu0
        %v6434 = vadd.f32 0.0, %v6433
        %v6435 = vpop.f32.mrb[0].mxu0
        %6436 = vmatprep.mubr.f32.mxu0 0.0
        %6437 = vmatmul.mubr.f32.gmra.mrb[0].mxu0 %v6267
        %v6438 = vpop.f32.mrb[0].mxu0
        %v6439 = vadd.f32 0.0, %v6438
        %v6440 = vpop.f32.mrb[0].mxu0
        %6441 = vmatprep.mubr.f32.mxu0 0.0
        %6442 = vmatmul.mubr.f32.gmra.mrb[0].mxu0 %v6270
        %v6443 = vpop.f32.mrb[0].mxu0
        %v6444 = vadd.f32 0.0, %v6443
        %v6445 = vpop.f32.mrb[0].mxu0
        %6446 = vmatprep.mubr.f32.mxu0 0.0
        %6447 = vmatmul.mubr.f32.gmra.mrb[0].mxu0 %v6273
        %v6448 = vpop.f32.mrb[0].mxu0
        %v6449 = vadd.f32 0.0, %v6448
        %v6450 = vpop.f32.mrb[0].mxu0
        %6451 = vmatprep.mubr.f32.mxu0 0.0
        %6452 = vmatmul.mubr.f32.gmra.mrb[0].mxu0 %v6276
        %v6453 = vpop.f32.mrb[0].mxu0
        %v6454 = vadd.f32 0.0, %v6453
        %v6455 = vpop.f32.mrb[0].mxu0
        %6456 = vmatprep.mubr.f32.mxu0 0.0
        %6457 = vmatmul.mubr.f32.gmra.mrb[0].mxu0 %v6279
        %v6458 = vpop.f32.mrb[0].mxu0
        %v6459 = vadd.f32 0.0, %v6458
        %v6460 = vpop.f32.mrb[0].mxu0
        %6461 = vmatprep.mubr.f32.mxu0 0.0
        %6462 = vmatmul.mubr.f32.gmra.mrb[0].mxu0 %v6282
        %v6463 = vpop.f32.mrb[0].mxu0
        %v6464 = vadd.f32 0.0, %v6463
        %v6465 = vpop.f32.mrb[0].mxu0
        %6466 = vmatprep.mubr.f32.mxu0 0.0
        %6467 = vmatmul.mubr.f32.gmra.mrb[0].mxu0 %v6285
        %v6468 = vpop.f32.mrb[0].mxu0
        %v6469 = vadd.f32 0.0, %v6468
        %v6470 = vpop.f32.mrb[0].mxu0
        %6471 = vmatprep.mubr.f32.mxu0 0.0
        %6472 = vmatmul.mubr.f32.gmra.mrb[0].mxu0 %v6288
        %v6473 = vpop.f32.mrb[0].mxu0
        %v6474 = vadd.f32 0.0, %v6473
        %v6475 = vpop.f32.mrb[0].mxu0
        %6476 = vmatprep.mubr.f32.mxu0 0.0
        %6477 = vmatmul.mubr.f32.gmra.mrb[0].mxu0 %v6291
        %v6478 = vpop.f32.mrb[0].mxu0
        %v6479 = vadd.f32 0.0, %v6478
        %v6480 = vpop.f32.mrb[0].mxu0
        %6481 = vmatprep.mubr.f32.mxu0 0.0
        %6482 = vmatmul.mubr.f32.gmra.mrb[0].mxu0 %v6294
        %v6483 = vpop.f32.mrb[0].mxu0
        %v6484 = vadd.f32 0.0, %v6483
        %v6485 = vpop.f32.mrb[0].mxu0
        %6486 = vmatprep.mubr.f32.mxu0 0.0
        %6487 = vmatmul.mubr.f32.gmra.mrb[0].mxu0 %v6297
        %v6488 = vpop.f32.mrb[0].mxu0
        %v6489 = vadd.f32 0.0, %v6488
        %v6490 = vpop.f32.mrb[0].mxu0
        %6491 = vmatprep.mubr.f32.mxu0 0.0
        %6492 = vmatmul.mubr.f32.gmra.mrb[0].mxu0 %v6300
        %v6493 = vpop.f32.mrb[0].mxu0
        %v6494 = vadd.f32 0.0, %v6493
        %v6495 = vpop.f32.mrb[0].mxu0
        %6496 = vmatprep.mubr.f32.mxu0 0.0
        %6497 = vmatmul.mubr.f32.gmra.mrb[0].mxu0 %v6303
        %v6498 = vpop.f32.mrb[0].mxu0
        %v6499 = vadd.f32 0.0, %v6498
        %v6500 = vpop.f32.mrb[0].mxu0
        %6501 = vmatprep.mubr.f32.mxu0 0.0
        %6502 = vmatmul.mubr.f32.gmra.mrb[0].mxu0 %v6306
        %v6503 = vpop.f32.mrb[0].mxu0
        %v6504 = vadd.f32 0.0, %v6503
        %v6505 = vpop.f32.mrb[0].mxu0
        %6506 = vmatprep.mubr.f32.mxu0 0.0
        %6507 = vmatmul.mubr.f32.gmra.mrb[0].mxu0 %v6309
        %v6508 = vpop.f32.mrb[0].mxu0
        %v6509 = vadd.f32 0.0, %v6508
        %v6510 = vpop.f32.mrb[0].mxu0
        %6511 = vmatprep.mubr.f32.mxu0 0.0
        %6512 = vmatmul.mubr.f32.gmra.mrb[0].mxu0 %v6312
        %v6513 = vpop.f32.mrb[0].mxu0
        %v6514 = vadd.f32 0.0, %v6513
        %v6515 = vpop.f32.mrb[0].mxu0
        %6516 = vmatprep.mubr.f32.mxu0 0.0
        %6517 = vmatmul.mubr.f32.gmra.mrb[0].mxu0 %v6315
        %v6518 = vpop.f32.mrb[0].mxu0
        %v6519 = vadd.f32 0.0, %v6518
        %v6520 = vpop.f32.mrb[0].mxu0
        %6521 = vmatprep.mubr.f32.mxu0 0.0
        %6522 = vmatmul.mubr.f32.gmra.mrb[0].mxu0 %v6318
        %v6523 = vpop.f32.mrb[0].mxu0
        %v6524 = vadd.f32 0.0, %v6523
        %v6525 = vpop.f32.mrb[0].mxu0
        %6526 = vmatprep.mubr.f32.mxu0 0.0
        %6527 = vmatmul.mubr.f32.gmra.mrb[0].mxu0 %v6321
        %v6528 = vpop.f32.mrb[0].mxu0
        %v6529 = vadd.f32 0.0, %v6528
        %v6530 = vpop.f32.mrb[0].mxu0
        %6531 = vmatprep.mubr.f32.mxu0 0.0
        %6532 = vmatmul.mubr.f32.gmra.mrb[0].mxu0 %v6324
        %v6533 = vpop.f32.mrb[0].mxu0
        %v6534 = vadd.f32 0.0, %v6533
        %v6535 = vpop.f32.mrb[0].mxu0
        %6536 = vmatprep.mubr.f32.mxu0 0.0
        %6537 = vmatmul.mubr.f32.gmra.mrb[0].mxu0 %v6327
        %v6538 = vpop.f32.mrb[0].mxu0
        %v6539 = vadd.f32 0.0, %v6538
        %v6540 = vpop.f32.mrb[0].mxu0
        %6541 = vmatprep.mubr.f32.mxu0 0.0
        %6542 = vmatmul.mubr.f32.gmra.mrb[0].mxu0 %v6330
        %v6543 = vpop.f32.mrb[0].mxu0
        %v6544 = vadd.f32 0.0, %v6543
        %v6545 = vpop.f32.mrb[0].mxu0
        %6546 = vmatprep.mubr.f32.mxu0 0.0
        %6547 = vmatmul.mubr.f32.gmra.mrb[0].mxu0 %v6333
        %v6548 = vpop.f32.mrb[0].mxu0
        %v6549 = vadd.f32 0.0, %v6548
        %v6550 = vpop.f32.mrb[0].mxu0
        %6551 = vmatprep.mubr.f32.mxu0 0.0
        %6552 = vmatmul.mubr.f32.gmra.mrb[0].mxu0 %v6336
        %v6553 = vpop.f32.mrb[0].mxu0
        %v6554 = vadd.f32 0.0, %v6553
        %v6555 = vpop.f32.mrb[0].mxu0
        %6556 = vmatprep.mubr.f32.mxu0 0.0
        %6557 = vmatmul.mubr.f32.gmra.mrb[0].mxu0 %v6339
        %v6558 = vpop.f32.mrb[0].mxu0
        %v6559 = vadd.f32 0.0, %v6558
        %v6560 = vpop.f32.mrb[0].mxu0
        %6561 = vmatprep.mubr.f32.mxu0 0.0
        %6562 = vmatmul.mubr.f32.gmra.mrb[0].mxu0 %v6342
        %v6563 = vpop.f32.mrb[0].mxu0
        %v6564 = vadd.f32 0.0, %v6563
        %v6565 = vpop.f32.mrb[0].mxu0
        %6566 = vmatprep.mubr.f32.mxu0 0.0
        %6567 = vmatmul.mubr.f32.gmra.mrb[0].mxu0 %v6345
        %v6568 = vpop.f32.mrb[0].mxu0
        %v6569 = vadd.f32 0.0, %v6568
        %v6570 = vpop.f32.mrb[0].mxu0
        %6571 = vdwg.mxu0
        %v6572 = vadd.f32 %v6181, %v6414
        %v6573 = vadd.f32 %v6182, %v6419
        %v6574 = vadd.f32 %v6183, %v6424
        %v6575 = vadd.f32 %v6184, %v6429
        %v6576 = vadd.f32 %v6185, %v6434
        %v6577 = vadd.f32 %v6186, %v6439
        %v6578 = vadd.f32 %v6187, %v6444
        %v6579 = vadd.f32 %v6188, %v6449
        %v6580 = vadd.f32 %v6189, %v6454
        %v6581 = vadd.f32 %v6190, %v6459
        %v6582 = vadd.f32 %v6191, %v6464
        %v6583 = vadd.f32 %v6192, %v6469
        %v6584 = vadd.f32 %v6193, %v6474
        %v6585 = vadd.f32 %v6194, %v6479
        %v6586 = vadd.f32 %v6195, %v6484
        %v6587 = vadd.f32 %v6196, %v6489
        %v6588 = vadd.f32 %v6197, %v6494
        %v6589 = vadd.f32 %v6198, %v6499
        %v6590 = vadd.f32 %v6199, %v6504
        %v6591 = vadd.f32 %v6200, %v6509
        %v6592 = vadd.f32 %v6201, %v6514
        %v6593 = vadd.f32 %v6202, %v6519
        %v6594 = vadd.f32 %v6203, %v6524
        %v6595 = vadd.f32 %v6204, %v6529
        %v6596 = vadd.f32 %v6205, %v6534
        %v6597 = vadd.f32 %v6206, %v6539
        %v6598 = vadd.f32 %v6207, %v6544
        %v6599 = vadd.f32 %v6208, %v6549
        %v6600 = vadd.f32 %v6209, %v6554
        %v6601 = vadd.f32 %v6210, %v6559
        %v6602 = vadd.f32 %v6211, %v6564
        %v6603 = vadd.f32 %v6212, %v6569
        %v6604 = vld [vmem:[%s6213 + $0x1] sm:$0xff]
        %v6605 = vld [vmem:[%s6213 + $0x9] sm:$0xff]
        %v6606 = vld [vmem:[%s6213 + $0x19] sm:$0xff]
        %v6607 = vld [vmem:[%s6213 + $0x21] sm:$0xff]
        %v6608 = vld [vmem:[%s6213 + $0x31] sm:$0xff]
        %v6609 = vld [vmem:[%s6213 + $0x39] sm:$0xff]
        %v6610 = vld [vmem:[%s6213 + $0x49] sm:$0xff]
        %v6611 = vld [vmem:[%s6213 + $0x51] sm:$0xff]
        %v6612 = vld [vmem:[%s6213 + $0x61] sm:$0xff]
        %v6613 = vld [vmem:[%s6213 + $0x69] sm:$0xff]
        %v6614 = vld [vmem:[%s6213 + $0x79] sm:$0xff]
        %v6615 = vld [vmem:[%s6213 + $0x81] sm:$0xff]
        %v6616 = vld [vmem:[%s6213 + $0x91] sm:$0xff]
        %v6617 = vld [vmem:[%s6213 + $0x99] sm:$0xff]
        %v6618 = vld [vmem:[%s6213 + $0xa9] sm:$0xff]
        %v6619 = vld [vmem:[%s6213 + $0xb1] sm:$0xff]
        %v6620 = vld [vmem:[%s6213 + $0xc1] sm:$0xff]
        %v6621 = vld [vmem:[%s6213 + $0xc9] sm:$0xff]
        %v6622 = vld [vmem:[%s6213 + $0xd9] sm:$0xff]
        %v6623 = vld [vmem:[%s6213 + $0xe1] sm:$0xff]
        %v6624 = vld [vmem:[%s6213 + $0xf1] sm:$0xff]
        %v6625 = vld [vmem:[%s6213 + $0xf9] sm:$0xff]
        %v6626 = vld [vmem:[%s6213 + $0x109] sm:$0xff]
        %v6627 = vld [vmem:[%s6213 + $0x111] sm:$0xff]
        %v6628 = vld [vmem:[%s6213 + $0x121] sm:$0xff]
        %v6629 = vld [vmem:[%s6213 + $0x129] sm:$0xff]
        %v6630 = vld [vmem:[%s6213 + $0x139] sm:$0xff]
        %v6631 = vld [vmem:[%s6213 + $0x141] sm:$0xff]
        %v6632 = vld [vmem:[%s6213 + $0x151] sm:$0xff]
        %v6633 = vld [vmem:[%s6213 + $0x159] sm:$0xff]
        %v6634 = vld [vmem:[%s6213 + $0x169] sm:$0xff]
        %v6635 = vld [vmem:[%s6213 + $0x171] sm:$0xff]
        %s6636 = scalar_lea.vmem %s3, 224
        %v6637 = vld [vmem:[%s6636] sm:$0xff]
        %v6638 = vld [vmem:[%s6636 + $0x8] sm:$0xff]
        %v6639 = vld [vmem:[%s6636 + $0x10] sm:$0xff]
        %v6640 = vld [vmem:[%s6636 + $0x18] sm:$0xff]
        %v6642 = vsel %vm404, %v6604, 0
        %v6645 = vsel %vm404, %v6605, 0
        %v6648 = vsel %vm404, %v6606, 0
        %v6651 = vsel %vm404, %v6607, 0
        %v6654 = vsel %vm404, %v6608, 0
        %v6657 = vsel %vm404, %v6609, 0
        %v6660 = vsel %vm404, %v6610, 0
        %v6663 = vsel %vm404, %v6611, 0
        %v6666 = vsel %vm404, %v6612, 0
        %v6669 = vsel %vm404, %v6613, 0
        %v6672 = vsel %vm404, %v6614, 0
        %v6675 = vsel %vm404, %v6615, 0
        %v6678 = vsel %vm404, %v6616, 0
        %v6681 = vsel %vm404, %v6617, 0
        %v6684 = vsel %vm404, %v6618, 0
        %v6687 = vsel %vm404, %v6619, 0
        %v6690 = vsel %vm404, %v6620, 0
        %v6693 = vsel %vm404, %v6621, 0
        %v6696 = vsel %vm404, %v6622, 0
        %v6699 = vsel %vm404, %v6623, 0
        %v6702 = vsel %vm404, %v6624, 0
        %v6705 = vsel %vm404, %v6625, 0
        %v6708 = vsel %vm404, %v6626, 0
        %v6711 = vsel %vm404, %v6627, 0
        %v6714 = vsel %vm404, %v6628, 0
        %v6717 = vsel %vm404, %v6629, 0
        %v6720 = vsel %vm404, %v6630, 0
        %v6723 = vsel %vm404, %v6631, 0
        %v6726 = vsel %vm404, %v6632, 0
        %v6729 = vsel %vm404, %v6633, 0
        %v6732 = vsel %vm404, %v6634, 0
        %v6735 = vsel %vm404, %v6635, 0
        %6737 = vmatprep.subr.mxu0 0.0
        %6738 = vmatpush1.msra.mxu0 %v6637
        %6739 = vmatprep.subr.mxu0 0.0
        %6740 = vmatpush1.msra.mxu0 %v6638
        %6741 = vmatprep.subr.mxu0 0.0
        %6742 = vmatpush1.msra.mxu0 %v6639
        %6743 = vmatprep.subr.mxu0 0.0
        %6744 = vmatpush1.msra.mxu0 %v6640
        %6745 = vmatprep.subr.mxu0 0.0
        %6746 = vmatpush1.msra.mxu0 0.0
        %6747 = vmatprep.subr.mxu0 0.0
        %6748 = vmatpush1.msra.mxu0 0.0
        %6749 = vmatprep.subr.mxu0 0.0
        %6750 = vmatpush1.msra.mxu0 0.0
        %6751 = vmatprep.subr.mxu0 0.0
        %6752 = vmatpush1.msra.mxu0 0.0
        %6753 = vmatprep.subr.mxu0 0.0
        %6754 = vmatpush1.msra.mxu0 0.0
        %6755 = vmatprep.subr.mxu0 0.0
        %6756 = vmatpush1.msra.mxu0 0.0
        %6757 = vmatprep.subr.mxu0 0.0
        %6758 = vmatpush1.msra.mxu0 0.0
        %6759 = vmatprep.subr.mxu0 0.0
        %6760 = vmatpush1.msra.mxu0 0.0
        %6761 = vmatprep.subr.mxu0 0.0
        %6762 = vmatpush1.msra.mxu0 0.0
        %6763 = vmatprep.subr.mxu0 0.0
        %6764 = vmatpush1.msra.mxu0 0.0
        %6765 = vmatprep.subr.mxu0 0.0
        %6766 = vmatpush1.msra.mxu0 0.0
        %6767 = vmatprep.subr.mxu0 0.0
        %6768 = vmatpush1.msra.mxu0 0.0
        %6769 = vmatprep.subr.mxu0 0.0
        %6770 = vmatpush1.msra.mxu0 0.0
        %6771 = vmatprep.subr.mxu0 0.0
        %6772 = vmatpush1.msra.mxu0 0.0
        %6773 = vmatprep.subr.mxu0 0.0
        %6774 = vmatpush1.msra.mxu0 0.0
        %6775 = vmatprep.subr.mxu0 0.0
        %6776 = vmatpush1.msra.mxu0 0.0
        %6777 = vmatprep.subr.mxu0 0.0
        %6778 = vmatpush1.msra.mxu0 0.0
        %6779 = vmatprep.subr.mxu0 0.0
        %6780 = vmatpush1.msra.mxu0 0.0
        %6781 = vmatprep.subr.mxu0 0.0
        %6782 = vmatpush1.msra.mxu0 0.0
        %6783 = vmatprep.subr.mxu0 0.0
        %6784 = vmatpush1.msra.mxu0 0.0
        %6785 = vmatprep.subr.mxu0 0.0
        %6786 = vmatpush1.msra.mxu0 0.0
        %6787 = vmatprep.subr.mxu0 0.0
        %6788 = vmatpush1.msra.mxu0 0.0
        %6789 = vmatprep.subr.mxu0 0.0
        %6790 = vmatpush1.msra.mxu0 0.0
        %6791 = vmatprep.subr.mxu0 0.0
        %6792 = vmatpush1.msra.mxu0 0.0
        %6793 = vmatprep.subr.mxu0 0.0
        %6794 = vmatpush1.msra.mxu0 0.0
        %6795 = vmatprep.subr.mxu0 0.0
        %6796 = vmatpush1.msra.mxu0 0.0
        %6797 = vmatprep.subr.mxu0 0.0
        %6798 = vmatpush1.msra.mxu0 0.0
        %6799 = vmatprep.subr.mxu0 0.0
        %6800 = vmatpush1.msra.mxu0 0.0
        %6801 = vmatprep.mubr.f32.mxu0 0.0
        %6802 = vmatmul.mubr.f32.gmra.mrb[0].mxu0 %v6642
        %v6803 = vpop.f32.mrb[0].mxu0
        %v6804 = vadd.f32 0.0, %v6803
        %v6805 = vpop.f32.mrb[0].mxu0
        %6806 = vmatprep.mubr.f32.mxu0 0.0
        %6807 = vmatmul.mubr.f32.gmra.mrb[0].mxu0 %v6645
        %v6808 = vpop.f32.mrb[0].mxu0
        %v6809 = vadd.f32 0.0, %v6808
        %v6810 = vpop.f32.mrb[0].mxu0
        %6811 = vmatprep.mubr.f32.mxu0 0.0
        %6812 = vmatmul.mubr.f32.gmra.mrb[0].mxu0 %v6648
        %v6813 = vpop.f32.mrb[0].mxu0
        %v6814 = vadd.f32 0.0, %v6813
        %v6815 = vpop.f32.mrb[0].mxu0
        %6816 = vmatprep.mubr.f32.mxu0 0.0
        %6817 = vmatmul.mubr.f32.gmra.mrb[0].mxu0 %v6651
        %v6818 = vpop.f32.mrb[0].mxu0
        %v6819 = vadd.f32 0.0, %v6818
        %v6820 = vpop.f32.mrb[0].mxu0
        %6821 = vmatprep.mubr.f32.mxu0 0.0
        %6822 = vmatmul.mubr.f32.gmra.mrb[0].mxu0 %v6654
        %v6823 = vpop.f32.mrb[0].mxu0
        %v6824 = vadd.f32 0.0, %v6823
        %v6825 = vpop.f32.mrb[0].mxu0
        %6826 = vmatprep.mubr.f32.mxu0 0.0
        %6827 = vmatmul.mubr.f32.gmra.mrb[0].mxu0 %v6657
        %v6828 = vpop.f32.mrb[0].mxu0
        %v6829 = vadd.f32 0.0, %v6828
        %v6830 = vpop.f32.mrb[0].mxu0
        %6831 = vmatprep.mubr.f32.mxu0 0.0
        %6832 = vmatmul.mubr.f32.gmra.mrb[0].mxu0 %v6660
        %v6833 = vpop.f32.mrb[0].mxu0
        %v6834 = vadd.f32 0.0, %v6833
        %v6835 = vpop.f32.mrb[0].mxu0
        %6836 = vmatprep.mubr.f32.mxu0 0.0
        %6837 = vmatmul.mubr.f32.gmra.mrb[0].mxu0 %v6663
        %v6838 = vpop.f32.mrb[0].mxu0
        %v6839 = vadd.f32 0.0, %v6838
        %v6840 = vpop.f32.mrb[0].mxu0
        %6841 = vmatprep.mubr.f32.mxu0 0.0
        %6842 = vmatmul.mubr.f32.gmra.mrb[0].mxu0 %v6666
        %v6843 = vpop.f32.mrb[0].mxu0
        %v6844 = vadd.f32 0.0, %v6843
        %v6845 = vpop.f32.mrb[0].mxu0
        %6846 = vmatprep.mubr.f32.mxu0 0.0
        %6847 = vmatmul.mubr.f32.gmra.mrb[0].mxu0 %v6669
        %v6848 = vpop.f32.mrb[0].mxu0
        %v6849 = vadd.f32 0.0, %v6848
        %v6850 = vpop.f32.mrb[0].mxu0
        %6851 = vmatprep.mubr.f32.mxu0 0.0
        %6852 = vmatmul.mubr.f32.gmra.mrb[0].mxu0 %v6672
        %v6853 = vpop.f32.mrb[0].mxu0
        %v6854 = vadd.f32 0.0, %v6853
        %v6855 = vpop.f32.mrb[0].mxu0
        %6856 = vmatprep.mubr.f32.mxu0 0.0
        %6857 = vmatmul.mubr.f32.gmra.mrb[0].mxu0 %v6675
        %v6858 = vpop.f32.mrb[0].mxu0
        %v6859 = vadd.f32 0.0, %v6858
        %v6860 = vpop.f32.mrb[0].mxu0
        %6861 = vmatprep.mubr.f32.mxu0 0.0
        %6862 = vmatmul.mubr.f32.gmra.mrb[0].mxu0 %v6678
        %v6863 = vpop.f32.mrb[0].mxu0
        %v6864 = vadd.f32 0.0, %v6863
        %v6865 = vpop.f32.mrb[0].mxu0
        %6866 = vmatprep.mubr.f32.mxu0 0.0
        %6867 = vmatmul.mubr.f32.gmra.mrb[0].mxu0 %v6681
        %v6868 = vpop.f32.mrb[0].mxu0
        %v6869 = vadd.f32 0.0, %v6868
        %v6870 = vpop.f32.mrb[0].mxu0
        %6871 = vmatprep.mubr.f32.mxu0 0.0
        %6872 = vmatmul.mubr.f32.gmra.mrb[0].mxu0 %v6684
        %v6873 = vpop.f32.mrb[0].mxu0
        %v6874 = vadd.f32 0.0, %v6873
        %v6875 = vpop.f32.mrb[0].mxu0
        %6876 = vmatprep.mubr.f32.mxu0 0.0
        %6877 = vmatmul.mubr.f32.gmra.mrb[0].mxu0 %v6687
        %v6878 = vpop.f32.mrb[0].mxu0
        %v6879 = vadd.f32 0.0, %v6878
        %v6880 = vpop.f32.mrb[0].mxu0
        %6881 = vmatprep.mubr.f32.mxu0 0.0
        %6882 = vmatmul.mubr.f32.gmra.mrb[0].mxu0 %v6690
        %v6883 = vpop.f32.mrb[0].mxu0
        %v6884 = vadd.f32 0.0, %v6883
        %v6885 = vpop.f32.mrb[0].mxu0
        %6886 = vmatprep.mubr.f32.mxu0 0.0
        %6887 = vmatmul.mubr.f32.gmra.mrb[0].mxu0 %v6693
        %v6888 = vpop.f32.mrb[0].mxu0
        %v6889 = vadd.f32 0.0, %v6888
        %v6890 = vpop.f32.mrb[0].mxu0
        %6891 = vmatprep.mubr.f32.mxu0 0.0
        %6892 = vmatmul.mubr.f32.gmra.mrb[0].mxu0 %v6696
        %v6893 = vpop.f32.mrb[0].mxu0
        %v6894 = vadd.f32 0.0, %v6893
        %v6895 = vpop.f32.mrb[0].mxu0
        %6896 = vmatprep.mubr.f32.mxu0 0.0
        %6897 = vmatmul.mubr.f32.gmra.mrb[0].mxu0 %v6699
        %v6898 = vpop.f32.mrb[0].mxu0
        %v6899 = vadd.f32 0.0, %v6898
        %v6900 = vpop.f32.mrb[0].mxu0
        %6901 = vmatprep.mubr.f32.mxu0 0.0
        %6902 = vmatmul.mubr.f32.gmra.mrb[0].mxu0 %v6702
        %v6903 = vpop.f32.mrb[0].mxu0
        %v6904 = vadd.f32 0.0, %v6903
        %v6905 = vpop.f32.mrb[0].mxu0
        %6906 = vmatprep.mubr.f32.mxu0 0.0
        %6907 = vmatmul.mubr.f32.gmra.mrb[0].mxu0 %v6705
        %v6908 = vpop.f32.mrb[0].mxu0
        %v6909 = vadd.f32 0.0, %v6908
        %v6910 = vpop.f32.mrb[0].mxu0
        %6911 = vmatprep.mubr.f32.mxu0 0.0
        %6912 = vmatmul.mubr.f32.gmra.mrb[0].mxu0 %v6708
        %v6913 = vpop.f32.mrb[0].mxu0
        %v6914 = vadd.f32 0.0, %v6913
        %v6915 = vpop.f32.mrb[0].mxu0
        %6916 = vmatprep.mubr.f32.mxu0 0.0
        %6917 = vmatmul.mubr.f32.gmra.mrb[0].mxu0 %v6711
        %v6918 = vpop.f32.mrb[0].mxu0
        %v6919 = vadd.f32 0.0, %v6918
        %v6920 = vpop.f32.mrb[0].mxu0
        %6921 = vmatprep.mubr.f32.mxu0 0.0
        %6922 = vmatmul.mubr.f32.gmra.mrb[0].mxu0 %v6714
        %v6923 = vpop.f32.mrb[0].mxu0
        %v6924 = vadd.f32 0.0, %v6923
        %v6925 = vpop.f32.mrb[0].mxu0
        %6926 = vmatprep.mubr.f32.mxu0 0.0
        %6927 = vmatmul.mubr.f32.gmra.mrb[0].mxu0 %v6717
        %v6928 = vpop.f32.mrb[0].mxu0
        %v6929 = vadd.f32 0.0, %v6928
        %v6930 = vpop.f32.mrb[0].mxu0
        %6931 = vmatprep.mubr.f32.mxu0 0.0
        %6932 = vmatmul.mubr.f32.gmra.mrb[0].mxu0 %v6720
        %v6933 = vpop.f32.mrb[0].mxu0
        %v6934 = vadd.f32 0.0, %v6933
        %v6935 = vpop.f32.mrb[0].mxu0
        %6936 = vmatprep.mubr.f32.mxu0 0.0
        %6937 = vmatmul.mubr.f32.gmra.mrb[0].mxu0 %v6723
        %v6938 = vpop.f32.mrb[0].mxu0
        %v6939 = vadd.f32 0.0, %v6938
        %v6940 = vpop.f32.mrb[0].mxu0
        %6941 = vmatprep.mubr.f32.mxu0 0.0
        %6942 = vmatmul.mubr.f32.gmra.mrb[0].mxu0 %v6726
        %v6943 = vpop.f32.mrb[0].mxu0
        %v6944 = vadd.f32 0.0, %v6943
        %v6945 = vpop.f32.mrb[0].mxu0
        %6946 = vmatprep.mubr.f32.mxu0 0.0
        %6947 = vmatmul.mubr.f32.gmra.mrb[0].mxu0 %v6729
        %v6948 = vpop.f32.mrb[0].mxu0
        %v6949 = vadd.f32 0.0, %v6948
        %v6950 = vpop.f32.mrb[0].mxu0
        %6951 = vmatprep.mubr.f32.mxu0 0.0
        %6952 = vmatmul.mubr.f32.gmra.mrb[0].mxu0 %v6732
        %v6953 = vpop.f32.mrb[0].mxu0
        %v6954 = vadd.f32 0.0, %v6953
        %v6955 = vpop.f32.mrb[0].mxu0
        %6956 = vmatprep.mubr.f32.mxu0 0.0
        %6957 = vmatmul.mubr.f32.gmra.mrb[0].mxu0 %v6735
        %v6958 = vpop.f32.mrb[0].mxu0
        %v6959 = vadd.f32 0.0, %v6958
        %v6960 = vpop.f32.mrb[0].mxu0
        %6961 = vdwg.mxu0
        %v6962 = vadd.f32 %v6572, %v6804
        %v6963 = vadd.f32 %v6573, %v6809
        %v6964 = vadd.f32 %v6574, %v6814
        %v6965 = vadd.f32 %v6575, %v6819
        %v6966 = vadd.f32 %v6576, %v6824
        %v6967 = vadd.f32 %v6577, %v6829
        %v6968 = vadd.f32 %v6578, %v6834
        %v6969 = vadd.f32 %v6579, %v6839
        %v6970 = vadd.f32 %v6580, %v6844
        %v6971 = vadd.f32 %v6581, %v6849
        %v6972 = vadd.f32 %v6582, %v6854
        %v6973 = vadd.f32 %v6583, %v6859
        %v6974 = vadd.f32 %v6584, %v6864
        %v6975 = vadd.f32 %v6585, %v6869
        %v6976 = vadd.f32 %v6586, %v6874
        %v6977 = vadd.f32 %v6587, %v6879
        %v6978 = vadd.f32 %v6588, %v6884
        %v6979 = vadd.f32 %v6589, %v6889
        %v6980 = vadd.f32 %v6590, %v6894
        %v6981 = vadd.f32 %v6591, %v6899
        %v6982 = vadd.f32 %v6592, %v6904
        %v6983 = vadd.f32 %v6593, %v6909
        %v6984 = vadd.f32 %v6594, %v6914
        %v6985 = vadd.f32 %v6595, %v6919
        %v6986 = vadd.f32 %v6596, %v6924
        %v6987 = vadd.f32 %v6597, %v6929
        %v6988 = vadd.f32 %v6598, %v6934
        %v6989 = vadd.f32 %v6599, %v6939
        %v6990 = vadd.f32 %v6600, %v6944
        %v6991 = vadd.f32 %v6601, %v6949
        %v6992 = vadd.f32 %v6602, %v6954
        %v6993 = vadd.f32 %v6603, %v6959
        %v6994 = vld [vmem:[%s6213 + $0x2] sm:$0xff]
        %v6995 = vld [vmem:[%s6213 + $0xa] sm:$0xff]
        %v6996 = vld [vmem:[%s6213 + $0x1a] sm:$0xff]
        %v6997 = vld [vmem:[%s6213 + $0x22] sm:$0xff]
        %v6998 = vld [vmem:[%s6213 + $0x32] sm:$0xff]
        %v6999 = vld [vmem:[%s6213 + $0x3a] sm:$0xff]
        %v7000 = vld [vmem:[%s6213 + $0x4a] sm:$0xff]
        %v7001 = vld [vmem:[%s6213 + $0x52] sm:$0xff]
        %v7002 = vld [vmem:[%s6213 + $0x62] sm:$0xff]
        %v7003 = vld [vmem:[%s6213 + $0x6a] sm:$0xff]
        %v7004 = vld [vmem:[%s6213 + $0x7a] sm:$0xff]
        %v7005 = vld [vmem:[%s6213 + $0x82] sm:$0xff]
        %v7006 = vld [vmem:[%s6213 + $0x92] sm:$0xff]
        %v7007 = vld [vmem:[%s6213 + $0x9a] sm:$0xff]
        %v7008 = vld [vmem:[%s6213 + $0xaa] sm:$0xff]
        %v7009 = vld [vmem:[%s6213 + $0xb2] sm:$0xff]
        %v7010 = vld [vmem:[%s6213 + $0xc2] sm:$0xff]
        %v7011 = vld [vmem:[%s6213 + $0xca] sm:$0xff]
        %v7012 = vld [vmem:[%s6213 + $0xda] sm:$0xff]
        %v7013 = vld [vmem:[%s6213 + $0xe2] sm:$0xff]
        %v7014 = vld [vmem:[%s6213 + $0xf2] sm:$0xff]
        %v7015 = vld [vmem:[%s6213 + $0xfa] sm:$0xff]
        %v7016 = vld [vmem:[%s6213 + $0x10a] sm:$0xff]
        %v7017 = vld [vmem:[%s6213 + $0x112] sm:$0xff]
        %v7018 = vld [vmem:[%s6213 + $0x122] sm:$0xff]
        %v7019 = vld [vmem:[%s6213 + $0x12a] sm:$0xff]
        %v7020 = vld [vmem:[%s6213 + $0x13a] sm:$0xff]
        %v7021 = vld [vmem:[%s6213 + $0x142] sm:$0xff]
        %v7022 = vld [vmem:[%s6213 + $0x152] sm:$0xff]
        %v7023 = vld [vmem:[%s6213 + $0x15a] sm:$0xff]
        %v7024 = vld [vmem:[%s6213 + $0x16a] sm:$0xff]
        %v7025 = vld [vmem:[%s6213 + $0x172] sm:$0xff]
        %s7026 = scalar_lea.vmem %s3, 256
        %v7027 = vld [vmem:[%s7026] sm:$0xff]
        %v7028 = vld [vmem:[%s7026 + $0x8] sm:$0xff]
        %v7029 = vld [vmem:[%s7026 + $0x10] sm:$0xff]
        %v7030 = vld [vmem:[%s7026 + $0x18] sm:$0xff]
        %v7032 = vsel %vm404, %v6994, 0
        %v7035 = vsel %vm404, %v6995, 0
        %v7038 = vsel %vm404, %v6996, 0
        %v7041 = vsel %vm404, %v6997, 0
        %v7044 = vsel %vm404, %v6998, 0
        %v7047 = vsel %vm404, %v6999, 0
        %v7050 = vsel %vm404, %v7000, 0
        %v7053 = vsel %vm404, %v7001, 0
        %v7056 = vsel %vm404, %v7002, 0
        %v7059 = vsel %vm404, %v7003, 0
        %v7062 = vsel %vm404, %v7004, 0
        %v7065 = vsel %vm404, %v7005, 0
        %v7068 = vsel %vm404, %v7006, 0
        %v7071 = vsel %vm404, %v7007, 0
        %v7074 = vsel %vm404, %v7008, 0
        %v7077 = vsel %vm404, %v7009, 0
        %v7080 = vsel %vm404, %v7010, 0
        %v7083 = vsel %vm404, %v7011, 0
        %v7086 = vsel %vm404, %v7012, 0
        %v7089 = vsel %vm404, %v7013, 0
        %v7092 = vsel %vm404, %v7014, 0
        %v7095 = vsel %vm404, %v7015, 0
        %v7098 = vsel %vm404, %v7016, 0
        %v7101 = vsel %vm404, %v7017, 0
        %v7104 = vsel %vm404, %v7018, 0
        %v7107 = vsel %vm404, %v7019, 0
        %v7110 = vsel %vm404, %v7020, 0
        %v7113 = vsel %vm404, %v7021, 0
        %v7116 = vsel %vm404, %v7022, 0
        %v7119 = vsel %vm404, %v7023, 0
        %v7122 = vsel %vm404, %v7024, 0
        %v7125 = vsel %vm404, %v7025, 0
        %7127 = vmatprep.subr.mxu0 0.0
        %7128 = vmatpush1.msra.mxu0 %v7027
        %7129 = vmatprep.subr.mxu0 0.0
        %7130 = vmatpush1.msra.mxu0 %v7028
        %7131 = vmatprep.subr.mxu0 0.0
        %7132 = vmatpush1.msra.mxu0 %v7029
        %7133 = vmatprep.subr.mxu0 0.0
        %7134 = vmatpush1.msra.mxu0 %v7030
        %7135 = vmatprep.subr.mxu0 0.0
        %7136 = vmatpush1.msra.mxu0 0.0
        %7137 = vmatprep.subr.mxu0 0.0
        %7138 = vmatpush1.msra.mxu0 0.0
        %7139 = vmatprep.subr.mxu0 0.0
        %7140 = vmatpush1.msra.mxu0 0.0
        %7141 = vmatprep.subr.mxu0 0.0
        %7142 = vmatpush1.msra.mxu0 0.0
        %7143 = vmatprep.subr.mxu0 0.0
        %7144 = vmatpush1.msra.mxu0 0.0
        %7145 = vmatprep.subr.mxu0 0.0
        %7146 = vmatpush1.msra.mxu0 0.0
        %7147 = vmatprep.subr.mxu0 0.0
        %7148 = vmatpush1.msra.mxu0 0.0
        %7149 = vmatprep.subr.mxu0 0.0
        %7150 = vmatpush1.msra.mxu0 0.0
        %7151 = vmatprep.subr.mxu0 0.0
        %7152 = vmatpush1.msra.mxu0 0.0
        %7153 = vmatprep.subr.mxu0 0.0
        %7154 = vmatpush1.msra.mxu0 0.0
        %7155 = vmatprep.subr.mxu0 0.0
        %7156 = vmatpush1.msra.mxu0 0.0
        %7157 = vmatprep.subr.mxu0 0.0
        %7158 = vmatpush1.msra.mxu0 0.0
        %7159 = vmatprep.subr.mxu0 0.0
        %7160 = vmatpush1.msra.mxu0 0.0
        %7161 = vmatprep.subr.mxu0 0.0
        %7162 = vmatpush1.msra.mxu0 0.0
        %7163 = vmatprep.subr.mxu0 0.0
        %7164 = vmatpush1.msra.mxu0 0.0
        %7165 = vmatprep.subr.mxu0 0.0
        %7166 = vmatpush1.msra.mxu0 0.0
        %7167 = vmatprep.subr.mxu0 0.0
        %7168 = vmatpush1.msra.mxu0 0.0
        %7169 = vmatprep.subr.mxu0 0.0
        %7170 = vmatpush1.msra.mxu0 0.0
        %7171 = vmatprep.subr.mxu0 0.0
        %7172 = vmatpush1.msra.mxu0 0.0
        %7173 = vmatprep.subr.mxu0 0.0
        %7174 = vmatpush1.msra.mxu0 0.0
        %7175 = vmatprep.subr.mxu0 0.0
        %7176 = vmatpush1.msra.mxu0 0.0
        %7177 = vmatprep.subr.mxu0 0.0
        %7178 = vmatpush1.msra.mxu0 0.0
        %7179 = vmatprep.subr.mxu0 0.0
        %7180 = vmatpush1.msra.mxu0 0.0
        %7181 = vmatprep.subr.mxu0 0.0
        %7182 = vmatpush1.msra.mxu0 0.0
        %7183 = vmatprep.subr.mxu0 0.0
        %7184 = vmatpush1.msra.mxu0 0.0
        %7185 = vmatprep.subr.mxu0 0.0
        %7186 = vmatpush1.msra.mxu0 0.0
        %7187 = vmatprep.subr.mxu0 0.0
        %7188 = vmatpush1.msra.mxu0 0.0
        %7189 = vmatprep.subr.mxu0 0.0
        %7190 = vmatpush1.msra.mxu0 0.0
        %7191 = vmatprep.mubr.f32.mxu0 0.0
        %7192 = vmatmul.mubr.f32.gmra.mrb[0].mxu0 %v7032
        %v7193 = vpop.f32.mrb[0].mxu0
        %v7194 = vadd.f32 0.0, %v7193
        %v7195 = vpop.f32.mrb[0].mxu0
        %7196 = vmatprep.mubr.f32.mxu0 0.0
        %7197 = vmatmul.mubr.f32.gmra.mrb[0].mxu0 %v7035
        %v7198 = vpop.f32.mrb[0].mxu0
        %v7199 = vadd.f32 0.0, %v7198
        %v7200 = vpop.f32.mrb[0].mxu0
        %7201 = vmatprep.mubr.f32.mxu0 0.0
        %7202 = vmatmul.mubr.f32.gmra.mrb[0].mxu0 %v7038
        %v7203 = vpop.f32.mrb[0].mxu0
        %v7204 = vadd.f32 0.0, %v7203
        %v7205 = vpop.f32.mrb[0].mxu0
        %7206 = vmatprep.mubr.f32.mxu0 0.0
        %7207 = vmatmul.mubr.f32.gmra.mrb[0].mxu0 %v7041
        %v7208 = vpop.f32.mrb[0].mxu0
        %v7209 = vadd.f32 0.0, %v7208
        %v7210 = vpop.f32.mrb[0].mxu0
        %7211 = vmatprep.mubr.f32.mxu0 0.0
        %7212 = vmatmul.mubr.f32.gmra.mrb[0].mxu0 %v7044
        %v7213 = vpop.f32.mrb[0].mxu0
        %v7214 = vadd.f32 0.0, %v7213
        %v7215 = vpop.f32.mrb[0].mxu0
        %7216 = vmatprep.mubr.f32.mxu0 0.0
        %7217 = vmatmul.mubr.f32.gmra.mrb[0].mxu0 %v7047
        %v7218 = vpop.f32.mrb[0].mxu0
        %v7219 = vadd.f32 0.0, %v7218
        %v7220 = vpop.f32.mrb[0].mxu0
        %7221 = vmatprep.mubr.f32.mxu0 0.0
        %7222 = vmatmul.mubr.f32.gmra.mrb[0].mxu0 %v7050
        %v7223 = vpop.f32.mrb[0].mxu0
        %v7224 = vadd.f32 0.0, %v7223
        %v7225 = vpop.f32.mrb[0].mxu0
        %7226 = vmatprep.mubr.f32.mxu0 0.0
        %7227 = vmatmul.mubr.f32.gmra.mrb[0].mxu0 %v7053
        %v7228 = vpop.f32.mrb[0].mxu0
        %v7229 = vadd.f32 0.0, %v7228
        %v7230 = vpop.f32.mrb[0].mxu0
        %7231 = vmatprep.mubr.f32.mxu0 0.0
        %7232 = vmatmul.mubr.f32.gmra.mrb[0].mxu0 %v7056
        %v7233 = vpop.f32.mrb[0].mxu0
        %v7234 = vadd.f32 0.0, %v7233
        %v7235 = vpop.f32.mrb[0].mxu0
        %7236 = vmatprep.mubr.f32.mxu0 0.0
        %7237 = vmatmul.mubr.f32.gmra.mrb[0].mxu0 %v7059
        %v7238 = vpop.f32.mrb[0].mxu0
        %v7239 = vadd.f32 0.0, %v7238
        %v7240 = vpop.f32.mrb[0].mxu0
        %7241 = vmatprep.mubr.f32.mxu0 0.0
        %7242 = vmatmul.mubr.f32.gmra.mrb[0].mxu0 %v7062
        %v7243 = vpop.f32.mrb[0].mxu0
        %v7244 = vadd.f32 0.0, %v7243
        %v7245 = vpop.f32.mrb[0].mxu0
        %7246 = vmatprep.mubr.f32.mxu0 0.0
        %7247 = vmatmul.mubr.f32.gmra.mrb[0].mxu0 %v7065
        %v7248 = vpop.f32.mrb[0].mxu0
        %v7249 = vadd.f32 0.0, %v7248
        %v7250 = vpop.f32.mrb[0].mxu0
        %7251 = vmatprep.mubr.f32.mxu0 0.0
        %7252 = vmatmul.mubr.f32.gmra.mrb[0].mxu0 %v7068
        %v7253 = vpop.f32.mrb[0].mxu0
        %v7254 = vadd.f32 0.0, %v7253
        %v7255 = vpop.f32.mrb[0].mxu0
        %7256 = vmatprep.mubr.f32.mxu0 0.0
        %7257 = vmatmul.mubr.f32.gmra.mrb[0].mxu0 %v7071
        %v7258 = vpop.f32.mrb[0].mxu0
        %v7259 = vadd.f32 0.0, %v7258
        %v7260 = vpop.f32.mrb[0].mxu0
        %7261 = vmatprep.mubr.f32.mxu0 0.0
        %7262 = vmatmul.mubr.f32.gmra.mrb[0].mxu0 %v7074
        %v7263 = vpop.f32.mrb[0].mxu0
        %v7264 = vadd.f32 0.0, %v7263
        %v7265 = vpop.f32.mrb[0].mxu0
        %7266 = vmatprep.mubr.f32.mxu0 0.0
        %7267 = vmatmul.mubr.f32.gmra.mrb[0].mxu0 %v7077
        %v7268 = vpop.f32.mrb[0].mxu0
        %v7269 = vadd.f32 0.0, %v7268
        %v7270 = vpop.f32.mrb[0].mxu0
        %7271 = vmatprep.mubr.f32.mxu0 0.0
        %7272 = vmatmul.mubr.f32.gmra.mrb[0].mxu0 %v7080
        %v7273 = vpop.f32.mrb[0].mxu0
        %v7274 = vadd.f32 0.0, %v7273
        %v7275 = vpop.f32.mrb[0].mxu0
        %7276 = vmatprep.mubr.f32.mxu0 0.0
        %7277 = vmatmul.mubr.f32.gmra.mrb[0].mxu0 %v7083
        %v7278 = vpop.f32.mrb[0].mxu0
        %v7279 = vadd.f32 0.0, %v7278
        %v7280 = vpop.f32.mrb[0].mxu0
        %7281 = vmatprep.mubr.f32.mxu0 0.0
        %7282 = vmatmul.mubr.f32.gmra.mrb[0].mxu0 %v7086
        %v7283 = vpop.f32.mrb[0].mxu0
        %v7284 = vadd.f32 0.0, %v7283
        %v7285 = vpop.f32.mrb[0].mxu0
        %7286 = vmatprep.mubr.f32.mxu0 0.0
        %7287 = vmatmul.mubr.f32.gmra.mrb[0].mxu0 %v7089
        %v7288 = vpop.f32.mrb[0].mxu0
        %v7289 = vadd.f32 0.0, %v7288
        %v7290 = vpop.f32.mrb[0].mxu0
        %7291 = vmatprep.mubr.f32.mxu0 0.0
        %7292 = vmatmul.mubr.f32.gmra.mrb[0].mxu0 %v7092
        %v7293 = vpop.f32.mrb[0].mxu0
        %v7294 = vadd.f32 0.0, %v7293
        %v7295 = vpop.f32.mrb[0].mxu0
        %7296 = vmatprep.mubr.f32.mxu0 0.0
        %7297 = vmatmul.mubr.f32.gmra.mrb[0].mxu0 %v7095
        %v7298 = vpop.f32.mrb[0].mxu0
        %v7299 = vadd.f32 0.0, %v7298
        %v7300 = vpop.f32.mrb[0].mxu0
        %7301 = vmatprep.mubr.f32.mxu0 0.0
        %7302 = vmatmul.mubr.f32.gmra.mrb[0].mxu0 %v7098
        %v7303 = vpop.f32.mrb[0].mxu0
        %v7304 = vadd.f32 0.0, %v7303
        %v7305 = vpop.f32.mrb[0].mxu0
        %7306 = vmatprep.mubr.f32.mxu0 0.0
        %7307 = vmatmul.mubr.f32.gmra.mrb[0].mxu0 %v7101
        %v7308 = vpop.f32.mrb[0].mxu0
        %v7309 = vadd.f32 0.0, %v7308
        %v7310 = vpop.f32.mrb[0].mxu0
        %7311 = vmatprep.mubr.f32.mxu0 0.0
        %7312 = vmatmul.mubr.f32.gmra.mrb[0].mxu0 %v7104
        %v7313 = vpop.f32.mrb[0].mxu0
        %v7314 = vadd.f32 0.0, %v7313
        %v7315 = vpop.f32.mrb[0].mxu0
        %7316 = vmatprep.mubr.f32.mxu0 0.0
        %7317 = vmatmul.mubr.f32.gmra.mrb[0].mxu0 %v7107
        %v7318 = vpop.f32.mrb[0].mxu0
        %v7319 = vadd.f32 0.0, %v7318
        %v7320 = vpop.f32.mrb[0].mxu0
        %7321 = vmatprep.mubr.f32.mxu0 0.0
        %7322 = vmatmul.mubr.f32.gmra.mrb[0].mxu0 %v7110
        %v7323 = vpop.f32.mrb[0].mxu0
        %v7324 = vadd.f32 0.0, %v7323
        %v7325 = vpop.f32.mrb[0].mxu0
        %7326 = vmatprep.mubr.f32.mxu0 0.0
        %7327 = vmatmul.mubr.f32.gmra.mrb[0].mxu0 %v7113
        %v7328 = vpop.f32.mrb[0].mxu0
        %v7329 = vadd.f32 0.0, %v7328
        %v7330 = vpop.f32.mrb[0].mxu0
        %7331 = vmatprep.mubr.f32.mxu0 0.0
        %7332 = vmatmul.mubr.f32.gmra.mrb[0].mxu0 %v7116
        %v7333 = vpop.f32.mrb[0].mxu0
        %v7334 = vadd.f32 0.0, %v7333
        %v7335 = vpop.f32.mrb[0].mxu0
        %7336 = vmatprep.mubr.f32.mxu0 0.0
        %7337 = vmatmul.mubr.f32.gmra.mrb[0].mxu0 %v7119
        %v7338 = vpop.f32.mrb[0].mxu0
        %v7339 = vadd.f32 0.0, %v7338
        %v7340 = vpop.f32.mrb[0].mxu0
        %7341 = vmatprep.mubr.f32.mxu0 0.0
        %7342 = vmatmul.mubr.f32.gmra.mrb[0].mxu0 %v7122
        %v7343 = vpop.f32.mrb[0].mxu0
        %v7344 = vadd.f32 0.0, %v7343
        %v7345 = vpop.f32.mrb[0].mxu0
        %7346 = vmatprep.mubr.f32.mxu0 0.0
        %7347 = vmatmul.mubr.f32.gmra.mrb[0].mxu0 %v7125
        %v7348 = vpop.f32.mrb[0].mxu0
        %v7349 = vadd.f32 0.0, %v7348
        %v7350 = vpop.f32.mrb[0].mxu0
        %7351 = vdwg.mxu0
        %v7352 = vadd.f32 %v6962, %v7194
        %v7353 = vadd.f32 %v6963, %v7199
        %v7354 = vadd.f32 %v6964, %v7204
        %v7355 = vadd.f32 %v6965, %v7209
        %v7356 = vadd.f32 %v6966, %v7214
        %v7357 = vadd.f32 %v6967, %v7219
        %v7358 = vadd.f32 %v6968, %v7224
        %v7359 = vadd.f32 %v6969, %v7229
        %v7360 = vadd.f32 %v6970, %v7234
        %v7361 = vadd.f32 %v6971, %v7239
        %v7362 = vadd.f32 %v6972, %v7244
        %v7363 = vadd.f32 %v6973, %v7249
        %v7364 = vadd.f32 %v6974, %v7254
        %v7365 = vadd.f32 %v6975, %v7259
        %v7366 = vadd.f32 %v6976, %v7264
        %v7367 = vadd.f32 %v6977, %v7269
        %v7368 = vadd.f32 %v6978, %v7274
        %v7369 = vadd.f32 %v6979, %v7279
        %v7370 = vadd.f32 %v6980, %v7284
        %v7371 = vadd.f32 %v6981, %v7289
        %v7372 = vadd.f32 %v6982, %v7294
        %v7373 = vadd.f32 %v6983, %v7299
        %v7374 = vadd.f32 %v6984, %v7304
        %v7375 = vadd.f32 %v6985, %v7309
        %v7376 = vadd.f32 %v6986, %v7314
        %v7377 = vadd.f32 %v6987, %v7319
        %v7378 = vadd.f32 %v6988, %v7324
        %v7379 = vadd.f32 %v6989, %v7329
        %v7380 = vadd.f32 %v6990, %v7334
        %v7381 = vadd.f32 %v6991, %v7339
        %v7382 = vadd.f32 %v6992, %v7344
        %v7383 = vadd.f32 %v6993, %v7349
        %v7384 = vld [vmem:[%s4] sm:$0x1]
        %v7386 = vlaneseq
        %v7387 = vshrl.u32 %v7386, 7
        %v7388 = vsub.s32 0, %v7387
        %v7389 = vrot.slane %v7384, %v7388
        %v7391 = vadd.f32 %v7352, %v7389
        %v7392 = vadd.f32 %v7353, %v7389
        %v7393 = vadd.f32 %v7354, %v7389
        %v7394 = vadd.f32 %v7355, %v7389
        %v7395 = vadd.f32 %v7356, %v7389
        %v7396 = vadd.f32 %v7357, %v7389
        %v7397 = vadd.f32 %v7358, %v7389
        %v7398 = vadd.f32 %v7359, %v7389
        %v7399 = vadd.f32 %v7360, %v7389
        %v7400 = vadd.f32 %v7361, %v7389
        %v7401 = vadd.f32 %v7362, %v7389
        %v7402 = vadd.f32 %v7363, %v7389
        %v7403 = vadd.f32 %v7364, %v7389
        %v7404 = vadd.f32 %v7365, %v7389
        %v7405 = vadd.f32 %v7366, %v7389
        %v7406 = vadd.f32 %v7367, %v7389
        %v7407 = vadd.f32 %v7368, %v7389
        %v7408 = vadd.f32 %v7369, %v7389
        %v7409 = vadd.f32 %v7370, %v7389
        %v7410 = vadd.f32 %v7371, %v7389
        %v7411 = vadd.f32 %v7372, %v7389
        %v7412 = vadd.f32 %v7373, %v7389
        %v7413 = vadd.f32 %v7374, %v7389
        %v7414 = vadd.f32 %v7375, %v7389
        %v7415 = vadd.f32 %v7376, %v7389
        %v7416 = vadd.f32 %v7377, %v7389
        %v7417 = vadd.f32 %v7378, %v7389
        %v7418 = vadd.f32 %v7379, %v7389
        %v7419 = vadd.f32 %v7380, %v7389
        %v7420 = vadd.f32 %v7381, %v7389
        %v7421 = vadd.f32 %v7382, %v7389
        %v7422 = vadd.f32 %v7383, %v7389
        %v7423 = vsel %vm404, %v7391, 0.0
        %v7424 = vsel %vm404, %v7392, 0.0
        %v7425 = vadd.f32 %v7423, %v7424
        %v7426 = vsel %vm404, %v7393, 0.0
        %v7427 = vadd.f32 %v7425, %v7426
        %v7428 = vsel %vm404, %v7394, 0.0
        %v7429 = vadd.f32 %v7427, %v7428
        %v7430 = vsel %vm404, %v7395, 0.0
        %v7431 = vadd.f32 %v7429, %v7430
        %v7432 = vsel %vm404, %v7396, 0.0
        %v7433 = vadd.f32 %v7431, %v7432
        %v7434 = vsel %vm404, %v7397, 0.0
        %v7435 = vadd.f32 %v7433, %v7434
        %v7436 = vsel %vm404, %v7398, 0.0
        %v7437 = vadd.f32 %v7435, %v7436
        %v7438 = vsel %vm404, %v7399, 0.0
        %v7439 = vadd.f32 %v7437, %v7438
        %v7440 = vsel %vm404, %v7400, 0.0
        %v7441 = vadd.f32 %v7439, %v7440
        %v7442 = vsel %vm404, %v7401, 0.0
        %v7443 = vadd.f32 %v7441, %v7442
        %v7444 = vsel %vm404, %v7402, 0.0
        %v7445 = vadd.f32 %v7443, %v7444
        %v7446 = vsel %vm404, %v7403, 0.0
        %v7447 = vadd.f32 %v7445, %v7446
        %v7448 = vsel %vm404, %v7404, 0.0
        %v7449 = vadd.f32 %v7447, %v7448
        %v7450 = vsel %vm404, %v7405, 0.0
        %v7451 = vadd.f32 %v7449, %v7450
        %v7452 = vsel %vm404, %v7406, 0.0
        %v7453 = vadd.f32 %v7451, %v7452
        %v7454 = vsel %vm404, %v7407, 0.0
        %v7455 = vadd.f32 %v7453, %v7454
        %v7456 = vsel %vm404, %v7408, 0.0
        %v7457 = vadd.f32 %v7455, %v7456
        %v7458 = vsel %vm404, %v7409, 0.0
        %v7459 = vadd.f32 %v7457, %v7458
        %v7460 = vsel %vm404, %v7410, 0.0
        %v7461 = vadd.f32 %v7459, %v7460
        %v7462 = vsel %vm404, %v7411, 0.0
        %v7463 = vadd.f32 %v7461, %v7462
        %v7464 = vsel %vm404, %v7412, 0.0
        %v7465 = vadd.f32 %v7463, %v7464
        %v7466 = vsel %vm404, %v7413, 0.0
        %v7467 = vadd.f32 %v7465, %v7466
        %v7468 = vsel %vm404, %v7414, 0.0
        %v7469 = vadd.f32 %v7467, %v7468
        %v7470 = vsel %vm404, %v7415, 0.0
        %v7471 = vadd.f32 %v7469, %v7470
        %v7472 = vsel %vm404, %v7416, 0.0
        %v7473 = vadd.f32 %v7471, %v7472
        %v7474 = vsel %vm404, %v7417, 0.0
        %v7475 = vadd.f32 %v7473, %v7474
        %v7476 = vsel %vm404, %v7418, 0.0
        %v7477 = vadd.f32 %v7475, %v7476
        %v7478 = vsel %vm404, %v7419, 0.0
        %v7479 = vadd.f32 %v7477, %v7478
        %v7480 = vsel %vm404, %v7420, 0.0
        %v7481 = vadd.f32 %v7479, %v7480
        %v7482 = vsel %vm404, %v7421, 0.0
        %v7483 = vadd.f32 %v7481, %v7482
        %v7484 = vsel %vm404, %v7422, 0.0
        %v7485 = vadd.f32 %v7483, %v7484
        %v7486 = vrot.slane %v7485, 4
        %v7487 = vadd.f32 %v7485, %v7486
        %v7488 = vrot.slane %v7487, 2
        %v7489 = vadd.f32 %v7487, %v7488
        %v7490 = vrot.slane %v7489, 1
        %v7491 = vadd.f32 %v7489, %v7490
        %v7492 = vrcp.pop 256.0
        %v7493 = vmul.f32 %v7491, %v7492
        %v7494 = vld [vmem:[%s5] sm:$0xff]
        %v7495 = vld [vmem:[%s5 + $0x8] sm:$0xff]
        %v7496 = vld [vmem:[%s5 + $0x10] sm:$0xff]
        %v7497 = vld [vmem:[%s5 + $0x18] sm:$0xff]
        %v7498 = vld [vmem:[%s6] sm:$0x1]
        %v7500 = vsel %vm404, %v7493, 0
        %7502 = vmatprep.subr.mxu0 0.0
        %7503 = vmatpush1.msra.mxu0 %v7494
        %7504 = vmatprep.subr.mxu0 0.0
        %7505 = vmatpush1.msra.mxu0 %v7495
        %7506 = vmatprep.subr.mxu0 0.0
        %7507 = vmatpush1.msra.mxu0 %v7496
        %7508 = vmatprep.subr.mxu0 0.0
        %7509 = vmatpush1.msra.mxu0 %v7497
        %7510 = vmatprep.subr.mxu0 0.0
        %7511 = vmatpush1.msra.mxu0 0.0
        %7512 = vmatprep.subr.mxu0 0.0
        %7513 = vmatpush1.msra.mxu0 0.0
        %7514 = vmatprep.subr.mxu0 0.0
        %7515 = vmatpush1.msra.mxu0 0.0
        %7516 = vmatprep.subr.mxu0 0.0
        %7517 = vmatpush1.msra.mxu0 0.0
        %7518 = vmatprep.subr.mxu0 0.0
        %7519 = vmatpush1.msra.mxu0 0.0
        %7520 = vmatprep.subr.mxu0 0.0
        %7521 = vmatpush1.msra.mxu0 0.0
        %7522 = vmatprep.subr.mxu0 0.0
        %7523 = vmatpush1.msra.mxu0 0.0
        %7524 = vmatprep.subr.mxu0 0.0
        %7525 = vmatpush1.msra.mxu0 0.0
        %7526 = vmatprep.subr.mxu0 0.0
        %7527 = vmatpush1.msra.mxu0 0.0
        %7528 = vmatprep.subr.mxu0 0.0
        %7529 = vmatpush1.msra.mxu0 0.0
        %7530 = vmatprep.subr.mxu0 0.0
        %7531 = vmatpush1.msra.mxu0 0.0
        %7532 = vmatprep.subr.mxu0 0.0
        %7533 = vmatpush1.msra.mxu0 0.0
        %7534 = vmatprep.subr.mxu0 0.0
        %7535 = vmatpush1.msra.mxu0 0.0
        %7536 = vmatprep.subr.mxu0 0.0
        %7537 = vmatpush1.msra.mxu0 0.0
        %7538 = vmatprep.subr.mxu0 0.0
        %7539 = vmatpush1.msra.mxu0 0.0
        %7540 = vmatprep.subr.mxu0 0.0
        %7541 = vmatpush1.msra.mxu0 0.0
        %7542 = vmatprep.subr.mxu0 0.0
        %7543 = vmatpush1.msra.mxu0 0.0
        %7544 = vmatprep.subr.mxu0 0.0
        %7545 = vmatpush1.msra.mxu0 0.0
        %7546 = vmatprep.subr.mxu0 0.0
        %7547 = vmatpush1.msra.mxu0 0.0
        %7548 = vmatprep.subr.mxu0 0.0
        %7549 = vmatpush1.msra.mxu0 0.0
        %7550 = vmatprep.subr.mxu0 0.0
        %7551 = vmatpush1.msra.mxu0 0.0
        %7552 = vmatprep.subr.mxu0 0.0
        %7553 = vmatpush1.msra.mxu0 0.0
        %7554 = vmatprep.subr.mxu0 0.0
        %7555 = vmatpush1.msra.mxu0 0.0
        %7556 = vmatprep.subr.mxu0 0.0
        %7557 = vmatpush1.msra.mxu0 0.0
        %7558 = vmatprep.subr.mxu0 0.0
        %7559 = vmatpush1.msra.mxu0 0.0
        %7560 = vmatprep.subr.mxu0 0.0
        %7561 = vmatpush1.msra.mxu0 0.0
        %7562 = vmatprep.subr.mxu0 0.0
        %7563 = vmatpush1.msra.mxu0 0.0
        %7564 = vmatprep.subr.mxu0 0.0
        %7565 = vmatpush1.msra.mxu0 0.0
        %7566 = vmatprep.mubr.f32.mxu0 0.0
        %7567 = vmatmul.mubr.f32.gmra.mrb[0].mxu0 %v7500
        %v7568 = vpop.f32.mrb[0].mxu0
        %v7569 = vadd.f32 %v7498, %v7568
        %v7570 = vpop.f32.mrb[0].mxu0
        %7571 = vdwg.mxu0
        %v7572 = vmax.f32 %v7569, 0.0
        %v7573 = vld [vmem:[%s7] sm:$0x3]
        %v7574 = vld [vmem:[%s8] sm:$0x1]
        %vm7575 = vcmask 15360
        %v7577 = vsel %vm7575, %v7572, 0
        %vm7579 = vcmask 1041408
        %v7581 = vsel %vm7579, %v7573, 0
        %7583 = vmatprep.subr.mxu0 0.0
        %7584 = vmatpush1.msra.mxu0 %v7581
        %7585 = vmatprep.subr.mxu0 0.0
        %7586 = vmatpush1.msra.mxu0 0.0
        %7587 = vmatprep.subr.mxu0 0.0
        %7588 = vmatpush1.msra.mxu0 0.0
        %7589 = vmatprep.subr.mxu0 0.0
        %7590 = vmatpush1.msra.mxu0 0.0
        %7591 = vmatprep.subr.mxu0 0.0
        %7592 = vmatpush1.msra.mxu0 0.0
        %7593 = vmatprep.subr.mxu0 0.0
        %7594 = vmatpush1.msra.mxu0 0.0
        %7595 = vmatprep.subr.mxu0 0.0
        %7596 = vmatpush1.msra.mxu0 0.0
        %7597 = vmatprep.subr.mxu0 0.0
        %7598 = vmatpush1.msra.mxu0 0.0
        %7599 = vmatprep.subr.mxu0 0.0
        %7600 = vmatpush1.msra.mxu0 0.0
        %7601 = vmatprep.subr.mxu0 0.0
        %7602 = vmatpush1.msra.mxu0 0.0
        %7603 = vmatprep.subr.mxu0 0.0
        %7604 = vmatpush1.msra.mxu0 0.0
        %7605 = vmatprep.subr.mxu0 0.0
        %7606 = vmatpush1.msra.mxu0 0.0
        %7607 = vmatprep.subr.mxu0 0.0
        %7608 = vmatpush1.msra.mxu0 0.0
        %7609 = vmatprep.subr.mxu0 0.0
        %7610 = vmatpush1.msra.mxu0 0.0
        %7611 = vmatprep.subr.mxu0 0.0
        %7612 = vmatpush1.msra.mxu0 0.0
        %7613 = vmatprep.subr.mxu0 0.0
        %7614 = vmatpush1.msra.mxu0 0.0
        %7615 = vmatprep.subr.mxu0 0.0
        %7616 = vmatpush1.msra.mxu0 0.0
        %7617 = vmatprep.subr.mxu0 0.0
        %7618 = vmatpush1.msra.mxu0 0.0
        %7619 = vmatprep.subr.mxu0 0.0
        %7620 = vmatpush1.msra.mxu0 0.0
        %7621 = vmatprep.subr.mxu0 0.0
        %7622 = vmatpush1.msra.mxu0 0.0
        %7623 = vmatprep.subr.mxu0 0.0
        %7624 = vmatpush1.msra.mxu0 0.0
        %7625 = vmatprep.subr.mxu0 0.0
        %7626 = vmatpush1.msra.mxu0 0.0
        %7627 = vmatprep.subr.mxu0 0.0
        %7628 = vmatpush1.msra.mxu0 0.0
        %7629 = vmatprep.subr.mxu0 0.0
        %7630 = vmatpush1.msra.mxu0 0.0
        %7631 = vmatprep.subr.mxu0 0.0
        %7632 = vmatpush1.msra.mxu0 0.0
        %7633 = vmatprep.subr.mxu0 0.0
        %7634 = vmatpush1.msra.mxu0 0.0
        %7635 = vmatprep.subr.mxu0 0.0
        %7636 = vmatpush1.msra.mxu0 0.0
        %7637 = vmatprep.subr.mxu0 0.0
        %7638 = vmatpush1.msra.mxu0 0.0
        %7639 = vmatprep.subr.mxu0 0.0
        %7640 = vmatpush1.msra.mxu0 0.0
        %7641 = vmatprep.subr.mxu0 0.0
        %7642 = vmatpush1.msra.mxu0 0.0
        %7643 = vmatprep.subr.mxu0 0.0
        %7644 = vmatpush1.msra.mxu0 0.0
        %7645 = vmatprep.subr.mxu0 0.0
        %7646 = vmatpush1.msra.mxu0 0.0
        %7647 = vmatprep.mubr.f32.mxu0 0.0
        %7648 = vmatmul.mubr.f32.gmra.mrb[0].mxu0 %v7577
        %v7649 = vpop.f32.mrb[0].mxu0
        %v7650 = vadd.f32 %v7574, %v7649
        %v7651 = vpop.f32.mrb[0].mxu0
        %7652 = vdwg.mxu0
        %v7653 = vxor.u32 %v7650, 2147483648
        %v7654 = vmul.f32 %v7653, 1.442695
        %v7655 = vpow.pop %v7654
        %v7656 = vadd.f32 %v7655, 1.0
        %v7657 = vrcp.pop %v7656
        %v7658 = vmul.f32 1.0, %v7657
        %v7659 = vld [vmem:[%s1437 + $0x1] sm:$0xff]
        %v7660 = vld [vmem:[%s1437 + $0x9] sm:$0xff]
        %v7661 = vld [vmem:[%s1437 + $0x19] sm:$0xff]
        %v7662 = vld [vmem:[%s1437 + $0x21] sm:$0xff]
        %v7663 = vld [vmem:[%s1437 + $0x31] sm:$0xff]
        %v7664 = vld [vmem:[%s1437 + $0x39] sm:$0xff]
        %v7665 = vld [vmem:[%s1437 + $0x49] sm:$0xff]
        %v7666 = vld [vmem:[%s1437 + $0x51] sm:$0xff]
        %v7667 = vld [vmem:[%s1437 + $0x61] sm:$0xff]
        %v7668 = vld [vmem:[%s1437 + $0x69] sm:$0xff]
        %v7669 = vld [vmem:[%s1437 + $0x79] sm:$0xff]
        %v7670 = vld [vmem:[%s1437 + $0x81] sm:$0xff]
        %v7671 = vld [vmem:[%s1437 + $0x91] sm:$0xff]
        %v7672 = vld [vmem:[%s1437 + $0x99] sm:$0xff]
        %v7673 = vld [vmem:[%s1437 + $0xa9] sm:$0xff]
        %v7674 = vld [vmem:[%s1437 + $0xb1] sm:$0xff]
        %v7675 = vld [vmem:[%s1437 + $0xc1] sm:$0xff]
        %v7676 = vld [vmem:[%s1437 + $0xc9] sm:$0xff]
        %v7677 = vld [vmem:[%s1437 + $0xd9] sm:$0xff]
        %v7678 = vld [vmem:[%s1437 + $0xe1] sm:$0xff]
        %v7679 = vld [vmem:[%s1437 + $0xf1] sm:$0xff]
        %v7680 = vld [vmem:[%s1437 + $0xf9] sm:$0xff]
        %v7681 = vld [vmem:[%s1437 + $0x109] sm:$0xff]
        %v7682 = vld [vmem:[%s1437 + $0x111] sm:$0xff]
        %v7683 = vld [vmem:[%s1437 + $0x121] sm:$0xff]
        %v7684 = vld [vmem:[%s1437 + $0x129] sm:$0xff]
        %v7685 = vld [vmem:[%s1437 + $0x139] sm:$0xff]
        %v7686 = vld [vmem:[%s1437 + $0x141] sm:$0xff]
        %v7687 = vld [vmem:[%s1437 + $0x151] sm:$0xff]
        %v7688 = vld [vmem:[%s1437 + $0x159] sm:$0xff]
        %v7689 = vld [vmem:[%s1437 + $0x169] sm:$0xff]
        %v7690 = vld [vmem:[%s1437 + $0x171] sm:$0xff]
        %v7691 = vlaneseq
        %v7692 = vshrl.u32 %v7691, 7
        %v7693 = vsub.s32 0, %v7692
        %v7694 = vrot.slane %v7658, %v7693
        %v7695 = vmul.f32 %v7391, %v7694
        %v7696 = vmul.f32 %v7392, %v7694
        %v7697 = vmul.f32 %v7393, %v7694
        %v7698 = vmul.f32 %v7394, %v7694
        %v7699 = vmul.f32 %v7395, %v7694
        %v7700 = vmul.f32 %v7396, %v7694
        %v7701 = vmul.f32 %v7397, %v7694
        %v7702 = vmul.f32 %v7398, %v7694
        %v7703 = vmul.f32 %v7399, %v7694
        %v7704 = vmul.f32 %v7400, %v7694
        %v7705 = vmul.f32 %v7401, %v7694
        %v7706 = vmul.f32 %v7402, %v7694
        %v7707 = vmul.f32 %v7403, %v7694
        %v7708 = vmul.f32 %v7404, %v7694
        %v7709 = vmul.f32 %v7405, %v7694
        %v7710 = vmul.f32 %v7406, %v7694
        %v7711 = vmul.f32 %v7407, %v7694
        %v7712 = vmul.f32 %v7408, %v7694
        %v7713 = vmul.f32 %v7409, %v7694
        %v7714 = vmul.f32 %v7410, %v7694
        %v7715 = vmul.f32 %v7411, %v7694
        %v7716 = vmul.f32 %v7412, %v7694
        %v7717 = vmul.f32 %v7413, %v7694
        %v7718 = vmul.f32 %v7414, %v7694
        %v7719 = vmul.f32 %v7415, %v7694
        %v7720 = vmul.f32 %v7416, %v7694
        %v7721 = vmul.f32 %v7417, %v7694
        %v7722 = vmul.f32 %v7418, %v7694
        %v7723 = vmul.f32 %v7419, %v7694
        %v7724 = vmul.f32 %v7420, %v7694
        %v7725 = vmul.f32 %v7421, %v7694
        %v7726 = vmul.f32 %v7422, %v7694
        %v7727 = vadd.f32 %v7659, %v7695
        %v7728 = vadd.f32 %v7660, %v7696
        %v7729 = vadd.f32 %v7661, %v7697
        %v7730 = vadd.f32 %v7662, %v7698
        %v7731 = vadd.f32 %v7663, %v7699
        %v7732 = vadd.f32 %v7664, %v7700
        %v7733 = vadd.f32 %v7665, %v7701
        %v7734 = vadd.f32 %v7666, %v7702
        %v7735 = vadd.f32 %v7667, %v7703
        %v7736 = vadd.f32 %v7668, %v7704
        %v7737 = vadd.f32 %v7669, %v7705
        %v7738 = vadd.f32 %v7670, %v7706
        %v7739 = vadd.f32 %v7671, %v7707
        %v7740 = vadd.f32 %v7672, %v7708
        %v7741 = vadd.f32 %v7673, %v7709
        %v7742 = vadd.f32 %v7674, %v7710
        %v7743 = vadd.f32 %v7675, %v7711
        %v7744 = vadd.f32 %v7676, %v7712
        %v7745 = vadd.f32 %v7677, %v7713
        %v7746 = vadd.f32 %v7678, %v7714
        %v7747 = vadd.f32 %v7679, %v7715
        %v7748 = vadd.f32 %v7680, %v7716
        %v7749 = vadd.f32 %v7681, %v7717
        %v7750 = vadd.f32 %v7682, %v7718
        %v7751 = vadd.f32 %v7683, %v7719
        %v7752 = vadd.f32 %v7684, %v7720
        %v7753 = vadd.f32 %v7685, %v7721
        %v7754 = vadd.f32 %v7686, %v7722
        %v7755 = vadd.f32 %v7687, %v7723
        %v7756 = vadd.f32 %v7688, %v7724
        %v7757 = vadd.f32 %v7689, %v7725
        %v7758 = vadd.f32 %v7690, %v7726
        %7759 = vst.msk [vmem:[%s325] sm:$0xff] %vm404, %v7727
        %7760 = vst.msk [vmem:[%s325 + $0x8] sm:$0xff] %vm404, %v7728
        %7761 = vst.msk [vmem:[%s325 + $0x10] sm:$0xff] %vm404, %v7729
        %7762 = vst.msk [vmem:[%s325 + $0x18] sm:$0xff] %vm404, %v7730
        %7763 = vst.msk [vmem:[%s325 + $0x20] sm:$0xff] %vm404, %v7731
        %7764 = vst.msk [vmem:[%s325 + $0x28] sm:$0xff] %vm404, %v7732
        %7765 = vst.msk [vmem:[%s325 + $0x30] sm:$0xff] %vm404, %v7733
        %7766 = vst.msk [vmem:[%s325 + $0x38] sm:$0xff] %vm404, %v7734
        %7767 = vst.msk [vmem:[%s325 + $0x40] sm:$0xff] %vm404, %v7735
        %7768 = vst.msk [vmem:[%s325 + $0x48] sm:$0xff] %vm404, %v7736
        %7769 = vst.msk [vmem:[%s325 + $0x50] sm:$0xff] %vm404, %v7737
        %7770 = vst.msk [vmem:[%s325 + $0x58] sm:$0xff] %vm404, %v7738
        %7771 = vst.msk [vmem:[%s325 + $0x60] sm:$0xff] %vm404, %v7739
        %7772 = vst.msk [vmem:[%s325 + $0x68] sm:$0xff] %vm404, %v7740
        %7773 = vst.msk [vmem:[%s325 + $0x70] sm:$0xff] %vm404, %v7741
        %7774 = vst.msk [vmem:[%s325 + $0x78] sm:$0xff] %vm404, %v7742
        %7775 = vst.msk [vmem:[%s325 + $0x80] sm:$0xff] %vm404, %v7743
        %7776 = vst.msk [vmem:[%s325 + $0x88] sm:$0xff] %vm404, %v7744
        %7777 = vst.msk [vmem:[%s325 + $0x90] sm:$0xff] %vm404, %v7745
        %7778 = vst.msk [vmem:[%s325 + $0x98] sm:$0xff] %vm404, %v7746
        %7779 = vst.msk [vmem:[%s325 + $0xa0] sm:$0xff] %vm404, %v7747
        %7780 = vst.msk [vmem:[%s325 + $0xa8] sm:$0xff] %vm404, %v7748
        %7781 = vst.msk [vmem:[%s325 + $0xb0] sm:$0xff] %vm404, %v7749
        %7782 = vst.msk [vmem:[%s325 + $0xb8] sm:$0xff] %vm404, %v7750
        %7783 = vst.msk [vmem:[%s325 + $0xc0] sm:$0xff] %vm404, %v7751
        %7784 = vst.msk [vmem:[%s325 + $0xc8] sm:$0xff] %vm404, %v7752
        %7785 = vst.msk [vmem:[%s325 + $0xd0] sm:$0xff] %vm404, %v7753
        %7786 = vst.msk [vmem:[%s325 + $0xd8] sm:$0xff] %vm404, %v7754
        %7787 = vst.msk [vmem:[%s325 + $0xe0] sm:$0xff] %vm404, %v7755
        %7788 = vst.msk [vmem:[%s325 + $0xe8] sm:$0xff] %vm404, %v7756
        %7789 = vst.msk [vmem:[%s325 + $0xf0] sm:$0xff] %vm404, %v7757
        %7790 = vst.msk [vmem:[%s325 + $0xf8] sm:$0xff] %vm404, %v7758
        %s7791 = sand.u32 %s225, 1
        %s7792 = scalar_lea.sflag [#allocation4], %s7791
        %s7793 = sand.u32 %s225, 1
        %s7794 = smul.addr %s7793, 256
        %s7795 = scalar_lea.vmem [#allocation3], %s7794
        // Predicated region
        $region57: #{tpu_custom_call.1} parent=55 // pred_check
          %p7796 = pneg %p235
        $region58: #{tpu_custom_call.1} parent=55 // pred_check_branch
          %7798 = sbr.rel (%p7796) target = $region60
        $region59: #{tpu_custom_call.1} parent=55 // pred_region
          %s7800 = ssub.s32 4096, 4096
          %7801 = vsyncadd %s7792, %s7800
          %s7802 = smul.addr %s23, 32
          %s7803 = smul.addr %s7802, 128
          %s7804 = scalar_lea.hbm %s9, %s7803
          %s7805 = sshll.u32 %s7795, 4
          %s7806 = int_to_ptr.vmem [resolvable:$true] %s7805
          %7811 = dma.vmem_to_hbm [thread:$0]  %s7806, 4096, %s7804, %s7792, 128, 128, 8
        $region60: #{tpu_custom_call.1} parent=55 // pred_fallthru
          _
      $region56: #{tpu_custom_call.1} parent=5 // pred_fallthru
        _
      %p7812 = scmp.le.s32.totalorder 2, %s18
      // Predicated region
      $region61: #{tpu_custom_call.1} parent=5 // pred_check
        %p7813 = pneg %p7812
      $region62: #{tpu_custom_call.1} parent=5 // pred_check_branch
        %7815 = sbr.rel (%p7813) target = $region64
      $region63: #{tpu_custom_call.1} parent=5 // pred_region
        %s7816 = ssub.s32 %s18, 2
        // Predicated region
        $region65: #{tpu_custom_call.1} parent=63 // pred_check
          %p7817 = pneg %p241
        $region66: #{tpu_custom_call.1} parent=63 // pred_check_branch
          %7819 = sbr.rel (%p7817) target = $region68
        $region67: #{tpu_custom_call.1} parent=63 // pred_region
          %s7820 = sand.u32 %s226, 1
          %s7821 = scalar_lea.sflag [#allocation4], %s7820
          %s7822 = sand.u32 %s226, 1
          %s7823 = smul.addr %s7822, 256
          %s7824 = scalar_lea.vmem [#allocation3], %s7823
          %7825 = dma.done %s7821, 4096
        $region68: #{tpu_custom_call.1} parent=63 // pred_fallthru
          _
      $region64: #{tpu_custom_call.1} parent=5 // pred_fallthru
        _
    $region6: #{tpu_custom_call.1} parent=1 // loop_footer
      %s22 = sadd.s32 1, %s18
    $region7: #{tpu_custom_call.1} parent=1 // loop_footer_branch
      %17 = sbr.rel target = $region3
    $region8: #{tpu_custom_call.1} parent=1 // loop_exit
      _
    %7826 = vsyncpa [#allocation4], 1
    %s7827 = scalar_lea.sflag [#allocation4], 1
    %7828 = vsyncpa %s7827, 1

</llo_original>
